<compile_context>
chip_gen: v7x
topology: tpu7x:2x2x1
jax: 0.10.0
libtpu: 0.0.40
codegen_flags: <defaults>
</compile_context>

<pallas_src>
import functools
import math

import jax
import jax.numpy as jnp
from jax.experimental import pallas as pl
from jax.experimental.pallas import tpu as pltpu

BN_EPS = 1e-5      # torch.nn.BatchNorm1d default
LN_EPS = 1e-12     # HuggingFace BERT LayerNorm default
_GELU_C = 0.7978845608028654  # sqrt(2/pi)
MATMUL_DTYPE = jnp.bfloat16   # MXU input dtype (f32 accumulation)


def _layer_norm(x, gamma, beta):
    mu = jnp.mean(x, axis=-1, keepdims=True)
    xc = x - mu
    var = jnp.mean(xc * xc, axis=-1, keepdims=True)
    return xc * jax.lax.rsqrt(var + LN_EPS) * gamma + beta


def _gelu_tanh(x):
    return 0.5 * x * (1.0 + jnp.tanh(_GELU_C * (x + 0.044715 * x * x * x)))


def _largest_divisor(n, cap):
    t = min(n, cap)
    while n % t:
        t -= 1
    return t


def _vmem_limit_bytes():
    # Per-generation scoped-VMEM budget: ~3/4 of physical, capped at 96 MiB.
    # v5e/v6e (128 MiB) -> 96 MiB so full bf16 per-layer weight sets stay
    # double/triple buffered; v7x (64 MiB) -> 48 MiB.
    try:
        cap = int(getattr(pltpu.get_tpu_info(), "vmem_capacity_bytes",
                          128 * 1024 * 1024))
    except Exception:
        cap = 128 * 1024 * 1024
    return min(cap * 3 // 4, 96 * 1024 * 1024)


# ----------------------------------------------------------------------------
# Kernel 1: one post-LN BERT encoder layer, grid = (stream, layer).
# ----------------------------------------------------------------------------
def _ffn_ln(h1, w_i, w_d, b_ff1, b_ff2, ln2_g, ln2_b, matmul_dtype, row_tile):
    """FFN + residual + LayerNorm, row-tiled over BL so the (rows, F) GELU
    intermediate stays bounded in VMEM/vregs at real BERT shapes."""
    BL, D = h1.shape

    def block(chunk):
        f = _gelu_tanh(jnp.dot(chunk.astype(matmul_dtype), w_i,
                               preferred_element_type=jnp.float32) + b_ff1)
        f = jnp.dot(f.astype(matmul_dtype), w_d,
                    preferred_element_type=jnp.float32) + b_ff2
        return _layer_norm(chunk + f, ln2_g, ln2_b)

    if row_tile >= BL:
        return block(h1)

    def body(t, acc):
        r0 = t * row_tile
        chunk = jax.lax.dynamic_slice(h1, (r0, 0), (row_tile, D))
        return jax.lax.dynamic_update_slice(acc, block(chunk), (r0, 0))

    return jax.lax.fori_loop(0, BL // row_tile, body,
                             jnp.zeros((BL, D), jnp.float32))


def _bert_layer_kernel(x_ref, wqkv_ref, wo_ref, wi_ref, wd_ref, vec_ref, h_ref,
                       *, num_heads, matmul_dtype, row_tile):
    """h_ref (output block) is resident across the layer axis and carries the running
    hidden state.  x aliases the output HBM buffer (input_output_aliases={0:0}); it is
    only read once at layer 0 to seed h_ref (output blocks are not HBM-prefetched).
    vec_ref packs the 8 per-feature vectors (biases / LN params) into one tile."""
    B, _, L, D = h_ref.shape
    BL = B * L
    F = wi_ref.shape[1]
    dh = D // num_heads
    inv_sqrt_dh = 1.0 / math.sqrt(dh)

    @pl.when(pl.program_id(1) == 0)
    def _seed():
        h_ref[...] = x_ref[...]

    vec = vec_ref[...]
    b_qkv = vec[0:1, :3 * D]
    b_ao = vec[1:2, :D]
    ln1_g = vec[2:3, :D]
    ln1_b = vec[3:4, :D]
    b_ff1 = vec[4:5, :F]
    b_ff2 = vec[5:6, :D]
    ln2_g = vec[6:7, :D]
    ln2_b = vec[7:8, :D]

    # Weights are stored bf16 in HBM; astype is a no-op when matmul_dtype == bf16.
    w_qkv = wqkv_ref[...].astype(matmul_dtype)
    w_o = wo_ref[...].astype(matmul_dtype)
    w_i = wi_ref[...].astype(matmul_dtype)
    w_d = wd_ref[...].astype(matmul_dtype)

    h = h_ref[...].reshape(BL, D)

    # ---- self attention (batched over a flattened (B*H) leading batch dim) ---------
    qkv = jnp.dot(h.astype(matmul_dtype), w_qkv,
                  preferred_element_type=jnp.float32) + b_qkv           # (BL, 3D) f32
    qkv3 = qkv.reshape(B, L, 3 * D)
    # 128-aligned lane slices (D is a multiple of 128), head split via reshape.
    q4 = qkv3[:, :, :D].reshape(B, L, num_heads, dh)
    k4 = qkv3[:, :, D:2 * D].reshape(B, L, num_heads, dh)
    v4 = qkv3[:, :, 2 * D:].reshape(B, L, num_heads, dh)

    def _heads_first(t):  # (B, L, H, dh) -> (B*H, L, dh): layout plumbing only.
        t = jnp.stack([t[:, :, hd, :] for hd in range(num_heads)], axis=1)
        return t.reshape(B * num_heads, L, dh)

    q = _heads_first(q4).astype(matmul_dtype)
    k = _heads_first(k4).astype(matmul_dtype)
    v = _heads_first(v4).astype(matmul_dtype)

    s = jnp.einsum("bqd,bkd->bqk", q, k,
                   preferred_element_type=jnp.float32) * inv_sqrt_dh    # one batched dot
    s = s - jnp.max(s, axis=-1, keepdims=True)
    p = jnp.exp(s)
    p = p * pl.reciprocal(jnp.sum(p, axis=-1, keepdims=True), approx=True)
    ctx = jnp.einsum("bqk,bkd->bqd", p.astype(matmul_dtype), v,
                     preferred_element_type=jnp.float32)                # one batched dot
    ctx = ctx.reshape(B, num_heads, L, dh)
    ctx = jnp.stack([ctx[:, hd] for hd in range(num_heads)], axis=2)    # (B, L, H, dh)
    attn = jnp.dot(ctx.reshape(BL, D).astype(matmul_dtype), w_o,
                   preferred_element_type=jnp.float32)                  # single K=D dot
    h1 = _layer_norm(h + attn + b_ao, ln1_g, ln1_b)

    # ---- feed forward + LayerNorm (row-tiled over BL) -------------------------------
    h2 = _ffn_ln(h1, w_i, w_d, b_ff1, b_ff2, ln2_g, ln2_b, matmul_dtype, row_tile)

    h_ref[...] = h2.reshape(B, 1, L, D)


def run_encoder_stack(x, p, *, num_heads, matmul_dtype=MATMUL_DTYPE, row_tile=512):
    """x: (B, S, L, D) with the stream axis at position 1 (so the cross-tower seq
    concat is a free reshape).  Weights have a leading stream dim of S or 1."""
    B, S, L, D = x.shape
    S_w, NL = p["wqkv"].shape[:2]
    assert S_w in (1, S), (S_w, S)
    F = p["wi"].shape[3]
    PW = p["vec"].shape[3]
    rt = _largest_divisor(B * L, row_tile)
    kernel = functools.partial(_bert_layer_kernel, num_heads=num_heads,
                               matmul_dtype=matmul_dtype, row_tile=rt)
    w_idx = (lambda s, l: (0, l, 0, 0)) if S_w == 1 else (lambda s, l: (s, l, 0, 0))
    return pl.pallas_call(
        kernel,
        out_shape=jax.ShapeDtypeStruct((B, S, L, D), jnp.float32),
        grid=(S, NL),
        in_specs=[
            pl.BlockSpec((B, 1, L, D), lambda s, l: (0, s, 0, 0)),
            pl.BlockSpec((None, None, D, 3 * D), w_idx),
            pl.BlockSpec((None, None, D, D), w_idx),
            pl.BlockSpec((None, None, D, F), w_idx),
            pl.BlockSpec((None, None, F, D), w_idx),
            pl.BlockSpec((None, None, 8, PW), w_idx),
        ],
        out_specs=pl.BlockSpec((B, 1, L, D), lambda s, l: (0, s, 0, 0)),
        input_output_aliases={0: 0},
        compiler_params=pltpu.CompilerParams(
            dimension_semantics=("parallel", "arbitrary"),
            vmem_limit_bytes=_vmem_limit_bytes(),
        ),
    )(x, p["wqkv"], p["wo"], p["wi"], p["wd"], p["vec"])


# ----------------------------------------------------------------------------
# Kernel 2: fused ['cls','mean'] pooling + DenseNet classification head.
# ----------------------------------------------------------------------------
def _pool_classify_kernel(e_ref, w1_ref, w2_ref, pv_ref, o_ref, *, n_classes, matmul_dtype):
    B, Lm, D = e_ref.shape
    H1 = w1_ref.shape[1]
    NP = o_ref.shape[1]

    emb = e_ref[...]
    cls_vec = emb[:, 0, :]                                   # CLSPooling (mask all ones)
    mean_vec = jnp.sum(emb, axis=1) * (1.0 / Lm)             # MeanPooling (mask all ones)
    pooled = jnp.concatenate([cls_vec, mean_vec], axis=-1)   # (B, 2D)

    pv = pv_ref[...]
    bn_gamma = pv[0:1, :H1]
    bn_beta = pv[1:2, :H1]
    b_out = pv[2:3, :NP]
    # pv[3] holds the inner Linear bias: intentionally NOT read — exactly cancelled by
    # the training-mode BatchNorm mean subtraction (dead work).

    y = jnp.dot(pooled.astype(matmul_dtype), w1_ref[...].astype(matmul_dtype),
                preferred_element_type=jnp.float32)          # (B, H1)
    mu = jnp.sum(y, axis=0, keepdims=True) * (1.0 / B)
    yc = y - mu
    var = jnp.sum(yc * yc, axis=0, keepdims=True) * (1.0 / B)
    scale = bn_gamma * jax.lax.rsqrt(var + BN_EPS)           # gamma folded into rsqrt
    hmid = jnp.maximum(yc * scale + bn_beta, 0.0)            # BN + ReLU

    logits = jnp.dot(hmid.astype(matmul_dtype), w2_ref[...].astype(matmul_dtype),
                     preferred_element_type=jnp.float32) + b_out        # (B, NP) padded
    col = jax.lax.broadcasted_iota(jnp.int32, logits.shape, 1)
    logits = jnp.where(col < n_classes, logits, jnp.float32(-1e30))
    logits = logits - jnp.max(logits, axis=-1, keepdims=True)
    ez = jnp.exp(logits)
    o_ref[...] = (ez * pl.reciprocal(jnp.sum(ez, axis=-1, keepdims=True),
                                     approx=True)).astype(o_ref.dtype)


def run_pool_classify(e, w1, w2_padded, pvec, *, n_classes, matmul_dtype=MATMUL_DTYPE):
    B, Lm, D = e.shape
    P_in, H1 = w1.shape
    NP = w2_padded.shape[1]
    kernel = functools.partial(_pool_classify_kernel, n_classes=n_classes,
                               matmul_dtype=matmul_dtype)
    out = pl.pallas_call(
        kernel,
        out_shape=jax.ShapeDtypeStruct((B, NP), jnp.float32),
        in_specs=[
            pl.BlockSpec((B, Lm, D), lambda: (0, 0, 0)),
            pl.BlockSpec((P_in, H1), lambda: (0, 0)),
            pl.BlockSpec((H1, NP), lambda: (0, 0)),
            pl.BlockSpec((8, pvec.shape[1]), lambda: (0, 0)),
        ],
        out_specs=pl.BlockSpec((B, NP), lambda: (0, 0)),
        compiler_params=pltpu.CompilerParams(vmem_limit_bytes=_vmem_limit_bytes()),
    )(e, w1, w2_padded, pvec)
    return out[:, :n_classes]


# ----------------------------------------------------------------------------
# Embeddings (data-dependent gather + tiny LayerNorm: left to XLA by design).
# ----------------------------------------------------------------------------
def _bert_embed(ids, p):
    L = ids.shape[1]
    x = p["word"][ids] + p["pos"][:L][None, :, :] + p["type"][0][None, None, :]
    return _layer_norm(x, p["ln_g"], p["ln_b"])


# ----------------------------------------------------------------------------
# Full DualBert forward (post-tokenization).
# ----------------------------------------------------------------------------
def dual_bert_forward(params, ids_mhc, ids_pep, *, matmul_dtype=MATMUL_DTYPE,
                      head_batch_split=2):
    emb_mhc = _bert_embed(ids_mhc, params["embed_mhc"])      # (B, L, D) f32
    emb_pep = _bert_embed(ids_pep, params["embed_pep"])
    B, L, D = emb_mhc.shape
    H = params["num_heads"]

    # Dual towers: ONE fused call, stream at axis 1 so the post-tower
    # torch.cat(dim=1) below is a free (contiguous) reshape, not an XLA concat.
    x_towers = jnp.stack([emb_mhc, emb_pep], axis=1)         # (B, 2, L, D)
    tower_out = run_encoder_stack(x_towers, params["towers"], num_heads=H,
                                  matmul_dtype=matmul_dtype)

    # torch.cat([embds_mhc, embds_pep], dim=1) == free reshape.  Optionally split the
    # batch into pseudo-streams so the head stack's "parallel" axis can use v7x's
    # second TensorCore (no-op on v5e/v6e, weights index_map ignores the stream).
    split = head_batch_split if (head_batch_split > 1 and B % head_batch_split == 0) else 1
    merged = tower_out.reshape(B // split, split, 2 * L, D)
    head_out = run_encoder_stack(merged, params["head_enc"], num_heads=H,
                                 matmul_dtype=matmul_dtype)
    head_out = head_out.reshape(B, 2 * L, D)

    # Fused pooling + classification head (lane-dense output, sliced outside).
    c = params["cls_head"]
    return run_pool_classify(head_out, c["w1"], c["w2"], c["vec"],
                             n_classes=params["n_classes"], matmul_dtype=matmul_dtype)


# ----------------------------------------------------------------------------
# Deterministic toy parameters (weights pre-transposed, packed, stored bf16 once).
# ----------------------------------------------------------------------------
def make_params(key, cfg):
    D, F, H1 = cfg["D"], cfg["F"], cfg["H1"]
    NC, NCP = cfg["n_classes"], 128               # class dim lane-padded to 128
    V, L = cfg["vocab"], cfg["L"]
    P = max(3 * D, F)
    PW = max(H1, NCP)

    keys = iter(jax.random.split(key, 64))

    def nrm(shape, s=0.02):
        return (s * jax.random.normal(next(keys), shape)).astype(jnp.float32)

    def embed_params():
        return dict(word=nrm((V, D)), pos=nrm((2 * L, D)), type=nrm((2, D)),
                    ln_g=1.0 + nrm((D,), 0.05), ln_b=nrm((D,)))

    def layer_stack(S, NL):
        vec = jnp.zeros((S, NL, 8, P), jnp.float32)
        vec = vec.at[:, :, 0, :3 * D].set(nrm((S, NL, 3 * D)))       # qkv bias
        vec = vec.at[:, :, 1, :D].set(nrm((S, NL, D)))               # attn-out bias
        vec = vec.at[:, :, 2, :D].set(1.0 + nrm((S, NL, D), 0.05))   # LN1 gamma
        vec = vec.at[:, :, 3, :D].set(nrm((S, NL, D)))               # LN1 beta
        vec = vec.at[:, :, 4, :F].set(nrm((S, NL, F)))               # FFN-in bias
        vec = vec.at[:, :, 5, :D].set(nrm((S, NL, D)))               # FFN-out bias
        vec = vec.at[:, :, 6, :D].set(1.0 + nrm((S, NL, D), 0.05))   # LN2 gamma
        vec = vec.at[:, :, 7, :D].set(nrm((S, NL, D)))               # LN2 beta
        return dict(wqkv=nrm((S, NL, D, 3 * D)).astype(jnp.bfloat16),
                    wo=nrm((S, NL, D, D)).astype(jnp.bfloat16),
                    wi=nrm((S, NL, D, F)).astype(jnp.bfloat16),
                    wd=nrm((S, NL, F, D)).astype(jnp.bfloat16),
                    vec=vec)

    w2 = jnp.zeros((H1, NCP), jnp.float32).at[:, :NC].set(nrm((H1, NC)))
    cvec = jnp.zeros((8, PW), jnp.float32)
    cvec = cvec.at[0, :H1].set(1.0 + nrm((H1,), 0.05))   # BN gamma
    cvec = cvec.at[1, :H1].set(nrm((H1,)))               # BN beta
    cvec = cvec.at[2, :NC].set(nrm((NC,)))               # head Linear bias
    cvec = cvec.at[3, :H1].set(nrm((H1,)))               # inner Linear bias (dead in kernel)

    return dict(
        embed_mhc=embed_params(), embed_pep=embed_params(),
        towers=layer_stack(2, cfg["n_tail"]),
        head_enc=layer_stack(1, cfg["n_head"]),
        cls_head=dict(w1=nrm((2 * D, H1)).astype(jnp.bfloat16),
                      w2=w2.astype(jnp.bfloat16), vec=cvec),
        num_heads=cfg["H"], n_classes=NC)


# ----------------------------------------------------------------------------
# Pure-JAX reference (PyTorch semantics; same bf16-in / f32-accumulate matmuls).
# ----------------------------------------------------------------------------
def _ref_bert_layer(h, wqkv, wo, wi, wd, vec, H, md):
    B, L, D = h.shape
    F = wi.shape[1]
    dh = D // H
    b_qkv, b_ao = vec[0, :3 * D], vec[1, :D]
    g1, be1 = vec[2, :D], vec[3, :D]
    b_ff1, b_ff2 = vec[4, :F], vec[5, :D]
    g2, be2 = vec[6, :D], vec[7, :D]

    qkv = jnp.dot(h.astype(md), wqkv.astype(md),
                  preferred_element_type=jnp.float32) + b_qkv
    q = qkv[..., :D].reshape(B, L, H, dh)
    k = qkv[..., D:2 * D].reshape(B, L, H, dh)
    v = qkv[..., 2 * D:].reshape(B, L, H, dh)
    s = jnp.einsum("bqhd,bkhd->bhqk", q.astype(md), k.astype(md),
                   preferred_element_type=jnp.float32) / math.sqrt(dh)
    p = jax.nn.softmax(s, axis=-1)
    ctx = jnp.einsum("bhqk,bkhd->bqhd", p.astype(md), v.astype(md),
                     preferred_element_type=jnp.float32).reshape(B, L, D)
    h1 = _layer_norm(h + jnp.dot(ctx.astype(md), wo.astype(md),
                                 preferred_element_type=jnp.float32) + b_ao, g1, be1)
    ff = _gelu_tanh(jnp.dot(h1.astype(md), wi.astype(md),
                            preferred_element_type=jnp.float32) + b_ff1)
    ff = jnp.dot(ff.astype(md), wd.astype(md),
                 preferred_element_type=jnp.float32) + b_ff2
    return _layer_norm(h1 + ff, g2, be2)


def _ref_encoder_stack(h, p, s, H, md):
    for l in range(p["wqkv"].shape[1]):
        h = _ref_bert_layer(h, p["wqkv"][s, l], p["wo"][s, l], p["wi"][s, l],
                            p["wd"][s, l], p["vec"][s, l], H, md)
    return h


def reference_forward(params, ids_mhc, ids_pep, matmul_dtype=MATMUL_DTYPE):
    H, md = params["num_heads"], matmul_dtype
    emb_mhc = _bert_embed(ids_mhc, params["embed_mhc"])
    emb_pep = _bert_embed(ids_pep, params["embed_pep"])
    h_mhc = _ref_encoder_stack(emb_mhc, params["towers"], 0, H, md)
    h_pep = _ref_encoder_stack(emb_pep, params["towers"], 1, H, md)
    merged = jnp.concatenate([h_mhc, h_pep], axis=1)
    h_head = _ref_encoder_stack(merged, params["head_enc"], 0, H, md)

    c = params["cls_head"]
    nc = params["n_classes"]
    H1 = c["w1"].shape[1]
    pooled = jnp.concatenate([h_head[:, 0, :], jnp.mean(h_head, axis=1)], axis=-1)
    y = jnp.dot(pooled.astype(md), c["w1"].astype(md),
                preferred_element_type=jnp.float32) + c["vec"][3, :H1]  # Linear WITH bias
    mu = jnp.mean(y, axis=0, keepdims=True)
    var = jnp.mean((y - mu) ** 2, axis=0, keepdims=True)
    hm = jnp.maximum((y - mu) / jnp.sqrt(var + BN_EPS) * c["vec"][0, :H1]
                     + c["vec"][1, :H1], 0.0)
    logits = jnp.dot(hm.astype(md), c["w2"][:, :nc].astype(md),
                     preferred_element_type=jnp.float32) + c["vec"][2, :nc]
    return jax.nn.softmax(logits, axis=-1)


if __name__ == "__main__":
    # Small shapes consistent with the module: two towers of seq-len 8, hidden=128
    # (lane-dense stand-in for BERT hidden), 2 heads, FFN=256, 2 tail + 2 head layers,
    # classification head [2*128 -> 128 -> 2 classes], pooling = ['cls', 'mean'].
    cfg = dict(vocab=32, B=2, L=8, D=128, H=2, F=256,
               n_tail=2, n_head=2, H1=128, n_classes=2)

    key = jax.random.PRNGKey(0)
    kp, km, kq = jax.random.split(key, 3)
    params = make_params(kp, cfg)
    ids_mhc = jax.random.randint(km, (cfg["B"], cfg["L"]), 0, cfg["vocab"], dtype=jnp.int32)
    ids_pep = jax.random.randint(kq, (cfg["B"], cfg["L"]), 0, cfg["vocab"], dtype=jnp.int32)

    # jit so the free-reshape tower merge and the input/output HBM aliasing apply to
    # intermediates (donation) rather than user-visible buffers.
    fwd = jax.jit(lambda a, b: dual_bert_forward(params, a, b,
                                                 matmul_dtype=MATMUL_DTYPE))
    out = jax.block_until_ready(fwd(ids_mhc, ids_pep))

    ref = jax.block_until_ready(
        reference_forward(params, ids_mhc, ids_pep, matmul_dtype=MATMUL_DTYPE))

    assert out.shape == (cfg["B"], cfg["n_classes"]), out.shape
    # Approx-EUP reciprocal + bf16 MXU inputs => slightly looser tolerances.
    assert jnp.allclose(jnp.sum(out, axis=-1), 1.0, atol=1e-2), "softmax rows ~ 1"
    assert jnp.allclose(out, ref, atol=2e-2, rtol=2e-2), (out, ref)

    print("KERNEL_OK")
</pallas_src>

<mosaic_0001>
module attributes {stable_mosaic.version = 11 : i64} {
  func.func @_bert_layer_kernel(%arg0: i32, %arg1: i32, %arg2: memref<1x1x16x128xf32, #tpu.memory_space<vmem>>, %arg3: memref<1x1x128x384xbf16, #tpu.memory_space<vmem>>, %arg4: memref<1x1x128x128xbf16, #tpu.memory_space<vmem>>, %arg5: memref<1x1x128x256xbf16, #tpu.memory_space<vmem>>, %arg6: memref<1x1x256x128xbf16, #tpu.memory_space<vmem>>, %arg7: memref<1x1x8x384xf32, #tpu.memory_space<vmem>>, %arg8: memref<1x1x16x128xf32, #tpu.memory_space<vmem>>) attributes {dimension_semantics = [#tpu.dimension_semantics<parallel>, #tpu.dimension_semantics<arbitrary>], iteration_bounds = array<i64: 2, 2>, scalar_prefetch = 0 : i64, scratch_operands = 0 : i64, tpu.core_type = #tpu.core_type<tc>, window_params = [{transform_indices = @transform_0, window_bounds = array<i64: 1, 1, 16, 128>}, {transform_indices = @transform_1, window_bounds = array<i64: 1, 1, 128, 384>}, {transform_indices = @transform_2, window_bounds = array<i64: 1, 1, 128, 128>}, {transform_indices = @transform_3, window_bounds = array<i64: 1, 1, 128, 256>}, {transform_indices = @transform_4, window_bounds = array<i64: 1, 1, 256, 128>}, {transform_indices = @transform_5, window_bounds = array<i64: 1, 1, 8, 384>}, {transform_indices = @transform_6, window_bounds = array<i64: 1, 1, 16, 128>}]} {
    %c0_i32 = arith.constant 0 : i32
    %0 = arith.cmpi eq, %arg1, %c0_i32 : i32
    %1 = arith.extui %0 : i1 to i32
    %c0_i32_0 = arith.constant 0 : i32
    %2 = arith.cmpi ne, %1, %c0_i32_0 : i32
    scf.if %2 {
      %c0_50 = arith.constant 0 : index
      %c0_51 = arith.constant 0 : index
      %c0_52 = arith.constant 0 : index
      %c0_53 = arith.constant 0 : index
      %154 = vector.load %arg2[%c0_50, %c0_51, %c0_52, %c0_53] : memref<1x1x16x128xf32, #tpu.memory_space<vmem>>, vector<1x1x16x128xf32>
      %c0_54 = arith.constant 0 : index
      %c0_55 = arith.constant 0 : index
      %c0_56 = arith.constant 0 : index
      %c0_57 = arith.constant 0 : index
      %155 = vector.load %arg8[%c0_54, %c0_55, %c0_56, %c0_57] : memref<1x1x16x128xf32, #tpu.memory_space<vmem>>, vector<1x1x16x128xf32>
      tpu.vector_store %arg8[%c0_54, %c0_55, %c0_56, %c0_57], %154 {strides = array<i32>} : memref<1x1x16x128xf32, #tpu.memory_space<vmem>>, vector<1x1x16x128xf32>,
    } else {
    }
    %c0 = arith.constant 0 : index
    %c0_1 = arith.constant 0 : index
    %c0_2 = arith.constant 0 : index
    %c0_3 = arith.constant 0 : index
    %3 = vector.load %arg7[%c0, %c0_1, %c0_2, %c0_3] : memref<1x1x8x384xf32, #tpu.memory_space<vmem>>, vector<1x1x8x384xf32>
    %4 = vector.shape_cast %3 : vector<1x1x8x384xf32> to vector<8x384xf32>
    %5 = vector.extract_strided_slice %4 {offsets = [0, 0], sizes = [1, 384], strides = [1, 1]} : vector<8x384xf32> to vector<1x384xf32>
    %6 = vector.extract_strided_slice %4 {offsets = [1, 0], sizes = [1, 128], strides = [1, 1]} : vector<8x384xf32> to vector<1x128xf32>
    %7 = vector.extract_strided_slice %4 {offsets = [2, 0], sizes = [1, 128], strides = [1, 1]} : vector<8x384xf32> to vector<1x128xf32>
    %8 = vector.extract_strided_slice %4 {offsets = [3, 0], sizes = [1, 128], strides = [1, 1]} : vector<8x384xf32> to vector<1x128xf32>
    %9 = vector.extract_strided_slice %4 {offsets = [4, 0], sizes = [1, 256], strides = [1, 1]} : vector<8x384xf32> to vector<1x256xf32>
    %10 = vector.extract_strided_slice %4 {offsets = [5, 0], sizes = [1, 128], strides = [1, 1]} : vector<8x384xf32> to vector<1x128xf32>
    %11 = vector.extract_strided_slice %4 {offsets = [6, 0], sizes = [1, 128], strides = [1, 1]} : vector<8x384xf32> to vector<1x128xf32>
    %12 = vector.extract_strided_slice %4 {offsets = [7, 0], sizes = [1, 128], strides = [1, 1]} : vector<8x384xf32> to vector<1x128xf32>
    %c0_4 = arith.constant 0 : index
    %c0_5 = arith.constant 0 : index
    %c0_6 = arith.constant 0 : index
    %c0_7 = arith.constant 0 : index
    %13 = vector.load %arg3[%c0_4, %c0_5, %c0_6, %c0_7] : memref<1x1x128x384xbf16, #tpu.memory_space<vmem>>, vector<1x1x128x384xbf16>
    %14 = vector.shape_cast %13 : vector<1x1x128x384xbf16> to vector<128x384xbf16>
    %c0_8 = arith.constant 0 : index
    %c0_9 = arith.constant 0 : index
    %c0_10 = arith.constant 0 : index
    %c0_11 = arith.constant 0 : index
    %15 = vector.load %arg4[%c0_8, %c0_9, %c0_10, %c0_11] : memref<1x1x128x128xbf16, #tpu.memory_space<vmem>>, vector<1x1x128x128xbf16>
    %16 = vector.shape_cast %15 : vector<1x1x128x128xbf16> to vector<128x128xbf16>
    %c0_12 = arith.constant 0 : index
    %c0_13 = arith.constant 0 : index
    %c0_14 = arith.constant 0 : index
    %c0_15 = arith.constant 0 : index
    %17 = vector.load %arg5[%c0_12, %c0_13, %c0_14, %c0_15] : memref<1x1x128x256xbf16, #tpu.memory_space<vmem>>, vector<1x1x128x256xbf16>
    %18 = vector.shape_cast %17 : vector<1x1x128x256xbf16> to vector<128x256xbf16>
    %c0_16 = arith.constant 0 : index
    %c0_17 = arith.constant 0 : index
    %c0_18 = arith.constant 0 : index
    %c0_19 = arith.constant 0 : index
    %19 = vector.load %arg6[%c0_16, %c0_17, %c0_18, %c0_19] : memref<1x1x256x128xbf16, #tpu.memory_space<vmem>>, vector<1x1x256x128xbf16>
    %20 = vector.shape_cast %19 : vector<1x1x256x128xbf16> to vector<256x128xbf16>
    %c0_20 = arith.constant 0 : index
    %c0_21 = arith.constant 0 : index
    %c0_22 = arith.constant 0 : index
    %c0_23 = arith.constant 0 : index
    %21 = vector.load %arg8[%c0_20, %c0_21, %c0_22, %c0_23] : memref<1x1x16x128xf32, #tpu.memory_space<vmem>>, vector<1x1x16x128xf32>
    %22 = vector.shape_cast %21 : vector<1x1x16x128xf32> to vector<16x128xf32>
    %23 = arith.truncf %22 : vector<16x128xf32> to vector<16x128xbf16>
    %cst = arith.constant dense<0.000000e+00> : vector<16x384xf32>
    %24 = tpu.matmul %23, %14, %cst {dimension_numbers = #tpu.dot_dimension_numbers<[1], [0], [0], [1], [0, 0, 1, 1], [], []>} : vector<16x128xbf16>, vector<128x384xbf16>, vector<16x384xf32> -> vector<16x384xf32>
    %25 = vector.broadcast %5 : vector<1x384xf32> to vector<16x384xf32>
    %26 = arith.addf %24, %25 : vector<16x384xf32>
    %27 = vector.shape_cast %26 : vector<16x384xf32> to vector<1x16x384xf32>
    %28 = vector.extract_strided_slice %27 {offsets = [0, 0, 0], sizes = [1, 16, 128], strides = [1, 1, 1]} : vector<1x16x384xf32> to vector<1x16x128xf32>
    %29 = vector.shape_cast %28 : vector<1x16x128xf32> to vector<1x16x2x64xf32>
    %30 = vector.extract_strided_slice %27 {offsets = [0, 0, 128], sizes = [1, 16, 128], strides = [1, 1, 1]} : vector<1x16x384xf32> to vector<1x16x128xf32>
    %31 = vector.shape_cast %30 : vector<1x16x128xf32> to vector<1x16x2x64xf32>
    %32 = vector.extract_strided_slice %27 {offsets = [0, 0, 256], sizes = [1, 16, 128], strides = [1, 1, 1]} : vector<1x16x384xf32> to vector<1x16x128xf32>
    %33 = vector.shape_cast %32 : vector<1x16x128xf32> to vector<1x16x2x64xf32>
    %34 = vector.extract_strided_slice %29 {offsets = [0, 0, 0, 0], sizes = [1, 16, 1, 64], strides = [1, 1, 1, 1]} : vector<1x16x2x64xf32> to vector<1x16x1x64xf32>
    %35 = vector.shape_cast %34 : vector<1x16x1x64xf32> to vector<1x16x64xf32>
    %36 = vector.extract_strided_slice %29 {offsets = [0, 0, 1, 0], sizes = [1, 16, 1, 64], strides = [1, 1, 1, 1]} : vector<1x16x2x64xf32> to vector<1x16x1x64xf32>
    %37 = vector.shape_cast %36 : vector<1x16x1x64xf32> to vector<1x16x64xf32>
    %38 = vector.shape_cast %35 : vector<1x16x64xf32> to vector<1x1x16x64xf32>
    %39 = vector.shape_cast %37 : vector<1x16x64xf32> to vector<1x1x16x64xf32>
    %40 = tpu.concatenate %38, %39 in 1 : vector<1x1x16x64xf32>, vector<1x1x16x64xf32> -> vector<1x2x16x64xf32>
    %41 = vector.shape_cast %40 : vector<1x2x16x64xf32> to vector<2x16x64xf32>
    %42 = arith.truncf %41 : vector<2x16x64xf32> to vector<2x16x64xbf16>
    %43 = vector.extract_strided_slice %31 {offsets = [0, 0, 0, 0], sizes = [1, 16, 1, 64], strides = [1, 1, 1, 1]} : vector<1x16x2x64xf32> to vector<1x16x1x64xf32>
    %44 = vector.shape_cast %43 : vector<1x16x1x64xf32> to vector<1x16x64xf32>
    %45 = vector.extract_strided_slice %31 {offsets = [0, 0, 1, 0], sizes = [1, 16, 1, 64], strides = [1, 1, 1, 1]} : vector<1x16x2x64xf32> to vector<1x16x1x64xf32>
    %46 = vector.shape_cast %45 : vector<1x16x1x64xf32> to vector<1x16x64xf32>
    %47 = vector.shape_cast %44 : vector<1x16x64xf32> to vector<1x1x16x64xf32>
    %48 = vector.shape_cast %46 : vector<1x16x64xf32> to vector<1x1x16x64xf32>
    %49 = tpu.concatenate %47, %48 in 1 : vector<1x1x16x64xf32>, vector<1x1x16x64xf32> -> vector<1x2x16x64xf32>
    %50 = vector.shape_cast %49 : vector<1x2x16x64xf32> to vector<2x16x64xf32>
    %51 = arith.truncf %50 : vector<2x16x64xf32> to vector<2x16x64xbf16>
    %52 = vector.extract_strided_slice %33 {offsets = [0, 0, 0, 0], sizes = [1, 16, 1, 64], strides = [1, 1, 1, 1]} : vector<1x16x2x64xf32> to vector<1x16x1x64xf32>
    %53 = vector.shape_cast %52 : vector<1x16x1x64xf32> to vector<1x16x64xf32>
    %54 = vector.extract_strided_slice %33 {offsets = [0, 0, 1, 0], sizes = [1, 16, 1, 64], strides = [1, 1, 1, 1]} : vector<1x16x2x64xf32> to vector<1x16x1x64xf32>
    %55 = vector.shape_cast %54 : vector<1x16x1x64xf32> to vector<1x16x64xf32>
    %56 = vector.shape_cast %53 : vector<1x16x64xf32> to vector<1x1x16x64xf32>
    %57 = vector.shape_cast %55 : vector<1x16x64xf32> to vector<1x1x16x64xf32>
    %58 = tpu.concatenate %56, %57 in 1 : vector<1x1x16x64xf32>, vector<1x1x16x64xf32> -> vector<1x2x16x64xf32>
    %59 = vector.shape_cast %58 : vector<1x2x16x64xf32> to vector<2x16x64xf32>
    %60 = arith.truncf %59 : vector<2x16x64xf32> to vector<2x16x64xbf16>
    "tpu.trace_start"() <{level = 10 : i32, message = "bqd,bkd->bqk"}> : () -> ()
    %cst_24 = arith.constant dense<0.000000e+00> : vector<2x16x16xf32>
    %61 = tpu.matmul %42, %51, %cst_24 {dimension_numbers = #tpu.dot_dimension_numbers<[2], [2], [1], [1], [0, 0, 0, 1, 1, 1], [0], [0]>} : vector<2x16x64xbf16>, vector<2x16x64xbf16>, vector<2x16x16xf32> -> vector<2x16x16xf32>
    "tpu.trace_stop"() : () -> ()
    %cst_25 = arith.constant 1.250000e-01 : f32
    %62 = vector.broadcast %cst_25 : f32 to vector<2x16x16xf32>
    %63 = arith.mulf %61, %62 : vector<2x16x16xf32>
    %cst_26 = arith.constant dense<0xFF800000> : vector<2x16xf32>
    %64 = vector.multi_reduction <maximumf>, %63, %cst_26 [2] : vector<2x16x16xf32> to vector<2x16xf32>
    %65 = vector.shape_cast %64 : vector<2x16xf32> to vector<2x16x1xf32>
    %66 = vector.broadcast %65 : vector<2x16x1xf32> to vector<2x16x16xf32>
    %67 = arith.subf %63, %66 : vector<2x16x16xf32>
    %68 = math.exp %67 : vector<2x16x16xf32>
    %cst_27 = arith.constant dense<0.000000e+00> : vector<2x16xf32>
    %69 = vector.multi_reduction <add>, %68, %cst_27 [2] : vector<2x16x16xf32> to vector<2x16xf32>
    %70 = vector.shape_cast %69 : vector<2x16xf32> to vector<2x16x1xf32>
    %71 = tpu.reciprocal %70 {approx = true} : vector<2x16x1xf32> -> vector<2x16x1xf32>
    %72 = vector.broadcast %71 : vector<2x16x1xf32> to vector<2x16x16xf32>
    %73 = arith.mulf %68, %72 : vector<2x16x16xf32>
    %74 = arith.truncf %73 : vector<2x16x16xf32> to vector<2x16x16xbf16>
    "tpu.trace_start"() <{level = 10 : i32, message = "bqk,bkd->bqd"}> : () -> ()
    %cst_28 = arith.constant dense<0.000000e+00> : vector<2x16x64xf32>
    %75 = tpu.matmul %74, %60, %cst_28 {dimension_numbers = #tpu.dot_dimension_numbers<[2], [1], [1], [2], [0, 0, 0, 1, 1, 2], [0], [0]>} : vector<2x16x16xbf16>, vector<2x16x64xbf16>, vector<2x16x64xf32> -> vector<2x16x64xf32>
    "tpu.trace_stop"() : () -> ()
    %76 = vector.shape_cast %75 : vector<2x16x64xf32> to vector<1x2x16x64xf32>
    %77 = vector.extract_strided_slice %76 {offsets = [0, 0, 0, 0], sizes = [1, 1, 16, 64], strides = [1, 1, 1, 1]} : vector<1x2x16x64xf32> to vector<1x1x16x64xf32>
    %78 = vector.shape_cast %77 : vector<1x1x16x64xf32> to vector<1x16x64xf32>
    %79 = vector.extract_strided_slice %76 {offsets = [0, 1, 0, 0], sizes = [1, 1, 16, 64], strides = [1, 1, 1, 1]} : vector<1x2x16x64xf32> to vector<1x1x16x64xf32>
    %80 = vector.shape_cast %79 : vector<1x1x16x64xf32> to vector<1x16x64xf32>
    %81 = vector.shape_cast %78 : vector<1x16x64xf32> to vector<1x16x1x64xf32>
    %82 = vector.shape_cast %80 : vector<1x16x64xf32> to vector<1x16x1x64xf32>
    %83 = tpu.concatenate %81, %82 in 2 : vector<1x16x1x64xf32>, vector<1x16x1x64xf32> -> vector<1x16x2x64xf32>
    %84 = vector.shape_cast %83 : vector<1x16x2x64xf32> to vector<16x128xf32>
    %85 = arith.truncf %84 : vector<16x128xf32> to vector<16x128xbf16>
    %cst_29 = arith.constant dense<0.000000e+00> : vector<16x128xf32>
    %86 = tpu.matmul %85, %16, %cst_29 {dimension_numbers = #tpu.dot_dimension_numbers<[1], [0], [0], [1], [0, 0, 1, 1], [], []>} : vector<16x128xbf16>, vector<128x128xbf16>, vector<16x128xf32> -> vector<16x128xf32>
    %87 = arith.addf %22, %86 : vector<16x128xf32>
    %88 = vector.broadcast %6 : vector<1x128xf32> to vector<16x128xf32>
    %89 = arith.addf %87, %88 : vector<16x128xf32>
    %cst_30 = arith.constant dense<0.000000e+00> : vector<16xf32>
    %90 = vector.multi_reduction <add>, %89, %cst_30 [1] : vector<16x128xf32> to vector<16xf32>
    %91 = vector.shape_cast %90 : vector<16xf32> to vector<16x1xf32>
    %cst_31 = arith.constant 1.280000e+02 : f32
    %92 = vector.broadcast %cst_31 : f32 to vector<16x1xf32>
    %93 = arith.divf %91, %92 : vector<16x1xf32>
    %94 = vector.broadcast %93 : vector<16x1xf32> to vector<16x128xf32>
    %95 = arith.subf %89, %94 : vector<16x128xf32>
    %96 = arith.mulf %95, %95 : vector<16x128xf32>
    %cst_32 = arith.constant dense<0.000000e+00> : vector<16xf32>
    %97 = vector.multi_reduction <add>, %96, %cst_32 [1] : vector<16x128xf32> to vector<16xf32>
    %98 = vector.shape_cast %97 : vector<16xf32> to vector<16x1xf32>
    %cst_33 = arith.constant 1.280000e+02 : f32
    %99 = vector.broadcast %cst_33 : f32 to vector<16x1xf32>
    %100 = arith.divf %98, %99 : vector<16x1xf32>
    %cst_34 = arith.constant 9.99999996E-13 : f32
    %101 = vector.broadcast %cst_34 : f32 to vector<16x1xf32>
    %102 = arith.addf %100, %101 : vector<16x1xf32>
    %103 = math.rsqrt %102 : vector<16x1xf32>
    %104 = vector.broadcast %103 : vector<16x1xf32> to vector<16x128xf32>
    %105 = arith.mulf %95, %104 : vector<16x128xf32>
    %106 = vector.broadcast %7 : vector<1x128xf32> to vector<16x128xf32>
    %107 = arith.mulf %105, %106 : vector<16x128xf32>
    %108 = vector.broadcast %8 : vector<1x128xf32> to vector<16x128xf32>
    %109 = arith.addf %107, %108 : vector<16x128xf32>
    %110 = arith.truncf %109 : vector<16x128xf32> to vector<16x128xbf16>
    %cst_35 = arith.constant dense<0.000000e+00> : vector<16x256xf32>
    %111 = tpu.matmul %110, %18, %cst_35 {dimension_numbers = #tpu.dot_dimension_numbers<[1], [0], [0], [1], [0, 0, 1, 1], [], []>} : vector<16x128xbf16>, vector<128x256xbf16>, vector<16x256xf32> -> vector<16x256xf32>
    %112 = vector.broadcast %9 : vector<1x256xf32> to vector<16x256xf32>
    %113 = arith.addf %111, %112 : vector<16x256xf32>
    %cst_36 = arith.constant 5.000000e-01 : f32
    %114 = vector.broadcast %cst_36 : f32 to vector<16x256xf32>
    %115 = arith.mulf %114, %113 : vector<16x256xf32>
    %cst_37 = arith.constant 4.471500e-02 : f32
    %116 = vector.broadcast %cst_37 : f32 to vector<16x256xf32>
    %117 = arith.mulf %116, %113 : vector<16x256xf32>
    %118 = arith.mulf %117, %113 : vector<16x256xf32>
    %119 = arith.mulf %118, %113 : vector<16x256xf32>
    %120 = arith.addf %113, %119 : vector<16x256xf32>
    %cst_38 = arith.constant 0.797884583 : f32
    %121 = vector.broadcast %cst_38 : f32 to vector<16x256xf32>
    %122 = arith.mulf %121, %120 : vector<16x256xf32>
    %123 = math.tanh %122 : vector<16x256xf32>
    %cst_39 = arith.constant 1.000000e+00 : f32
    %124 = vector.broadcast %cst_39 : f32 to vector<16x256xf32>
    %125 = arith.addf %124, %123 : vector<16x256xf32>
    %126 = arith.mulf %115, %125 : vector<16x256xf32>
    %127 = arith.truncf %126 : vector<16x256xf32> to vector<16x256xbf16>
    %cst_40 = arith.constant dense<0.000000e+00> : vector<16x128xf32>
    %128 = tpu.matmul %127, %20, %cst_40 {dimension_numbers = #tpu.dot_dimension_numbers<[1], [0], [0], [1], [0, 0, 1, 1], [], []>} : vector<16x256xbf16>, vector<256x128xbf16>, vector<16x128xf32> -> vector<16x128xf32>
    %129 = vector.broadcast %10 : vector<1x128xf32> to vector<16x128xf32>
    %130 = arith.addf %128, %129 : vector<16x128xf32>
    %131 = arith.addf %109, %130 : vector<16x128xf32>
    %cst_41 = arith.constant dense<0.000000e+00> : vector<16xf32>
    %132 = vector.multi_reduction <add>, %131, %cst_41 [1] : vector<16x128xf32> to vector<16xf32>
    %133 = vector.shape_cast %132 : vector<16xf32> to vector<16x1xf32>
    %cst_42 = arith.constant 1.280000e+02 : f32
    %134 = vector.broadcast %cst_42 : f32 to vector<16x1xf32>
    %135 = arith.divf %133, %134 : vector<16x1xf32>
    %136 = vector.broadcast %135 : vector<16x1xf32> to vector<16x128xf32>
    %137 = arith.subf %131, %136 : vector<16x128xf32>
    %138 = arith.mulf %137, %137 : vector<16x128xf32>
    %cst_43 = arith.constant dense<0.000000e+00> : vector<16xf32>
    %139 = vector.multi_reduction <add>, %138, %cst_43 [1] : vector<16x128xf32> to vector<16xf32>
    %140 = vector.shape_cast %139 : vector<16xf32> to vector<16x1xf32>
    %cst_44 = arith.constant 1.280000e+02 : f32
    %141 = vector.broadcast %cst_44 : f32 to vector<16x1xf32>
    %142 = arith.divf %140, %141 : vector<16x1xf32>
    %cst_45 = arith.constant 9.99999996E-13 : f32
    %143 = vector.broadcast %cst_45 : f32 to vector<16x1xf32>
    %144 = arith.addf %142, %143 : vector<16x1xf32>
    %145 = math.rsqrt %144 : vector<16x1xf32>
    %146 = vector.broadcast %145 : vector<16x1xf32> to vector<16x128xf32>
    %147 = arith.mulf %137, %146 : vector<16x128xf32>
    %148 = vector.broadcast %11 : vector<1x128xf32> to vector<16x128xf32>
    %149 = arith.mulf %147, %148 : vector<16x128xf32>
    %150 = vector.broadcast %12 : vector<1x128xf32> to vector<16x128xf32>
    %151 = arith.addf %149, %150 : vector<16x128xf32>
    %152 = vector.shape_cast %151 : vector<16x128xf32> to vector<1x1x16x128xf32>
    %c0_46 = arith.constant 0 : index
    %c0_47 = arith.constant 0 : index
    %c0_48 = arith.constant 0 : index
    %c0_49 = arith.constant 0 : index
    %153 = vector.load %arg8[%c0_46, %c0_47, %c0_48, %c0_49] : memref<1x1x16x128xf32, #tpu.memory_space<vmem>>, vector<1x1x16x128xf32>
    tpu.vector_store %arg8[%c0_46, %c0_47, %c0_48, %c0_49], %152 {strides = array<i32>} : memref<1x1x16x128xf32, #tpu.memory_space<vmem>>, vector<1x1x16x128xf32>,
    return
  }
  func.func @transform_0(%arg0: i32, %arg1: i32) -> (i32, i32, i32, i32) {
    %c0_i32 = arith.constant 0 : i32
    %c0_i32_0 = arith.constant 0 : i32
    %c0_i32_1 = arith.constant 0 : i32
    %c0_i32_2 = arith.constant 0 : i32
    return %c0_i32, %arg0, %c0_i32_0, %c0_i32_1 : i32, i32, i32, i32
  }
  func.func @transform_1(%arg0: i32, %arg1: i32) -> (i32, i32, i32, i32) {
    %c0_i32 = arith.constant 0 : i32
    %c0_i32_0 = arith.constant 0 : i32
    %c0_i32_1 = arith.constant 0 : i32
    %c0_i32_2 = arith.constant 0 : i32
    return %c0_i32, %arg1, %c0_i32_0, %c0_i32_1 : i32, i32, i32, i32
  }
  func.func @transform_2(%arg0: i32, %arg1: i32) -> (i32, i32, i32, i32) {
    %c0_i32 = arith.constant 0 : i32
    %c0_i32_0 = arith.constant 0 : i32
    %c0_i32_1 = arith.constant 0 : i32
    %c0_i32_2 = arith.constant 0 : i32
    return %c0_i32, %arg1, %c0_i32_0, %c0_i32_1 : i32, i32, i32, i32
  }
  func.func @transform_3(%arg0: i32, %arg1: i32) -> (i32, i32, i32, i32) {
    %c0_i32 = arith.constant 0 : i32
    %c0_i32_0 = arith.constant 0 : i32
    %c0_i32_1 = arith.constant 0 : i32
    %c0_i32_2 = arith.constant 0 : i32
    return %c0_i32, %arg1, %c0_i32_0, %c0_i32_1 : i32, i32, i32, i32
  }
  func.func @transform_4(%arg0: i32, %arg1: i32) -> (i32, i32, i32, i32) {
    %c0_i32 = arith.constant 0 : i32
    %c0_i32_0 = arith.constant 0 : i32
    %c0_i32_1 = arith.constant 0 : i32
    %c0_i32_2 = arith.constant 0 : i32
    return %c0_i32, %arg1, %c0_i32_0, %c0_i32_1 : i32, i32, i32, i32
  }
  func.func @transform_5(%arg0: i32, %arg1: i32) -> (i32, i32, i32, i32) {
    %c0_i32 = arith.constant 0 : i32
    %c0_i32_0 = arith.constant 0 : i32
    %c0_i32_1 = arith.constant 0 : i32
    %c0_i32_2 = arith.constant 0 : i32
    return %c0_i32, %arg1, %c0_i32_0, %c0_i32_1 : i32, i32, i32, i32
  }
  func.func @transform_6(%arg0: i32, %arg1: i32) -> (i32, i32, i32, i32) {
    %c0_i32 = arith.constant 0 : i32
    %c0_i32_0 = arith.constant 0 : i32
    %c0_i32_1 = arith.constant 0 : i32
    %c0_i32_2 = arith.constant 0 : i32
    return %c0_i32, %arg0, %c0_i32_0, %c0_i32_1 : i32, i32, i32, i32
  }
}

module attributes {stable_mosaic.version = 11 : i64} {
  func.func @_bert_layer_kernel(%arg0: i32, %arg1: i32, %arg2: memref<2x1x8x128xf32, #tpu.memory_space<vmem>>, %arg3: memref<1x1x128x384xbf16, #tpu.memory_space<vmem>>, %arg4: memref<1x1x128x128xbf16, #tpu.memory_space<vmem>>, %arg5: memref<1x1x128x256xbf16, #tpu.memory_space<vmem>>, %arg6: memref<1x1x256x128xbf16, #tpu.memory_space<vmem>>, %arg7: memref<1x1x8x384xf32, #tpu.memory_space<vmem>>, %arg8: memref<2x1x8x128xf32, #tpu.memory_space<vmem>>) attributes {dimension_semantics = [#tpu.dimension_semantics<parallel>, #tpu.dimension_semantics<arbitrary>], iteration_bounds = array<i64: 2, 2>, scalar_prefetch = 0 : i64, scratch_operands = 0 : i64, tpu.core_type = #tpu.core_type<tc>, window_params = [{transform_indices = @transform_0, window_bounds = array<i64: 2, 1, 8, 128>}, {transform_indices = @transform_1, window_bounds = array<i64: 1, 1, 128, 384>}, {transform_indices = @transform_2, window_bounds = array<i64: 1, 1, 128, 128>}, {transform_indices = @transform_3, window_bounds = array<i64: 1, 1, 128, 256>}, {transform_indices = @transform_4, window_bounds = array<i64: 1, 1, 256, 128>}, {transform_indices = @transform_5, window_bounds = array<i64: 1, 1, 8, 384>}, {transform_indices = @transform_6, window_bounds = array<i64: 2, 1, 8, 128>}]} {
    %c0_i32 = arith.constant 0 : i32
    %0 = arith.cmpi eq, %arg1, %c0_i32 : i32
    %1 = arith.extui %0 : i1 to i32
    %c0_i32_0 = arith.constant 0 : i32
    %2 = arith.cmpi ne, %1, %c0_i32_0 : i32
    scf.if %2 {
      %c0_50 = arith.constant 0 : index
      %c0_51 = arith.constant 0 : index
      %c0_52 = arith.constant 0 : index
      %c0_53 = arith.constant 0 : index
      %154 = vector.load %arg2[%c0_50, %c0_51, %c0_52, %c0_53] : memref<2x1x8x128xf32, #tpu.memory_space<vmem>>, vector<2x1x8x128xf32>
      %c0_54 = arith.constant 0 : index
      %c0_55 = arith.constant 0 : index
      %c0_56 = arith.constant 0 : index
      %c0_57 = arith.constant 0 : index
      %155 = vector.load %arg8[%c0_54, %c0_55, %c0_56, %c0_57] : memref<2x1x8x128xf32, #tpu.memory_space<vmem>>, vector<2x1x8x128xf32>
      tpu.vector_store %arg8[%c0_54, %c0_55, %c0_56, %c0_57], %154 {strides = array<i32>} : memref<2x1x8x128xf32, #tpu.memory_space<vmem>>, vector<2x1x8x128xf32>,
    } else {
    }
    %c0 = arith.constant 0 : index
    %c0_1 = arith.constant 0 : index
    %c0_2 = arith.constant 0 : index
    %c0_3 = arith.constant 0 : index
    %3 = vector.load %arg7[%c0, %c0_1, %c0_2, %c0_3] : memref<1x1x8x384xf32, #tpu.memory_space<vmem>>, vector<1x1x8x384xf32>
    %4 = vector.shape_cast %3 : vector<1x1x8x384xf32> to vector<8x384xf32>
    %5 = vector.extract_strided_slice %4 {offsets = [0, 0], sizes = [1, 384], strides = [1, 1]} : vector<8x384xf32> to vector<1x384xf32>
    %6 = vector.extract_strided_slice %4 {offsets = [1, 0], sizes = [1, 128], strides = [1, 1]} : vector<8x384xf32> to vector<1x128xf32>
    %7 = vector.extract_strided_slice %4 {offsets = [2, 0], sizes = [1, 128], strides = [1, 1]} : vector<8x384xf32> to vector<1x128xf32>
    %8 = vector.extract_strided_slice %4 {offsets = [3, 0], sizes = [1, 128], strides = [1, 1]} : vector<8x384xf32> to vector<1x128xf32>
    %9 = vector.extract_strided_slice %4 {offsets = [4, 0], sizes = [1, 256], strides = [1, 1]} : vector<8x384xf32> to vector<1x256xf32>
    %10 = vector.extract_strided_slice %4 {offsets = [5, 0], sizes = [1, 128], strides = [1, 1]} : vector<8x384xf32> to vector<1x128xf32>
    %11 = vector.extract_strided_slice %4 {offsets = [6, 0], sizes = [1, 128], strides = [1, 1]} : vector<8x384xf32> to vector<1x128xf32>
    %12 = vector.extract_strided_slice %4 {offsets = [7, 0], sizes = [1, 128], strides = [1, 1]} : vector<8x384xf32> to vector<1x128xf32>
    %c0_4 = arith.constant 0 : index
    %c0_5 = arith.constant 0 : index
    %c0_6 = arith.constant 0 : index
    %c0_7 = arith.constant 0 : index
    %13 = vector.load %arg3[%c0_4, %c0_5, %c0_6, %c0_7] : memref<1x1x128x384xbf16, #tpu.memory_space<vmem>>, vector<1x1x128x384xbf16>
    %14 = vector.shape_cast %13 : vector<1x1x128x384xbf16> to vector<128x384xbf16>
    %c0_8 = arith.constant 0 : index
    %c0_9 = arith.constant 0 : index
    %c0_10 = arith.constant 0 : index
    %c0_11 = arith.constant 0 : index
    %15 = vector.load %arg4[%c0_8, %c0_9, %c0_10, %c0_11] : memref<1x1x128x128xbf16, #tpu.memory_space<vmem>>, vector<1x1x128x128xbf16>
    %16 = vector.shape_cast %15 : vector<1x1x128x128xbf16> to vector<128x128xbf16>
    %c0_12 = arith.constant 0 : index
    %c0_13 = arith.constant 0 : index
    %c0_14 = arith.constant 0 : index
    %c0_15 = arith.constant 0 : index
    %17 = vector.load %arg5[%c0_12, %c0_13, %c0_14, %c0_15] : memref<1x1x128x256xbf16, #tpu.memory_space<vmem>>, vector<1x1x128x256xbf16>
    %18 = vector.shape_cast %17 : vector<1x1x128x256xbf16> to vector<128x256xbf16>
    %c0_16 = arith.constant 0 : index
    %c0_17 = arith.constant 0 : index
    %c0_18 = arith.constant 0 : index
    %c0_19 = arith.constant 0 : index
    %19 = vector.load %arg6[%c0_16, %c0_17, %c0_18, %c0_19] : memref<1x1x256x128xbf16, #tpu.memory_space<vmem>>, vector<1x1x256x128xbf16>
    %20 = vector.shape_cast %19 : vector<1x1x256x128xbf16> to vector<256x128xbf16>
    %c0_20 = arith.constant 0 : index
    %c0_21 = arith.constant 0 : index
    %c0_22 = arith.constant 0 : index
    %c0_23 = arith.constant 0 : index
    %21 = vector.load %arg8[%c0_20, %c0_21, %c0_22, %c0_23] : memref<2x1x8x128xf32, #tpu.memory_space<vmem>>, vector<2x1x8x128xf32>
    %22 = vector.shape_cast %21 : vector<2x1x8x128xf32> to vector<16x128xf32>
    %23 = arith.truncf %22 : vector<16x128xf32> to vector<16x128xbf16>
    %cst = arith.constant dense<0.000000e+00> : vector<16x384xf32>
    %24 = tpu.matmul %23, %14, %cst {dimension_numbers = #tpu.dot_dimension_numbers<[1], [0], [0], [1], [0, 0, 1, 1], [], []>} : vector<16x128xbf16>, vector<128x384xbf16>, vector<16x384xf32> -> vector<16x384xf32>
    %25 = vector.broadcast %5 : vector<1x384xf32> to vector<16x384xf32>
    %26 = arith.addf %24, %25 : vector<16x384xf32>
    %27 = vector.shape_cast %26 : vector<16x384xf32> to vector<2x8x384xf32>
    %28 = vector.extract_strided_slice %27 {offsets = [0, 0, 0], sizes = [2, 8, 128], strides = [1, 1, 1]} : vector<2x8x384xf32> to vector<2x8x128xf32>
    %29 = vector.shape_cast %28 : vector<2x8x128xf32> to vector<2x8x2x64xf32>
    %30 = vector.extract_strided_slice %27 {offsets = [0, 0, 128], sizes = [2, 8, 128], strides = [1, 1, 1]} : vector<2x8x384xf32> to vector<2x8x128xf32>
    %31 = vector.shape_cast %30 : vector<2x8x128xf32> to vector<2x8x2x64xf32>
    %32 = vector.extract_strided_slice %27 {offsets = [0, 0, 256], sizes = [2, 8, 128], strides = [1, 1, 1]} : vector<2x8x384xf32> to vector<2x8x128xf32>
    %33 = vector.shape_cast %32 : vector<2x8x128xf32> to vector<2x8x2x64xf32>
    %34 = vector.extract_strided_slice %29 {offsets = [0, 0, 0, 0], sizes = [2, 8, 1, 64], strides = [1, 1, 1, 1]} : vector<2x8x2x64xf32> to vector<2x8x1x64xf32>
    %35 = vector.shape_cast %34 : vector<2x8x1x64xf32> to vector<2x8x64xf32>
    %36 = vector.extract_strided_slice %29 {offsets = [0, 0, 1, 0], sizes = [2, 8, 1, 64], strides = [1, 1, 1, 1]} : vector<2x8x2x64xf32> to vector<2x8x1x64xf32>
    %37 = vector.shape_cast %36 : vector<2x8x1x64xf32> to vector<2x8x64xf32>
    %38 = vector.shape_cast %35 : vector<2x8x64xf32> to vector<2x1x8x64xf32>
    %39 = vector.shape_cast %37 : vector<2x8x64xf32> to vector<2x1x8x64xf32>
    %40 = tpu.concatenate %38, %39 in 1 : vector<2x1x8x64xf32>, vector<2x1x8x64xf32> -> vector<2x2x8x64xf32>
    %41 = vector.shape_cast %40 : vector<2x2x8x64xf32> to vector<4x8x64xf32>
    %42 = arith.truncf %41 : vector<4x8x64xf32> to vector<4x8x64xbf16>
    %43 = vector.extract_strided_slice %31 {offsets = [0, 0, 0, 0], sizes = [2, 8, 1, 64], strides = [1, 1, 1, 1]} : vector<2x8x2x64xf32> to vector<2x8x1x64xf32>
    %44 = vector.shape_cast %43 : vector<2x8x1x64xf32> to vector<2x8x64xf32>
    %45 = vector.extract_strided_slice %31 {offsets = [0, 0, 1, 0], sizes = [2, 8, 1, 64], strides = [1, 1, 1, 1]} : vector<2x8x2x64xf32> to vector<2x8x1x64xf32>
    %46 = vector.shape_cast %45 : vector<2x8x1x64xf32> to vector<2x8x64xf32>
    %47 = vector.shape_cast %44 : vector<2x8x64xf32> to vector<2x1x8x64xf32>
    %48 = vector.shape_cast %46 : vector<2x8x64xf32> to vector<2x1x8x64xf32>
    %49 = tpu.concatenate %47, %48 in 1 : vector<2x1x8x64xf32>, vector<2x1x8x64xf32> -> vector<2x2x8x64xf32>
    %50 = vector.shape_cast %49 : vector<2x2x8x64xf32> to vector<4x8x64xf32>
    %51 = arith.truncf %50 : vector<4x8x64xf32> to vector<4x8x64xbf16>
    %52 = vector.extract_strided_slice %33 {offsets = [0, 0, 0, 0], sizes = [2, 8, 1, 64], strides = [1, 1, 1, 1]} : vector<2x8x2x64xf32> to vector<2x8x1x64xf32>
    %53 = vector.shape_cast %52 : vector<2x8x1x64xf32> to vector<2x8x64xf32>
    %54 = vector.extract_strided_slice %33 {offsets = [0, 0, 1, 0], sizes = [2, 8, 1, 64], strides = [1, 1, 1, 1]} : vector<2x8x2x64xf32> to vector<2x8x1x64xf32>
    %55 = vector.shape_cast %54 : vector<2x8x1x64xf32> to vector<2x8x64xf32>
    %56 = vector.shape_cast %53 : vector<2x8x64xf32> to vector<2x1x8x64xf32>
    %57 = vector.shape_cast %55 : vector<2x8x64xf32> to vector<2x1x8x64xf32>
    %58 = tpu.concatenate %56, %57 in 1 : vector<2x1x8x64xf32>, vector<2x1x8x64xf32> -> vector<2x2x8x64xf32>
    %59 = vector.shape_cast %58 : vector<2x2x8x64xf32> to vector<4x8x64xf32>
    %60 = arith.truncf %59 : vector<4x8x64xf32> to vector<4x8x64xbf16>
    "tpu.trace_start"() <{level = 10 : i32, message = "bqd,bkd->bqk"}> : () -> ()
    %cst_24 = arith.constant dense<0.000000e+00> : vector<4x8x8xf32>
    %61 = tpu.matmul %42, %51, %cst_24 {dimension_numbers = #tpu.dot_dimension_numbers<[2], [2], [1], [1], [0, 0, 0, 1, 1, 1], [0], [0]>} : vector<4x8x64xbf16>, vector<4x8x64xbf16>, vector<4x8x8xf32> -> vector<4x8x8xf32>
    "tpu.trace_stop"() : () -> ()
    %cst_25 = arith.constant 1.250000e-01 : f32
    %62 = vector.broadcast %cst_25 : f32 to vector<4x8x8xf32>
    %63 = arith.mulf %61, %62 : vector<4x8x8xf32>
    %cst_26 = arith.constant dense<0xFF800000> : vector<4x8xf32>
    %64 = vector.multi_reduction <maximumf>, %63, %cst_26 [2] : vector<4x8x8xf32> to vector<4x8xf32>
    %65 = vector.shape_cast %64 : vector<4x8xf32> to vector<4x8x1xf32>
    %66 = vector.broadcast %65 : vector<4x8x1xf32> to vector<4x8x8xf32>
    %67 = arith.subf %63, %66 : vector<4x8x8xf32>
    %68 = math.exp %67 : vector<4x8x8xf32>
    %cst_27 = arith.constant dense<0.000000e+00> : vector<4x8xf32>
    %69 = vector.multi_reduction <add>, %68, %cst_27 [2] : vector<4x8x8xf32> to vector<4x8xf32>
    %70 = vector.shape_cast %69 : vector<4x8xf32> to vector<4x8x1xf32>
    %71 = tpu.reciprocal %70 {approx = true} : vector<4x8x1xf32> -> vector<4x8x1xf32>
    %72 = vector.broadcast %71 : vector<4x8x1xf32> to vector<4x8x8xf32>
    %73 = arith.mulf %68, %72 : vector<4x8x8xf32>
    %74 = arith.truncf %73 : vector<4x8x8xf32> to vector<4x8x8xbf16>
    "tpu.trace_start"() <{level = 10 : i32, message = "bqk,bkd->bqd"}> : () -> ()
    %cst_28 = arith.constant dense<0.000000e+00> : vector<4x8x64xf32>
    %75 = tpu.matmul %74, %60, %cst_28 {dimension_numbers = #tpu.dot_dimension_numbers<[2], [1], [1], [2], [0, 0, 0, 1, 1, 2], [0], [0]>} : vector<4x8x8xbf16>, vector<4x8x64xbf16>, vector<4x8x64xf32> -> vector<4x8x64xf32>
    "tpu.trace_stop"() : () -> ()
    %76 = vector.shape_cast %75 : vector<4x8x64xf32> to vector<2x2x8x64xf32>
    %77 = vector.extract_strided_slice %76 {offsets = [0, 0, 0, 0], sizes = [2, 1, 8, 64], strides = [1, 1, 1, 1]} : vector<2x2x8x64xf32> to vector<2x1x8x64xf32>
    %78 = vector.shape_cast %77 : vector<2x1x8x64xf32> to vector<2x8x64xf32>
    %79 = vector.extract_strided_slice %76 {offsets = [0, 1, 0, 0], sizes = [2, 1, 8, 64], strides = [1, 1, 1, 1]} : vector<2x2x8x64xf32> to vector<2x1x8x64xf32>
    %80 = vector.shape_cast %79 : vector<2x1x8x64xf32> to vector<2x8x64xf32>
    %81 = vector.shape_cast %78 : vector<2x8x64xf32> to vector<2x8x1x64xf32>
    %82 = vector.shape_cast %80 : vector<2x8x64xf32> to vector<2x8x1x64xf32>
    %83 = tpu.concatenate %81, %82 in 2 : vector<2x8x1x64xf32>, vector<2x8x1x64xf32> -> vector<2x8x2x64xf32>
    %84 = vector.shape_cast %83 : vector<2x8x2x64xf32> to vector<16x128xf32>
    %85 = arith.truncf %84 : vector<16x128xf32> to vector<16x128xbf16>
    %cst_29 = arith.constant dense<0.000000e+00> : vector<16x128xf32>
    %86 = tpu.matmul %85, %16, %cst_29 {dimension_numbers = #tpu.dot_dimension_numbers<[1], [0], [0], [1], [0, 0, 1, 1], [], []>} : vector<16x128xbf16>, vector<128x128xbf16>, vector<16x128xf32> -> vector<16x128xf32>
    %87 = arith.addf %22, %86 : vector<16x128xf32>
    %88 = vector.broadcast %6 : vector<1x128xf32> to vector<16x128xf32>
    %89 = arith.addf %87, %88 : vector<16x128xf32>
    %cst_30 = arith.constant dense<0.000000e+00> : vector<16xf32>
    %90 = vector.multi_reduction <add>, %89, %cst_30 [1] : vector<16x128xf32> to vector<16xf32>
    %91 = vector.shape_cast %90 : vector<16xf32> to vector<16x1xf32>
    %cst_31 = arith.constant 1.280000e+02 : f32
    %92 = vector.broadcast %cst_31 : f32 to vector<16x1xf32>
    %93 = arith.divf %91, %92 : vector<16x1xf32>
    %94 = vector.broadcast %93 : vector<16x1xf32> to vector<16x128xf32>
    %95 = arith.subf %89, %94 : vector<16x128xf32>
    %96 = arith.mulf %95, %95 : vector<16x128xf32>
    %cst_32 = arith.constant dense<0.000000e+00> : vector<16xf32>
    %97 = vector.multi_reduction <add>, %96, %cst_32 [1] : vector<16x128xf32> to vector<16xf32>
    %98 = vector.shape_cast %97 : vector<16xf32> to vector<16x1xf32>
    %cst_33 = arith.constant 1.280000e+02 : f32
    %99 = vector.broadcast %cst_33 : f32 to vector<16x1xf32>
    %100 = arith.divf %98, %99 : vector<16x1xf32>
    %cst_34 = arith.constant 9.99999996E-13 : f32
    %101 = vector.broadcast %cst_34 : f32 to vector<16x1xf32>
    %102 = arith.addf %100, %101 : vector<16x1xf32>
    %103 = math.rsqrt %102 : vector<16x1xf32>
    %104 = vector.broadcast %103 : vector<16x1xf32> to vector<16x128xf32>
    %105 = arith.mulf %95, %104 : vector<16x128xf32>
    %106 = vector.broadcast %7 : vector<1x128xf32> to vector<16x128xf32>
    %107 = arith.mulf %105, %106 : vector<16x128xf32>
    %108 = vector.broadcast %8 : vector<1x128xf32> to vector<16x128xf32>
    %109 = arith.addf %107, %108 : vector<16x128xf32>
    %110 = arith.truncf %109 : vector<16x128xf32> to vector<16x128xbf16>
    %cst_35 = arith.constant dense<0.000000e+00> : vector<16x256xf32>
    %111 = tpu.matmul %110, %18, %cst_35 {dimension_numbers = #tpu.dot_dimension_numbers<[1], [0], [0], [1], [0, 0, 1, 1], [], []>} : vector<16x128xbf16>, vector<128x256xbf16>, vector<16x256xf32> -> vector<16x256xf32>
    %112 = vector.broadcast %9 : vector<1x256xf32> to vector<16x256xf32>
    %113 = arith.addf %111, %112 : vector<16x256xf32>
    %cst_36 = arith.constant 5.000000e-01 : f32
    %114 = vector.broadcast %cst_36 : f32 to vector<16x256xf32>
    %115 = arith.mulf %114, %113 : vector<16x256xf32>
    %cst_37 = arith.constant 4.471500e-02 : f32
    %116 = vector.broadcast %cst_37 : f32 to vector<16x256xf32>
    %117 = arith.mulf %116, %113 : vector<16x256xf32>
    %118 = arith.mulf %117, %113 : vector<16x256xf32>
    %119 = arith.mulf %118, %113 : vector<16x256xf32>
    %120 = arith.addf %113, %119 : vector<16x256xf32>
    %cst_38 = arith.constant 0.797884583 : f32
    %121 = vector.broadcast %cst_38 : f32 to vector<16x256xf32>
    %122 = arith.mulf %121, %120 : vector<16x256xf32>
    %123 = math.tanh %122 : vector<16x256xf32>
    %cst_39 = arith.constant 1.000000e+00 : f32
    %124 = vector.broadcast %cst_39 : f32 to vector<16x256xf32>
    %125 = arith.addf %124, %123 : vector<16x256xf32>
    %126 = arith.mulf %115, %125 : vector<16x256xf32>
    %127 = arith.truncf %126 : vector<16x256xf32> to vector<16x256xbf16>
    %cst_40 = arith.constant dense<0.000000e+00> : vector<16x128xf32>
    %128 = tpu.matmul %127, %20, %cst_40 {dimension_numbers = #tpu.dot_dimension_numbers<[1], [0], [0], [1], [0, 0, 1, 1], [], []>} : vector<16x256xbf16>, vector<256x128xbf16>, vector<16x128xf32> -> vector<16x128xf32>
    %129 = vector.broadcast %10 : vector<1x128xf32> to vector<16x128xf32>
    %130 = arith.addf %128, %129 : vector<16x128xf32>
    %131 = arith.addf %109, %130 : vector<16x128xf32>
    %cst_41 = arith.constant dense<0.000000e+00> : vector<16xf32>
    %132 = vector.multi_reduction <add>, %131, %cst_41 [1] : vector<16x128xf32> to vector<16xf32>
    %133 = vector.shape_cast %132 : vector<16xf32> to vector<16x1xf32>
    %cst_42 = arith.constant 1.280000e+02 : f32
    %134 = vector.broadcast %cst_42 : f32 to vector<16x1xf32>
    %135 = arith.divf %133, %134 : vector<16x1xf32>
    %136 = vector.broadcast %135 : vector<16x1xf32> to vector<16x128xf32>
    %137 = arith.subf %131, %136 : vector<16x128xf32>
    %138 = arith.mulf %137, %137 : vector<16x128xf32>
    %cst_43 = arith.constant dense<0.000000e+00> : vector<16xf32>
    %139 = vector.multi_reduction <add>, %138, %cst_43 [1] : vector<16x128xf32> to vector<16xf32>
    %140 = vector.shape_cast %139 : vector<16xf32> to vector<16x1xf32>
    %cst_44 = arith.constant 1.280000e+02 : f32
    %141 = vector.broadcast %cst_44 : f32 to vector<16x1xf32>
    %142 = arith.divf %140, %141 : vector<16x1xf32>
    %cst_45 = arith.constant 9.99999996E-13 : f32
    %143 = vector.broadcast %cst_45 : f32 to vector<16x1xf32>
    %144 = arith.addf %142, %143 : vector<16x1xf32>
    %145 = math.rsqrt %144 : vector<16x1xf32>
    %146 = vector.broadcast %145 : vector<16x1xf32> to vector<16x128xf32>
    %147 = arith.mulf %137, %146 : vector<16x128xf32>
    %148 = vector.broadcast %11 : vector<1x128xf32> to vector<16x128xf32>
    %149 = arith.mulf %147, %148 : vector<16x128xf32>
    %150 = vector.broadcast %12 : vector<1x128xf32> to vector<16x128xf32>
    %151 = arith.addf %149, %150 : vector<16x128xf32>
    %152 = vector.shape_cast %151 : vector<16x128xf32> to vector<2x1x8x128xf32>
    %c0_46 = arith.constant 0 : index
    %c0_47 = arith.constant 0 : index
    %c0_48 = arith.constant 0 : index
    %c0_49 = arith.constant 0 : index
    %153 = vector.load %arg8[%c0_46, %c0_47, %c0_48, %c0_49] : memref<2x1x8x128xf32, #tpu.memory_space<vmem>>, vector<2x1x8x128xf32>
    tpu.vector_store %arg8[%c0_46, %c0_47, %c0_48, %c0_49], %152 {strides = array<i32>} : memref<2x1x8x128xf32, #tpu.memory_space<vmem>>, vector<2x1x8x128xf32>,
    return
  }
  func.func @transform_0(%arg0: i32, %arg1: i32) -> (i32, i32, i32, i32) {
    %c0_i32 = arith.constant 0 : i32
    %c0_i32_0 = arith.constant 0 : i32
    %c0_i32_1 = arith.constant 0 : i32
    %c0_i32_2 = arith.constant 0 : i32
    return %c0_i32, %arg0, %c0_i32_0, %c0_i32_1 : i32, i32, i32, i32
  }
  func.func @transform_1(%arg0: i32, %arg1: i32) -> (i32, i32, i32, i32) {
    %c0_i32 = arith.constant 0 : i32
    %c0_i32_0 = arith.constant 0 : i32
    %c0_i32_1 = arith.constant 0 : i32
    return %arg0, %arg1, %c0_i32, %c0_i32_0 : i32, i32, i32, i32
  }
  func.func @transform_2(%arg0: i32, %arg1: i32) -> (i32, i32, i32, i32) {
    %c0_i32 = arith.constant 0 : i32
    %c0_i32_0 = arith.constant 0 : i32
    %c0_i32_1 = arith.constant 0 : i32
    return %arg0, %arg1, %c0_i32, %c0_i32_0 : i32, i32, i32, i32
  }
  func.func @transform_3(%arg0: i32, %arg1: i32) -> (i32, i32, i32, i32) {
    %c0_i32 = arith.constant 0 : i32
    %c0_i32_0 = arith.constant 0 : i32
    %c0_i32_1 = arith.constant 0 : i32
    return %arg0, %arg1, %c0_i32, %c0_i32_0 : i32, i32, i32, i32
  }
  func.func @transform_4(%arg0: i32, %arg1: i32) -> (i32, i32, i32, i32) {
    %c0_i32 = arith.constant 0 : i32
    %c0_i32_0 = arith.constant 0 : i32
    %c0_i32_1 = arith.constant 0 : i32
    return %arg0, %arg1, %c0_i32, %c0_i32_0 : i32, i32, i32, i32
  }
  func.func @transform_5(%arg0: i32, %arg1: i32) -> (i32, i32, i32, i32) {
    %c0_i32 = arith.constant 0 : i32
    %c0_i32_0 = arith.constant 0 : i32
    %c0_i32_1 = arith.constant 0 : i32
    return %arg0, %arg1, %c0_i32, %c0_i32_0 : i32, i32, i32, i32
  }
  func.func @transform_6(%arg0: i32, %arg1: i32) -> (i32, i32, i32, i32) {
    %c0_i32 = arith.constant 0 : i32
    %c0_i32_0 = arith.constant 0 : i32
    %c0_i32_1 = arith.constant 0 : i32
    %c0_i32_2 = arith.constant 0 : i32
    return %c0_i32, %arg0, %c0_i32_0, %c0_i32_1 : i32, i32, i32, i32
  }
}

module attributes {stable_mosaic.version = 11 : i64} {
  func.func @_pool_classify_kernel(%arg0: memref<2x16x128xf32, #tpu.memory_space<vmem>>, %arg1: memref<256x128xbf16, #tpu.memory_space<vmem>>, %arg2: memref<128x128xbf16, #tpu.memory_space<vmem>>, %arg3: memref<8x128xf32, #tpu.memory_space<vmem>>, %arg4: memref<2x128xf32, #tpu.memory_space<vmem>>) attributes {dimension_semantics = [], scalar_prefetch = 0 : i64, scratch_operands = 0 : i64, tpu.core_type = #tpu.core_type<tc>} {
    %c0 = arith.constant 0 : index
    %c0_0 = arith.constant 0 : index
    %c0_1 = arith.constant 0 : index
    %0 = vector.load %arg0[%c0, %c0_0, %c0_1] : memref<2x16x128xf32, #tpu.memory_space<vmem>>, vector<2x16x128xf32>
    %1 = vector.extract_strided_slice %0 {offsets = [0, 0, 0], sizes = [2, 1, 128], strides = [1, 1, 1]} : vector<2x16x128xf32> to vector<2x1x128xf32>
    %2 = vector.shape_cast %1 : vector<2x1x128xf32> to vector<2x128xf32>
    %cst = arith.constant dense<0.000000e+00> : vector<2x128xf32>
    %3 = vector.multi_reduction <add>, %0, %cst [1] : vector<2x16x128xf32> to vector<2x128xf32>
    %cst_2 = arith.constant 6.250000e-02 : f32
    %4 = vector.broadcast %cst_2 : f32 to vector<2x128xf32>
    %5 = arith.mulf %3, %4 : vector<2x128xf32>
    %6 = tpu.concatenate %2, %5 in 1 : vector<2x128xf32>, vector<2x128xf32> -> vector<2x256xf32>
    %c0_3 = arith.constant 0 : index
    %c0_4 = arith.constant 0 : index
    %7 = vector.load %arg3[%c0_3, %c0_4] : memref<8x128xf32, #tpu.memory_space<vmem>>, vector<8x128xf32>
    %8 = vector.extract_strided_slice %7 {offsets = [0, 0], sizes = [1, 128], strides = [1, 1]} : vector<8x128xf32> to vector<1x128xf32>
    %9 = vector.extract_strided_slice %7 {offsets = [1, 0], sizes = [1, 128], strides = [1, 1]} : vector<8x128xf32> to vector<1x128xf32>
    %10 = vector.extract_strided_slice %7 {offsets = [2, 0], sizes = [1, 128], strides = [1, 1]} : vector<8x128xf32> to vector<1x128xf32>
    %11 = arith.truncf %6 : vector<2x256xf32> to vector<2x256xbf16>
    %c0_5 = arith.constant 0 : index
    %c0_6 = arith.constant 0 : index
    %12 = vector.load %arg1[%c0_5, %c0_6] : memref<256x128xbf16, #tpu.memory_space<vmem>>, vector<256x128xbf16>
    %cst_7 = arith.constant dense<0.000000e+00> : vector<2x128xf32>
    %13 = tpu.matmul %11, %12, %cst_7 {dimension_numbers = #tpu.dot_dimension_numbers<[1], [0], [0], [1], [0, 0, 1, 1], [], []>} : vector<2x256xbf16>, vector<256x128xbf16>, vector<2x128xf32> -> vector<2x128xf32>
    %cst_8 = arith.constant dense<0.000000e+00> : vector<128xf32>
    %14 = vector.multi_reduction <add>, %13, %cst_8 [0] : vector<2x128xf32> to vector<128xf32>
    %15 = vector.shape_cast %14 : vector<128xf32> to vector<1x128xf32>
    %cst_9 = arith.constant 5.000000e-01 : f32
    %16 = vector.broadcast %cst_9 : f32 to vector<1x128xf32>
    %17 = arith.mulf %15, %16 : vector<1x128xf32>
    %18 = vector.broadcast %17 : vector<1x128xf32> to vector<2x128xf32>
    %19 = arith.subf %13, %18 : vector<2x128xf32>
    %20 = arith.mulf %19, %19 : vector<2x128xf32>
    %cst_10 = arith.constant dense<0.000000e+00> : vector<128xf32>
    %21 = vector.multi_reduction <add>, %20, %cst_10 [0] : vector<2x128xf32> to vector<128xf32>
    %22 = vector.shape_cast %21 : vector<128xf32> to vector<1x128xf32>
    %cst_11 = arith.constant 5.000000e-01 : f32
    %23 = vector.broadcast %cst_11 : f32 to vector<1x128xf32>
    %24 = arith.mulf %22, %23 : vector<1x128xf32>
    %cst_12 = arith.constant 9.99999974E-6 : f32
    %25 = vector.broadcast %cst_12 : f32 to vector<1x128xf32>
    %26 = arith.addf %24, %25 : vector<1x128xf32>
    %27 = math.rsqrt %26 : vector<1x128xf32>
    %28 = arith.mulf %8, %27 : vector<1x128xf32>
    %29 = vector.broadcast %28 : vector<1x128xf32> to vector<2x128xf32>
    %30 = arith.mulf %19, %29 : vector<2x128xf32>
    %31 = vector.broadcast %9 : vector<1x128xf32> to vector<2x128xf32>
    %32 = arith.addf %30, %31 : vector<2x128xf32>
    %cst_13 = arith.constant 0.000000e+00 : f32
    %33 = vector.broadcast %cst_13 : f32 to vector<2x128xf32>
    %34 = arith.maximumf %32, %33 : vector<2x128xf32>
    %35 = arith.truncf %34 : vector<2x128xf32> to vector<2x128xbf16>
    %c0_14 = arith.constant 0 : index
    %c0_15 = arith.constant 0 : index
    %36 = vector.load %arg2[%c0_14, %c0_15] : memref<128x128xbf16, #tpu.memory_space<vmem>>, vector<128x128xbf16>
    %cst_16 = arith.constant dense<0.000000e+00> : vector<2x128xf32>
    %37 = tpu.matmul %35, %36, %cst_16 {dimension_numbers = #tpu.dot_dimension_numbers<[1], [0], [0], [1], [0, 0, 1, 1], [], []>} : vector<2x128xbf16>, vector<128x128xbf16>, vector<2x128xf32> -> vector<2x128xf32>
    %38 = vector.broadcast %10 : vector<1x128xf32> to vector<2x128xf32>
    %39 = arith.addf %37, %38 : vector<2x128xf32>
    %40 = tpu.iota {dimensions = array<i32: 1>} : vector<2x128xi32>
    %c2_i32 = arith.constant 2 : i32
    %41 = vector.broadcast %c2_i32 : i32 to vector<2x128xi32>
    %42 = arith.cmpi slt, %40, %41 : vector<2x128xi32>
    %cst_17 = arith.constant -1.000000e+30 : f32
    %43 = vector.broadcast %cst_17 : f32 to vector<2x128xf32>
    %44 = arith.select %42, %39, %43 : vector<2x128xi1>, vector<2x128xf32>
    %cst_18 = arith.constant dense<0xFF800000> : vector<2xf32>
    %45 = vector.multi_reduction <maximumf>, %44, %cst_18 [1] : vector<2x128xf32> to vector<2xf32>
    %46 = vector.shape_cast %45 : vector<2xf32> to vector<2x1xf32>
    %47 = vector.broadcast %46 : vector<2x1xf32> to vector<2x128xf32>
    %48 = arith.subf %44, %47 : vector<2x128xf32>
    %49 = math.exp %48 : vector<2x128xf32>
    %cst_19 = arith.constant dense<0.000000e+00> : vector<2xf32>
    %50 = vector.multi_reduction <add>, %49, %cst_19 [1] : vector<2x128xf32> to vector<2xf32>
    %51 = vector.shape_cast %50 : vector<2xf32> to vector<2x1xf32>
    %52 = tpu.reciprocal %51 {approx = true} : vector<2x1xf32> -> vector<2x1xf32>
    %53 = vector.broadcast %52 : vector<2x1xf32> to vector<2x128xf32>
    %54 = arith.mulf %49, %53 : vector<2x128xf32>
    %c0_20 = arith.constant 0 : index
    %c0_21 = arith.constant 0 : index
    %55 = vector.load %arg4[%c0_20, %c0_21] : memref<2x128xf32, #tpu.memory_space<vmem>>, vector<2x128xf32>
    tpu.vector_store %arg4[%c0_20, %c0_21], %54 {strides = array<i32>} : memref<2x128xf32, #tpu.memory_space<vmem>>, vector<2x128xf32>,
    return
  }
}

</mosaic_0001>

<llo_original>
// kernel: _lambda_.5
$region0: #{_lambda_.5}
  #allocation0 [shape = 'u32[]', space=smem, size = 0x4, offset = 0x4, fixed_abs, tag = 'smem constant byte address 0x4 - core index']
  #allocation1 [shape = 'u32[144,128]{1,0:T(1,128)}', space=vmem, size = 0x12000, scoped, tag = 'internal scratch']
  %s0 = inlined_call_operand.hbm [shape: f32[2,16,128], index: 0, kind: input, shape index: {}]
  %s1 = inlined_call_operand.hbm [shape: bf16[256,128], index: 1, kind: input, shape index: {}]
  %s2 = inlined_call_operand.hbm [shape: bf16[128,128], index: 2, kind: input, shape index: {}]
  %s3 = inlined_call_operand.hbm [shape: f32[8,128], index: 3, kind: input, shape index: {}]
  %s4 = inlined_call_operand.hbm [shape: f32[2,128], index: 4, kind: output, shape index: {}]
  %s5 = sld [smem:[#allocation0]]
  $region42: #{_lambda_.5} parent=0
    _
  %s7 = ssub.s32 1, %s5
  %s8 = scalar_select 0, %s7, %s5
  $region1: #{_lambda_.5} parent=0
    #allocation2 [shape = 'u8[16384]{0}', space=vmem, size = 0x4000, scoped, tag = 'input window, operand 0, single buffered']
    #allocation3 [shape = 's32[1]{0}', space=sflag, size = 0x4, scoped, tag = 'scoped memory for _lambda_.5']
    #allocation4 [shape = 's32[1]{0}', space=sflag, size = 0x4, scoped, tag = 'scoped memory for _lambda_.5']
    #allocation5 [shape = 'u8[65536]{0}', space=vmem, size = 0x10000, scoped, tag = 'input window, operand 1, single buffered']
    #allocation6 [shape = 's32[1]{0}', space=sflag, size = 0x4, scoped, tag = 'scoped memory for _lambda_.5']
    #allocation7 [shape = 'u8[32768]{0}', space=vmem, size = 0x8000, scoped, tag = 'input window, operand 2, single buffered']
    #allocation8 [shape = 'u8[4096]{0}', space=vmem, size = 0x1000, scoped, tag = 'input window, operand 3, single buffered']
    #allocation9 [shape = 's32[1]{0}', space=sflag, size = 0x4, scoped, tag = 'scoped memory for _lambda_.5']
    #allocation10 [shape = 'u8[1024]{0}', space=vmem, size = 0x400, scoped, tag = 'output window, operand 0, single buffered']
    %9 = vsyncpa [#allocation3], 0
    %10 = vsyncpa [#allocation6], 0
    %11 = vsyncpa [#allocation9], 0
    %12 = vsyncpa [#allocation4], 0
    // Predicated region
    $region2: #{_lambda_.5} parent=1 // pred_check
      _
    $region3: #{_lambda_.5} parent=1 // pred_check_branch
      %14 = sbr.rel (0) target = $region5
    $region4: #{_lambda_.5} parent=1 // pred_region
      %s16 = ssub.s32 512, 512
      %17 = vsyncadd [#allocation3], %s16
      %s18 = sshll.u32 [#allocation2], 4
      %s19 = int_to_ptr.vmem [resolvable:$true] %s18
      %24 = dma.hbm_to_vmem [thread:$0]  %s0, 512, %s19, [#allocation3], 128, 128, 8
    $region5: #{_lambda_.5} parent=1 // pred_fallthru
      _
    // Predicated region
    $region6: #{_lambda_.5} parent=1 // pred_check
      _
    $region7: #{_lambda_.5} parent=1 // pred_check_branch
      %26 = sbr.rel (0) target = $region9
    $region8: #{_lambda_.5} parent=1 // pred_region
      %s28 = ssub.s32 2048, 2048
      %29 = vsyncadd [#allocation6], %s28
      %s30 = sshll.u32 [#allocation5], 4
      %s31 = int_to_ptr.vmem [resolvable:$true] %s30
      %36 = dma.hbm_to_vmem [thread:$0]  %s1, 2048, %s31, [#allocation6], 64, 64, 4
    $region9: #{_lambda_.5} parent=1 // pred_fallthru
      _
    // Predicated region
    $region10: #{_lambda_.5} parent=1 // pred_check
      _
    $region11: #{_lambda_.5} parent=1 // pred_check_branch
      %38 = sbr.rel (0) target = $region13
    $region12: #{_lambda_.5} parent=1 // pred_region
      %s40 = ssub.s32 1024, 1024
      %41 = vsyncadd [#allocation6], %s40
      %s42 = sshll.u32 [#allocation7], 4
      %s43 = int_to_ptr.vmem [resolvable:$true] %s42
      %48 = dma.hbm_to_vmem [thread:$0]  %s2, 1024, %s43, [#allocation6], 64, 64, 4
    $region13: #{_lambda_.5} parent=1 // pred_fallthru
      _
    // Predicated region
    $region14: #{_lambda_.5} parent=1 // pred_check
      _
    $region15: #{_lambda_.5} parent=1 // pred_check_branch
      %50 = sbr.rel (0) target = $region17
    $region16: #{_lambda_.5} parent=1 // pred_region
      %s52 = ssub.s32 128, 128
      %53 = vsyncadd [#allocation9], %s52
      %s55 = sshll.u32 [#allocation8], 4
      %s56 = int_to_ptr.vmem [resolvable:$true] %s55
      %58 = dma.hbm_to_vmem [thread:$0]  %s3, 128, %s56, [#allocation9]
    $region17: #{_lambda_.5} parent=1 // pred_fallthru
      _
    // Predicated region
    $region18: #{_lambda_.5} parent=1 // pred_check
      _
    $region19: #{_lambda_.5} parent=1 // pred_check_branch
      %60 = sbr.rel (0) target = $region21
    $region20: #{_lambda_.5} parent=1 // pred_region
      %61 = dma.done [#allocation3], 512
    $region21: #{_lambda_.5} parent=1 // pred_fallthru
      _
    // Predicated region
    $region22: #{_lambda_.5} parent=1 // pred_check
      _
    $region23: #{_lambda_.5} parent=1 // pred_check_branch
      %63 = sbr.rel (0) target = $region25
    $region24: #{_lambda_.5} parent=1 // pred_region
      %64 = dma.done [#allocation6], 2048
    $region25: #{_lambda_.5} parent=1 // pred_fallthru
      _
    // Predicated region
    $region26: #{_lambda_.5} parent=1 // pred_check
      _
    $region27: #{_lambda_.5} parent=1 // pred_check_branch
      %66 = sbr.rel (0) target = $region29
    $region28: #{_lambda_.5} parent=1 // pred_region
      %67 = dma.done [#allocation6], 1024
    $region29: #{_lambda_.5} parent=1 // pred_fallthru
      _
    // Predicated region
    $region30: #{_lambda_.5} parent=1 // pred_check
      _
    $region31: #{_lambda_.5} parent=1 // pred_check_branch
      %69 = sbr.rel (0) target = $region33
    $region32: #{_lambda_.5} parent=1 // pred_region
      %70 = dma.done [#allocation9], 128
    $region33: #{_lambda_.5} parent=1 // pred_fallthru
      _
    %v72 = vld [vmem:[#allocation2] sm:$0xff]
    %v73 = vld [vmem:[#allocation2 + $0x8] sm:$0xff]
    %v74 = vld [vmem:[#allocation2 + $0x10] sm:$0xff]
    %v75 = vld [vmem:[#allocation2 + $0x18] sm:$0xff]
    %v76 = vadd.f32 %v72, %v73
    %v77 = vrot.slane %v76, 4
    %v78 = vadd.f32 %v76, %v77
    %v79 = vrot.slane %v78, 2
    %v80 = vadd.f32 %v78, %v79
    %v81 = vrot.slane %v80, 1
    %v82 = vadd.f32 %v80, %v81
    %v83 = vadd.f32 %v74, %v75
    %v84 = vrot.slane %v83, 4
    %v85 = vadd.f32 %v83, %v84
    %v86 = vrot.slane %v85, 2
    %v87 = vadd.f32 %v85, %v86
    %v88 = vrot.slane %v87, 1
    %v89 = vadd.f32 %v87, %v88
    %v90 = vmul.f32 %v82, 0.0625
    %v91 = vmul.f32 %v89, 0.0625
    %v94 = vrot.slane %v74, 7
    %vm95 = vcmask 1041409
    %v96 = vsel %vm95, %v94, %v72
    %v100 = vsel %vm95, %v91, %v90
    %v102 = vld [vmem:[#allocation8] sm:$0xff]
    %v103 = vpack.c.bf16 %v96, %v96
    %v104 = vpack.c.bf16 %v100, %v100
    %v105 = vld [vmem:[#allocation5] sm:$0xf]
    %v106 = vld [vmem:[#allocation5 + $0x4] sm:$0xf]
    %v107 = vld [vmem:[#allocation5 + $0x8] sm:$0xf]
    %v108 = vld [vmem:[#allocation5 + $0xc] sm:$0xf]
    %v109 = vld [vmem:[#allocation5 + $0x10] sm:$0xf]
    %v110 = vld [vmem:[#allocation5 + $0x14] sm:$0xf]
    %v111 = vld [vmem:[#allocation5 + $0x18] sm:$0xf]
    %v112 = vld [vmem:[#allocation5 + $0x1c] sm:$0xf]
    %v113 = vld [vmem:[#allocation5 + $0x20] sm:$0xf]
    %v114 = vld [vmem:[#allocation5 + $0x24] sm:$0xf]
    %v115 = vld [vmem:[#allocation5 + $0x28] sm:$0xf]
    %v116 = vld [vmem:[#allocation5 + $0x2c] sm:$0xf]
    %v117 = vld [vmem:[#allocation5 + $0x30] sm:$0xf]
    %v118 = vld [vmem:[#allocation5 + $0x34] sm:$0xf]
    %v119 = vld [vmem:[#allocation5 + $0x38] sm:$0xf]
    %v120 = vld [vmem:[#allocation5 + $0x3c] sm:$0xf]
    %v121 = vld [vmem:[#allocation5 + $0x40] sm:$0xf]
    %v122 = vld [vmem:[#allocation5 + $0x44] sm:$0xf]
    %v123 = vld [vmem:[#allocation5 + $0x48] sm:$0xf]
    %v124 = vld [vmem:[#allocation5 + $0x4c] sm:$0xf]
    %v125 = vld [vmem:[#allocation5 + $0x50] sm:$0xf]
    %v126 = vld [vmem:[#allocation5 + $0x54] sm:$0xf]
    %v127 = vld [vmem:[#allocation5 + $0x58] sm:$0xf]
    %v128 = vld [vmem:[#allocation5 + $0x5c] sm:$0xf]
    %v129 = vld [vmem:[#allocation5 + $0x60] sm:$0xf]
    %v130 = vld [vmem:[#allocation5 + $0x64] sm:$0xf]
    %v131 = vld [vmem:[#allocation5 + $0x68] sm:$0xf]
    %v132 = vld [vmem:[#allocation5 + $0x6c] sm:$0xf]
    %v133 = vld [vmem:[#allocation5 + $0x70] sm:$0xf]
    %v134 = vld [vmem:[#allocation5 + $0x74] sm:$0xf]
    %v135 = vld [vmem:[#allocation5 + $0x78] sm:$0xf]
    %v136 = vld [vmem:[#allocation5 + $0x7c] sm:$0xf]
    %v169 = vunpack.c.l.b16 %v105
    %v170 = vunpack.c.l.b16 %v106
    %v171 = vunpack.c.l.b16 %v107
    %v172 = vunpack.c.l.b16 %v108
    %v173 = vunpack.c.l.b16 %v109
    %v174 = vunpack.c.l.b16 %v110
    %v175 = vunpack.c.l.b16 %v111
    %v176 = vunpack.c.l.b16 %v112
    %v177 = vunpack.c.l.b16 %v113
    %v178 = vunpack.c.l.b16 %v114
    %v179 = vunpack.c.l.b16 %v115
    %v180 = vunpack.c.l.b16 %v116
    %v181 = vunpack.c.l.b16 %v117
    %v182 = vunpack.c.l.b16 %v118
    %v183 = vunpack.c.l.b16 %v119
    %v184 = vunpack.c.l.b16 %v120
    %v185 = vunpack.c.l.b16 %v121
    %v186 = vunpack.c.l.b16 %v122
    %v187 = vunpack.c.l.b16 %v123
    %v188 = vunpack.c.l.b16 %v124
    %v189 = vunpack.c.l.b16 %v125
    %v190 = vunpack.c.l.b16 %v126
    %v191 = vunpack.c.l.b16 %v127
    %v192 = vunpack.c.l.b16 %v128
    %v193 = vunpack.c.l.b16 %v129
    %v194 = vunpack.c.l.b16 %v130
    %v195 = vunpack.c.l.b16 %v131
    %v196 = vunpack.c.l.b16 %v132
    %v197 = vunpack.c.l.b16 %v133
    %v198 = vunpack.c.l.b16 %v134
    %v199 = vunpack.c.l.b16 %v135
    %v200 = vunpack.c.l.b16 %v136
    %v201 = vpack.c.b16 %v170, %v169
    %v202 = vpack.c.b16 %v172, %v171
    %v203 = vpack.c.b16 %v174, %v173
    %v204 = vpack.c.b16 %v176, %v175
    %v205 = vpack.c.b16 %v178, %v177
    %v206 = vpack.c.b16 %v180, %v179
    %v207 = vpack.c.b16 %v182, %v181
    %v208 = vpack.c.b16 %v184, %v183
    %v209 = vpack.c.b16 %v186, %v185
    %v210 = vpack.c.b16 %v188, %v187
    %v211 = vpack.c.b16 %v190, %v189
    %v212 = vpack.c.b16 %v192, %v191
    %v213 = vpack.c.b16 %v194, %v193
    %v214 = vpack.c.b16 %v196, %v195
    %v215 = vpack.c.b16 %v198, %v197
    %v216 = vpack.c.b16 %v200, %v199
    %233 = vmatprep.subr.bf16.mxu0 0
    %234 = vmatpush1.bf16.msra.mxu0 %v201
    %235 = vmatprep.subr.bf16.mxu0 0
    %236 = vmatpush1.bf16.msra.mxu0 %v202
    %237 = vmatprep.subr.bf16.mxu0 0
    %238 = vmatpush1.bf16.msra.mxu0 %v203
    %239 = vmatprep.subr.bf16.mxu0 0
    %240 = vmatpush1.bf16.msra.mxu0 %v204
    %241 = vmatprep.subr.bf16.mxu0 0
    %242 = vmatpush1.bf16.msra.mxu0 %v205
    %243 = vmatprep.subr.bf16.mxu0 0
    %244 = vmatpush1.bf16.msra.mxu0 %v206
    %245 = vmatprep.subr.bf16.mxu0 0
    %246 = vmatpush1.bf16.msra.mxu0 %v207
    %247 = vmatprep.subr.bf16.mxu0 0
    %248 = vmatpush1.bf16.msra.mxu0 %v208
    %249 = vmatprep.subr.bf16.mxu0 0
    %250 = vmatpush1.bf16.msra.mxu0 %v209
    %251 = vmatprep.subr.bf16.mxu0 0
    %252 = vmatpush1.bf16.msra.mxu0 %v210
    %253 = vmatprep.subr.bf16.mxu0 0
    %254 = vmatpush1.bf16.msra.mxu0 %v211
    %255 = vmatprep.subr.bf16.mxu0 0
    %256 = vmatpush1.bf16.msra.mxu0 %v212
    %257 = vmatprep.subr.bf16.mxu0 0
    %258 = vmatpush1.bf16.msra.mxu0 %v213
    %259 = vmatprep.subr.bf16.mxu0 0
    %260 = vmatpush1.bf16.msra.mxu0 %v214
    %261 = vmatprep.subr.bf16.mxu0 0
    %262 = vmatpush1.bf16.msra.mxu0 %v215
    %263 = vmatprep.subr.bf16.mxu0 0
    %264 = vmatpush1.bf16.msra.mxu0 %v216
    %265 = vmatprep.mubr.bf16.mxu0 %v104
    %266 = vmatmul.mubr.bf16.gmra.mrb[0].mxu0 %v103
    %v267 = vpop.f32.mrb[0].mxu0
    %v268 = vadd.f32 0.0, %v267
    %v269 = vpop.f32.mrb[0].mxu0
    %v270 = vpop.f32.mrb[0].mxu0
    %v271 = vpop.f32.mrb[0].mxu0
    %272 = vdwg.mxu0
    %vm273 = vcmask 1041408
    %v274 = vsel %vm273, %v268, 0.0
    %v275 = vrot.slane %v274, 4
    %v276 = vadd.f32 %v274, %v275
    %v277 = vrot.slane %v276, 2
    %v278 = vadd.f32 %v276, %v277
    %v279 = vrot.slane %v278, 1
    %v280 = vadd.f32 %v278, %v279
    %v281 = vmul.f32 %v280, 0.5
    %v282 = vsub.f32 %v268, %v281
    %v283 = vmul.f32 %v282, %v282
    %v284 = vsel %vm273, %v283, 0.0
    %v285 = vrot.slane %v284, 4
    %v286 = vadd.f32 %v284, %v285
    %v287 = vrot.slane %v286, 2
    %v288 = vadd.f32 %v286, %v287
    %v289 = vrot.slane %v288, 1
    %v290 = vadd.f32 %v288, %v289
    %v291 = vmul.f32 %v290, 0.5
    %v292 = vadd.f32 %v291, 1e-05
    %v293 = vrsqrt.pop %v292
    %v294 = vmul.f32 %v102, %v293
    %v295 = vlaneseq
    %v296 = vshrl.u32 %v295, 7
    %v297 = vsub.s32 0, %v296
    %v298 = vrot.slane %v294, %v297
    %v299 = vmul.f32 %v282, %v298
    %v300 = vlaneseq
    %v301 = vshrl.u32 %v300, 7
    %v302 = vsub.s32 1, %v301
    %v303 = vrot.slane %v102, %v302
    %v304 = vadd.f32 %v299, %v303
    %v305 = vmax.f32 %v304, 0.0
    %v306 = vpack.c.bf16 %v305, %v305
    %v307 = vld [vmem:[#allocation7] sm:$0xf]
    %v308 = vld [vmem:[#allocation7 + $0x4] sm:$0xf]
    %v309 = vld [vmem:[#allocation7 + $0x8] sm:$0xf]
    %v310 = vld [vmem:[#allocation7 + $0xc] sm:$0xf]
    %v311 = vld [vmem:[#allocation7 + $0x10] sm:$0xf]
    %v312 = vld [vmem:[#allocation7 + $0x14] sm:$0xf]
    %v313 = vld [vmem:[#allocation7 + $0x18] sm:$0xf]
    %v314 = vld [vmem:[#allocation7 + $0x1c] sm:$0xf]
    %v315 = vld [vmem:[#allocation7 + $0x20] sm:$0xf]
    %v316 = vld [vmem:[#allocation7 + $0x24] sm:$0xf]
    %v317 = vld [vmem:[#allocation7 + $0x28] sm:$0xf]
    %v318 = vld [vmem:[#allocation7 + $0x2c] sm:$0xf]
    %v319 = vld [vmem:[#allocation7 + $0x30] sm:$0xf]
    %v320 = vld [vmem:[#allocation7 + $0x34] sm:$0xf]
    %v321 = vld [vmem:[#allocation7 + $0x38] sm:$0xf]
    %v322 = vld [vmem:[#allocation7 + $0x3c] sm:$0xf]
    %v323 = vlaneseq
    %v324 = vshrl.u32 %v323, 7
    %v325 = vsub.s32 2, %v324
    %v326 = vrot.slane %v102, %v325
    %v343 = vunpack.c.l.b16 %v307
    %v344 = vunpack.c.l.b16 %v308
    %v345 = vunpack.c.l.b16 %v309
    %v346 = vunpack.c.l.b16 %v310
    %v347 = vunpack.c.l.b16 %v311
    %v348 = vunpack.c.l.b16 %v312
    %v349 = vunpack.c.l.b16 %v313
    %v350 = vunpack.c.l.b16 %v314
    %v351 = vunpack.c.l.b16 %v315
    %v352 = vunpack.c.l.b16 %v316
    %v353 = vunpack.c.l.b16 %v317
    %v354 = vunpack.c.l.b16 %v318
    %v355 = vunpack.c.l.b16 %v319
    %v356 = vunpack.c.l.b16 %v320
    %v357 = vunpack.c.l.b16 %v321
    %v358 = vunpack.c.l.b16 %v322
    %v359 = vpack.c.b16 %v344, %v343
    %v360 = vpack.c.b16 %v346, %v345
    %v361 = vpack.c.b16 %v348, %v347
    %v362 = vpack.c.b16 %v350, %v349
    %v363 = vpack.c.b16 %v352, %v351
    %v364 = vpack.c.b16 %v354, %v353
    %v365 = vpack.c.b16 %v356, %v355
    %v366 = vpack.c.b16 %v358, %v357
    %375 = vmatprep.subr.bf16.mxu0 0
    %376 = vmatpush1.bf16.msra.mxu0 %v359
    %377 = vmatprep.subr.bf16.mxu0 0
    %378 = vmatpush1.bf16.msra.mxu0 %v360
    %379 = vmatprep.subr.bf16.mxu0 0
    %380 = vmatpush1.bf16.msra.mxu0 %v361
    %381 = vmatprep.subr.bf16.mxu0 0
    %382 = vmatpush1.bf16.msra.mxu0 %v362
    %383 = vmatprep.subr.bf16.mxu0 0
    %384 = vmatpush1.bf16.msra.mxu0 %v363
    %385 = vmatprep.subr.bf16.mxu0 0
    %386 = vmatpush1.bf16.msra.mxu0 %v364
    %387 = vmatprep.subr.bf16.mxu0 0
    %388 = vmatpush1.bf16.msra.mxu0 %v365
    %389 = vmatprep.subr.bf16.mxu0 0
    %390 = vmatpush1.bf16.msra.mxu0 %v366
    %391 = vmatprep.subr.bf16.mxu0 0
    %392 = vmatpush1.bf16.msra.mxu0 0
    %393 = vmatprep.subr.bf16.mxu0 0
    %394 = vmatpush1.bf16.msra.mxu0 0
    %395 = vmatprep.subr.bf16.mxu0 0
    %396 = vmatpush1.bf16.msra.mxu0 0
    %397 = vmatprep.subr.bf16.mxu0 0
    %398 = vmatpush1.bf16.msra.mxu0 0
    %399 = vmatprep.subr.bf16.mxu0 0
    %400 = vmatpush1.bf16.msra.mxu0 0
    %401 = vmatprep.subr.bf16.mxu0 0
    %402 = vmatpush1.bf16.msra.mxu0 0
    %403 = vmatprep.subr.bf16.mxu0 0
    %404 = vmatpush1.bf16.msra.mxu0 0
    %405 = vmatprep.subr.bf16.mxu0 0
    %406 = vmatpush1.bf16.msra.mxu0 0
    %407 = vmatprep.mubr.bf16.mxu0 0
    %408 = vmatmul.mubr.bf16.gmra.mrb[0].mxu0 %v306
    %v409 = vpop.f32.mrb[0].mxu0
    %v410 = vadd.f32 %v326, %v409
    %v411 = vpop.f32.mrb[0].mxu0
    %v412 = vpop.f32.mrb[0].mxu0
    %v413 = vpop.f32.mrb[0].mxu0
    %414 = vdwg.mxu0
    %v415 = vlaneseq
    %v416 = vand.u32 %v415, 127
    %vm417 = vcmp.lt.s32.totalorder %v416, 2
    %v418 = vsel %vm417, %v410, -1e+30
    %v419 = vsel %vm273, %v418, -inf
    %420 = vmax.xlane.f32.xlu0 %v419
    %v421 = vpop.xlane.xlu0 %420
    %v422 = vsub.f32 %v418, %v421
    %v423 = vmul.f32 %v422, 1.442695
    %v424 = vpow.pop %v423
    %v425 = vsel %vm273, %v424, 0.0
    %426 = vadd.xlane.f32.xlu0 %v425
    %v427 = vpop.xlane.xlu0 %426
    %v428 = vrcp.pop %v427
    %v429 = vmul.f32 %v424, %v428
    %430 = vst [vmem:[#allocation10] sm:$0x3] %v429
    // Predicated region
    $region34: #{_lambda_.5} parent=1 // pred_check
      _
    $region35: #{_lambda_.5} parent=1 // pred_check_branch
      %432 = sbr.rel (0) target = $region37
    $region36: #{_lambda_.5} parent=1 // pred_region
      %s434 = ssub.s32 32, 32
      %435 = vsyncadd [#allocation4], %s434
      %s437 = sshll.u32 [#allocation10], 4
      %s438 = int_to_ptr.vmem [resolvable:$true] %s437
      %440 = dma.vmem_to_hbm [thread:$0]  %s438, 32, %s4, [#allocation4]
    $region37: #{_lambda_.5} parent=1 // pred_fallthru
      _
    // Predicated region
    $region38: #{_lambda_.5} parent=1 // pred_check
      _
    $region39: #{_lambda_.5} parent=1 // pred_check_branch
      %442 = sbr.rel (0) target = $region41
    $region40: #{_lambda_.5} parent=1 // pred_region
      %443 = dma.done [#allocation4], 32
    $region41: #{_lambda_.5} parent=1 // pred_fallthru
      _
    %444 = vsyncpa [#allocation3], 1
    %445 = vsyncpa [#allocation6], 1
    %446 = vsyncpa [#allocation9], 1
    %447 = vsyncpa [#allocation4], 1

// kernel: _lambda_.4
$region0: #{_lambda_.4}
  #allocation0 [shape = 'u32[]', space=smem, size = 0x4, offset = 0x4, fixed_abs, tag = 'smem constant byte address 0x4 - core index']
  #allocation1 [shape = 'u32[144,128]{1,0:T(1,128)}', space=vmem, size = 0x12000, scoped, tag = 'internal scratch']
  %s0 = inlined_call_operand.hbm [shape: f32[1,2,16,128], index: 0, kind: input, shape index: {}, may-alias: {0,6}]
  %s1 = inlined_call_operand.hbm [shape: bf16[1,2,128,384], index: 1, kind: input, shape index: {}]
  %s2 = inlined_call_operand.hbm [shape: bf16[1,2,128,128], index: 2, kind: input, shape index: {}]
  %s3 = inlined_call_operand.hbm [shape: bf16[1,2,128,256], index: 3, kind: input, shape index: {}]
  %s4 = inlined_call_operand.hbm [shape: bf16[1,2,256,128], index: 4, kind: input, shape index: {}]
  %s5 = inlined_call_operand.hbm [shape: f32[1,2,8,384], index: 5, kind: input, shape index: {}]
  %s6 = inlined_call_operand.hbm [shape: f32[1,2,16,128], index: 6, kind: output, shape index: {}, may-alias: {0,6}]
  %s7 = sld [smem:[#allocation0]]
  $region85: #{_lambda_.4} parent=0
    _
  %s9 = ssub.s32 1, %s7
  %s10 = scalar_select 0, %s9, %s7
  $region1: #{_lambda_.4} parent=0
    #allocation2 [shape = 'u8[16384]{0}', space=vmem, size = 0x4000, scoped, tag = 'input window, operand 0']
    #allocation3 [shape = 's32[2]{0}', space=sflag, size = 0x8, scoped, tag = 'scoped memory for _lambda_.4']
    #allocation4 [shape = 's32[2]{0}', space=sflag, size = 0x8, scoped, tag = 'scoped memory for _lambda_.4']
    #allocation5 [shape = 'u8[196608]{0}', space=vmem, size = 0x30000, scoped, tag = 'input window, operand 1']
    #allocation6 [shape = 's32[2]{0}', space=sflag, size = 0x8, scoped, tag = 'scoped memory for _lambda_.4']
    #allocation7 [shape = 'u8[65536]{0}', space=vmem, size = 0x10000, scoped, tag = 'input window, operand 2']
    #allocation8 [shape = 'u8[131072]{0}', space=vmem, size = 0x20000, scoped, tag = 'input window, operand 3']
    #allocation9 [shape = 's32[2]{0}', space=sflag, size = 0x8, scoped, tag = 'scoped memory for _lambda_.4']
    #allocation10 [shape = 'u8[131072]{0}', space=vmem, size = 0x20000, scoped, tag = 'input window, operand 4']
    #allocation11 [shape = 'u8[24576]{0}', space=vmem, size = 0x6000, scoped, tag = 'input window, operand 5']
    #allocation12 [shape = 's32[2]{0}', space=sflag, size = 0x8, scoped, tag = 'scoped memory for _lambda_.4']
    #allocation13 [shape = 'u8[16384]{0}', space=vmem, size = 0x4000, scoped, tag = 'output window, operand 0']
    %11 = vsyncpa [#allocation3], 0
    %s12 = scalar_lea.sflag [#allocation3], 1
    %13 = vsyncpa %s12, 0
    %14 = vsyncpa [#allocation6], 0
    %s15 = scalar_lea.sflag [#allocation6], 1
    %16 = vsyncpa %s15, 0
    %17 = vsyncpa [#allocation9], 0
    %s18 = scalar_lea.sflag [#allocation9], 1
    %19 = vsyncpa %s18, 0
    %20 = vsyncpa [#allocation12], 0
    %s21 = scalar_lea.sflag [#allocation12], 1
    %22 = vsyncpa %s21, 0
    %23 = vsyncpa [#allocation4], 0
    %s24 = scalar_lea.sflag [#allocation4], 1
    %25 = vsyncpa %s24, 0
    loop: start=0, step=1, limit=6
    $region2: #{_lambda_.4} parent=1 // loop_pre_header
      _
    $region3: #{_lambda_.4} parent=1 // loop_header
      %s27 = sphi 0, %s31
      %p28 = scmp.ge.s32.totalorder %s27, 6
      %s34 = sphi 0, %s46
      %s35 = sphi 0, %s42
      %s36 = sphi 0, %s34
      %s37 = sphi 0, %s35
      %s38 = sphi 0, %s36
      %s39 = sphi 0, %s37
      %s49 = sphi 0, %s51
      %s52 = sphi 0, %s49
      %s53 = sphi 0, %s52
      %s69 = sphi 0, %s53
      %s75 = sphi 0, %s77
      %s78 = sphi 0, %s75
      %s79 = sphi 0, %s78
      %s95 = sphi 0, %s79
      %s101 = sphi 0, %s103
      %s104 = sphi 0, %s101
      %s105 = sphi 0, %s104
      %s121 = sphi 0, %s105
      %s127 = sphi 0, %s129
      %s130 = sphi 0, %s127
      %s131 = sphi 0, %s130
      %s147 = sphi 0, %s131
      %s153 = sphi 0, %s155
      %s156 = sphi 0, %s153
      %s157 = sphi 0, %s156
      %s173 = sphi 0, %s157
      %s179 = sphi 0, %s181
      %s182 = sphi 0, %s179
      %s183 = sphi 0, %s182
      %s199 = sphi 0, %s183
      %s205 = sphi 0, %s207
      %s208 = sphi 0, %s205
      %s209 = sphi 0, %s208
      %s225 = sphi 0, %s209
    $region4: #{_lambda_.4} parent=1 // loop_header_branch
      %30 = sbr.rel (%p28) target = $region8
    $region5: #{_lambda_.4} parent=1 // loop_body
      %s32 = ssub.s32 %s27, 1
      %s33 = ssub.s32 %s27, 2
      %s40 = sadd.s32 1, %s35
      %p41 = scmp.ge.s32.totalorder %s40, 2
      %s42 = scalar_select %p41, 0, %s40
      %s43 = sadd.s32 1, %s34
      %s44 = scalar_select %p41, %s43, %s34
      %p45 = scmp.ge.s32.totalorder %s44, 2
      %s46 = scalar_select %p45, 0, %s44
      %s47 = ssub.s32 %s34, %s46
      %p48 = scmp.eq.s32.totalorder %s47, 0
      %s50 = sadd.s32 %s49, 1
      %s51 = scalar_select %p48, %s49, %s50
      %p54 = pneg %p48
      %p55 = scmp.eq.s32.totalorder %s27, 3
      %p56 = por %p54, %p55
      %p57 = scmp.ne.s32.totalorder %s49, %s52
      %p58 = scmp.eq.s32.totalorder %s27, 0
      %p59 = por %p57, %p58
      %p60 = scmp.ne.s32.totalorder %s49, %s52
      %p61 = scmp.eq.s32.totalorder %s32, 3
      %p62 = por %p60, %p61
      %p63 = scmp.ne.s32.totalorder %s52, %s53
      %p64 = scmp.eq.s32.totalorder %s32, 0
      %p65 = por %p63, %p64
      %p66 = scmp.ne.s32.totalorder %s52, %s53
      %p67 = scmp.eq.s32.totalorder %s33, 3
      %p68 = por %p66, %p67
      %p70 = scmp.ne.s32.totalorder %s53, %s69
      %p71 = scmp.eq.s32.totalorder %s33, 0
      %p72 = por %p70, %p71
      %s73 = ssub.s32 %s35, %s42
      %p74 = scmp.eq.s32.totalorder %s73, 0
      %s76 = sadd.s32 %s75, 1
      %s77 = scalar_select %p74, %s75, %s76
      %p80 = pneg %p74
      %p81 = scmp.eq.s32.totalorder %s27, 3
      %p82 = por %p80, %p81
      %p83 = scmp.ne.s32.totalorder %s75, %s78
      %p84 = scmp.eq.s32.totalorder %s27, 0
      %p85 = por %p83, %p84
      %p86 = scmp.ne.s32.totalorder %s75, %s78
      %p87 = scmp.eq.s32.totalorder %s32, 3
      %p88 = por %p86, %p87
      %p89 = scmp.ne.s32.totalorder %s78, %s79
      %p90 = scmp.eq.s32.totalorder %s32, 0
      %p91 = por %p89, %p90
      %p92 = scmp.ne.s32.totalorder %s78, %s79
      %p93 = scmp.eq.s32.totalorder %s33, 3
      %p94 = por %p92, %p93
      %p96 = scmp.ne.s32.totalorder %s79, %s95
      %p97 = scmp.eq.s32.totalorder %s33, 0
      %p98 = por %p96, %p97
      %s99 = ssub.s32 %s35, %s42
      %p100 = scmp.eq.s32.totalorder %s99, 0
      %s102 = sadd.s32 %s101, 1
      %s103 = scalar_select %p100, %s101, %s102
      %p106 = pneg %p100
      %p107 = scmp.eq.s32.totalorder %s27, 3
      %p108 = por %p106, %p107
      %p109 = scmp.ne.s32.totalorder %s101, %s104
      %p110 = scmp.eq.s32.totalorder %s27, 0
      %p111 = por %p109, %p110
      %p112 = scmp.ne.s32.totalorder %s101, %s104
      %p113 = scmp.eq.s32.totalorder %s32, 3
      %p114 = por %p112, %p113
      %p115 = scmp.ne.s32.totalorder %s104, %s105
      %p116 = scmp.eq.s32.totalorder %s32, 0
      %p117 = por %p115, %p116
      %p118 = scmp.ne.s32.totalorder %s104, %s105
      %p119 = scmp.eq.s32.totalorder %s33, 3
      %p120 = por %p118, %p119
      %p122 = scmp.ne.s32.totalorder %s105, %s121
      %p123 = scmp.eq.s32.totalorder %s33, 0
      %p124 = por %p122, %p123
      %s125 = ssub.s32 %s35, %s42
      %p126 = scmp.eq.s32.totalorder %s125, 0
      %s128 = sadd.s32 %s127, 1
      %s129 = scalar_select %p126, %s127, %s128
      %p132 = pneg %p126
      %p133 = scmp.eq.s32.totalorder %s27, 3
      %p134 = por %p132, %p133
      %p135 = scmp.ne.s32.totalorder %s127, %s130
      %p136 = scmp.eq.s32.totalorder %s27, 0
      %p137 = por %p135, %p136
      %p138 = scmp.ne.s32.totalorder %s127, %s130
      %p139 = scmp.eq.s32.totalorder %s32, 3
      %p140 = por %p138, %p139
      %p141 = scmp.ne.s32.totalorder %s130, %s131
      %p142 = scmp.eq.s32.totalorder %s32, 0
      %p143 = por %p141, %p142
      %p144 = scmp.ne.s32.totalorder %s130, %s131
      %p145 = scmp.eq.s32.totalorder %s33, 3
      %p146 = por %p144, %p145
      %p148 = scmp.ne.s32.totalorder %s131, %s147
      %p149 = scmp.eq.s32.totalorder %s33, 0
      %p150 = por %p148, %p149
      %s151 = ssub.s32 %s35, %s42
      %p152 = scmp.eq.s32.totalorder %s151, 0
      %s154 = sadd.s32 %s153, 1
      %s155 = scalar_select %p152, %s153, %s154
      %p158 = pneg %p152
      %p159 = scmp.eq.s32.totalorder %s27, 3
      %p160 = por %p158, %p159
      %p161 = scmp.ne.s32.totalorder %s153, %s156
      %p162 = scmp.eq.s32.totalorder %s27, 0
      %p163 = por %p161, %p162
      %p164 = scmp.ne.s32.totalorder %s153, %s156
      %p165 = scmp.eq.s32.totalorder %s32, 3
      %p166 = por %p164, %p165
      %p167 = scmp.ne.s32.totalorder %s156, %s157
      %p168 = scmp.eq.s32.totalorder %s32, 0
      %p169 = por %p167, %p168
      %p170 = scmp.ne.s32.totalorder %s156, %s157
      %p171 = scmp.eq.s32.totalorder %s33, 3
      %p172 = por %p170, %p171
      %p174 = scmp.ne.s32.totalorder %s157, %s173
      %p175 = scmp.eq.s32.totalorder %s33, 0
      %p176 = por %p174, %p175
      %s177 = ssub.s32 %s35, %s42
      %p178 = scmp.eq.s32.totalorder %s177, 0
      %s180 = sadd.s32 %s179, 1
      %s181 = scalar_select %p178, %s179, %s180
      %p184 = pneg %p178
      %p185 = scmp.eq.s32.totalorder %s27, 3
      %p186 = por %p184, %p185
      %p187 = scmp.ne.s32.totalorder %s179, %s182
      %p188 = scmp.eq.s32.totalorder %s27, 0
      %p189 = por %p187, %p188
      %p190 = scmp.ne.s32.totalorder %s179, %s182
      %p191 = scmp.eq.s32.totalorder %s32, 3
      %p192 = por %p190, %p191
      %p193 = scmp.ne.s32.totalorder %s182, %s183
      %p194 = scmp.eq.s32.totalorder %s32, 0
      %p195 = por %p193, %p194
      %p196 = scmp.ne.s32.totalorder %s182, %s183
      %p197 = scmp.eq.s32.totalorder %s33, 3
      %p198 = por %p196, %p197
      %p200 = scmp.ne.s32.totalorder %s183, %s199
      %p201 = scmp.eq.s32.totalorder %s33, 0
      %p202 = por %p200, %p201
      %s203 = ssub.s32 %s34, %s46
      %p204 = scmp.eq.s32.totalorder %s203, 0
      %s206 = sadd.s32 %s205, 1
      %s207 = scalar_select %p204, %s205, %s206
      %p210 = pneg %p204
      %p211 = scmp.eq.s32.totalorder %s27, 3
      %p212 = por %p210, %p211
      %p213 = scmp.ne.s32.totalorder %s205, %s208
      %p214 = scmp.eq.s32.totalorder %s27, 0
      %p215 = por %p213, %p214
      %p216 = scmp.ne.s32.totalorder %s205, %s208
      %p217 = scmp.eq.s32.totalorder %s32, 3
      %p218 = por %p216, %p217
      %p219 = scmp.ne.s32.totalorder %s208, %s209
      %p220 = scmp.eq.s32.totalorder %s32, 0
      %p221 = por %p219, %p220
      %p222 = scmp.ne.s32.totalorder %s208, %s209
      %p223 = scmp.eq.s32.totalorder %s33, 3
      %p224 = por %p222, %p223
      %p226 = scmp.ne.s32.totalorder %s209, %s225
      %p227 = scmp.eq.s32.totalorder %s33, 0
      %p228 = por %p226, %p227
      %p229 = scmp.le.s32.totalorder 1, %s27
      %p230 = scmp.lt.s32.totalorder %s27, 5
      %p231 = pnand %p229, %p230
      %p232 = pneg %p231
      // Predicated region
      $region9: #{_lambda_.4} parent=5 // pred_check
        _
      $region10: #{_lambda_.4} parent=5 // pred_check_branch
        %234 = sbr.rel (%p231) target = $region12
      $region11: #{_lambda_.4} parent=5 // pred_region
        %s235 = ssub.s32 %s27, 1
      $region12: #{_lambda_.4} parent=5 // pred_fallthru
        _
      %p236 = scmp.lt.s32.totalorder %s27, 4
      // Predicated region
      $region13: #{_lambda_.4} parent=5 // pred_check
        %p237 = pneg %p236
      $region14: #{_lambda_.4} parent=5 // pred_check_branch
        %239 = sbr.rel (%p237) target = $region16
      $region15: #{_lambda_.4} parent=5 // pred_region
        // Predicated region
        $region17: #{_lambda_.4} parent=15 // pred_check
          %p240 = pneg %p59
        $region18: #{_lambda_.4} parent=15 // pred_check_branch
          %242 = sbr.rel (%p240) target = $region20
        $region19: #{_lambda_.4} parent=15 // pred_region
          %s243 = sand.u32 %s49, 1
          %s244 = scalar_lea.sflag [#allocation3], %s243
          %s245 = sand.u32 %s49, 1
          %s246 = smul.addr %s245, 16
          %s247 = scalar_lea.vmem [#allocation2], %s246
          %s249 = ssub.s32 256, 256
          %250 = vsyncadd %s244, %s249
          %s251 = smul.addr %s34, 2
          %s252 = smul.addr %s251, 128
          %s253 = scalar_lea.hbm %s0, %s252
          %s254 = sshll.u32 %s247, 4
          %s255 = int_to_ptr.vmem [resolvable:$true] %s254
          %260 = dma.hbm_to_vmem [thread:$0]  %s253, 256, %s255, %s244, 128, 128, 8
        $region20: #{_lambda_.4} parent=15 // pred_fallthru
          _
        // Predicated region
        $region21: #{_lambda_.4} parent=15 // pred_check
          %p261 = pneg %p85
        $region22: #{_lambda_.4} parent=15 // pred_check_branch
          %263 = sbr.rel (%p261) target = $region24
        $region23: #{_lambda_.4} parent=15 // pred_region
          %s264 = sand.u32 %s27, 1
          %s265 = scalar_lea.sflag [#allocation6], %s264
          %s266 = sand.u32 %s75, 1
          %s267 = smul.addr %s266, 192
          %s268 = scalar_lea.vmem [#allocation5], %s267
          %s270 = ssub.s32 3072, 3072
          %271 = vsyncadd %s265, %s270
          %s272 = smul.addr %s35, 48
          %s273 = smul.addr %s272, 64
          %s274 = scalar_lea.hbm %s1, %s273
          %s275 = sshll.u32 %s268, 4
          %s276 = int_to_ptr.vmem [resolvable:$true] %s275
          %281 = dma.hbm_to_vmem [thread:$0]  %s274, 3072, %s276, %s265, 192, 192, 12
        $region24: #{_lambda_.4} parent=15 // pred_fallthru
          _
        // Predicated region
        $region25: #{_lambda_.4} parent=15 // pred_check
          %p282 = pneg %p111
        $region26: #{_lambda_.4} parent=15 // pred_check_branch
          %284 = sbr.rel (%p282) target = $region28
        $region27: #{_lambda_.4} parent=15 // pred_region
          %s285 = sand.u32 %s27, 1
          %s286 = scalar_lea.sflag [#allocation6], %s285
          %s287 = sand.u32 %s101, 1
          %s288 = smul.addr %s287, 64
          %s289 = scalar_lea.vmem [#allocation7], %s288
          %s291 = ssub.s32 1024, 1024
          %292 = vsyncadd %s286, %s291
          %s293 = smul.addr %s35, 16
          %s294 = smul.addr %s293, 64
          %s295 = scalar_lea.hbm %s2, %s294
          %s296 = sshll.u32 %s289, 4
          %s297 = int_to_ptr.vmem [resolvable:$true] %s296
          %302 = dma.hbm_to_vmem [thread:$0]  %s295, 1024, %s297, %s286, 64, 64, 4
        $region28: #{_lambda_.4} parent=15 // pred_fallthru
          _
        // Predicated region
        $region29: #{_lambda_.4} parent=15 // pred_check
          %p303 = pneg %p137
        $region30: #{_lambda_.4} parent=15 // pred_check_branch
          %305 = sbr.rel (%p303) target = $region32
        $region31: #{_lambda_.4} parent=15 // pred_region
          %s306 = sand.u32 %s27, 1
          %s307 = scalar_lea.sflag [#allocation9], %s306
          %s308 = sand.u32 %s127, 1
          %s309 = smul.addr %s308, 128
          %s310 = scalar_lea.vmem [#allocation8], %s309
          %s312 = ssub.s32 2048, 2048
          %313 = vsyncadd %s307, %s312
          %s314 = smul.addr %s35, 32
          %s315 = smul.addr %s314, 64
          %s316 = scalar_lea.hbm %s3, %s315
          %s317 = sshll.u32 %s310, 4
          %s318 = int_to_ptr.vmem [resolvable:$true] %s317
          %323 = dma.hbm_to_vmem [thread:$0]  %s316, 2048, %s318, %s307, 128, 128, 8
        $region32: #{_lambda_.4} parent=15 // pred_fallthru
          _
        // Predicated region
        $region33: #{_lambda_.4} parent=15 // pred_check
          %p324 = pneg %p163
        $region34: #{_lambda_.4} parent=15 // pred_check_branch
          %326 = sbr.rel (%p324) target = $region36
        $region35: #{_lambda_.4} parent=15 // pred_region
          %s327 = sand.u32 %s27, 1
          %s328 = scalar_lea.sflag [#allocation9], %s327
          %s329 = sand.u32 %s153, 1
          %s330 = smul.addr %s329, 128
          %s331 = scalar_lea.vmem [#allocation10], %s330
          %s333 = ssub.s32 2048, 2048
          %334 = vsyncadd %s328, %s333
          %s335 = smul.addr %s35, 32
          %s336 = smul.addr %s335, 64
          %s337 = scalar_lea.hbm %s4, %s336
          %s338 = sshll.u32 %s331, 4
          %s339 = int_to_ptr.vmem [resolvable:$true] %s338
          %344 = dma.hbm_to_vmem [thread:$0]  %s337, 2048, %s339, %s328, 64, 64, 4
        $region36: #{_lambda_.4} parent=15 // pred_fallthru
          _
        // Predicated region
        $region37: #{_lambda_.4} parent=15 // pred_check
          %p345 = pneg %p189
        $region38: #{_lambda_.4} parent=15 // pred_check_branch
          %347 = sbr.rel (%p345) target = $region40
        $region39: #{_lambda_.4} parent=15 // pred_region
          %s348 = sand.u32 %s179, 1
          %s349 = scalar_lea.sflag [#allocation12], %s348
          %s350 = sand.u32 %s179, 1
          %s351 = smul.addr %s350, 24
          %s352 = scalar_lea.vmem [#allocation11], %s351
          %s354 = ssub.s32 384, 384
          %355 = vsyncadd %s349, %s354
          %s356 = smul.addr %s35, 3
          %s357 = smul.addr %s356, 128
          %s358 = scalar_lea.hbm %s5, %s357
          %s360 = sshll.u32 %s352, 4
          %s361 = int_to_ptr.vmem [resolvable:$true] %s360
          %363 = dma.hbm_to_vmem [thread:$0]  %s358, 384, %s361, %s349
        $region40: #{_lambda_.4} parent=15 // pred_fallthru
          _
      $region16: #{_lambda_.4} parent=5 // pred_fallthru
        _
      %p364 = scmp.le.s32.totalorder 1, %s27
      %p365 = scmp.lt.s32.totalorder %s27, 5
      %p366 = pnand %p364, %p365
      %p367 = pneg %p366
      // Predicated region
      $region41: #{_lambda_.4} parent=5 // pred_check
        _
      $region42: #{_lambda_.4} parent=5 // pred_check_branch
        %369 = sbr.rel (%p366) target = $region44
      $region43: #{_lambda_.4} parent=5 // pred_region
        %s370 = ssub.s32 %s27, 1
        %s371 = sand.u32 %s52, 1
        %s372 = scalar_lea.sflag [#allocation3], %s371
        %s373 = sand.u32 %s52, 1
        %s374 = smul.addr %s373, 16
        %s375 = scalar_lea.vmem [#allocation2], %s374
        // Predicated region
        $region45: #{_lambda_.4} parent=43 // pred_check
          %p376 = pneg %p65
        $region46: #{_lambda_.4} parent=43 // pred_check_branch
          %378 = sbr.rel (%p376) target = $region48
        $region47: #{_lambda_.4} parent=43 // pred_region
          %379 = dma.done %s372, 256
        $region48: #{_lambda_.4} parent=43 // pred_fallthru
          _
        %s380 = sand.u32 %s32, 1
        %s381 = scalar_lea.sflag [#allocation6], %s380
        %s382 = sand.u32 %s78, 1
        %s383 = smul.addr %s382, 192
        %s384 = scalar_lea.vmem [#allocation5], %s383
        // Predicated region
        $region49: #{_lambda_.4} parent=43 // pred_check
          %p385 = pneg %p91
        $region50: #{_lambda_.4} parent=43 // pred_check_branch
          %387 = sbr.rel (%p385) target = $region52
        $region51: #{_lambda_.4} parent=43 // pred_region
          %388 = dma.done %s381, 3072
        $region52: #{_lambda_.4} parent=43 // pred_fallthru
          _
        %s389 = sand.u32 %s32, 1
        %s390 = scalar_lea.sflag [#allocation6], %s389
        %s391 = sand.u32 %s104, 1
        %s392 = smul.addr %s391, 64
        %s393 = scalar_lea.vmem [#allocation7], %s392
        // Predicated region
        $region53: #{_lambda_.4} parent=43 // pred_check
          %p394 = pneg %p117
        $region54: #{_lambda_.4} parent=43 // pred_check_branch
          %396 = sbr.rel (%p394) target = $region56
        $region55: #{_lambda_.4} parent=43 // pred_region
          %397 = dma.done %s390, 1024
        $region56: #{_lambda_.4} parent=43 // pred_fallthru
          _
        %s398 = sand.u32 %s32, 1
        %s399 = scalar_lea.sflag [#allocation9], %s398
        %s400 = sand.u32 %s130, 1
        %s401 = smul.addr %s400, 128
        %s402 = scalar_lea.vmem [#allocation8], %s401
        // Predicated region
        $region57: #{_lambda_.4} parent=43 // pred_check
          %p403 = pneg %p143
        $region58: #{_lambda_.4} parent=43 // pred_check_branch
          %405 = sbr.rel (%p403) target = $region60
        $region59: #{_lambda_.4} parent=43 // pred_region
          %406 = dma.done %s399, 2048
        $region60: #{_lambda_.4} parent=43 // pred_fallthru
          _
        %s407 = sand.u32 %s32, 1
        %s408 = scalar_lea.sflag [#allocation9], %s407
        %s409 = sand.u32 %s156, 1
        %s410 = smul.addr %s409, 128
        %s411 = scalar_lea.vmem [#allocation10], %s410
        // Predicated region
        $region61: #{_lambda_.4} parent=43 // pred_check
          %p412 = pneg %p169
        $region62: #{_lambda_.4} parent=43 // pred_check_branch
          %414 = sbr.rel (%p412) target = $region64
        $region63: #{_lambda_.4} parent=43 // pred_region
          %415 = dma.done %s408, 2048
        $region64: #{_lambda_.4} parent=43 // pred_fallthru
          _
        %s416 = sand.u32 %s182, 1
        %s417 = scalar_lea.sflag [#allocation12], %s416
        %s418 = sand.u32 %s182, 1
        %s419 = smul.addr %s418, 24
        %s420 = scalar_lea.vmem [#allocation11], %s419
        // Predicated region
        $region65: #{_lambda_.4} parent=43 // pred_check
          %p421 = pneg %p195
        $region66: #{_lambda_.4} parent=43 // pred_check_branch
          %423 = sbr.rel (%p421) target = $region68
        $region67: #{_lambda_.4} parent=43 // pred_region
          %424 = dma.done %s417, 384
        $region68: #{_lambda_.4} parent=43 // pred_fallthru
          _
        %s425 = sand.u32 %s52, 1
        %s426 = scalar_lea.sflag [#allocation3], %s425
        %s427 = sand.u32 %s52, 1
        %s428 = smul.addr %s427, 16
        %s429 = scalar_lea.vmem [#allocation2], %s428
        %p430 = pneg %p65
        %p431 = pneg %p62
        %s432 = sand.u32 %s32, 1
        %s433 = scalar_lea.sflag [#allocation6], %s432
        %s434 = sand.u32 %s78, 1
        %s435 = smul.addr %s434, 192
        %s436 = scalar_lea.vmem [#allocation5], %s435
        %p437 = pneg %p91
        %p438 = pneg %p88
        %s439 = sand.u32 %s32, 1
        %s440 = scalar_lea.sflag [#allocation6], %s439
        %s441 = sand.u32 %s104, 1
        %s442 = smul.addr %s441, 64
        %s443 = scalar_lea.vmem [#allocation7], %s442
        %p444 = pneg %p117
        %p445 = pneg %p114
        %s446 = sand.u32 %s32, 1
        %s447 = scalar_lea.sflag [#allocation9], %s446
        %s448 = sand.u32 %s130, 1
        %s449 = smul.addr %s448, 128
        %s450 = scalar_lea.vmem [#allocation8], %s449
        %p451 = pneg %p143
        %p452 = pneg %p140
        %s453 = sand.u32 %s32, 1
        %s454 = scalar_lea.sflag [#allocation9], %s453
        %s455 = sand.u32 %s156, 1
        %s456 = smul.addr %s455, 128
        %s457 = scalar_lea.vmem [#allocation10], %s456
        %p458 = pneg %p169
        %p459 = pneg %p166
        %s460 = sand.u32 %s182, 1
        %s461 = scalar_lea.sflag [#allocation12], %s460
        %s462 = sand.u32 %s182, 1
        %s463 = smul.addr %s462, 24
        %s464 = scalar_lea.vmem [#allocation11], %s463
        %p465 = pneg %p195
        %p466 = pneg %p192
        %p467 = pneg %p221
        %p468 = pneg %p218
        %s469 = sand.u32 %s208, 1
        %s470 = scalar_lea.sflag [#allocation4], %s469
        %s471 = sand.u32 %s208, 1
        %s472 = smul.addr %s471, 16
        %s473 = scalar_lea.vmem [#allocation13], %s472
        %p475 = scmp.eq.s32.totalorder %s37, 0
        // Predicated region
        $region69: #{_lambda_.4} parent=43 // pred_check
          %p476 = pneg %p475
        $region70: #{_lambda_.4} parent=43 // pred_check_branch
          %478 = sbr.rel (%p476) target = $region72
        $region71: #{_lambda_.4} parent=43 // pred_region
          %v479 = vld [vmem:[%s375] sm:$0xff]
          %v480 = vld [vmem:[%s375 + $0x8] sm:$0xff]
          %481 = vst [vmem:[%s473] sm:$0xff] %v479
          %482 = vst [vmem:[%s473 + $0x8] sm:$0xff] %v480
        $region72: #{_lambda_.4} parent=43 // pred_fallthru
          _
        %v483 = vld [vmem:[%s420] sm:$0xff]
        %v484 = vld [vmem:[%s420 + $0x8] sm:$0xff]
        %v485 = vld [vmem:[%s420 + $0x10] sm:$0xff]
        %v486 = vld [vmem:[%s384] sm:$0xff]
        %v487 = vld [vmem:[%s384 + $0x8] sm:$0xf]
        %v488 = vld [vmem:[%s384 + $0xc] sm:$0xff]
        %v489 = vld [vmem:[%s384 + $0x14] sm:$0xf]
        %v490 = vld [vmem:[%s384 + $0x18] sm:$0xff]
        %v491 = vld [vmem:[%s384 + $0x20] sm:$0xf]
        %v492 = vld [vmem:[%s384 + $0x24] sm:$0xff]
        %v493 = vld [vmem:[%s384 + $0x2c] sm:$0xf]
        %v494 = vld [vmem:[%s384 + $0x30] sm:$0xff]
        %v495 = vld [vmem:[%s384 + $0x38] sm:$0xf]
        %v496 = vld [vmem:[%s384 + $0x3c] sm:$0xff]
        %v497 = vld [vmem:[%s384 + $0x44] sm:$0xf]
        %v498 = vld [vmem:[%s384 + $0x48] sm:$0xff]
        %v499 = vld [vmem:[%s384 + $0x50] sm:$0xf]
        %v500 = vld [vmem:[%s384 + $0x54] sm:$0xff]
        %v501 = vld [vmem:[%s384 + $0x5c] sm:$0xf]
        %v502 = vld [vmem:[%s384 + $0x60] sm:$0xff]
        %v503 = vld [vmem:[%s384 + $0x68] sm:$0xf]
        %v504 = vld [vmem:[%s384 + $0x6c] sm:$0xff]
        %v505 = vld [vmem:[%s384 + $0x74] sm:$0xf]
        %v506 = vld [vmem:[%s384 + $0x78] sm:$0xff]
        %v507 = vld [vmem:[%s384 + $0x80] sm:$0xf]
        %v508 = vld [vmem:[%s384 + $0x84] sm:$0xff]
        %v509 = vld [vmem:[%s384 + $0x8c] sm:$0xf]
        %v510 = vld [vmem:[%s384 + $0x90] sm:$0xff]
        %v511 = vld [vmem:[%s384 + $0x98] sm:$0xf]
        %v512 = vld [vmem:[%s384 + $0x9c] sm:$0xff]
        %v513 = vld [vmem:[%s384 + $0xa4] sm:$0xf]
        %v514 = vld [vmem:[%s384 + $0xa8] sm:$0xff]
        %v515 = vld [vmem:[%s384 + $0xb0] sm:$0xf]
        %v516 = vld [vmem:[%s384 + $0xb4] sm:$0xff]
        %v517 = vld [vmem:[%s384 + $0xbc] sm:$0xf]
        %v518 = vld [vmem:[%s393] sm:$0xf]
        %v519 = vld [vmem:[%s393 + $0x4] sm:$0xf]
        %v520 = vld [vmem:[%s393 + $0x8] sm:$0xf]
        %v521 = vld [vmem:[%s393 + $0xc] sm:$0xf]
        %v522 = vld [vmem:[%s393 + $0x10] sm:$0xf]
        %v523 = vld [vmem:[%s393 + $0x14] sm:$0xf]
        %v524 = vld [vmem:[%s393 + $0x18] sm:$0xf]
        %v525 = vld [vmem:[%s393 + $0x1c] sm:$0xf]
        %v526 = vld [vmem:[%s393 + $0x20] sm:$0xf]
        %v527 = vld [vmem:[%s393 + $0x24] sm:$0xf]
        %v528 = vld [vmem:[%s393 + $0x28] sm:$0xf]
        %v529 = vld [vmem:[%s393 + $0x2c] sm:$0xf]
        %v530 = vld [vmem:[%s393 + $0x30] sm:$0xf]
        %v531 = vld [vmem:[%s393 + $0x34] sm:$0xf]
        %v532 = vld [vmem:[%s393 + $0x38] sm:$0xf]
        %v533 = vld [vmem:[%s393 + $0x3c] sm:$0xf]
        %v534 = vld [vmem:[%s402] sm:$0xff]
        %v535 = vld [vmem:[%s402 + $0x8] sm:$0xff]
        %v536 = vld [vmem:[%s402 + $0x10] sm:$0xff]
        %v537 = vld [vmem:[%s402 + $0x18] sm:$0xff]
        %v538 = vld [vmem:[%s402 + $0x20] sm:$0xff]
        %v539 = vld [vmem:[%s402 + $0x28] sm:$0xff]
        %v540 = vld [vmem:[%s402 + $0x30] sm:$0xff]
        %v541 = vld [vmem:[%s402 + $0x38] sm:$0xff]
        %v542 = vld [vmem:[%s402 + $0x40] sm:$0xff]
        %v543 = vld [vmem:[%s402 + $0x48] sm:$0xff]
        %v544 = vld [vmem:[%s402 + $0x50] sm:$0xff]
        %v545 = vld [vmem:[%s402 + $0x58] sm:$0xff]
        %v546 = vld [vmem:[%s402 + $0x60] sm:$0xff]
        %v547 = vld [vmem:[%s402 + $0x68] sm:$0xff]
        %v548 = vld [vmem:[%s402 + $0x70] sm:$0xff]
        %v549 = vld [vmem:[%s402 + $0x78] sm:$0xff]
        %v550 = vld [vmem:[%s411] sm:$0xf]
        %v551 = vld [vmem:[%s411 + $0x4] sm:$0xf]
        %v552 = vld [vmem:[%s411 + $0x8] sm:$0xf]
        %v553 = vld [vmem:[%s411 + $0xc] sm:$0xf]
        %v554 = vld [vmem:[%s411 + $0x10] sm:$0xf]
        %v555 = vld [vmem:[%s411 + $0x14] sm:$0xf]
        %v556 = vld [vmem:[%s411 + $0x18] sm:$0xf]
        %v557 = vld [vmem:[%s411 + $0x1c] sm:$0xf]
        %v558 = vld [vmem:[%s411 + $0x20] sm:$0xf]
        %v559 = vld [vmem:[%s411 + $0x24] sm:$0xf]
        %v560 = vld [vmem:[%s411 + $0x28] sm:$0xf]
        %v561 = vld [vmem:[%s411 + $0x2c] sm:$0xf]
        %v562 = vld [vmem:[%s411 + $0x30] sm:$0xf]
        %v563 = vld [vmem:[%s411 + $0x34] sm:$0xf]
        %v564 = vld [vmem:[%s411 + $0x38] sm:$0xf]
        %v565 = vld [vmem:[%s411 + $0x3c] sm:$0xf]
        %v566 = vld [vmem:[%s411 + $0x40] sm:$0xf]
        %v567 = vld [vmem:[%s411 + $0x44] sm:$0xf]
        %v568 = vld [vmem:[%s411 + $0x48] sm:$0xf]
        %v569 = vld [vmem:[%s411 + $0x4c] sm:$0xf]
        %v570 = vld [vmem:[%s411 + $0x50] sm:$0xf]
        %v571 = vld [vmem:[%s411 + $0x54] sm:$0xf]
        %v572 = vld [vmem:[%s411 + $0x58] sm:$0xf]
        %v573 = vld [vmem:[%s411 + $0x5c] sm:$0xf]
        %v574 = vld [vmem:[%s411 + $0x60] sm:$0xf]
        %v575 = vld [vmem:[%s411 + $0x64] sm:$0xf]
        %v576 = vld [vmem:[%s411 + $0x68] sm:$0xf]
        %v577 = vld [vmem:[%s411 + $0x6c] sm:$0xf]
        %v578 = vld [vmem:[%s411 + $0x70] sm:$0xf]
        %v579 = vld [vmem:[%s411 + $0x74] sm:$0xf]
        %v580 = vld [vmem:[%s411 + $0x78] sm:$0xf]
        %v581 = vld [vmem:[%s411 + $0x7c] sm:$0xf]
        %v582 = vld [vmem:[%s473] sm:$0xff]
        %v583 = vld [vmem:[%s473 + $0x8] sm:$0xff]
        %v584 = vpack.c.bf16 %v583, %v582
        %v585 = vlaneseq
        %v586 = vshrl.u32 %v585, 7
        %v587 = vsub.s32 0, %v586
        %v588 = vrot.slane %v483, %v587
        %v589 = vlaneseq
        %v590 = vshrl.u32 %v589, 7
        %v591 = vsub.s32 0, %v590
        %v592 = vrot.slane %v484, %v591
        %v593 = vlaneseq
        %v594 = vshrl.u32 %v593, 7
        %v595 = vsub.s32 0, %v594
        %v596 = vrot.slane %v485, %v595
        %v629 = vunpack.c.l.b16 %v486
        %v630 = vunpack.c.h.b16 %v486
        %v631 = vunpack.c.l.b16 %v487
        %v632 = vunpack.c.l.b16 %v488
        %v633 = vunpack.c.h.b16 %v488
        %v634 = vunpack.c.l.b16 %v489
        %v635 = vunpack.c.l.b16 %v490
        %v636 = vunpack.c.h.b16 %v490
        %v637 = vunpack.c.l.b16 %v491
        %v638 = vunpack.c.l.b16 %v492
        %v639 = vunpack.c.h.b16 %v492
        %v640 = vunpack.c.l.b16 %v493
        %v641 = vunpack.c.l.b16 %v494
        %v642 = vunpack.c.h.b16 %v494
        %v643 = vunpack.c.l.b16 %v495
        %v644 = vunpack.c.l.b16 %v496
        %v645 = vunpack.c.h.b16 %v496
        %v646 = vunpack.c.l.b16 %v497
        %v647 = vunpack.c.l.b16 %v498
        %v648 = vunpack.c.h.b16 %v498
        %v649 = vunpack.c.l.b16 %v499
        %v650 = vunpack.c.l.b16 %v500
        %v651 = vunpack.c.h.b16 %v500
        %v652 = vunpack.c.l.b16 %v501
        %v653 = vunpack.c.l.b16 %v502
        %v654 = vunpack.c.h.b16 %v502
        %v655 = vunpack.c.l.b16 %v503
        %v656 = vunpack.c.l.b16 %v504
        %v657 = vunpack.c.h.b16 %v504
        %v658 = vunpack.c.l.b16 %v505
        %v659 = vunpack.c.l.b16 %v506
        %v660 = vunpack.c.h.b16 %v506
        %v661 = vunpack.c.l.b16 %v507
        %v662 = vunpack.c.l.b16 %v508
        %v663 = vunpack.c.h.b16 %v508
        %v664 = vunpack.c.l.b16 %v509
        %v665 = vunpack.c.l.b16 %v510
        %v666 = vunpack.c.h.b16 %v510
        %v667 = vunpack.c.l.b16 %v511
        %v668 = vunpack.c.l.b16 %v512
        %v669 = vunpack.c.h.b16 %v512
        %v670 = vunpack.c.l.b16 %v513
        %v671 = vunpack.c.l.b16 %v514
        %v672 = vunpack.c.h.b16 %v514
        %v673 = vunpack.c.l.b16 %v515
        %v674 = vunpack.c.l.b16 %v516
        %v675 = vunpack.c.h.b16 %v516
        %v676 = vunpack.c.l.b16 %v517
        %v677 = vpack.c.b16 %v632, %v629
        %v678 = vpack.c.b16 %v633, %v630
        %v679 = vpack.c.b16 %v634, %v631
        %v680 = vpack.c.b16 %v638, %v635
        %v681 = vpack.c.b16 %v639, %v636
        %v682 = vpack.c.b16 %v640, %v637
        %v683 = vpack.c.b16 %v644, %v641
        %v684 = vpack.c.b16 %v645, %v642
        %v685 = vpack.c.b16 %v646, %v643
        %v686 = vpack.c.b16 %v650, %v647
        %v687 = vpack.c.b16 %v651, %v648
        %v688 = vpack.c.b16 %v652, %v649
        %v689 = vpack.c.b16 %v656, %v653
        %v690 = vpack.c.b16 %v657, %v654
        %v691 = vpack.c.b16 %v658, %v655
        %v692 = vpack.c.b16 %v662, %v659
        %v693 = vpack.c.b16 %v663, %v660
        %v694 = vpack.c.b16 %v664, %v661
        %v695 = vpack.c.b16 %v668, %v665
        %v696 = vpack.c.b16 %v669, %v666
        %v697 = vpack.c.b16 %v670, %v667
        %v698 = vpack.c.b16 %v674, %v671
        %v699 = vpack.c.b16 %v675, %v672
        %v700 = vpack.c.b16 %v676, %v673
        %725 = vmatprep.subr.bf16.mxu0 %v678
        %726 = vmatpush1.bf16.msra.mxu0 %v677
        %727 = vmatprep.subr.bf16.mxu0 %v681
        %728 = vmatpush1.bf16.msra.mxu0 %v680
        %729 = vmatprep.subr.bf16.mxu0 %v684
        %730 = vmatpush1.bf16.msra.mxu0 %v683
        %731 = vmatprep.subr.bf16.mxu0 %v687
        %732 = vmatpush1.bf16.msra.mxu0 %v686
        %733 = vmatprep.subr.bf16.mxu0 %v690
        %734 = vmatpush1.bf16.msra.mxu0 %v689
        %735 = vmatprep.subr.bf16.mxu0 %v693
        %736 = vmatpush1.bf16.msra.mxu0 %v692
        %737 = vmatprep.subr.bf16.mxu0 %v696
        %738 = vmatpush1.bf16.msra.mxu0 %v695
        %739 = vmatprep.subr.bf16.mxu0 %v699
        %740 = vmatpush1.bf16.msra.mxu0 %v698
        %741 = vmatprep.subr.bf16.mxu0 0
        %742 = vmatpush1.bf16.msra.mxu0 0
        %743 = vmatprep.subr.bf16.mxu0 0
        %744 = vmatpush1.bf16.msra.mxu0 0
        %745 = vmatprep.subr.bf16.mxu0 0
        %746 = vmatpush1.bf16.msra.mxu0 0
        %747 = vmatprep.subr.bf16.mxu0 0
        %748 = vmatpush1.bf16.msra.mxu0 0
        %749 = vmatprep.subr.bf16.mxu0 0
        %750 = vmatpush1.bf16.msra.mxu0 0
        %751 = vmatprep.subr.bf16.mxu0 0
        %752 = vmatpush1.bf16.msra.mxu0 0
        %753 = vmatprep.subr.bf16.mxu0 0
        %754 = vmatpush1.bf16.msra.mxu0 0
        %755 = vmatprep.subr.bf16.mxu0 0
        %756 = vmatpush1.bf16.msra.mxu0 0
        %757 = vmatprep.mubr.bf16.mxu0 0
        %758 = vmatmul.mubr.bf16.gmra.mrb[0].mxu0 %v584
        %v759 = vpop.f32.mrb[0].mxu0
        %v760 = vadd.f32 %v588, %v759
        %v761 = vpop.f32.mrb[0].mxu0
        %v762 = vadd.f32 %v592, %v761
        %v763 = vpop.f32.mrb[0].mxu0
        %v764 = vadd.f32 %v588, %v763
        %v765 = vpop.f32.mrb[0].mxu0
        %v766 = vadd.f32 %v592, %v765
        %767 = vdwg.mxu0
        %768 = vmatprep.subr.bf16.mxu0 0
        %769 = vmatpush1.bf16.msra.mxu0 %v679
        %770 = vmatprep.subr.bf16.mxu0 0
        %771 = vmatpush1.bf16.msra.mxu0 %v682
        %772 = vmatprep.subr.bf16.mxu0 0
        %773 = vmatpush1.bf16.msra.mxu0 %v685
        %774 = vmatprep.subr.bf16.mxu0 0
        %775 = vmatpush1.bf16.msra.mxu0 %v688
        %776 = vmatprep.subr.bf16.mxu0 0
        %777 = vmatpush1.bf16.msra.mxu0 %v691
        %778 = vmatprep.subr.bf16.mxu0 0
        %779 = vmatpush1.bf16.msra.mxu0 %v694
        %780 = vmatprep.subr.bf16.mxu0 0
        %781 = vmatpush1.bf16.msra.mxu0 %v697
        %782 = vmatprep.subr.bf16.mxu0 0
        %783 = vmatpush1.bf16.msra.mxu0 %v700
        %784 = vmatprep.subr.bf16.mxu0 0
        %785 = vmatpush1.bf16.msra.mxu0 0
        %786 = vmatprep.subr.bf16.mxu0 0
        %787 = vmatpush1.bf16.msra.mxu0 0
        %788 = vmatprep.subr.bf16.mxu0 0
        %789 = vmatpush1.bf16.msra.mxu0 0
        %790 = vmatprep.subr.bf16.mxu0 0
        %791 = vmatpush1.bf16.msra.mxu0 0
        %792 = vmatprep.subr.bf16.mxu0 0
        %793 = vmatpush1.bf16.msra.mxu0 0
        %794 = vmatprep.subr.bf16.mxu0 0
        %795 = vmatpush1.bf16.msra.mxu0 0
        %796 = vmatprep.subr.bf16.mxu0 0
        %797 = vmatpush1.bf16.msra.mxu0 0
        %798 = vmatprep.subr.bf16.mxu0 0
        %799 = vmatpush1.bf16.msra.mxu0 0
        %800 = vmatprep.mubr.bf16.mxu0 0
        %801 = vmatmul.mubr.bf16.gmra.mrb[0].mxu0 %v584
        %v802 = vpop.f32.mrb[0].mxu0
        %v803 = vadd.f32 %v596, %v802
        %v804 = vpop.f32.mrb[0].mxu0
        %v805 = vpop.f32.mrb[0].mxu0
        %v806 = vadd.f32 %v596, %v805
        %v807 = vpop.f32.mrb[0].mxu0
        %808 = vdwg.mxu0
        %811 = vrot.lane.b32.xlu0 %v760, 64
        %v812 = vpop.permute.xlu0 %811
        %813 = vrot.lane.b32.xlu0 %v764, 64
        %v814 = vpop.permute.xlu0 %813
        %v817 = vcombine.high %v760, 0.0
        %v819 = vunpack.c.l.s4 1983009808
        %v820 = vunpack.c.0.s8 %v819
        %v821 = vlaneseq
        %v822 = vshrl.u32 %v821, 7
        %v823 = vsub.s32 %v820, %v822
        %v824 = vrot.slane %v760, %v823
        %v826 = vunpack.c.l.s4 1983009808
        %v827 = vunpack.c.0.s8 %v826
        %v828 = vlaneseq
        %v829 = vshrl.u32 %v828, 7
        %v830 = vsub.s32 %v827, %v829
        %v831 = vrot.slane %v817, %v830
        %v832 = vcombine.high %v812, 0.0
        %v834 = vunpack.c.l.s4 1983009808
        %v835 = vunpack.c.0.s8 %v834
        %v836 = vlaneseq
        %v837 = vshrl.u32 %v836, 7
        %v838 = vsub.s32 %v835, %v837
        %v839 = vrot.slane %v812, %v838
        %v841 = vunpack.c.l.s4 1983009808
        %v842 = vunpack.c.0.s8 %v841
        %v843 = vlaneseq
        %v844 = vshrl.u32 %v843, 7
        %v845 = vsub.s32 %v842, %v844
        %v846 = vrot.slane %v832, %v845
        %v847 = vcombine.low %v824, %v839
        %v848 = vcombine.high %v824, %v839
        %v850 = vunpack.c.l.s4 1934713408
        %v851 = vunpack.c.0.s8 %v850
        %v852 = vlaneseq
        %v853 = vshrl.u32 %v852, 7
        %v854 = vsub.s32 %v851, %v853
        %v855 = vrot.slane %v847, %v854
        %v857 = vunpack.c.l.s4 1934713408
        %v858 = vunpack.c.0.s8 %v857
        %v859 = vlaneseq
        %v860 = vshrl.u32 %v859, 7
        %v861 = vsub.s32 %v858, %v860
        %v862 = vrot.slane %v848, %v861
        %v863 = vcombine.low %v831, %v846
        %v864 = vcombine.high %v831, %v846
        %v866 = vunpack.c.l.s4 1934713408
        %v867 = vunpack.c.0.s8 %v866
        %v868 = vlaneseq
        %v869 = vshrl.u32 %v868, 7
        %v870 = vsub.s32 %v867, %v869
        %v871 = vrot.slane %v863, %v870
        %v873 = vunpack.c.l.s4 1934713408
        %v874 = vunpack.c.0.s8 %v873
        %v875 = vlaneseq
        %v876 = vshrl.u32 %v875, 7
        %v877 = vsub.s32 %v874, %v876
        %v878 = vrot.slane %v864, %v877
        %v879 = vcombine.high %v855, 0.0
        %v880 = vcombine.high %v862, 0.0
        %v881 = vcombine.high %v871, 0.0
        %v882 = vcombine.high %v878, 0.0
        %v883 = vcombine.high %v764, 0.0
        %v885 = vunpack.c.l.s4 1983009808
        %v886 = vunpack.c.0.s8 %v885
        %v887 = vlaneseq
        %v888 = vshrl.u32 %v887, 7
        %v889 = vsub.s32 %v886, %v888
        %v890 = vrot.slane %v764, %v889
        %v892 = vunpack.c.l.s4 1983009808
        %v893 = vunpack.c.0.s8 %v892
        %v894 = vlaneseq
        %v895 = vshrl.u32 %v894, 7
        %v896 = vsub.s32 %v893, %v895
        %v897 = vrot.slane %v883, %v896
        %v898 = vcombine.high %v814, 0.0
        %v900 = vunpack.c.l.s4 1983009808
        %v901 = vunpack.c.0.s8 %v900
        %v902 = vlaneseq
        %v903 = vshrl.u32 %v902, 7
        %v904 = vsub.s32 %v901, %v903
        %v905 = vrot.slane %v814, %v904
        %v907 = vunpack.c.l.s4 1983009808
        %v908 = vunpack.c.0.s8 %v907
        %v909 = vlaneseq
        %v910 = vshrl.u32 %v909, 7
        %v911 = vsub.s32 %v908, %v910
        %v912 = vrot.slane %v898, %v911
        %v913 = vcombine.low %v890, %v905
        %v914 = vcombine.high %v890, %v905
        %v916 = vunpack.c.l.s4 1934713408
        %v917 = vunpack.c.0.s8 %v916
        %v918 = vlaneseq
        %v919 = vshrl.u32 %v918, 7
        %v920 = vsub.s32 %v917, %v919
        %v921 = vrot.slane %v913, %v920
        %v923 = vunpack.c.l.s4 1934713408
        %v924 = vunpack.c.0.s8 %v923
        %v925 = vlaneseq
        %v926 = vshrl.u32 %v925, 7
        %v927 = vsub.s32 %v924, %v926
        %v928 = vrot.slane %v914, %v927
        %v929 = vcombine.low %v897, %v912
        %v930 = vcombine.high %v897, %v912
        %v932 = vunpack.c.l.s4 1934713408
        %v933 = vunpack.c.0.s8 %v932
        %v934 = vlaneseq
        %v935 = vshrl.u32 %v934, 7
        %v936 = vsub.s32 %v933, %v935
        %v937 = vrot.slane %v929, %v936
        %v939 = vunpack.c.l.s4 1934713408
        %v940 = vunpack.c.0.s8 %v939
        %v941 = vlaneseq
        %v942 = vshrl.u32 %v941, 7
        %v943 = vsub.s32 %v940, %v942
        %v944 = vrot.slane %v930, %v943
        %v945 = vcombine.high %v921, 0.0
        %v946 = vcombine.high %v928, 0.0
        %v947 = vcombine.high %v937, 0.0
        %v948 = vcombine.high %v944, 0.0
        %951 = vrot.lane.b32.xlu0 %v762, 64
        %v952 = vpop.permute.xlu0 %951
        %953 = vrot.lane.b32.xlu0 %v766, 64
        %v954 = vpop.permute.xlu0 %953
        %v957 = vcombine.high %v762, 0.0
        %v959 = vunpack.c.l.s4 1983009808
        %v960 = vunpack.c.0.s8 %v959
        %v961 = vlaneseq
        %v962 = vshrl.u32 %v961, 7
        %v963 = vsub.s32 %v960, %v962
        %v964 = vrot.slane %v762, %v963
        %v966 = vunpack.c.l.s4 1983009808
        %v967 = vunpack.c.0.s8 %v966
        %v968 = vlaneseq
        %v969 = vshrl.u32 %v968, 7
        %v970 = vsub.s32 %v967, %v969
        %v971 = vrot.slane %v957, %v970
        %v972 = vcombine.high %v952, 0.0
        %v974 = vunpack.c.l.s4 1983009808
        %v975 = vunpack.c.0.s8 %v974
        %v976 = vlaneseq
        %v977 = vshrl.u32 %v976, 7
        %v978 = vsub.s32 %v975, %v977
        %v979 = vrot.slane %v952, %v978
        %v981 = vunpack.c.l.s4 1983009808
        %v982 = vunpack.c.0.s8 %v981
        %v983 = vlaneseq
        %v984 = vshrl.u32 %v983, 7
        %v985 = vsub.s32 %v982, %v984
        %v986 = vrot.slane %v972, %v985
        %v987 = vcombine.low %v964, %v979
        %v988 = vcombine.high %v964, %v979
        %v990 = vunpack.c.l.s4 1934713408
        %v991 = vunpack.c.0.s8 %v990
        %v992 = vlaneseq
        %v993 = vshrl.u32 %v992, 7
        %v994 = vsub.s32 %v991, %v993
        %v995 = vrot.slane %v987, %v994
        %v997 = vunpack.c.l.s4 1934713408
        %v998 = vunpack.c.0.s8 %v997
        %v999 = vlaneseq
        %v1000 = vshrl.u32 %v999, 7
        %v1001 = vsub.s32 %v998, %v1000
        %v1002 = vrot.slane %v988, %v1001
        %v1003 = vcombine.low %v971, %v986
        %v1004 = vcombine.high %v971, %v986
        %v1006 = vunpack.c.l.s4 1934713408
        %v1007 = vunpack.c.0.s8 %v1006
        %v1008 = vlaneseq
        %v1009 = vshrl.u32 %v1008, 7
        %v1010 = vsub.s32 %v1007, %v1009
        %v1011 = vrot.slane %v1003, %v1010
        %v1013 = vunpack.c.l.s4 1934713408
        %v1014 = vunpack.c.0.s8 %v1013
        %v1015 = vlaneseq
        %v1016 = vshrl.u32 %v1015, 7
        %v1017 = vsub.s32 %v1014, %v1016
        %v1018 = vrot.slane %v1004, %v1017
        %v1019 = vcombine.high %v995, 0.0
        %v1020 = vcombine.high %v1002, 0.0
        %v1021 = vcombine.high %v1011, 0.0
        %v1022 = vcombine.high %v1018, 0.0
        %v1023 = vcombine.high %v766, 0.0
        %v1025 = vunpack.c.l.s4 1983009808
        %v1026 = vunpack.c.0.s8 %v1025
        %v1027 = vlaneseq
        %v1028 = vshrl.u32 %v1027, 7
        %v1029 = vsub.s32 %v1026, %v1028
        %v1030 = vrot.slane %v766, %v1029
        %v1032 = vunpack.c.l.s4 1983009808
        %v1033 = vunpack.c.0.s8 %v1032
        %v1034 = vlaneseq
        %v1035 = vshrl.u32 %v1034, 7
        %v1036 = vsub.s32 %v1033, %v1035
        %v1037 = vrot.slane %v1023, %v1036
        %v1038 = vcombine.high %v954, 0.0
        %v1040 = vunpack.c.l.s4 1983009808
        %v1041 = vunpack.c.0.s8 %v1040
        %v1042 = vlaneseq
        %v1043 = vshrl.u32 %v1042, 7
        %v1044 = vsub.s32 %v1041, %v1043
        %v1045 = vrot.slane %v954, %v1044
        %v1047 = vunpack.c.l.s4 1983009808
        %v1048 = vunpack.c.0.s8 %v1047
        %v1049 = vlaneseq
        %v1050 = vshrl.u32 %v1049, 7
        %v1051 = vsub.s32 %v1048, %v1050
        %v1052 = vrot.slane %v1038, %v1051
        %v1053 = vcombine.low %v1030, %v1045
        %v1054 = vcombine.high %v1030, %v1045
        %v1056 = vunpack.c.l.s4 1934713408
        %v1057 = vunpack.c.0.s8 %v1056
        %v1058 = vlaneseq
        %v1059 = vshrl.u32 %v1058, 7
        %v1060 = vsub.s32 %v1057, %v1059
        %v1061 = vrot.slane %v1053, %v1060
        %v1063 = vunpack.c.l.s4 1934713408
        %v1064 = vunpack.c.0.s8 %v1063
        %v1065 = vlaneseq
        %v1066 = vshrl.u32 %v1065, 7
        %v1067 = vsub.s32 %v1064, %v1066
        %v1068 = vrot.slane %v1054, %v1067
        %v1069 = vcombine.low %v1037, %v1052
        %v1070 = vcombine.high %v1037, %v1052
        %v1072 = vunpack.c.l.s4 1934713408
        %v1073 = vunpack.c.0.s8 %v1072
        %v1074 = vlaneseq
        %v1075 = vshrl.u32 %v1074, 7
        %v1076 = vsub.s32 %v1073, %v1075
        %v1077 = vrot.slane %v1069, %v1076
        %v1079 = vunpack.c.l.s4 1934713408
        %v1080 = vunpack.c.0.s8 %v1079
        %v1081 = vlaneseq
        %v1082 = vshrl.u32 %v1081, 7
        %v1083 = vsub.s32 %v1080, %v1082
        %v1084 = vrot.slane %v1070, %v1083
        %v1085 = vcombine.high %v1061, 0.0
        %v1086 = vcombine.high %v1068, 0.0
        %v1087 = vcombine.high %v1077, 0.0
        %v1088 = vcombine.high %v1084, 0.0
        %1091 = vrot.lane.b32.xlu0 %v803, 64
        %v1092 = vpop.permute.xlu0 %1091
        %1093 = vrot.lane.b32.xlu0 %v806, 64
        %v1094 = vpop.permute.xlu0 %1093
        %v1097 = vcombine.high %v803, 0.0
        %v1099 = vunpack.c.l.s4 1983009808
        %v1100 = vunpack.c.0.s8 %v1099
        %v1101 = vlaneseq
        %v1102 = vshrl.u32 %v1101, 7
        %v1103 = vsub.s32 %v1100, %v1102
        %v1104 = vrot.slane %v803, %v1103
        %v1106 = vunpack.c.l.s4 1983009808
        %v1107 = vunpack.c.0.s8 %v1106
        %v1108 = vlaneseq
        %v1109 = vshrl.u32 %v1108, 7
        %v1110 = vsub.s32 %v1107, %v1109
        %v1111 = vrot.slane %v1097, %v1110
        %v1112 = vcombine.high %v1092, 0.0
        %v1114 = vunpack.c.l.s4 1983009808
        %v1115 = vunpack.c.0.s8 %v1114
        %v1116 = vlaneseq
        %v1117 = vshrl.u32 %v1116, 7
        %v1118 = vsub.s32 %v1115, %v1117
        %v1119 = vrot.slane %v1092, %v1118
        %v1121 = vunpack.c.l.s4 1983009808
        %v1122 = vunpack.c.0.s8 %v1121
        %v1123 = vlaneseq
        %v1124 = vshrl.u32 %v1123, 7
        %v1125 = vsub.s32 %v1122, %v1124
        %v1126 = vrot.slane %v1112, %v1125
        %v1127 = vcombine.low %v1104, %v1119
        %v1128 = vcombine.high %v1104, %v1119
        %v1130 = vunpack.c.l.s4 1934713408
        %v1131 = vunpack.c.0.s8 %v1130
        %v1132 = vlaneseq
        %v1133 = vshrl.u32 %v1132, 7
        %v1134 = vsub.s32 %v1131, %v1133
        %v1135 = vrot.slane %v1127, %v1134
        %v1137 = vunpack.c.l.s4 1934713408
        %v1138 = vunpack.c.0.s8 %v1137
        %v1139 = vlaneseq
        %v1140 = vshrl.u32 %v1139, 7
        %v1141 = vsub.s32 %v1138, %v1140
        %v1142 = vrot.slane %v1128, %v1141
        %v1143 = vcombine.low %v1111, %v1126
        %v1144 = vcombine.high %v1111, %v1126
        %v1146 = vunpack.c.l.s4 1934713408
        %v1147 = vunpack.c.0.s8 %v1146
        %v1148 = vlaneseq
        %v1149 = vshrl.u32 %v1148, 7
        %v1150 = vsub.s32 %v1147, %v1149
        %v1151 = vrot.slane %v1143, %v1150
        %v1153 = vunpack.c.l.s4 1934713408
        %v1154 = vunpack.c.0.s8 %v1153
        %v1155 = vlaneseq
        %v1156 = vshrl.u32 %v1155, 7
        %v1157 = vsub.s32 %v1154, %v1156
        %v1158 = vrot.slane %v1144, %v1157
        %v1159 = vcombine.high %v1135, 0.0
        %v1160 = vcombine.high %v1142, 0.0
        %v1161 = vcombine.high %v1151, 0.0
        %v1162 = vcombine.high %v1158, 0.0
        %v1163 = vcombine.high %v806, 0.0
        %v1165 = vunpack.c.l.s4 1983009808
        %v1166 = vunpack.c.0.s8 %v1165
        %v1167 = vlaneseq
        %v1168 = vshrl.u32 %v1167, 7
        %v1169 = vsub.s32 %v1166, %v1168
        %v1170 = vrot.slane %v806, %v1169
        %v1172 = vunpack.c.l.s4 1983009808
        %v1173 = vunpack.c.0.s8 %v1172
        %v1174 = vlaneseq
        %v1175 = vshrl.u32 %v1174, 7
        %v1176 = vsub.s32 %v1173, %v1175
        %v1177 = vrot.slane %v1163, %v1176
        %v1178 = vcombine.high %v1094, 0.0
        %v1180 = vunpack.c.l.s4 1983009808
        %v1181 = vunpack.c.0.s8 %v1180
        %v1182 = vlaneseq
        %v1183 = vshrl.u32 %v1182, 7
        %v1184 = vsub.s32 %v1181, %v1183
        %v1185 = vrot.slane %v1094, %v1184
        %v1187 = vunpack.c.l.s4 1983009808
        %v1188 = vunpack.c.0.s8 %v1187
        %v1189 = vlaneseq
        %v1190 = vshrl.u32 %v1189, 7
        %v1191 = vsub.s32 %v1188, %v1190
        %v1192 = vrot.slane %v1178, %v1191
        %v1193 = vcombine.low %v1170, %v1185
        %v1194 = vcombine.high %v1170, %v1185
        %v1196 = vunpack.c.l.s4 1934713408
        %v1197 = vunpack.c.0.s8 %v1196
        %v1198 = vlaneseq
        %v1199 = vshrl.u32 %v1198, 7
        %v1200 = vsub.s32 %v1197, %v1199
        %v1201 = vrot.slane %v1193, %v1200
        %v1203 = vunpack.c.l.s4 1934713408
        %v1204 = vunpack.c.0.s8 %v1203
        %v1205 = vlaneseq
        %v1206 = vshrl.u32 %v1205, 7
        %v1207 = vsub.s32 %v1204, %v1206
        %v1208 = vrot.slane %v1194, %v1207
        %v1209 = vcombine.low %v1177, %v1192
        %v1210 = vcombine.high %v1177, %v1192
        %v1212 = vunpack.c.l.s4 1934713408
        %v1213 = vunpack.c.0.s8 %v1212
        %v1214 = vlaneseq
        %v1215 = vshrl.u32 %v1214, 7
        %v1216 = vsub.s32 %v1213, %v1215
        %v1217 = vrot.slane %v1209, %v1216
        %v1219 = vunpack.c.l.s4 1934713408
        %v1220 = vunpack.c.0.s8 %v1219
        %v1221 = vlaneseq
        %v1222 = vshrl.u32 %v1221, 7
        %v1223 = vsub.s32 %v1220, %v1222
        %v1224 = vrot.slane %v1210, %v1223
        %v1225 = vcombine.high %v1201, 0.0
        %v1226 = vcombine.high %v1208, 0.0
        %v1227 = vcombine.high %v1217, 0.0
        %v1228 = vcombine.high %v1224, 0.0
        %v1245 = vrot.slane %v855, 1
        %v1246 = vrot.slane %v879, 1
        %v1247 = vrot.slane %v862, 1
        %v1248 = vrot.slane %v880, 1
        %v1249 = vrot.slane %v871, 1
        %v1250 = vrot.slane %v881, 1
        %v1251 = vrot.slane %v878, 1
        %v1252 = vrot.slane %v882, 1
        %v1253 = vrot.slane %v921, 1
        %v1254 = vrot.slane %v945, 1
        %v1255 = vrot.slane %v928, 1
        %v1256 = vrot.slane %v946, 1
        %v1257 = vrot.slane %v937, 1
        %v1258 = vrot.slane %v947, 1
        %v1259 = vrot.slane %v944, 1
        %v1260 = vrot.slane %v948, 1
        %v1277 = vpack.c.bf16 %v855, %v855
        %v1278 = vpack.c.bf16 %v879, %v879
        %v1279 = vpack.c.bf16 %v862, %v862
        %v1280 = vpack.c.bf16 %v880, %v880
        %v1281 = vpack.c.bf16 %v871, %v871
        %v1282 = vpack.c.bf16 %v881, %v881
        %v1283 = vpack.c.bf16 %v878, %v878
        %v1284 = vpack.c.bf16 %v882, %v882
        %v1285 = vpack.c.bf16 %v921, %v921
        %v1286 = vpack.c.bf16 %v945, %v945
        %v1287 = vpack.c.bf16 %v928, %v928
        %v1288 = vpack.c.bf16 %v946, %v946
        %v1289 = vpack.c.bf16 %v937, %v937
        %v1290 = vpack.c.bf16 %v947, %v947
        %v1291 = vpack.c.bf16 %v944, %v944
        %v1292 = vpack.c.bf16 %v948, %v948
        %v1293 = vpack.c.bf16 %v1245, %v1245
        %v1294 = vpack.c.bf16 %v1246, %v1246
        %v1295 = vpack.c.bf16 %v1247, %v1247
        %v1296 = vpack.c.bf16 %v1248, %v1248
        %v1297 = vpack.c.bf16 %v1249, %v1249
        %v1298 = vpack.c.bf16 %v1250, %v1250
        %v1299 = vpack.c.bf16 %v1251, %v1251
        %v1300 = vpack.c.bf16 %v1252, %v1252
        %v1301 = vpack.c.bf16 %v1253, %v1253
        %v1302 = vpack.c.bf16 %v1254, %v1254
        %v1303 = vpack.c.bf16 %v1255, %v1255
        %v1304 = vpack.c.bf16 %v1256, %v1256
        %v1305 = vpack.c.bf16 %v1257, %v1257
        %v1306 = vpack.c.bf16 %v1258, %v1258
        %v1307 = vpack.c.bf16 %v1259, %v1259
        %v1308 = vpack.c.bf16 %v1260, %v1260
        %v1325 = vrot.slane %v995, 1
        %v1326 = vrot.slane %v1019, 1
        %v1327 = vrot.slane %v1002, 1
        %v1328 = vrot.slane %v1020, 1
        %v1329 = vrot.slane %v1011, 1
        %v1330 = vrot.slane %v1021, 1
        %v1331 = vrot.slane %v1018, 1
        %v1332 = vrot.slane %v1022, 1
        %v1333 = vrot.slane %v1061, 1
        %v1334 = vrot.slane %v1085, 1
        %v1335 = vrot.slane %v1068, 1
        %v1336 = vrot.slane %v1086, 1
        %v1337 = vrot.slane %v1077, 1
        %v1338 = vrot.slane %v1087, 1
        %v1339 = vrot.slane %v1084, 1
        %v1340 = vrot.slane %v1088, 1
        %v1357 = vpack.c.bf16 %v995, %v995
        %v1358 = vpack.c.bf16 %v1019, %v1019
        %v1359 = vpack.c.bf16 %v1002, %v1002
        %v1360 = vpack.c.bf16 %v1020, %v1020
        %v1361 = vpack.c.bf16 %v1011, %v1011
        %v1362 = vpack.c.bf16 %v1021, %v1021
        %v1363 = vpack.c.bf16 %v1018, %v1018
        %v1364 = vpack.c.bf16 %v1022, %v1022
        %v1365 = vpack.c.bf16 %v1061, %v1061
        %v1366 = vpack.c.bf16 %v1085, %v1085
        %v1367 = vpack.c.bf16 %v1068, %v1068
        %v1368 = vpack.c.bf16 %v1086, %v1086
        %v1369 = vpack.c.bf16 %v1077, %v1077
        %v1370 = vpack.c.bf16 %v1087, %v1087
        %v1371 = vpack.c.bf16 %v1084, %v1084
        %v1372 = vpack.c.bf16 %v1088, %v1088
        %v1373 = vpack.c.bf16 %v1325, %v1325
        %v1374 = vpack.c.bf16 %v1326, %v1326
        %v1375 = vpack.c.bf16 %v1327, %v1327
        %v1376 = vpack.c.bf16 %v1328, %v1328
        %v1377 = vpack.c.bf16 %v1329, %v1329
        %v1378 = vpack.c.bf16 %v1330, %v1330
        %v1379 = vpack.c.bf16 %v1331, %v1331
        %v1380 = vpack.c.bf16 %v1332, %v1332
        %v1381 = vpack.c.bf16 %v1333, %v1333
        %v1382 = vpack.c.bf16 %v1334, %v1334
        %v1383 = vpack.c.bf16 %v1335, %v1335
        %v1384 = vpack.c.bf16 %v1336, %v1336
        %v1385 = vpack.c.bf16 %v1337, %v1337
        %v1386 = vpack.c.bf16 %v1338, %v1338
        %v1387 = vpack.c.bf16 %v1339, %v1339
        %v1388 = vpack.c.bf16 %v1340, %v1340
        %v1405 = vrot.slane %v1135, 1
        %v1406 = vrot.slane %v1159, 1
        %v1407 = vrot.slane %v1142, 1
        %v1408 = vrot.slane %v1160, 1
        %v1409 = vrot.slane %v1151, 1
        %v1410 = vrot.slane %v1161, 1
        %v1411 = vrot.slane %v1158, 1
        %v1412 = vrot.slane %v1162, 1
        %v1413 = vrot.slane %v1201, 1
        %v1414 = vrot.slane %v1225, 1
        %v1415 = vrot.slane %v1208, 1
        %v1416 = vrot.slane %v1226, 1
        %v1417 = vrot.slane %v1217, 1
        %v1418 = vrot.slane %v1227, 1
        %v1419 = vrot.slane %v1224, 1
        %v1420 = vrot.slane %v1228, 1
        %v1437 = vpack.c.bf16 %v1135, %v1135
        %v1438 = vpack.c.bf16 %v1159, %v1159
        %v1439 = vpack.c.bf16 %v1142, %v1142
        %v1440 = vpack.c.bf16 %v1160, %v1160
        %v1441 = vpack.c.bf16 %v1151, %v1151
        %v1442 = vpack.c.bf16 %v1161, %v1161
        %v1443 = vpack.c.bf16 %v1158, %v1158
        %v1444 = vpack.c.bf16 %v1162, %v1162
        %v1445 = vpack.c.bf16 %v1201, %v1201
        %v1446 = vpack.c.bf16 %v1225, %v1225
        %v1447 = vpack.c.bf16 %v1208, %v1208
        %v1448 = vpack.c.bf16 %v1226, %v1226
        %v1449 = vpack.c.bf16 %v1217, %v1217
        %v1450 = vpack.c.bf16 %v1227, %v1227
        %v1451 = vpack.c.bf16 %v1224, %v1224
        %v1452 = vpack.c.bf16 %v1228, %v1228
        %v1453 = vpack.c.bf16 %v1405, %v1405
        %v1454 = vpack.c.bf16 %v1406, %v1406
        %v1455 = vpack.c.bf16 %v1407, %v1407
        %v1456 = vpack.c.bf16 %v1408, %v1408
        %v1457 = vpack.c.bf16 %v1409, %v1409
        %v1458 = vpack.c.bf16 %v1410, %v1410
        %v1459 = vpack.c.bf16 %v1411, %v1411
        %v1460 = vpack.c.bf16 %v1412, %v1412
        %v1461 = vpack.c.bf16 %v1413, %v1413
        %v1462 = vpack.c.bf16 %v1414, %v1414
        %v1463 = vpack.c.bf16 %v1415, %v1415
        %v1464 = vpack.c.bf16 %v1416, %v1416
        %v1465 = vpack.c.bf16 %v1417, %v1417
        %v1466 = vpack.c.bf16 %v1418, %v1418
        %v1467 = vpack.c.bf16 %v1419, %v1419
        %v1468 = vpack.c.bf16 %v1420, %v1420
        %v1485 = vunpack.c.l.b16 %v1277
        %v1486 = vunpack.c.l.b16 %v1278
        %v1487 = vunpack.c.l.b16 %v1279
        %v1488 = vunpack.c.l.b16 %v1280
        %v1489 = vunpack.c.l.b16 %v1281
        %v1490 = vunpack.c.l.b16 %v1282
        %v1491 = vunpack.c.l.b16 %v1283
        %v1492 = vunpack.c.l.b16 %v1284
        %v1493 = vunpack.c.l.b16 %v1285
        %v1494 = vunpack.c.l.b16 %v1286
        %v1495 = vunpack.c.l.b16 %v1287
        %v1496 = vunpack.c.l.b16 %v1288
        %v1497 = vunpack.c.l.b16 %v1289
        %v1498 = vunpack.c.l.b16 %v1290
        %v1499 = vunpack.c.l.b16 %v1291
        %v1500 = vunpack.c.l.b16 %v1292
        %v1501 = vrot.slane %v1486, 7
        %vm1502 = vcmask 1041409
        %v1503 = vsel %vm1502, %v1501, %v1485
        %v1504 = vrot.slane %v1487, 6
        %vm1505 = vcmask 1042434
        %v1506 = vsel %vm1505, %v1504, %v1503
        %v1507 = vrot.slane %v1488, 5
        %vm1508 = vcmask 1043459
        %v1509 = vsel %vm1508, %v1507, %v1506
        %v1510 = vrot.slane %v1489, 4
        %vm1511 = vcmask 1044484
        %v1512 = vsel %vm1511, %v1510, %v1509
        %v1513 = vrot.slane %v1490, 3
        %vm1514 = vcmask 1045509
        %v1515 = vsel %vm1514, %v1513, %v1512
        %v1516 = vrot.slane %v1491, 2
        %vm1517 = vcmask 1046534
        %v1518 = vsel %vm1517, %v1516, %v1515
        %v1519 = vrot.slane %v1492, 1
        %vm1520 = vcmask 1047559
        %v1521 = vsel %vm1520, %v1519, %v1518
        %v1522 = vrot.slane %v1494, 7
        %v1523 = vsel %vm1502, %v1522, %v1493
        %v1524 = vrot.slane %v1495, 6
        %v1525 = vsel %vm1505, %v1524, %v1523
        %v1526 = vrot.slane %v1496, 5
        %v1527 = vsel %vm1508, %v1526, %v1525
        %v1528 = vrot.slane %v1497, 4
        %v1529 = vsel %vm1511, %v1528, %v1527
        %v1530 = vrot.slane %v1498, 3
        %v1531 = vsel %vm1514, %v1530, %v1529
        %v1532 = vrot.slane %v1499, 2
        %v1533 = vsel %vm1517, %v1532, %v1531
        %v1534 = vrot.slane %v1500, 1
        %v1535 = vsel %vm1520, %v1534, %v1533
        %v1536 = vpack.c.b16 %v1535, %v1521
        %v1553 = vunpack.c.l.b16 %v1357
        %v1554 = vunpack.c.l.b16 %v1358
        %v1555 = vunpack.c.l.b16 %v1359
        %v1556 = vunpack.c.l.b16 %v1360
        %v1557 = vunpack.c.l.b16 %v1361
        %v1558 = vunpack.c.l.b16 %v1362
        %v1559 = vunpack.c.l.b16 %v1363
        %v1560 = vunpack.c.l.b16 %v1364
        %v1561 = vunpack.c.l.b16 %v1365
        %v1562 = vunpack.c.l.b16 %v1366
        %v1563 = vunpack.c.l.b16 %v1367
        %v1564 = vunpack.c.l.b16 %v1368
        %v1565 = vunpack.c.l.b16 %v1369
        %v1566 = vunpack.c.l.b16 %v1370
        %v1567 = vunpack.c.l.b16 %v1371
        %v1568 = vunpack.c.l.b16 %v1372
        %v1569 = vrot.slane %v1554, 7
        %v1570 = vsel %vm1502, %v1569, %v1553
        %v1571 = vrot.slane %v1555, 6
        %v1572 = vsel %vm1505, %v1571, %v1570
        %v1573 = vrot.slane %v1556, 5
        %v1574 = vsel %vm1508, %v1573, %v1572
        %v1575 = vrot.slane %v1557, 4
        %v1576 = vsel %vm1511, %v1575, %v1574
        %v1577 = vrot.slane %v1558, 3
        %v1578 = vsel %vm1514, %v1577, %v1576
        %v1579 = vrot.slane %v1559, 2
        %v1580 = vsel %vm1517, %v1579, %v1578
        %v1581 = vrot.slane %v1560, 1
        %v1582 = vsel %vm1520, %v1581, %v1580
        %v1583 = vrot.slane %v1562, 7
        %v1584 = vsel %vm1502, %v1583, %v1561
        %v1585 = vrot.slane %v1563, 6
        %v1586 = vsel %vm1505, %v1585, %v1584
        %v1587 = vrot.slane %v1564, 5
        %v1588 = vsel %vm1508, %v1587, %v1586
        %v1589 = vrot.slane %v1565, 4
        %v1590 = vsel %vm1511, %v1589, %v1588
        %v1591 = vrot.slane %v1566, 3
        %v1592 = vsel %vm1514, %v1591, %v1590
        %v1593 = vrot.slane %v1567, 2
        %v1594 = vsel %vm1517, %v1593, %v1592
        %v1595 = vrot.slane %v1568, 1
        %v1596 = vsel %vm1520, %v1595, %v1594
        %v1597 = vpack.c.b16 %v1596, %v1582
        %vm1598 = vcmask 523264
        %v1600 = vsel %vm1598, %v1536, 0
        %v1603 = vsel %vm1598, %v1597, 0
        %1605 = vmatprep.subr.bf16.mxu0 0
        %1606 = vmatpush1.bf16.xpose.msra.mxu0 %v1603
        %1607 = vmatprep.subr.bf16.mxu0 0
        %1608 = vmatpush1.bf16.xpose.msra.mxu0 0
        %1609 = vmatprep.subr.bf16.mxu0 0
        %1610 = vmatpush1.bf16.xpose.msra.mxu0 0
        %1611 = vmatprep.subr.bf16.mxu0 0
        %1612 = vmatpush1.bf16.xpose.msra.mxu0 0
        %1613 = vmatprep.subr.bf16.mxu0 0
        %1614 = vmatpush1.bf16.xpose.msra.mxu0 0
        %1615 = vmatprep.subr.bf16.mxu0 0
        %1616 = vmatpush1.bf16.xpose.msra.mxu0 0
        %1617 = vmatprep.subr.bf16.mxu0 0
        %1618 = vmatpush1.bf16.xpose.msra.mxu0 0
        %1619 = vmatprep.subr.bf16.mxu0 0
        %1620 = vmatpush1.bf16.xpose.msra.mxu0 0
        %1621 = vmatprep.subr.bf16.mxu0 0
        %1622 = vmatpush1.bf16.xpose.msra.mxu0 0
        %1623 = vmatprep.subr.bf16.mxu0 0
        %1624 = vmatpush1.bf16.xpose.msra.mxu0 0
        %1625 = vmatprep.subr.bf16.mxu0 0
        %1626 = vmatpush1.bf16.xpose.msra.mxu0 0
        %1627 = vmatprep.subr.bf16.mxu0 0
        %1628 = vmatpush1.bf16.xpose.msra.mxu0 0
        %1629 = vmatprep.subr.bf16.mxu0 0
        %1630 = vmatpush1.bf16.xpose.msra.mxu0 0
        %1631 = vmatprep.subr.bf16.mxu0 0
        %1632 = vmatpush1.bf16.xpose.msra.mxu0 0
        %1633 = vmatprep.subr.bf16.mxu0 0
        %1634 = vmatpush1.bf16.xpose.msra.mxu0 0
        %1635 = vmatprep.subr.bf16.mxu0 0
        %1636 = vmatpush1.bf16.xpose.msra.mxu0 0
        %1637 = vmatprep.mubr.bf16.mxu0 0
        %1638 = vmatmul.mubr.bf16.gmra.mrb[0].mxu0 %v1600
        %v1639 = vpop.f32.mrb[0].mxu0
        %v1640 = vadd.f32 0.0, %v1639
        %v1641 = vpop.f32.mrb[0].mxu0
        %v1642 = vpop.f32.mrb[0].mxu0
        %v1643 = vadd.f32 0.0, %v1642
        %v1644 = vpop.f32.mrb[0].mxu0
        %1645 = vdwg.mxu0
        %v1662 = vunpack.c.l.b16 %v1293
        %v1663 = vunpack.c.l.b16 %v1294
        %v1664 = vunpack.c.l.b16 %v1295
        %v1665 = vunpack.c.l.b16 %v1296
        %v1666 = vunpack.c.l.b16 %v1297
        %v1667 = vunpack.c.l.b16 %v1298
        %v1668 = vunpack.c.l.b16 %v1299
        %v1669 = vunpack.c.l.b16 %v1300
        %v1670 = vunpack.c.l.b16 %v1301
        %v1671 = vunpack.c.l.b16 %v1302
        %v1672 = vunpack.c.l.b16 %v1303
        %v1673 = vunpack.c.l.b16 %v1304
        %v1674 = vunpack.c.l.b16 %v1305
        %v1675 = vunpack.c.l.b16 %v1306
        %v1676 = vunpack.c.l.b16 %v1307
        %v1677 = vunpack.c.l.b16 %v1308
        %v1678 = vrot.slane %v1663, 7
        %v1679 = vsel %vm1502, %v1678, %v1662
        %v1680 = vrot.slane %v1664, 6
        %v1681 = vsel %vm1505, %v1680, %v1679
        %v1682 = vrot.slane %v1665, 5
        %v1683 = vsel %vm1508, %v1682, %v1681
        %v1684 = vrot.slane %v1666, 4
        %v1685 = vsel %vm1511, %v1684, %v1683
        %v1686 = vrot.slane %v1667, 3
        %v1687 = vsel %vm1514, %v1686, %v1685
        %v1688 = vrot.slane %v1668, 2
        %v1689 = vsel %vm1517, %v1688, %v1687
        %v1690 = vrot.slane %v1669, 1
        %v1691 = vsel %vm1520, %v1690, %v1689
        %v1692 = vrot.slane %v1671, 7
        %v1693 = vsel %vm1502, %v1692, %v1670
        %v1694 = vrot.slane %v1672, 6
        %v1695 = vsel %vm1505, %v1694, %v1693
        %v1696 = vrot.slane %v1673, 5
        %v1697 = vsel %vm1508, %v1696, %v1695
        %v1698 = vrot.slane %v1674, 4
        %v1699 = vsel %vm1511, %v1698, %v1697
        %v1700 = vrot.slane %v1675, 3
        %v1701 = vsel %vm1514, %v1700, %v1699
        %v1702 = vrot.slane %v1676, 2
        %v1703 = vsel %vm1517, %v1702, %v1701
        %v1704 = vrot.slane %v1677, 1
        %v1705 = vsel %vm1520, %v1704, %v1703
        %v1706 = vpack.c.b16 %v1705, %v1691
        %v1723 = vunpack.c.l.b16 %v1373
        %v1724 = vunpack.c.l.b16 %v1374
        %v1725 = vunpack.c.l.b16 %v1375
        %v1726 = vunpack.c.l.b16 %v1376
        %v1727 = vunpack.c.l.b16 %v1377
        %v1728 = vunpack.c.l.b16 %v1378
        %v1729 = vunpack.c.l.b16 %v1379
        %v1730 = vunpack.c.l.b16 %v1380
        %v1731 = vunpack.c.l.b16 %v1381
        %v1732 = vunpack.c.l.b16 %v1382
        %v1733 = vunpack.c.l.b16 %v1383
        %v1734 = vunpack.c.l.b16 %v1384
        %v1735 = vunpack.c.l.b16 %v1385
        %v1736 = vunpack.c.l.b16 %v1386
        %v1737 = vunpack.c.l.b16 %v1387
        %v1738 = vunpack.c.l.b16 %v1388
        %v1739 = vrot.slane %v1724, 7
        %v1740 = vsel %vm1502, %v1739, %v1723
        %v1741 = vrot.slane %v1725, 6
        %v1742 = vsel %vm1505, %v1741, %v1740
        %v1743 = vrot.slane %v1726, 5
        %v1744 = vsel %vm1508, %v1743, %v1742
        %v1745 = vrot.slane %v1727, 4
        %v1746 = vsel %vm1511, %v1745, %v1744
        %v1747 = vrot.slane %v1728, 3
        %v1748 = vsel %vm1514, %v1747, %v1746
        %v1749 = vrot.slane %v1729, 2
        %v1750 = vsel %vm1517, %v1749, %v1748
        %v1751 = vrot.slane %v1730, 1
        %v1752 = vsel %vm1520, %v1751, %v1750
        %v1753 = vrot.slane %v1732, 7
        %v1754 = vsel %vm1502, %v1753, %v1731
        %v1755 = vrot.slane %v1733, 6
        %v1756 = vsel %vm1505, %v1755, %v1754
        %v1757 = vrot.slane %v1734, 5
        %v1758 = vsel %vm1508, %v1757, %v1756
        %v1759 = vrot.slane %v1735, 4
        %v1760 = vsel %vm1511, %v1759, %v1758
        %v1761 = vrot.slane %v1736, 3
        %v1762 = vsel %vm1514, %v1761, %v1760
        %v1763 = vrot.slane %v1737, 2
        %v1764 = vsel %vm1517, %v1763, %v1762
        %v1765 = vrot.slane %v1738, 1
        %v1766 = vsel %vm1520, %v1765, %v1764
        %v1767 = vpack.c.b16 %v1766, %v1752
        %v1769 = vsel %vm1598, %v1706, 0
        %v1772 = vsel %vm1598, %v1767, 0
        %1774 = vmatprep.subr.bf16.mxu0 0
        %1775 = vmatpush1.bf16.xpose.msra.mxu0 %v1772
        %1776 = vmatprep.subr.bf16.mxu0 0
        %1777 = vmatpush1.bf16.xpose.msra.mxu0 0
        %1778 = vmatprep.subr.bf16.mxu0 0
        %1779 = vmatpush1.bf16.xpose.msra.mxu0 0
        %1780 = vmatprep.subr.bf16.mxu0 0
        %1781 = vmatpush1.bf16.xpose.msra.mxu0 0
        %1782 = vmatprep.subr.bf16.mxu0 0
        %1783 = vmatpush1.bf16.xpose.msra.mxu0 0
        %1784 = vmatprep.subr.bf16.mxu0 0
        %1785 = vmatpush1.bf16.xpose.msra.mxu0 0
        %1786 = vmatprep.subr.bf16.mxu0 0
        %1787 = vmatpush1.bf16.xpose.msra.mxu0 0
        %1788 = vmatprep.subr.bf16.mxu0 0
        %1789 = vmatpush1.bf16.xpose.msra.mxu0 0
        %1790 = vmatprep.subr.bf16.mxu0 0
        %1791 = vmatpush1.bf16.xpose.msra.mxu0 0
        %1792 = vmatprep.subr.bf16.mxu0 0
        %1793 = vmatpush1.bf16.xpose.msra.mxu0 0
        %1794 = vmatprep.subr.bf16.mxu0 0
        %1795 = vmatpush1.bf16.xpose.msra.mxu0 0
        %1796 = vmatprep.subr.bf16.mxu0 0
        %1797 = vmatpush1.bf16.xpose.msra.mxu0 0
        %1798 = vmatprep.subr.bf16.mxu0 0
        %1799 = vmatpush1.bf16.xpose.msra.mxu0 0
        %1800 = vmatprep.subr.bf16.mxu0 0
        %1801 = vmatpush1.bf16.xpose.msra.mxu0 0
        %1802 = vmatprep.subr.bf16.mxu0 0
        %1803 = vmatpush1.bf16.xpose.msra.mxu0 0
        %1804 = vmatprep.subr.bf16.mxu0 0
        %1805 = vmatpush1.bf16.xpose.msra.mxu0 0
        %1806 = vmatprep.mubr.bf16.mxu0 0
        %1807 = vmatmul.mubr.bf16.gmra.mrb[0].mxu0 %v1769
        %v1808 = vpop.f32.mrb[0].mxu0
        %v1809 = vadd.f32 0.0, %v1808
        %v1810 = vpop.f32.mrb[0].mxu0
        %v1811 = vpop.f32.mrb[0].mxu0
        %v1812 = vadd.f32 0.0, %v1811
        %v1813 = vpop.f32.mrb[0].mxu0
        %1814 = vdwg.mxu0
        %v1815 = vmul.f32 %v1640, 0.125
        %v1816 = vmul.f32 %v1643, 0.125
        %v1817 = vmul.f32 %v1809, 0.125
        %v1818 = vmul.f32 %v1812, 0.125
        %vm1819 = vcmask 130048
        %v1820 = vsel %vm1819, %v1815, -inf
        %1821 = vmax.xlane.f32.xlu0 %v1820
        %v1822 = vpop.xlane.xlu0 %1821
        %v1823 = vsel %vm1819, %v1816, -inf
        %1824 = vmax.xlane.f32.xlu0 %v1823
        %v1825 = vpop.xlane.xlu0 %1824
        %v1826 = vsel %vm1819, %v1817, -inf
        %1827 = vmax.xlane.f32.xlu0 %v1826
        %v1828 = vpop.xlane.xlu0 %1827
        %v1829 = vsel %vm1819, %v1818, -inf
        %1830 = vmax.xlane.f32.xlu0 %v1829
        %v1831 = vpop.xlane.xlu0 %1830
        %v1832 = vsub.f32 %v1815, %v1822
        %v1833 = vsub.f32 %v1816, %v1825
        %v1834 = vsub.f32 %v1817, %v1828
        %v1835 = vsub.f32 %v1818, %v1831
        %v1836 = vmul.f32 %v1832, 1.442695
        %v1837 = vpow.pop %v1836
        %v1838 = vmul.f32 %v1833, 1.442695
        %v1839 = vpow.pop %v1838
        %v1840 = vmul.f32 %v1834, 1.442695
        %v1841 = vpow.pop %v1840
        %v1842 = vmul.f32 %v1835, 1.442695
        %v1843 = vpow.pop %v1842
        %v1844 = vsel %vm1819, %v1837, 0.0
        %1845 = vadd.xlane.f32.xlu0 %v1844
        %v1846 = vpop.xlane.xlu0 %1845
        %v1847 = vsel %vm1819, %v1839, 0.0
        %1848 = vadd.xlane.f32.xlu0 %v1847
        %v1849 = vpop.xlane.xlu0 %1848
        %v1850 = vsel %vm1819, %v1841, 0.0
        %1851 = vadd.xlane.f32.xlu0 %v1850
        %v1852 = vpop.xlane.xlu0 %1851
        %v1853 = vsel %vm1819, %v1843, 0.0
        %1854 = vadd.xlane.f32.xlu0 %v1853
        %v1855 = vpop.xlane.xlu0 %1854
        %v1856 = vrcp.pop %v1846
        %v1857 = vrcp.pop %v1849
        %v1858 = vrcp.pop %v1852
        %v1859 = vrcp.pop %v1855
        %v1860 = vmul.f32 %v1837, %v1856
        %v1861 = vmul.f32 %v1839, %v1857
        %v1862 = vmul.f32 %v1841, %v1858
        %v1863 = vmul.f32 %v1843, %v1859
        %v1864 = vpack.c.bf16 %v1861, %v1860
        %v1865 = vpack.c.bf16 %v1863, %v1862
        %v1882 = vunpack.c.l.b16 %v1437
        %v1883 = vunpack.c.l.b16 %v1438
        %v1884 = vunpack.c.l.b16 %v1439
        %v1885 = vunpack.c.l.b16 %v1440
        %v1886 = vunpack.c.l.b16 %v1441
        %v1887 = vunpack.c.l.b16 %v1442
        %v1888 = vunpack.c.l.b16 %v1443
        %v1889 = vunpack.c.l.b16 %v1444
        %v1890 = vunpack.c.l.b16 %v1445
        %v1891 = vunpack.c.l.b16 %v1446
        %v1892 = vunpack.c.l.b16 %v1447
        %v1893 = vunpack.c.l.b16 %v1448
        %v1894 = vunpack.c.l.b16 %v1449
        %v1895 = vunpack.c.l.b16 %v1450
        %v1896 = vunpack.c.l.b16 %v1451
        %v1897 = vunpack.c.l.b16 %v1452
        %v1898 = vrot.slane %v1883, 7
        %v1899 = vsel %vm1502, %v1898, %v1882
        %v1900 = vrot.slane %v1884, 6
        %v1901 = vsel %vm1505, %v1900, %v1899
        %v1902 = vrot.slane %v1885, 5
        %v1903 = vsel %vm1508, %v1902, %v1901
        %v1904 = vrot.slane %v1886, 4
        %v1905 = vsel %vm1511, %v1904, %v1903
        %v1906 = vrot.slane %v1887, 3
        %v1907 = vsel %vm1514, %v1906, %v1905
        %v1908 = vrot.slane %v1888, 2
        %v1909 = vsel %vm1517, %v1908, %v1907
        %v1910 = vrot.slane %v1889, 1
        %v1911 = vsel %vm1520, %v1910, %v1909
        %v1912 = vrot.slane %v1891, 7
        %v1913 = vsel %vm1502, %v1912, %v1890
        %v1914 = vrot.slane %v1892, 6
        %v1915 = vsel %vm1505, %v1914, %v1913
        %v1916 = vrot.slane %v1893, 5
        %v1917 = vsel %vm1508, %v1916, %v1915
        %v1918 = vrot.slane %v1894, 4
        %v1919 = vsel %vm1511, %v1918, %v1917
        %v1920 = vrot.slane %v1895, 3
        %v1921 = vsel %vm1514, %v1920, %v1919
        %v1922 = vrot.slane %v1896, 2
        %v1923 = vsel %vm1517, %v1922, %v1921
        %v1924 = vrot.slane %v1897, 1
        %v1925 = vsel %vm1520, %v1924, %v1923
        %v1926 = vpack.c.b16 %v1925, %v1911
        %v1929 = vsel %vm1819, %v1864, 0
        %1931 = vmatprep.subr.bf16.mxu0 0
        %1932 = vmatpush1.bf16.msra.mxu0 %v1926
        %1933 = vmatprep.subr.bf16.mxu0 0
        %1934 = vmatpush1.bf16.msra.mxu0 0
        %1935 = vmatprep.subr.bf16.mxu0 0
        %1936 = vmatpush1.bf16.msra.mxu0 0
        %1937 = vmatprep.subr.bf16.mxu0 0
        %1938 = vmatpush1.bf16.msra.mxu0 0
        %1939 = vmatprep.subr.bf16.mxu0 0
        %1940 = vmatpush1.bf16.msra.mxu0 0
        %1941 = vmatprep.subr.bf16.mxu0 0
        %1942 = vmatpush1.bf16.msra.mxu0 0
        %1943 = vmatprep.subr.bf16.mxu0 0
        %1944 = vmatpush1.bf16.msra.mxu0 0
        %1945 = vmatprep.subr.bf16.mxu0 0
        %1946 = vmatpush1.bf16.msra.mxu0 0
        %1947 = vmatprep.subr.bf16.mxu0 0
        %1948 = vmatpush1.bf16.msra.mxu0 0
        %1949 = vmatprep.subr.bf16.mxu0 0
        %1950 = vmatpush1.bf16.msra.mxu0 0
        %1951 = vmatprep.subr.bf16.mxu0 0
        %1952 = vmatpush1.bf16.msra.mxu0 0
        %1953 = vmatprep.subr.bf16.mxu0 0
        %1954 = vmatpush1.bf16.msra.mxu0 0
        %1955 = vmatprep.subr.bf16.mxu0 0
        %1956 = vmatpush1.bf16.msra.mxu0 0
        %1957 = vmatprep.subr.bf16.mxu0 0
        %1958 = vmatpush1.bf16.msra.mxu0 0
        %1959 = vmatprep.subr.bf16.mxu0 0
        %1960 = vmatpush1.bf16.msra.mxu0 0
        %1961 = vmatprep.subr.bf16.mxu0 0
        %1962 = vmatpush1.bf16.msra.mxu0 0
        %1963 = vmatprep.mubr.bf16.mxu0 0
        %1964 = vmatmul.mubr.bf16.gmra.mrb[0].mxu0 %v1929
        %v1965 = vpop.f32.mrb[0].mxu0
        %v1966 = vadd.f32 0.0, %v1965
        %v1967 = vpop.f32.mrb[0].mxu0
        %v1968 = vpop.f32.mrb[0].mxu0
        %v1969 = vadd.f32 0.0, %v1968
        %v1970 = vpop.f32.mrb[0].mxu0
        %1971 = vdwg.mxu0
        %v1988 = vunpack.c.l.b16 %v1453
        %v1989 = vunpack.c.l.b16 %v1454
        %v1990 = vunpack.c.l.b16 %v1455
        %v1991 = vunpack.c.l.b16 %v1456
        %v1992 = vunpack.c.l.b16 %v1457
        %v1993 = vunpack.c.l.b16 %v1458
        %v1994 = vunpack.c.l.b16 %v1459
        %v1995 = vunpack.c.l.b16 %v1460
        %v1996 = vunpack.c.l.b16 %v1461
        %v1997 = vunpack.c.l.b16 %v1462
        %v1998 = vunpack.c.l.b16 %v1463
        %v1999 = vunpack.c.l.b16 %v1464
        %v2000 = vunpack.c.l.b16 %v1465
        %v2001 = vunpack.c.l.b16 %v1466
        %v2002 = vunpack.c.l.b16 %v1467
        %v2003 = vunpack.c.l.b16 %v1468
        %v2004 = vrot.slane %v1989, 7
        %v2005 = vsel %vm1502, %v2004, %v1988
        %v2006 = vrot.slane %v1990, 6
        %v2007 = vsel %vm1505, %v2006, %v2005
        %v2008 = vrot.slane %v1991, 5
        %v2009 = vsel %vm1508, %v2008, %v2007
        %v2010 = vrot.slane %v1992, 4
        %v2011 = vsel %vm1511, %v2010, %v2009
        %v2012 = vrot.slane %v1993, 3
        %v2013 = vsel %vm1514, %v2012, %v2011
        %v2014 = vrot.slane %v1994, 2
        %v2015 = vsel %vm1517, %v2014, %v2013
        %v2016 = vrot.slane %v1995, 1
        %v2017 = vsel %vm1520, %v2016, %v2015
        %v2018 = vrot.slane %v1997, 7
        %v2019 = vsel %vm1502, %v2018, %v1996
        %v2020 = vrot.slane %v1998, 6
        %v2021 = vsel %vm1505, %v2020, %v2019
        %v2022 = vrot.slane %v1999, 5
        %v2023 = vsel %vm1508, %v2022, %v2021
        %v2024 = vrot.slane %v2000, 4
        %v2025 = vsel %vm1511, %v2024, %v2023
        %v2026 = vrot.slane %v2001, 3
        %v2027 = vsel %vm1514, %v2026, %v2025
        %v2028 = vrot.slane %v2002, 2
        %v2029 = vsel %vm1517, %v2028, %v2027
        %v2030 = vrot.slane %v2003, 1
        %v2031 = vsel %vm1520, %v2030, %v2029
        %v2032 = vpack.c.b16 %v2031, %v2017
        %v2035 = vsel %vm1819, %v1865, 0
        %2037 = vmatprep.subr.bf16.mxu0 0
        %2038 = vmatpush1.bf16.msra.mxu0 %v2032
        %2039 = vmatprep.subr.bf16.mxu0 0
        %2040 = vmatpush1.bf16.msra.mxu0 0
        %2041 = vmatprep.subr.bf16.mxu0 0
        %2042 = vmatpush1.bf16.msra.mxu0 0
        %2043 = vmatprep.subr.bf16.mxu0 0
        %2044 = vmatpush1.bf16.msra.mxu0 0
        %2045 = vmatprep.subr.bf16.mxu0 0
        %2046 = vmatpush1.bf16.msra.mxu0 0
        %2047 = vmatprep.subr.bf16.mxu0 0
        %2048 = vmatpush1.bf16.msra.mxu0 0
        %2049 = vmatprep.subr.bf16.mxu0 0
        %2050 = vmatpush1.bf16.msra.mxu0 0
        %2051 = vmatprep.subr.bf16.mxu0 0
        %2052 = vmatpush1.bf16.msra.mxu0 0
        %2053 = vmatprep.subr.bf16.mxu0 0
        %2054 = vmatpush1.bf16.msra.mxu0 0
        %2055 = vmatprep.subr.bf16.mxu0 0
        %2056 = vmatpush1.bf16.msra.mxu0 0
        %2057 = vmatprep.subr.bf16.mxu0 0
        %2058 = vmatpush1.bf16.msra.mxu0 0
        %2059 = vmatprep.subr.bf16.mxu0 0
        %2060 = vmatpush1.bf16.msra.mxu0 0
        %2061 = vmatprep.subr.bf16.mxu0 0
        %2062 = vmatpush1.bf16.msra.mxu0 0
        %2063 = vmatprep.subr.bf16.mxu0 0
        %2064 = vmatpush1.bf16.msra.mxu0 0
        %2065 = vmatprep.subr.bf16.mxu0 0
        %2066 = vmatpush1.bf16.msra.mxu0 0
        %2067 = vmatprep.subr.bf16.mxu0 0
        %2068 = vmatpush1.bf16.msra.mxu0 0
        %2069 = vmatprep.mubr.bf16.mxu0 0
        %2070 = vmatmul.mubr.bf16.gmra.mrb[0].mxu0 %v2035
        %v2071 = vpop.f32.mrb[0].mxu0
        %v2072 = vadd.f32 0.0, %v2071
        %v2073 = vpop.f32.mrb[0].mxu0
        %v2074 = vpop.f32.mrb[0].mxu0
        %v2075 = vadd.f32 0.0, %v2074
        %v2076 = vpop.f32.mrb[0].mxu0
        %2077 = vdwg.mxu0
        %v2080 = vcombine.high %v1966, %v1966
        %v2082 = vunpack.c.l.s4 1966171168
        %v2083 = vunpack.c.0.s8 %v2082
        %v2084 = vlaneseq
        %v2085 = vshrl.u32 %v2084, 7
        %v2086 = vsub.s32 %v2083, %v2085
        %v2087 = vrot.slane %v1966, %v2086
        %v2089 = vunpack.c.l.s4 1966171168
        %v2090 = vunpack.c.0.s8 %v2089
        %v2091 = vlaneseq
        %v2092 = vshrl.u32 %v2091, 7
        %v2093 = vsub.s32 %v2090, %v2092
        %v2094 = vrot.slane %v2080, %v2093
        %v2095 = vcombine.high %v2087, %v2087
        %v2096 = vcombine.high %v2094, %v2094
        %v2098 = vunpack.c.l.s4 1966171168
        %v2099 = vunpack.c.0.s8 %v2098
        %v2100 = vlaneseq
        %v2101 = vshrl.u32 %v2100, 7
        %v2102 = vsub.s32 %v2099, %v2101
        %v2103 = vrot.slane %v2087, %v2102
        %v2105 = vunpack.c.l.s4 1966171168
        %v2106 = vunpack.c.0.s8 %v2105
        %v2107 = vlaneseq
        %v2108 = vshrl.u32 %v2107, 7
        %v2109 = vsub.s32 %v2106, %v2108
        %v2110 = vrot.slane %v2094, %v2109
        %v2112 = vunpack.c.l.s4 1966171168
        %v2113 = vunpack.c.0.s8 %v2112
        %v2114 = vlaneseq
        %v2115 = vshrl.u32 %v2114, 7
        %v2116 = vsub.s32 %v2113, %v2115
        %v2117 = vrot.slane %v2095, %v2116
        %v2119 = vunpack.c.l.s4 1966171168
        %v2120 = vunpack.c.0.s8 %v2119
        %v2121 = vlaneseq
        %v2122 = vshrl.u32 %v2121, 7
        %v2123 = vsub.s32 %v2120, %v2122
        %v2124 = vrot.slane %v2096, %v2123
        %v2125 = vcombine.high %v2103, %v2103
        %v2126 = vcombine.high %v2110, %v2110
        %v2127 = vcombine.high %v2117, %v2117
        %v2128 = vcombine.high %v2124, %v2124
        %v2129 = vcombine.high %v1969, %v1969
        %v2131 = vunpack.c.l.s4 1966171168
        %v2132 = vunpack.c.0.s8 %v2131
        %v2133 = vlaneseq
        %v2134 = vshrl.u32 %v2133, 7
        %v2135 = vsub.s32 %v2132, %v2134
        %v2136 = vrot.slane %v1969, %v2135
        %v2138 = vunpack.c.l.s4 1966171168
        %v2139 = vunpack.c.0.s8 %v2138
        %v2140 = vlaneseq
        %v2141 = vshrl.u32 %v2140, 7
        %v2142 = vsub.s32 %v2139, %v2141
        %v2143 = vrot.slane %v2129, %v2142
        %v2144 = vcombine.high %v2136, %v2136
        %v2145 = vcombine.high %v2143, %v2143
        %v2147 = vunpack.c.l.s4 1966171168
        %v2148 = vunpack.c.0.s8 %v2147
        %v2149 = vlaneseq
        %v2150 = vshrl.u32 %v2149, 7
        %v2151 = vsub.s32 %v2148, %v2150
        %v2152 = vrot.slane %v2136, %v2151
        %v2154 = vunpack.c.l.s4 1966171168
        %v2155 = vunpack.c.0.s8 %v2154
        %v2156 = vlaneseq
        %v2157 = vshrl.u32 %v2156, 7
        %v2158 = vsub.s32 %v2155, %v2157
        %v2159 = vrot.slane %v2143, %v2158
        %v2161 = vunpack.c.l.s4 1966171168
        %v2162 = vunpack.c.0.s8 %v2161
        %v2163 = vlaneseq
        %v2164 = vshrl.u32 %v2163, 7
        %v2165 = vsub.s32 %v2162, %v2164
        %v2166 = vrot.slane %v2144, %v2165
        %v2168 = vunpack.c.l.s4 1966171168
        %v2169 = vunpack.c.0.s8 %v2168
        %v2170 = vlaneseq
        %v2171 = vshrl.u32 %v2170, 7
        %v2172 = vsub.s32 %v2169, %v2171
        %v2173 = vrot.slane %v2145, %v2172
        %v2174 = vcombine.high %v2152, %v2152
        %v2175 = vcombine.high %v2159, %v2159
        %v2176 = vcombine.high %v2166, %v2166
        %v2177 = vcombine.high %v2173, %v2173
        %v2196 = vcombine.high %v2072, %v2072
        %v2198 = vunpack.c.l.s4 1966171168
        %v2199 = vunpack.c.0.s8 %v2198
        %v2200 = vlaneseq
        %v2201 = vshrl.u32 %v2200, 7
        %v2202 = vsub.s32 %v2199, %v2201
        %v2203 = vrot.slane %v2072, %v2202
        %v2205 = vunpack.c.l.s4 1966171168
        %v2206 = vunpack.c.0.s8 %v2205
        %v2207 = vlaneseq
        %v2208 = vshrl.u32 %v2207, 7
        %v2209 = vsub.s32 %v2206, %v2208
        %v2210 = vrot.slane %v2196, %v2209
        %v2211 = vcombine.high %v2203, %v2203
        %v2212 = vcombine.high %v2210, %v2210
        %v2214 = vunpack.c.l.s4 1966171168
        %v2215 = vunpack.c.0.s8 %v2214
        %v2216 = vlaneseq
        %v2217 = vshrl.u32 %v2216, 7
        %v2218 = vsub.s32 %v2215, %v2217
        %v2219 = vrot.slane %v2203, %v2218
        %v2221 = vunpack.c.l.s4 1966171168
        %v2222 = vunpack.c.0.s8 %v2221
        %v2223 = vlaneseq
        %v2224 = vshrl.u32 %v2223, 7
        %v2225 = vsub.s32 %v2222, %v2224
        %v2226 = vrot.slane %v2210, %v2225
        %v2228 = vunpack.c.l.s4 1966171168
        %v2229 = vunpack.c.0.s8 %v2228
        %v2230 = vlaneseq
        %v2231 = vshrl.u32 %v2230, 7
        %v2232 = vsub.s32 %v2229, %v2231
        %v2233 = vrot.slane %v2211, %v2232
        %v2235 = vunpack.c.l.s4 1966171168
        %v2236 = vunpack.c.0.s8 %v2235
        %v2237 = vlaneseq
        %v2238 = vshrl.u32 %v2237, 7
        %v2239 = vsub.s32 %v2236, %v2238
        %v2240 = vrot.slane %v2212, %v2239
        %v2241 = vcombine.high %v2219, %v2219
        %v2242 = vcombine.high %v2226, %v2226
        %v2243 = vcombine.high %v2233, %v2233
        %v2244 = vcombine.high %v2240, %v2240
        %v2245 = vcombine.high %v2075, %v2075
        %v2247 = vunpack.c.l.s4 1966171168
        %v2248 = vunpack.c.0.s8 %v2247
        %v2249 = vlaneseq
        %v2250 = vshrl.u32 %v2249, 7
        %v2251 = vsub.s32 %v2248, %v2250
        %v2252 = vrot.slane %v2075, %v2251
        %v2254 = vunpack.c.l.s4 1966171168
        %v2255 = vunpack.c.0.s8 %v2254
        %v2256 = vlaneseq
        %v2257 = vshrl.u32 %v2256, 7
        %v2258 = vsub.s32 %v2255, %v2257
        %v2259 = vrot.slane %v2245, %v2258
        %v2260 = vcombine.high %v2252, %v2252
        %v2261 = vcombine.high %v2259, %v2259
        %v2263 = vunpack.c.l.s4 1966171168
        %v2264 = vunpack.c.0.s8 %v2263
        %v2265 = vlaneseq
        %v2266 = vshrl.u32 %v2265, 7
        %v2267 = vsub.s32 %v2264, %v2266
        %v2268 = vrot.slane %v2252, %v2267
        %v2270 = vunpack.c.l.s4 1966171168
        %v2271 = vunpack.c.0.s8 %v2270
        %v2272 = vlaneseq
        %v2273 = vshrl.u32 %v2272, 7
        %v2274 = vsub.s32 %v2271, %v2273
        %v2275 = vrot.slane %v2259, %v2274
        %v2277 = vunpack.c.l.s4 1966171168
        %v2278 = vunpack.c.0.s8 %v2277
        %v2279 = vlaneseq
        %v2280 = vshrl.u32 %v2279, 7
        %v2281 = vsub.s32 %v2278, %v2280
        %v2282 = vrot.slane %v2260, %v2281
        %v2284 = vunpack.c.l.s4 1966171168
        %v2285 = vunpack.c.0.s8 %v2284
        %v2286 = vlaneseq
        %v2287 = vshrl.u32 %v2286, 7
        %v2288 = vsub.s32 %v2285, %v2287
        %v2289 = vrot.slane %v2261, %v2288
        %v2290 = vcombine.high %v2268, %v2268
        %v2291 = vcombine.high %v2275, %v2275
        %v2292 = vcombine.high %v2282, %v2282
        %v2293 = vcombine.high %v2289, %v2289
        %v2294 = vlaneseq
        %v2295 = vshrl.u32 %v2294, 7
        %v2296 = vsub.s32 0, %v2295
        %v2297 = vrot.slane %v2219, %v2296
        %v2298 = vlaneseq
        %v2299 = vshrl.u32 %v2298, 7
        %v2300 = vsub.s32 0, %v2299
        %v2301 = vrot.slane %v2233, %v2300
        %v2302 = vlaneseq
        %v2303 = vshrl.u32 %v2302, 7
        %v2304 = vsub.s32 0, %v2303
        %v2305 = vrot.slane %v2241, %v2304
        %v2306 = vlaneseq
        %v2307 = vshrl.u32 %v2306, 7
        %v2308 = vsub.s32 0, %v2307
        %v2309 = vrot.slane %v2243, %v2308
        %v2310 = vlaneseq
        %v2311 = vshrl.u32 %v2310, 7
        %v2312 = vsub.s32 0, %v2311
        %v2313 = vrot.slane %v2226, %v2312
        %v2314 = vlaneseq
        %v2315 = vshrl.u32 %v2314, 7
        %v2316 = vsub.s32 0, %v2315
        %v2317 = vrot.slane %v2240, %v2316
        %v2318 = vlaneseq
        %v2319 = vshrl.u32 %v2318, 7
        %v2320 = vsub.s32 0, %v2319
        %v2321 = vrot.slane %v2242, %v2320
        %v2322 = vlaneseq
        %v2323 = vshrl.u32 %v2322, 7
        %v2324 = vsub.s32 0, %v2323
        %v2325 = vrot.slane %v2244, %v2324
        %v2326 = vlaneseq
        %v2327 = vshrl.u32 %v2326, 7
        %v2328 = vsub.s32 0, %v2327
        %v2329 = vrot.slane %v2268, %v2328
        %v2330 = vlaneseq
        %v2331 = vshrl.u32 %v2330, 7
        %v2332 = vsub.s32 0, %v2331
        %v2333 = vrot.slane %v2282, %v2332
        %v2334 = vlaneseq
        %v2335 = vshrl.u32 %v2334, 7
        %v2336 = vsub.s32 0, %v2335
        %v2337 = vrot.slane %v2290, %v2336
        %v2338 = vlaneseq
        %v2339 = vshrl.u32 %v2338, 7
        %v2340 = vsub.s32 0, %v2339
        %v2341 = vrot.slane %v2292, %v2340
        %v2342 = vlaneseq
        %v2343 = vshrl.u32 %v2342, 7
        %v2344 = vsub.s32 0, %v2343
        %v2345 = vrot.slane %v2275, %v2344
        %v2346 = vlaneseq
        %v2347 = vshrl.u32 %v2346, 7
        %v2348 = vsub.s32 0, %v2347
        %v2349 = vrot.slane %v2289, %v2348
        %v2350 = vlaneseq
        %v2351 = vshrl.u32 %v2350, 7
        %v2352 = vsub.s32 0, %v2351
        %v2353 = vrot.slane %v2291, %v2352
        %v2354 = vlaneseq
        %v2355 = vshrl.u32 %v2354, 7
        %v2356 = vsub.s32 0, %v2355
        %v2357 = vrot.slane %v2293, %v2356
        %vm2374 = vcmask 1040384
        %v2375 = vsel %vm2374, %v2103, %v2297
        %v2376 = vsel %vm2374, %v2117, %v2301
        %v2377 = vsel %vm2374, %v2125, %v2305
        %v2378 = vsel %vm2374, %v2127, %v2309
        %v2379 = vsel %vm2374, %v2110, %v2313
        %v2380 = vsel %vm2374, %v2124, %v2317
        %v2381 = vsel %vm2374, %v2126, %v2321
        %v2382 = vsel %vm2374, %v2128, %v2325
        %v2383 = vsel %vm2374, %v2152, %v2329
        %v2384 = vsel %vm2374, %v2166, %v2333
        %v2385 = vsel %vm2374, %v2174, %v2337
        %v2386 = vsel %vm2374, %v2176, %v2341
        %v2387 = vsel %vm2374, %v2159, %v2345
        %v2388 = vsel %vm2374, %v2173, %v2349
        %v2389 = vsel %vm2374, %v2175, %v2353
        %v2390 = vsel %vm2374, %v2177, %v2357
        %v2391 = vcombine.low %v2375, %v2377
        %v2393 = vunpack.c.l.s4 1983009808
        %v2394 = vunpack.c.0.s8 %v2393
        %v2395 = vlaneseq
        %v2396 = vshrl.u32 %v2395, 7
        %v2397 = vsub.s32 %v2394, %v2396
        %v2398 = vrot.slane %v2391, %v2397
        %v2399 = vcombine.low %v2376, %v2378
        %v2401 = vunpack.c.l.s4 1983009808
        %v2402 = vunpack.c.0.s8 %v2401
        %v2403 = vlaneseq
        %v2404 = vshrl.u32 %v2403, 7
        %v2405 = vsub.s32 %v2402, %v2404
        %v2406 = vrot.slane %v2399, %v2405
        %v2407 = vcombine.low %v2379, %v2381
        %v2409 = vunpack.c.l.s4 1983009808
        %v2410 = vunpack.c.0.s8 %v2409
        %v2411 = vlaneseq
        %v2412 = vshrl.u32 %v2411, 7
        %v2413 = vsub.s32 %v2410, %v2412
        %v2414 = vrot.slane %v2407, %v2413
        %v2415 = vcombine.low %v2380, %v2382
        %v2417 = vunpack.c.l.s4 1983009808
        %v2418 = vunpack.c.0.s8 %v2417
        %v2419 = vlaneseq
        %v2420 = vshrl.u32 %v2419, 7
        %v2421 = vsub.s32 %v2418, %v2420
        %v2422 = vrot.slane %v2415, %v2421
        %v2423 = vcombine.low %v2398, %v2406
        %v2425 = vunpack.c.l.s4 1934713408
        %v2426 = vunpack.c.0.s8 %v2425
        %v2427 = vlaneseq
        %v2428 = vshrl.u32 %v2427, 7
        %v2429 = vsub.s32 %v2426, %v2428
        %v2430 = vrot.slane %v2423, %v2429
        %v2431 = vcombine.low %v2414, %v2422
        %v2433 = vunpack.c.l.s4 1934713408
        %v2434 = vunpack.c.0.s8 %v2433
        %v2435 = vlaneseq
        %v2436 = vshrl.u32 %v2435, 7
        %v2437 = vsub.s32 %v2434, %v2436
        %v2438 = vrot.slane %v2431, %v2437
        %v2439 = vcombine.low %v2430, %v2438
        %v2440 = vcombine.high %v2430, %v2438
        %v2441 = vcombine.low %v2383, %v2385
        %v2443 = vunpack.c.l.s4 1983009808
        %v2444 = vunpack.c.0.s8 %v2443
        %v2445 = vlaneseq
        %v2446 = vshrl.u32 %v2445, 7
        %v2447 = vsub.s32 %v2444, %v2446
        %v2448 = vrot.slane %v2441, %v2447
        %v2449 = vcombine.low %v2384, %v2386
        %v2451 = vunpack.c.l.s4 1983009808
        %v2452 = vunpack.c.0.s8 %v2451
        %v2453 = vlaneseq
        %v2454 = vshrl.u32 %v2453, 7
        %v2455 = vsub.s32 %v2452, %v2454
        %v2456 = vrot.slane %v2449, %v2455
        %v2457 = vcombine.low %v2387, %v2389
        %v2459 = vunpack.c.l.s4 1983009808
        %v2460 = vunpack.c.0.s8 %v2459
        %v2461 = vlaneseq
        %v2462 = vshrl.u32 %v2461, 7
        %v2463 = vsub.s32 %v2460, %v2462
        %v2464 = vrot.slane %v2457, %v2463
        %v2465 = vcombine.low %v2388, %v2390
        %v2467 = vunpack.c.l.s4 1983009808
        %v2468 = vunpack.c.0.s8 %v2467
        %v2469 = vlaneseq
        %v2470 = vshrl.u32 %v2469, 7
        %v2471 = vsub.s32 %v2468, %v2470
        %v2472 = vrot.slane %v2465, %v2471
        %v2473 = vcombine.low %v2448, %v2456
        %v2475 = vunpack.c.l.s4 1934713408
        %v2476 = vunpack.c.0.s8 %v2475
        %v2477 = vlaneseq
        %v2478 = vshrl.u32 %v2477, 7
        %v2479 = vsub.s32 %v2476, %v2478
        %v2480 = vrot.slane %v2473, %v2479
        %v2481 = vcombine.low %v2464, %v2472
        %v2483 = vunpack.c.l.s4 1934713408
        %v2484 = vunpack.c.0.s8 %v2483
        %v2485 = vlaneseq
        %v2486 = vshrl.u32 %v2485, 7
        %v2487 = vsub.s32 %v2484, %v2486
        %v2488 = vrot.slane %v2481, %v2487
        %v2489 = vcombine.low %v2480, %v2488
        %v2490 = vcombine.high %v2480, %v2488
        %2493 = vrot.lane.b32.xlu0 %v2440, 64
        %v2494 = vpop.permute.xlu0 %2493
        %2495 = vrot.lane.b32.xlu0 %v2490, 64
        %v2496 = vpop.permute.xlu0 %2495
        %v2499 = vsel %vm1598, %v2439, %v2494
        %v2500 = vsel %vm1598, %v2489, %v2496
        %v2501 = vpack.c.bf16 %v2500, %v2499
        %v2518 = vunpack.c.l.b16 %v518
        %v2519 = vunpack.c.l.b16 %v519
        %v2520 = vunpack.c.l.b16 %v520
        %v2521 = vunpack.c.l.b16 %v521
        %v2522 = vunpack.c.l.b16 %v522
        %v2523 = vunpack.c.l.b16 %v523
        %v2524 = vunpack.c.l.b16 %v524
        %v2525 = vunpack.c.l.b16 %v525
        %v2526 = vunpack.c.l.b16 %v526
        %v2527 = vunpack.c.l.b16 %v527
        %v2528 = vunpack.c.l.b16 %v528
        %v2529 = vunpack.c.l.b16 %v529
        %v2530 = vunpack.c.l.b16 %v530
        %v2531 = vunpack.c.l.b16 %v531
        %v2532 = vunpack.c.l.b16 %v532
        %v2533 = vunpack.c.l.b16 %v533
        %v2534 = vpack.c.b16 %v2519, %v2518
        %v2535 = vpack.c.b16 %v2521, %v2520
        %v2536 = vpack.c.b16 %v2523, %v2522
        %v2537 = vpack.c.b16 %v2525, %v2524
        %v2538 = vpack.c.b16 %v2527, %v2526
        %v2539 = vpack.c.b16 %v2529, %v2528
        %v2540 = vpack.c.b16 %v2531, %v2530
        %v2541 = vpack.c.b16 %v2533, %v2532
        %2550 = vmatprep.subr.bf16.mxu0 0
        %2551 = vmatpush1.bf16.msra.mxu0 %v2534
        %2552 = vmatprep.subr.bf16.mxu0 0
        %2553 = vmatpush1.bf16.msra.mxu0 %v2535
        %2554 = vmatprep.subr.bf16.mxu0 0
        %2555 = vmatpush1.bf16.msra.mxu0 %v2536
        %2556 = vmatprep.subr.bf16.mxu0 0
        %2557 = vmatpush1.bf16.msra.mxu0 %v2537
        %2558 = vmatprep.subr.bf16.mxu0 0
        %2559 = vmatpush1.bf16.msra.mxu0 %v2538
        %2560 = vmatprep.subr.bf16.mxu0 0
        %2561 = vmatpush1.bf16.msra.mxu0 %v2539
        %2562 = vmatprep.subr.bf16.mxu0 0
        %2563 = vmatpush1.bf16.msra.mxu0 %v2540
        %2564 = vmatprep.subr.bf16.mxu0 0
        %2565 = vmatpush1.bf16.msra.mxu0 %v2541
        %2566 = vmatprep.subr.bf16.mxu0 0
        %2567 = vmatpush1.bf16.msra.mxu0 0
        %2568 = vmatprep.subr.bf16.mxu0 0
        %2569 = vmatpush1.bf16.msra.mxu0 0
        %2570 = vmatprep.subr.bf16.mxu0 0
        %2571 = vmatpush1.bf16.msra.mxu0 0
        %2572 = vmatprep.subr.bf16.mxu0 0
        %2573 = vmatpush1.bf16.msra.mxu0 0
        %2574 = vmatprep.subr.bf16.mxu0 0
        %2575 = vmatpush1.bf16.msra.mxu0 0
        %2576 = vmatprep.subr.bf16.mxu0 0
        %2577 = vmatpush1.bf16.msra.mxu0 0
        %2578 = vmatprep.subr.bf16.mxu0 0
        %2579 = vmatpush1.bf16.msra.mxu0 0
        %2580 = vmatprep.subr.bf16.mxu0 0
        %2581 = vmatpush1.bf16.msra.mxu0 0
        %2582 = vmatprep.mubr.bf16.mxu0 0
        %2583 = vmatmul.mubr.bf16.gmra.mrb[0].mxu0 %v2501
        %v2584 = vpop.f32.mrb[0].mxu0
        %v2585 = vadd.f32 0.0, %v2584
        %v2586 = vpop.f32.mrb[0].mxu0
        %v2587 = vpop.f32.mrb[0].mxu0
        %v2588 = vadd.f32 0.0, %v2587
        %v2589 = vpop.f32.mrb[0].mxu0
        %2590 = vdwg.mxu0
        %v2591 = vadd.f32 %v582, %v2585
        %v2592 = vadd.f32 %v583, %v2588
        %v2593 = vlaneseq
        %v2594 = vshrl.u32 %v2593, 7
        %v2595 = vsub.s32 1, %v2594
        %v2596 = vrot.slane %v483, %v2595
        %v2597 = vadd.f32 %v2591, %v2596
        %v2598 = vadd.f32 %v2592, %v2596
        %2599 = vadd.xlane.f32.xlu0 %v2597
        %v2600 = vpop.xlane.xlu0 %2599
        %2601 = vadd.xlane.f32.xlu0 %v2598
        %v2602 = vpop.xlane.xlu0 %2601
        %v2603 = vrcp.pop 128.0
        %v2604 = vmul.f32 %v2600, %v2603
        %v2605 = vmul.f32 %v2602, %v2603
        %v2606 = vsub.f32 %v2597, %v2604
        %v2607 = vsub.f32 %v2598, %v2605
        %v2608 = vmul.f32 %v2606, %v2606
        %v2609 = vmul.f32 %v2607, %v2607
        %2610 = vadd.xlane.f32.xlu0 %v2608
        %v2611 = vpop.xlane.xlu0 %2610
        %2612 = vadd.xlane.f32.xlu0 %v2609
        %v2613 = vpop.xlane.xlu0 %2612
        %v2614 = vmul.f32 %v2611, %v2603
        %v2615 = vmul.f32 %v2613, %v2603
        %v2616 = vadd.f32 %v2614, 1e-12
        %v2617 = vadd.f32 %v2615, 1e-12
        %v2618 = vrsqrt.pop %v2616
        %v2619 = vrsqrt.pop %v2617
        %v2620 = vmul.f32 %v2606, %v2618
        %v2621 = vmul.f32 %v2607, %v2619
        %v2622 = vlaneseq
        %v2623 = vshrl.u32 %v2622, 7
        %v2624 = vsub.s32 2, %v2623
        %v2625 = vrot.slane %v483, %v2624
        %v2626 = vmul.f32 %v2620, %v2625
        %v2627 = vmul.f32 %v2621, %v2625
        %v2628 = vlaneseq
        %v2629 = vshrl.u32 %v2628, 7
        %v2630 = vsub.s32 3, %v2629
        %v2631 = vrot.slane %v483, %v2630
        %v2632 = vadd.f32 %v2626, %v2631
        %v2633 = vadd.f32 %v2627, %v2631
        %v2634 = vpack.c.bf16 %v2633, %v2632
        %v2635 = vlaneseq
        %v2636 = vshrl.u32 %v2635, 7
        %v2637 = vsub.s32 4, %v2636
        %v2638 = vrot.slane %v483, %v2637
        %v2639 = vlaneseq
        %v2640 = vshrl.u32 %v2639, 7
        %v2641 = vsub.s32 4, %v2640
        %v2642 = vrot.slane %v484, %v2641
        %v2659 = vunpack.c.l.b16 %v534
        %v2660 = vunpack.c.h.b16 %v534
        %v2661 = vunpack.c.l.b16 %v535
        %v2662 = vunpack.c.h.b16 %v535
        %v2663 = vunpack.c.l.b16 %v536
        %v2664 = vunpack.c.h.b16 %v536
        %v2665 = vunpack.c.l.b16 %v537
        %v2666 = vunpack.c.h.b16 %v537
        %v2667 = vunpack.c.l.b16 %v538
        %v2668 = vunpack.c.h.b16 %v538
        %v2669 = vunpack.c.l.b16 %v539
        %v2670 = vunpack.c.h.b16 %v539
        %v2671 = vunpack.c.l.b16 %v540
        %v2672 = vunpack.c.h.b16 %v540
        %v2673 = vunpack.c.l.b16 %v541
        %v2674 = vunpack.c.h.b16 %v541
        %v2675 = vunpack.c.l.b16 %v542
        %v2676 = vunpack.c.h.b16 %v542
        %v2677 = vunpack.c.l.b16 %v543
        %v2678 = vunpack.c.h.b16 %v543
        %v2679 = vunpack.c.l.b16 %v544
        %v2680 = vunpack.c.h.b16 %v544
        %v2681 = vunpack.c.l.b16 %v545
        %v2682 = vunpack.c.h.b16 %v545
        %v2683 = vunpack.c.l.b16 %v546
        %v2684 = vunpack.c.h.b16 %v546
        %v2685 = vunpack.c.l.b16 %v547
        %v2686 = vunpack.c.h.b16 %v547
        %v2687 = vunpack.c.l.b16 %v548
        %v2688 = vunpack.c.h.b16 %v548
        %v2689 = vunpack.c.l.b16 %v549
        %v2690 = vunpack.c.h.b16 %v549
        %v2691 = vpack.c.b16 %v2661, %v2659
        %v2692 = vpack.c.b16 %v2662, %v2660
        %v2693 = vpack.c.b16 %v2665, %v2663
        %v2694 = vpack.c.b16 %v2666, %v2664
        %v2695 = vpack.c.b16 %v2669, %v2667
        %v2696 = vpack.c.b16 %v2670, %v2668
        %v2697 = vpack.c.b16 %v2673, %v2671
        %v2698 = vpack.c.b16 %v2674, %v2672
        %v2699 = vpack.c.b16 %v2677, %v2675
        %v2700 = vpack.c.b16 %v2678, %v2676
        %v2701 = vpack.c.b16 %v2681, %v2679
        %v2702 = vpack.c.b16 %v2682, %v2680
        %v2703 = vpack.c.b16 %v2685, %v2683
        %v2704 = vpack.c.b16 %v2686, %v2684
        %v2705 = vpack.c.b16 %v2689, %v2687
        %v2706 = vpack.c.b16 %v2690, %v2688
        %2723 = vmatprep.subr.bf16.mxu0 %v2692
        %2724 = vmatpush1.bf16.msra.mxu0 %v2691
        %2725 = vmatprep.subr.bf16.mxu0 %v2694
        %2726 = vmatpush1.bf16.msra.mxu0 %v2693
        %2727 = vmatprep.subr.bf16.mxu0 %v2696
        %2728 = vmatpush1.bf16.msra.mxu0 %v2695
        %2729 = vmatprep.subr.bf16.mxu0 %v2698
        %2730 = vmatpush1.bf16.msra.mxu0 %v2697
        %2731 = vmatprep.subr.bf16.mxu0 %v2700
        %2732 = vmatpush1.bf16.msra.mxu0 %v2699
        %2733 = vmatprep.subr.bf16.mxu0 %v2702
        %2734 = vmatpush1.bf16.msra.mxu0 %v2701
        %2735 = vmatprep.subr.bf16.mxu0 %v2704
        %2736 = vmatpush1.bf16.msra.mxu0 %v2703
        %2737 = vmatprep.subr.bf16.mxu0 %v2706
        %2738 = vmatpush1.bf16.msra.mxu0 %v2705
        %2739 = vmatprep.subr.bf16.mxu0 0
        %2740 = vmatpush1.bf16.msra.mxu0 0
        %2741 = vmatprep.subr.bf16.mxu0 0
        %2742 = vmatpush1.bf16.msra.mxu0 0
        %2743 = vmatprep.subr.bf16.mxu0 0
        %2744 = vmatpush1.bf16.msra.mxu0 0
        %2745 = vmatprep.subr.bf16.mxu0 0
        %2746 = vmatpush1.bf16.msra.mxu0 0
        %2747 = vmatprep.subr.bf16.mxu0 0
        %2748 = vmatpush1.bf16.msra.mxu0 0
        %2749 = vmatprep.subr.bf16.mxu0 0
        %2750 = vmatpush1.bf16.msra.mxu0 0
        %2751 = vmatprep.subr.bf16.mxu0 0
        %2752 = vmatpush1.bf16.msra.mxu0 0
        %2753 = vmatprep.subr.bf16.mxu0 0
        %2754 = vmatpush1.bf16.msra.mxu0 0
        %2755 = vmatprep.mubr.bf16.mxu0 0
        %2756 = vmatmul.mubr.bf16.gmra.mrb[0].mxu0 %v2634
        %v2757 = vpop.f32.mrb[0].mxu0
        %v2758 = vadd.f32 %v2638, %v2757
        %v2759 = vpop.f32.mrb[0].mxu0
        %v2760 = vadd.f32 %v2642, %v2759
        %v2761 = vpop.f32.mrb[0].mxu0
        %v2762 = vadd.f32 %v2638, %v2761
        %v2763 = vpop.f32.mrb[0].mxu0
        %v2764 = vadd.f32 %v2642, %v2763
        %2765 = vdwg.mxu0
        %v2766 = vmul.f32 %v2758, 0.5
        %v2767 = vmul.f32 %v2760, 0.5
        %v2768 = vmul.f32 %v2762, 0.5
        %v2769 = vmul.f32 %v2764, 0.5
        %v2770 = vmul.f32 %v2758, 0.044715
        %v2771 = vmul.f32 %v2760, 0.044715
        %v2772 = vmul.f32 %v2762, 0.044715
        %v2773 = vmul.f32 %v2764, 0.044715
        %v2774 = vmul.f32 %v2770, %v2758
        %v2775 = vmul.f32 %v2771, %v2760
        %v2776 = vmul.f32 %v2772, %v2762
        %v2777 = vmul.f32 %v2773, %v2764
        %v2778 = vmul.f32 %v2774, %v2758
        %v2779 = vmul.f32 %v2775, %v2760
        %v2780 = vmul.f32 %v2776, %v2762
        %v2781 = vmul.f32 %v2777, %v2764
        %v2782 = vadd.f32 %v2758, %v2778
        %v2783 = vadd.f32 %v2760, %v2779
        %v2784 = vadd.f32 %v2762, %v2780
        %v2785 = vadd.f32 %v2764, %v2781
        %v2786 = vmul.f32 %v2782, 0.7978846
        %v2787 = vmul.f32 %v2783, 0.7978846
        %v2788 = vmul.f32 %v2784, 0.7978846
        %v2789 = vmul.f32 %v2785, 0.7978846
        %v2790 = vtanh.pop %v2786
        %v2791 = vtanh.pop %v2787
        %v2792 = vtanh.pop %v2788
        %v2793 = vtanh.pop %v2789
        %v2794 = vadd.f32 %v2790, 1.0
        %v2795 = vadd.f32 %v2791, 1.0
        %v2796 = vadd.f32 %v2792, 1.0
        %v2797 = vadd.f32 %v2793, 1.0
        %v2798 = vmul.f32 %v2766, %v2794
        %v2799 = vmul.f32 %v2767, %v2795
        %v2800 = vmul.f32 %v2768, %v2796
        %v2801 = vmul.f32 %v2769, %v2797
        %v2802 = vpack.c.bf16 %v2800, %v2798
        %v2803 = vpack.c.bf16 %v2801, %v2799
        %v2804 = vlaneseq
        %v2805 = vshrl.u32 %v2804, 7
        %v2806 = vsub.s32 5, %v2805
        %v2807 = vrot.slane %v483, %v2806
        %v2840 = vunpack.c.l.b16 %v550
        %v2841 = vunpack.c.l.b16 %v551
        %v2842 = vunpack.c.l.b16 %v552
        %v2843 = vunpack.c.l.b16 %v553
        %v2844 = vunpack.c.l.b16 %v554
        %v2845 = vunpack.c.l.b16 %v555
        %v2846 = vunpack.c.l.b16 %v556
        %v2847 = vunpack.c.l.b16 %v557
        %v2848 = vunpack.c.l.b16 %v558
        %v2849 = vunpack.c.l.b16 %v559
        %v2850 = vunpack.c.l.b16 %v560
        %v2851 = vunpack.c.l.b16 %v561
        %v2852 = vunpack.c.l.b16 %v562
        %v2853 = vunpack.c.l.b16 %v563
        %v2854 = vunpack.c.l.b16 %v564
        %v2855 = vunpack.c.l.b16 %v565
        %v2856 = vunpack.c.l.b16 %v566
        %v2857 = vunpack.c.l.b16 %v567
        %v2858 = vunpack.c.l.b16 %v568
        %v2859 = vunpack.c.l.b16 %v569
        %v2860 = vunpack.c.l.b16 %v570
        %v2861 = vunpack.c.l.b16 %v571
        %v2862 = vunpack.c.l.b16 %v572
        %v2863 = vunpack.c.l.b16 %v573
        %v2864 = vunpack.c.l.b16 %v574
        %v2865 = vunpack.c.l.b16 %v575
        %v2866 = vunpack.c.l.b16 %v576
        %v2867 = vunpack.c.l.b16 %v577
        %v2868 = vunpack.c.l.b16 %v578
        %v2869 = vunpack.c.l.b16 %v579
        %v2870 = vunpack.c.l.b16 %v580
        %v2871 = vunpack.c.l.b16 %v581
        %v2872 = vpack.c.b16 %v2841, %v2840
        %v2873 = vpack.c.b16 %v2843, %v2842
        %v2874 = vpack.c.b16 %v2845, %v2844
        %v2875 = vpack.c.b16 %v2847, %v2846
        %v2876 = vpack.c.b16 %v2849, %v2848
        %v2877 = vpack.c.b16 %v2851, %v2850
        %v2878 = vpack.c.b16 %v2853, %v2852
        %v2879 = vpack.c.b16 %v2855, %v2854
        %v2880 = vpack.c.b16 %v2857, %v2856
        %v2881 = vpack.c.b16 %v2859, %v2858
        %v2882 = vpack.c.b16 %v2861, %v2860
        %v2883 = vpack.c.b16 %v2863, %v2862
        %v2884 = vpack.c.b16 %v2865, %v2864
        %v2885 = vpack.c.b16 %v2867, %v2866
        %v2886 = vpack.c.b16 %v2869, %v2868
        %v2887 = vpack.c.b16 %v2871, %v2870
        %2904 = vmatprep.subr.bf16.mxu0 0
        %2905 = vmatpush1.bf16.msra.mxu0 %v2872
        %2906 = vmatprep.subr.bf16.mxu0 0
        %2907 = vmatpush1.bf16.msra.mxu0 %v2873
        %2908 = vmatprep.subr.bf16.mxu0 0
        %2909 = vmatpush1.bf16.msra.mxu0 %v2874
        %2910 = vmatprep.subr.bf16.mxu0 0
        %2911 = vmatpush1.bf16.msra.mxu0 %v2875
        %2912 = vmatprep.subr.bf16.mxu0 0
        %2913 = vmatpush1.bf16.msra.mxu0 %v2876
        %2914 = vmatprep.subr.bf16.mxu0 0
        %2915 = vmatpush1.bf16.msra.mxu0 %v2877
        %2916 = vmatprep.subr.bf16.mxu0 0
        %2917 = vmatpush1.bf16.msra.mxu0 %v2878
        %2918 = vmatprep.subr.bf16.mxu0 0
        %2919 = vmatpush1.bf16.msra.mxu0 %v2879
        %2920 = vmatprep.subr.bf16.mxu0 0
        %2921 = vmatpush1.bf16.msra.mxu0 %v2880
        %2922 = vmatprep.subr.bf16.mxu0 0
        %2923 = vmatpush1.bf16.msra.mxu0 %v2881
        %2924 = vmatprep.subr.bf16.mxu0 0
        %2925 = vmatpush1.bf16.msra.mxu0 %v2882
        %2926 = vmatprep.subr.bf16.mxu0 0
        %2927 = vmatpush1.bf16.msra.mxu0 %v2883
        %2928 = vmatprep.subr.bf16.mxu0 0
        %2929 = vmatpush1.bf16.msra.mxu0 %v2884
        %2930 = vmatprep.subr.bf16.mxu0 0
        %2931 = vmatpush1.bf16.msra.mxu0 %v2885
        %2932 = vmatprep.subr.bf16.mxu0 0
        %2933 = vmatpush1.bf16.msra.mxu0 %v2886
        %2934 = vmatprep.subr.bf16.mxu0 0
        %2935 = vmatpush1.bf16.msra.mxu0 %v2887
        %2936 = vmatprep.mubr.bf16.mxu0 %v2803
        %2937 = vmatmul.mubr.bf16.gmra.mrb[0].mxu0 %v2802
        %v2938 = vpop.f32.mrb[0].mxu0
        %v2939 = vadd.f32 %v2807, %v2938
        %v2940 = vpop.f32.mrb[0].mxu0
        %v2941 = vpop.f32.mrb[0].mxu0
        %v2942 = vadd.f32 %v2807, %v2941
        %v2943 = vpop.f32.mrb[0].mxu0
        %2944 = vdwg.mxu0
        %v2945 = vadd.f32 %v2632, %v2939
        %v2946 = vadd.f32 %v2633, %v2942
        %2947 = vadd.xlane.f32.xlu0 %v2945
        %v2948 = vpop.xlane.xlu0 %2947
        %2949 = vadd.xlane.f32.xlu0 %v2946
        %v2950 = vpop.xlane.xlu0 %2949
        %v2951 = vmul.f32 %v2948, %v2603
        %v2952 = vmul.f32 %v2950, %v2603
        %v2953 = vsub.f32 %v2945, %v2951
        %v2954 = vsub.f32 %v2946, %v2952
        %v2955 = vmul.f32 %v2953, %v2953
        %v2956 = vmul.f32 %v2954, %v2954
        %2957 = vadd.xlane.f32.xlu0 %v2955
        %v2958 = vpop.xlane.xlu0 %2957
        %2959 = vadd.xlane.f32.xlu0 %v2956
        %v2960 = vpop.xlane.xlu0 %2959
        %v2961 = vmul.f32 %v2958, %v2603
        %v2962 = vmul.f32 %v2960, %v2603
        %v2963 = vadd.f32 %v2961, 1e-12
        %v2964 = vadd.f32 %v2962, 1e-12
        %v2965 = vrsqrt.pop %v2963
        %v2966 = vrsqrt.pop %v2964
        %v2967 = vmul.f32 %v2953, %v2965
        %v2968 = vmul.f32 %v2954, %v2966
        %v2969 = vlaneseq
        %v2970 = vshrl.u32 %v2969, 7
        %v2971 = vsub.s32 6, %v2970
        %v2972 = vrot.slane %v483, %v2971
        %v2973 = vmul.f32 %v2967, %v2972
        %v2974 = vmul.f32 %v2968, %v2972
        %v2975 = vlaneseq
        %v2976 = vshrl.u32 %v2975, 7
        %v2977 = vsub.s32 7, %v2976
        %v2978 = vrot.slane %v483, %v2977
        %v2979 = vadd.f32 %v2973, %v2978
        %v2980 = vadd.f32 %v2974, %v2978
        %2981 = vst [vmem:[%s473] sm:$0xff] %v2979
        %2982 = vst [vmem:[%s473 + $0x8] sm:$0xff] %v2980
        %s2983 = sand.u32 %s208, 1
        %s2984 = scalar_lea.sflag [#allocation4], %s2983
        %s2985 = sand.u32 %s208, 1
        %s2986 = smul.addr %s2985, 16
        %s2987 = scalar_lea.vmem [#allocation13], %s2986
        // Predicated region
        $region73: #{_lambda_.4} parent=43 // pred_check
          %p2988 = pneg %p218
        $region74: #{_lambda_.4} parent=43 // pred_check_branch
          %2990 = sbr.rel (%p2988) target = $region76
        $region75: #{_lambda_.4} parent=43 // pred_region
          %s2992 = ssub.s32 256, 256
          %2993 = vsyncadd %s2984, %s2992
          %s2994 = smul.addr %s36, 2
          %s2995 = smul.addr %s2994, 128
          %s2996 = scalar_lea.hbm %s6, %s2995
          %s2997 = sshll.u32 %s2987, 4
          %s2998 = int_to_ptr.vmem [resolvable:$true] %s2997
          %3003 = dma.vmem_to_hbm [thread:$0]  %s2998, 256, %s2996, %s2984, 128, 128, 8
        $region76: #{_lambda_.4} parent=43 // pred_fallthru
          _
      $region44: #{_lambda_.4} parent=5 // pred_fallthru
        _
      %p3004 = scmp.le.s32.totalorder 2, %s27
      // Predicated region
      $region77: #{_lambda_.4} parent=5 // pred_check
        %p3005 = pneg %p3004
      $region78: #{_lambda_.4} parent=5 // pred_check_branch
        %3007 = sbr.rel (%p3005) target = $region80
      $region79: #{_lambda_.4} parent=5 // pred_region
        %s3008 = ssub.s32 %s27, 2
        // Predicated region
        $region81: #{_lambda_.4} parent=79 // pred_check
          %p3009 = pneg %p224
        $region82: #{_lambda_.4} parent=79 // pred_check_branch
          %3011 = sbr.rel (%p3009) target = $region84
        $region83: #{_lambda_.4} parent=79 // pred_region
          %s3012 = sand.u32 %s209, 1
          %s3013 = scalar_lea.sflag [#allocation4], %s3012
          %s3014 = sand.u32 %s209, 1
          %s3015 = smul.addr %s3014, 16
          %s3016 = scalar_lea.vmem [#allocation13], %s3015
          %3017 = dma.done %s3013, 256
        $region84: #{_lambda_.4} parent=79 // pred_fallthru
          _
      $region80: #{_lambda_.4} parent=5 // pred_fallthru
        _
    $region6: #{_lambda_.4} parent=1 // loop_footer
      %s31 = sadd.s32 1, %s27
    $region7: #{_lambda_.4} parent=1 // loop_footer_branch
      %26 = sbr.rel target = $region3
    $region8: #{_lambda_.4} parent=1 // loop_exit
      _
    %3018 = vsyncpa [#allocation3], 1
    %s3019 = scalar_lea.sflag [#allocation3], 1
    %3020 = vsyncpa %s3019, 1
    %3021 = vsyncpa [#allocation6], 1
    %s3022 = scalar_lea.sflag [#allocation6], 1
    %3023 = vsyncpa %s3022, 1
    %3024 = vsyncpa [#allocation9], 1
    %s3025 = scalar_lea.sflag [#allocation9], 1
    %3026 = vsyncpa %s3025, 1
    %3027 = vsyncpa [#allocation12], 1
    %s3028 = scalar_lea.sflag [#allocation12], 1
    %3029 = vsyncpa %s3028, 1
    %3030 = vsyncpa [#allocation4], 1
    %s3031 = scalar_lea.sflag [#allocation4], 1
    %3032 = vsyncpa %s3031, 1

// kernel: _lambda_.3
$region0: #{_lambda_.3}
  #allocation0 [shape = 'u32[]', space=smem, size = 0x4, offset = 0x4, fixed_abs, tag = 'smem constant byte address 0x4 - core index']
  #allocation1 [shape = 'u32[144,128]{1,0:T(1,128)}', space=vmem, size = 0x12000, scoped, tag = 'internal scratch']
  %s0 = inlined_call_operand.hbm [shape: f32[2,2,8,128], index: 0, kind: input, shape index: {}, may-alias: {0,6}]
  %s1 = inlined_call_operand.hbm [shape: bf16[2,2,128,384], index: 1, kind: input, shape index: {}]
  %s2 = inlined_call_operand.hbm [shape: bf16[2,2,128,128], index: 2, kind: input, shape index: {}]
  %s3 = inlined_call_operand.hbm [shape: bf16[2,2,128,256], index: 3, kind: input, shape index: {}]
  %s4 = inlined_call_operand.hbm [shape: bf16[2,2,256,128], index: 4, kind: input, shape index: {}]
  %s5 = inlined_call_operand.hbm [shape: f32[2,2,8,384], index: 5, kind: input, shape index: {}]
  %s6 = inlined_call_operand.hbm [shape: f32[2,2,8,128], index: 6, kind: output, shape index: {}, may-alias: {0,6}]
  %s7 = sld [smem:[#allocation0]]
  $region85: #{_lambda_.3} parent=0
    _
  %s9 = ssub.s32 1, %s7
  %s10 = scalar_select 0, %s9, %s7
  $region1: #{_lambda_.3} parent=0
    #allocation2 [shape = 'u8[16384]{0}', space=vmem, size = 0x4000, scoped, tag = 'input window, operand 0']
    #allocation3 [shape = 's32[2]{0}', space=sflag, size = 0x8, scoped, tag = 'scoped memory for _lambda_.3']
    #allocation4 [shape = 's32[2]{0}', space=sflag, size = 0x8, scoped, tag = 'scoped memory for _lambda_.3']
    #allocation5 [shape = 'u8[196608]{0}', space=vmem, size = 0x30000, scoped, tag = 'input window, operand 1']
    #allocation6 [shape = 's32[2]{0}', space=sflag, size = 0x8, scoped, tag = 'scoped memory for _lambda_.3']
    #allocation7 [shape = 'u8[65536]{0}', space=vmem, size = 0x10000, scoped, tag = 'input window, operand 2']
    #allocation8 [shape = 'u8[131072]{0}', space=vmem, size = 0x20000, scoped, tag = 'input window, operand 3']
    #allocation9 [shape = 's32[2]{0}', space=sflag, size = 0x8, scoped, tag = 'scoped memory for _lambda_.3']
    #allocation10 [shape = 'u8[131072]{0}', space=vmem, size = 0x20000, scoped, tag = 'input window, operand 4']
    #allocation11 [shape = 'u8[24576]{0}', space=vmem, size = 0x6000, scoped, tag = 'input window, operand 5']
    #allocation12 [shape = 's32[2]{0}', space=sflag, size = 0x8, scoped, tag = 'scoped memory for _lambda_.3']
    #allocation13 [shape = 'u8[16384]{0}', space=vmem, size = 0x4000, scoped, tag = 'output window, operand 0']
    %11 = vsyncpa [#allocation3], 0
    %s12 = scalar_lea.sflag [#allocation3], 1
    %13 = vsyncpa %s12, 0
    %14 = vsyncpa [#allocation6], 0
    %s15 = scalar_lea.sflag [#allocation6], 1
    %16 = vsyncpa %s15, 0
    %17 = vsyncpa [#allocation9], 0
    %s18 = scalar_lea.sflag [#allocation9], 1
    %19 = vsyncpa %s18, 0
    %20 = vsyncpa [#allocation12], 0
    %s21 = scalar_lea.sflag [#allocation12], 1
    %22 = vsyncpa %s21, 0
    %23 = vsyncpa [#allocation4], 0
    %s24 = scalar_lea.sflag [#allocation4], 1
    %25 = vsyncpa %s24, 0
    loop: start=0, step=1, limit=6
    $region2: #{_lambda_.3} parent=1 // loop_pre_header
      _
    $region3: #{_lambda_.3} parent=1 // loop_header
      %s27 = sphi 0, %s31
      %p28 = scmp.ge.s32.totalorder %s27, 6
      %s34 = sphi 0, %s46
      %s35 = sphi 0, %s42
      %s36 = sphi 0, %s34
      %s37 = sphi 0, %s35
      %s38 = sphi 0, %s36
      %s39 = sphi 0, %s37
      %s49 = sphi 0, %s51
      %s52 = sphi 0, %s49
      %s53 = sphi 0, %s52
      %s69 = sphi 0, %s53
      %s77 = sphi 0, %s79
      %s80 = sphi 0, %s77
      %s81 = sphi 0, %s80
      %s97 = sphi 0, %s81
      %s105 = sphi 0, %s107
      %s108 = sphi 0, %s105
      %s109 = sphi 0, %s108
      %s125 = sphi 0, %s109
      %s133 = sphi 0, %s135
      %s136 = sphi 0, %s133
      %s137 = sphi 0, %s136
      %s153 = sphi 0, %s137
      %s161 = sphi 0, %s163
      %s164 = sphi 0, %s161
      %s165 = sphi 0, %s164
      %s181 = sphi 0, %s165
      %s189 = sphi 0, %s191
      %s192 = sphi 0, %s189
      %s193 = sphi 0, %s192
      %s209 = sphi 0, %s193
      %s215 = sphi 0, %s217
      %s218 = sphi 0, %s215
      %s219 = sphi 0, %s218
      %s235 = sphi 0, %s219
    $region4: #{_lambda_.3} parent=1 // loop_header_branch
      %30 = sbr.rel (%p28) target = $region8
    $region5: #{_lambda_.3} parent=1 // loop_body
      %s32 = ssub.s32 %s27, 1
      %s33 = ssub.s32 %s27, 2
      %s40 = sadd.s32 1, %s35
      %p41 = scmp.ge.s32.totalorder %s40, 2
      %s42 = scalar_select %p41, 0, %s40
      %s43 = sadd.s32 1, %s34
      %s44 = scalar_select %p41, %s43, %s34
      %p45 = scmp.ge.s32.totalorder %s44, 2
      %s46 = scalar_select %p45, 0, %s44
      %s47 = ssub.s32 %s34, %s46
      %p48 = scmp.eq.s32.totalorder %s47, 0
      %s50 = sadd.s32 %s49, 1
      %s51 = scalar_select %p48, %s49, %s50
      %p54 = pneg %p48
      %p55 = scmp.eq.s32.totalorder %s27, 3
      %p56 = por %p54, %p55
      %p57 = scmp.ne.s32.totalorder %s49, %s52
      %p58 = scmp.eq.s32.totalorder %s27, 0
      %p59 = por %p57, %p58
      %p60 = scmp.ne.s32.totalorder %s49, %s52
      %p61 = scmp.eq.s32.totalorder %s32, 3
      %p62 = por %p60, %p61
      %p63 = scmp.ne.s32.totalorder %s52, %s53
      %p64 = scmp.eq.s32.totalorder %s32, 0
      %p65 = por %p63, %p64
      %p66 = scmp.ne.s32.totalorder %s52, %s53
      %p67 = scmp.eq.s32.totalorder %s33, 3
      %p68 = por %p66, %p67
      %p70 = scmp.ne.s32.totalorder %s53, %s69
      %p71 = scmp.eq.s32.totalorder %s33, 0
      %p72 = por %p70, %p71
      %s73 = ssub.s32 %s34, %s46
      %s74 = ssub.s32 %s35, %s42
      %s75 = sor.u32 %s73, %s74
      %p76 = scmp.eq.s32.totalorder %s75, 0
      %s78 = sadd.s32 %s77, 1
      %s79 = scalar_select %p76, %s77, %s78
      %p82 = pneg %p76
      %p83 = scmp.eq.s32.totalorder %s27, 3
      %p84 = por %p82, %p83
      %p85 = scmp.ne.s32.totalorder %s77, %s80
      %p86 = scmp.eq.s32.totalorder %s27, 0
      %p87 = por %p85, %p86
      %p88 = scmp.ne.s32.totalorder %s77, %s80
      %p89 = scmp.eq.s32.totalorder %s32, 3
      %p90 = por %p88, %p89
      %p91 = scmp.ne.s32.totalorder %s80, %s81
      %p92 = scmp.eq.s32.totalorder %s32, 0
      %p93 = por %p91, %p92
      %p94 = scmp.ne.s32.totalorder %s80, %s81
      %p95 = scmp.eq.s32.totalorder %s33, 3
      %p96 = por %p94, %p95
      %p98 = scmp.ne.s32.totalorder %s81, %s97
      %p99 = scmp.eq.s32.totalorder %s33, 0
      %p100 = por %p98, %p99
      %s101 = ssub.s32 %s34, %s46
      %s102 = ssub.s32 %s35, %s42
      %s103 = sor.u32 %s101, %s102
      %p104 = scmp.eq.s32.totalorder %s103, 0
      %s106 = sadd.s32 %s105, 1
      %s107 = scalar_select %p104, %s105, %s106
      %p110 = pneg %p104
      %p111 = scmp.eq.s32.totalorder %s27, 3
      %p112 = por %p110, %p111
      %p113 = scmp.ne.s32.totalorder %s105, %s108
      %p114 = scmp.eq.s32.totalorder %s27, 0
      %p115 = por %p113, %p114
      %p116 = scmp.ne.s32.totalorder %s105, %s108
      %p117 = scmp.eq.s32.totalorder %s32, 3
      %p118 = por %p116, %p117
      %p119 = scmp.ne.s32.totalorder %s108, %s109
      %p120 = scmp.eq.s32.totalorder %s32, 0
      %p121 = por %p119, %p120
      %p122 = scmp.ne.s32.totalorder %s108, %s109
      %p123 = scmp.eq.s32.totalorder %s33, 3
      %p124 = por %p122, %p123
      %p126 = scmp.ne.s32.totalorder %s109, %s125
      %p127 = scmp.eq.s32.totalorder %s33, 0
      %p128 = por %p126, %p127
      %s129 = ssub.s32 %s34, %s46
      %s130 = ssub.s32 %s35, %s42
      %s131 = sor.u32 %s129, %s130
      %p132 = scmp.eq.s32.totalorder %s131, 0
      %s134 = sadd.s32 %s133, 1
      %s135 = scalar_select %p132, %s133, %s134
      %p138 = pneg %p132
      %p139 = scmp.eq.s32.totalorder %s27, 3
      %p140 = por %p138, %p139
      %p141 = scmp.ne.s32.totalorder %s133, %s136
      %p142 = scmp.eq.s32.totalorder %s27, 0
      %p143 = por %p141, %p142
      %p144 = scmp.ne.s32.totalorder %s133, %s136
      %p145 = scmp.eq.s32.totalorder %s32, 3
      %p146 = por %p144, %p145
      %p147 = scmp.ne.s32.totalorder %s136, %s137
      %p148 = scmp.eq.s32.totalorder %s32, 0
      %p149 = por %p147, %p148
      %p150 = scmp.ne.s32.totalorder %s136, %s137
      %p151 = scmp.eq.s32.totalorder %s33, 3
      %p152 = por %p150, %p151
      %p154 = scmp.ne.s32.totalorder %s137, %s153
      %p155 = scmp.eq.s32.totalorder %s33, 0
      %p156 = por %p154, %p155
      %s157 = ssub.s32 %s34, %s46
      %s158 = ssub.s32 %s35, %s42
      %s159 = sor.u32 %s157, %s158
      %p160 = scmp.eq.s32.totalorder %s159, 0
      %s162 = sadd.s32 %s161, 1
      %s163 = scalar_select %p160, %s161, %s162
      %p166 = pneg %p160
      %p167 = scmp.eq.s32.totalorder %s27, 3
      %p168 = por %p166, %p167
      %p169 = scmp.ne.s32.totalorder %s161, %s164
      %p170 = scmp.eq.s32.totalorder %s27, 0
      %p171 = por %p169, %p170
      %p172 = scmp.ne.s32.totalorder %s161, %s164
      %p173 = scmp.eq.s32.totalorder %s32, 3
      %p174 = por %p172, %p173
      %p175 = scmp.ne.s32.totalorder %s164, %s165
      %p176 = scmp.eq.s32.totalorder %s32, 0
      %p177 = por %p175, %p176
      %p178 = scmp.ne.s32.totalorder %s164, %s165
      %p179 = scmp.eq.s32.totalorder %s33, 3
      %p180 = por %p178, %p179
      %p182 = scmp.ne.s32.totalorder %s165, %s181
      %p183 = scmp.eq.s32.totalorder %s33, 0
      %p184 = por %p182, %p183
      %s185 = ssub.s32 %s34, %s46
      %s186 = ssub.s32 %s35, %s42
      %s187 = sor.u32 %s185, %s186
      %p188 = scmp.eq.s32.totalorder %s187, 0
      %s190 = sadd.s32 %s189, 1
      %s191 = scalar_select %p188, %s189, %s190
      %p194 = pneg %p188
      %p195 = scmp.eq.s32.totalorder %s27, 3
      %p196 = por %p194, %p195
      %p197 = scmp.ne.s32.totalorder %s189, %s192
      %p198 = scmp.eq.s32.totalorder %s27, 0
      %p199 = por %p197, %p198
      %p200 = scmp.ne.s32.totalorder %s189, %s192
      %p201 = scmp.eq.s32.totalorder %s32, 3
      %p202 = por %p200, %p201
      %p203 = scmp.ne.s32.totalorder %s192, %s193
      %p204 = scmp.eq.s32.totalorder %s32, 0
      %p205 = por %p203, %p204
      %p206 = scmp.ne.s32.totalorder %s192, %s193
      %p207 = scmp.eq.s32.totalorder %s33, 3
      %p208 = por %p206, %p207
      %p210 = scmp.ne.s32.totalorder %s193, %s209
      %p211 = scmp.eq.s32.totalorder %s33, 0
      %p212 = por %p210, %p211
      %s213 = ssub.s32 %s34, %s46
      %p214 = scmp.eq.s32.totalorder %s213, 0
      %s216 = sadd.s32 %s215, 1
      %s217 = scalar_select %p214, %s215, %s216
      %p220 = pneg %p214
      %p221 = scmp.eq.s32.totalorder %s27, 3
      %p222 = por %p220, %p221
      %p223 = scmp.ne.s32.totalorder %s215, %s218
      %p224 = scmp.eq.s32.totalorder %s27, 0
      %p225 = por %p223, %p224
      %p226 = scmp.ne.s32.totalorder %s215, %s218
      %p227 = scmp.eq.s32.totalorder %s32, 3
      %p228 = por %p226, %p227
      %p229 = scmp.ne.s32.totalorder %s218, %s219
      %p230 = scmp.eq.s32.totalorder %s32, 0
      %p231 = por %p229, %p230
      %p232 = scmp.ne.s32.totalorder %s218, %s219
      %p233 = scmp.eq.s32.totalorder %s33, 3
      %p234 = por %p232, %p233
      %p236 = scmp.ne.s32.totalorder %s219, %s235
      %p237 = scmp.eq.s32.totalorder %s33, 0
      %p238 = por %p236, %p237
      %p239 = scmp.le.s32.totalorder 1, %s27
      %p240 = scmp.lt.s32.totalorder %s27, 5
      %p241 = pnand %p239, %p240
      %p242 = pneg %p241
      // Predicated region
      $region9: #{_lambda_.3} parent=5 // pred_check
        _
      $region10: #{_lambda_.3} parent=5 // pred_check_branch
        %244 = sbr.rel (%p241) target = $region12
      $region11: #{_lambda_.3} parent=5 // pred_region
        %s245 = ssub.s32 %s27, 1
      $region12: #{_lambda_.3} parent=5 // pred_fallthru
        _
      %p246 = scmp.lt.s32.totalorder %s27, 4
      // Predicated region
      $region13: #{_lambda_.3} parent=5 // pred_check
        %p247 = pneg %p246
      $region14: #{_lambda_.3} parent=5 // pred_check_branch
        %249 = sbr.rel (%p247) target = $region16
      $region15: #{_lambda_.3} parent=5 // pred_region
        // Predicated region
        $region17: #{_lambda_.3} parent=15 // pred_check
          %p250 = pneg %p59
        $region18: #{_lambda_.3} parent=15 // pred_check_branch
          %252 = sbr.rel (%p250) target = $region20
        $region19: #{_lambda_.3} parent=15 // pred_region
          %s253 = sand.u32 %s49, 1
          %s254 = scalar_lea.sflag [#allocation3], %s253
          %s255 = sand.u32 %s49, 1
          %s256 = smul.addr %s255, 16
          %s257 = scalar_lea.vmem [#allocation2], %s256
          %s259 = ssub.s32 256, 256
          %260 = vsyncadd %s254, %s259
          %s261 = smul.addr %s34, 128
          %s262 = scalar_lea.hbm %s0, %s261
          %s263 = sshll.u32 %s257, 4
          %s264 = int_to_ptr.vmem [resolvable:$true] %s263
          %269 = dma.hbm_to_vmem [thread:$0]  %s262, 256, %s264, %s254, 256, 128, 8
        $region20: #{_lambda_.3} parent=15 // pred_fallthru
          _
        // Predicated region
        $region21: #{_lambda_.3} parent=15 // pred_check
          %p270 = pneg %p87
        $region22: #{_lambda_.3} parent=15 // pred_check_branch
          %272 = sbr.rel (%p270) target = $region24
        $region23: #{_lambda_.3} parent=15 // pred_region
          %s273 = sand.u32 %s27, 1
          %s274 = scalar_lea.sflag [#allocation6], %s273
          %s275 = sand.u32 %s77, 1
          %s276 = smul.addr %s275, 192
          %s277 = scalar_lea.vmem [#allocation5], %s276
          %s279 = ssub.s32 3072, 3072
          %280 = vsyncadd %s274, %s279
          %s281 = smul.addr %s35, 48
          %s282 = smul.addr %s34, 96
          %s283 = sadd.s32 %s281, %s282
          %s284 = smul.addr %s283, 64
          %s285 = scalar_lea.hbm %s1, %s284
          %s286 = sshll.u32 %s277, 4
          %s287 = int_to_ptr.vmem [resolvable:$true] %s286
          %292 = dma.hbm_to_vmem [thread:$0]  %s285, 3072, %s287, %s274, 192, 192, 12
        $region24: #{_lambda_.3} parent=15 // pred_fallthru
          _
        // Predicated region
        $region25: #{_lambda_.3} parent=15 // pred_check
          %p293 = pneg %p115
        $region26: #{_lambda_.3} parent=15 // pred_check_branch
          %295 = sbr.rel (%p293) target = $region28
        $region27: #{_lambda_.3} parent=15 // pred_region
          %s296 = sand.u32 %s27, 1
          %s297 = scalar_lea.sflag [#allocation6], %s296
          %s298 = sand.u32 %s105, 1
          %s299 = smul.addr %s298, 64
          %s300 = scalar_lea.vmem [#allocation7], %s299
          %s302 = ssub.s32 1024, 1024
          %303 = vsyncadd %s297, %s302
          %s304 = smul.addr %s35, 16
          %s305 = smul.addr %s34, 32
          %s306 = sadd.s32 %s304, %s305
          %s307 = smul.addr %s306, 64
          %s308 = scalar_lea.hbm %s2, %s307
          %s309 = sshll.u32 %s300, 4
          %s310 = int_to_ptr.vmem [resolvable:$true] %s309
          %315 = dma.hbm_to_vmem [thread:$0]  %s308, 1024, %s310, %s297, 64, 64, 4
        $region28: #{_lambda_.3} parent=15 // pred_fallthru
          _
        // Predicated region
        $region29: #{_lambda_.3} parent=15 // pred_check
          %p316 = pneg %p143
        $region30: #{_lambda_.3} parent=15 // pred_check_branch
          %318 = sbr.rel (%p316) target = $region32
        $region31: #{_lambda_.3} parent=15 // pred_region
          %s319 = sand.u32 %s27, 1
          %s320 = scalar_lea.sflag [#allocation9], %s319
          %s321 = sand.u32 %s133, 1
          %s322 = smul.addr %s321, 128
          %s323 = scalar_lea.vmem [#allocation8], %s322
          %s325 = ssub.s32 2048, 2048
          %326 = vsyncadd %s320, %s325
          %s327 = smul.addr %s35, 32
          %s328 = smul.addr %s34, 64
          %s329 = sadd.s32 %s327, %s328
          %s330 = smul.addr %s329, 64
          %s331 = scalar_lea.hbm %s3, %s330
          %s332 = sshll.u32 %s323, 4
          %s333 = int_to_ptr.vmem [resolvable:$true] %s332
          %338 = dma.hbm_to_vmem [thread:$0]  %s331, 2048, %s333, %s320, 128, 128, 8
        $region32: #{_lambda_.3} parent=15 // pred_fallthru
          _
        // Predicated region
        $region33: #{_lambda_.3} parent=15 // pred_check
          %p339 = pneg %p171
        $region34: #{_lambda_.3} parent=15 // pred_check_branch
          %341 = sbr.rel (%p339) target = $region36
        $region35: #{_lambda_.3} parent=15 // pred_region
          %s342 = sand.u32 %s27, 1
          %s343 = scalar_lea.sflag [#allocation9], %s342
          %s344 = sand.u32 %s161, 1
          %s345 = smul.addr %s344, 128
          %s346 = scalar_lea.vmem [#allocation10], %s345
          %s348 = ssub.s32 2048, 2048
          %349 = vsyncadd %s343, %s348
          %s350 = smul.addr %s35, 32
          %s351 = smul.addr %s34, 64
          %s352 = sadd.s32 %s350, %s351
          %s353 = smul.addr %s352, 64
          %s354 = scalar_lea.hbm %s4, %s353
          %s355 = sshll.u32 %s346, 4
          %s356 = int_to_ptr.vmem [resolvable:$true] %s355
          %361 = dma.hbm_to_vmem [thread:$0]  %s354, 2048, %s356, %s343, 64, 64, 4
        $region36: #{_lambda_.3} parent=15 // pred_fallthru
          _
        // Predicated region
        $region37: #{_lambda_.3} parent=15 // pred_check
          %p362 = pneg %p199
        $region38: #{_lambda_.3} parent=15 // pred_check_branch
          %364 = sbr.rel (%p362) target = $region40
        $region39: #{_lambda_.3} parent=15 // pred_region
          %s365 = sand.u32 %s189, 1
          %s366 = scalar_lea.sflag [#allocation12], %s365
          %s367 = sand.u32 %s189, 1
          %s368 = smul.addr %s367, 24
          %s369 = scalar_lea.vmem [#allocation11], %s368
          %s371 = ssub.s32 384, 384
          %372 = vsyncadd %s366, %s371
          %s373 = smul.addr %s35, 3
          %s374 = smul.addr %s34, 6
          %s375 = sadd.s32 %s373, %s374
          %s376 = smul.addr %s375, 128
          %s377 = scalar_lea.hbm %s5, %s376
          %s379 = sshll.u32 %s369, 4
          %s380 = int_to_ptr.vmem [resolvable:$true] %s379
          %382 = dma.hbm_to_vmem [thread:$0]  %s377, 384, %s380, %s366
        $region40: #{_lambda_.3} parent=15 // pred_fallthru
          _
      $region16: #{_lambda_.3} parent=5 // pred_fallthru
        _
      %p383 = scmp.le.s32.totalorder 1, %s27
      %p384 = scmp.lt.s32.totalorder %s27, 5
      %p385 = pnand %p383, %p384
      %p386 = pneg %p385
      // Predicated region
      $region41: #{_lambda_.3} parent=5 // pred_check
        _
      $region42: #{_lambda_.3} parent=5 // pred_check_branch
        %388 = sbr.rel (%p385) target = $region44
      $region43: #{_lambda_.3} parent=5 // pred_region
        %s389 = ssub.s32 %s27, 1
        %s390 = sand.u32 %s52, 1
        %s391 = scalar_lea.sflag [#allocation3], %s390
        %s392 = sand.u32 %s52, 1
        %s393 = smul.addr %s392, 16
        %s394 = scalar_lea.vmem [#allocation2], %s393
        // Predicated region
        $region45: #{_lambda_.3} parent=43 // pred_check
          %p395 = pneg %p65
        $region46: #{_lambda_.3} parent=43 // pred_check_branch
          %397 = sbr.rel (%p395) target = $region48
        $region47: #{_lambda_.3} parent=43 // pred_region
          %398 = dma.done %s391, 256
        $region48: #{_lambda_.3} parent=43 // pred_fallthru
          _
        %s399 = sand.u32 %s32, 1
        %s400 = scalar_lea.sflag [#allocation6], %s399
        %s401 = sand.u32 %s80, 1
        %s402 = smul.addr %s401, 192
        %s403 = scalar_lea.vmem [#allocation5], %s402
        // Predicated region
        $region49: #{_lambda_.3} parent=43 // pred_check
          %p404 = pneg %p93
        $region50: #{_lambda_.3} parent=43 // pred_check_branch
          %406 = sbr.rel (%p404) target = $region52
        $region51: #{_lambda_.3} parent=43 // pred_region
          %407 = dma.done %s400, 3072
        $region52: #{_lambda_.3} parent=43 // pred_fallthru
          _
        %s408 = sand.u32 %s32, 1
        %s409 = scalar_lea.sflag [#allocation6], %s408
        %s410 = sand.u32 %s108, 1
        %s411 = smul.addr %s410, 64
        %s412 = scalar_lea.vmem [#allocation7], %s411
        // Predicated region
        $region53: #{_lambda_.3} parent=43 // pred_check
          %p413 = pneg %p121
        $region54: #{_lambda_.3} parent=43 // pred_check_branch
          %415 = sbr.rel (%p413) target = $region56
        $region55: #{_lambda_.3} parent=43 // pred_region
          %416 = dma.done %s409, 1024
        $region56: #{_lambda_.3} parent=43 // pred_fallthru
          _
        %s417 = sand.u32 %s32, 1
        %s418 = scalar_lea.sflag [#allocation9], %s417
        %s419 = sand.u32 %s136, 1
        %s420 = smul.addr %s419, 128
        %s421 = scalar_lea.vmem [#allocation8], %s420
        // Predicated region
        $region57: #{_lambda_.3} parent=43 // pred_check
          %p422 = pneg %p149
        $region58: #{_lambda_.3} parent=43 // pred_check_branch
          %424 = sbr.rel (%p422) target = $region60
        $region59: #{_lambda_.3} parent=43 // pred_region
          %425 = dma.done %s418, 2048
        $region60: #{_lambda_.3} parent=43 // pred_fallthru
          _
        %s426 = sand.u32 %s32, 1
        %s427 = scalar_lea.sflag [#allocation9], %s426
        %s428 = sand.u32 %s164, 1
        %s429 = smul.addr %s428, 128
        %s430 = scalar_lea.vmem [#allocation10], %s429
        // Predicated region
        $region61: #{_lambda_.3} parent=43 // pred_check
          %p431 = pneg %p177
        $region62: #{_lambda_.3} parent=43 // pred_check_branch
          %433 = sbr.rel (%p431) target = $region64
        $region63: #{_lambda_.3} parent=43 // pred_region
          %434 = dma.done %s427, 2048
        $region64: #{_lambda_.3} parent=43 // pred_fallthru
          _
        %s435 = sand.u32 %s192, 1
        %s436 = scalar_lea.sflag [#allocation12], %s435
        %s437 = sand.u32 %s192, 1
        %s438 = smul.addr %s437, 24
        %s439 = scalar_lea.vmem [#allocation11], %s438
        // Predicated region
        $region65: #{_lambda_.3} parent=43 // pred_check
          %p440 = pneg %p205
        $region66: #{_lambda_.3} parent=43 // pred_check_branch
          %442 = sbr.rel (%p440) target = $region68
        $region67: #{_lambda_.3} parent=43 // pred_region
          %443 = dma.done %s436, 384
        $region68: #{_lambda_.3} parent=43 // pred_fallthru
          _
        %s444 = sand.u32 %s52, 1
        %s445 = scalar_lea.sflag [#allocation3], %s444
        %s446 = sand.u32 %s52, 1
        %s447 = smul.addr %s446, 16
        %s448 = scalar_lea.vmem [#allocation2], %s447
        %p449 = pneg %p65
        %p450 = pneg %p62
        %s451 = sand.u32 %s32, 1
        %s452 = scalar_lea.sflag [#allocation6], %s451
        %s453 = sand.u32 %s80, 1
        %s454 = smul.addr %s453, 192
        %s455 = scalar_lea.vmem [#allocation5], %s454
        %p456 = pneg %p93
        %p457 = pneg %p90
        %s458 = sand.u32 %s32, 1
        %s459 = scalar_lea.sflag [#allocation6], %s458
        %s460 = sand.u32 %s108, 1
        %s461 = smul.addr %s460, 64
        %s462 = scalar_lea.vmem [#allocation7], %s461
        %p463 = pneg %p121
        %p464 = pneg %p118
        %s465 = sand.u32 %s32, 1
        %s466 = scalar_lea.sflag [#allocation9], %s465
        %s467 = sand.u32 %s136, 1
        %s468 = smul.addr %s467, 128
        %s469 = scalar_lea.vmem [#allocation8], %s468
        %p470 = pneg %p149
        %p471 = pneg %p146
        %s472 = sand.u32 %s32, 1
        %s473 = scalar_lea.sflag [#allocation9], %s472
        %s474 = sand.u32 %s164, 1
        %s475 = smul.addr %s474, 128
        %s476 = scalar_lea.vmem [#allocation10], %s475
        %p477 = pneg %p177
        %p478 = pneg %p174
        %s479 = sand.u32 %s192, 1
        %s480 = scalar_lea.sflag [#allocation12], %s479
        %s481 = sand.u32 %s192, 1
        %s482 = smul.addr %s481, 24
        %s483 = scalar_lea.vmem [#allocation11], %s482
        %p484 = pneg %p205
        %p485 = pneg %p202
        %p486 = pneg %p231
        %p487 = pneg %p228
        %s488 = sand.u32 %s218, 1
        %s489 = scalar_lea.sflag [#allocation4], %s488
        %s490 = sand.u32 %s218, 1
        %s491 = smul.addr %s490, 16
        %s492 = scalar_lea.vmem [#allocation13], %s491
        %p494 = scmp.eq.s32.totalorder %s37, 0
        // Predicated region
        $region69: #{_lambda_.3} parent=43 // pred_check
          %p495 = pneg %p494
        $region70: #{_lambda_.3} parent=43 // pred_check_branch
          %497 = sbr.rel (%p495) target = $region72
        $region71: #{_lambda_.3} parent=43 // pred_region
          %v498 = vld [vmem:[%s394] sm:$0xff]
          %v499 = vld [vmem:[%s394 + $0x8] sm:$0xff]
          %500 = vst [vmem:[%s492] sm:$0xff] %v498
          %501 = vst [vmem:[%s492 + $0x8] sm:$0xff] %v499
        $region72: #{_lambda_.3} parent=43 // pred_fallthru
          _
        %v502 = vld [vmem:[%s439] sm:$0xff]
        %v503 = vld [vmem:[%s439 + $0x8] sm:$0xff]
        %v504 = vld [vmem:[%s439 + $0x10] sm:$0xff]
        %v505 = vld [vmem:[%s403] sm:$0xff]
        %v506 = vld [vmem:[%s403 + $0x8] sm:$0xf]
        %v507 = vld [vmem:[%s403 + $0xc] sm:$0xff]
        %v508 = vld [vmem:[%s403 + $0x14] sm:$0xf]
        %v509 = vld [vmem:[%s403 + $0x18] sm:$0xff]
        %v510 = vld [vmem:[%s403 + $0x20] sm:$0xf]
        %v511 = vld [vmem:[%s403 + $0x24] sm:$0xff]
        %v512 = vld [vmem:[%s403 + $0x2c] sm:$0xf]
        %v513 = vld [vmem:[%s403 + $0x30] sm:$0xff]
        %v514 = vld [vmem:[%s403 + $0x38] sm:$0xf]
        %v515 = vld [vmem:[%s403 + $0x3c] sm:$0xff]
        %v516 = vld [vmem:[%s403 + $0x44] sm:$0xf]
        %v517 = vld [vmem:[%s403 + $0x48] sm:$0xff]
        %v518 = vld [vmem:[%s403 + $0x50] sm:$0xf]
        %v519 = vld [vmem:[%s403 + $0x54] sm:$0xff]
        %v520 = vld [vmem:[%s403 + $0x5c] sm:$0xf]
        %v521 = vld [vmem:[%s403 + $0x60] sm:$0xff]
        %v522 = vld [vmem:[%s403 + $0x68] sm:$0xf]
        %v523 = vld [vmem:[%s403 + $0x6c] sm:$0xff]
        %v524 = vld [vmem:[%s403 + $0x74] sm:$0xf]
        %v525 = vld [vmem:[%s403 + $0x78] sm:$0xff]
        %v526 = vld [vmem:[%s403 + $0x80] sm:$0xf]
        %v527 = vld [vmem:[%s403 + $0x84] sm:$0xff]
        %v528 = vld [vmem:[%s403 + $0x8c] sm:$0xf]
        %v529 = vld [vmem:[%s403 + $0x90] sm:$0xff]
        %v530 = vld [vmem:[%s403 + $0x98] sm:$0xf]
        %v531 = vld [vmem:[%s403 + $0x9c] sm:$0xff]
        %v532 = vld [vmem:[%s403 + $0xa4] sm:$0xf]
        %v533 = vld [vmem:[%s403 + $0xa8] sm:$0xff]
        %v534 = vld [vmem:[%s403 + $0xb0] sm:$0xf]
        %v535 = vld [vmem:[%s403 + $0xb4] sm:$0xff]
        %v536 = vld [vmem:[%s403 + $0xbc] sm:$0xf]
        %v537 = vld [vmem:[%s412] sm:$0xf]
        %v538 = vld [vmem:[%s412 + $0x4] sm:$0xf]
        %v539 = vld [vmem:[%s412 + $0x8] sm:$0xf]
        %v540 = vld [vmem:[%s412 + $0xc] sm:$0xf]
        %v541 = vld [vmem:[%s412 + $0x10] sm:$0xf]
        %v542 = vld [vmem:[%s412 + $0x14] sm:$0xf]
        %v543 = vld [vmem:[%s412 + $0x18] sm:$0xf]
        %v544 = vld [vmem:[%s412 + $0x1c] sm:$0xf]
        %v545 = vld [vmem:[%s412 + $0x20] sm:$0xf]
        %v546 = vld [vmem:[%s412 + $0x24] sm:$0xf]
        %v547 = vld [vmem:[%s412 + $0x28] sm:$0xf]
        %v548 = vld [vmem:[%s412 + $0x2c] sm:$0xf]
        %v549 = vld [vmem:[%s412 + $0x30] sm:$0xf]
        %v550 = vld [vmem:[%s412 + $0x34] sm:$0xf]
        %v551 = vld [vmem:[%s412 + $0x38] sm:$0xf]
        %v552 = vld [vmem:[%s412 + $0x3c] sm:$0xf]
        %v553 = vld [vmem:[%s421] sm:$0xff]
        %v554 = vld [vmem:[%s421 + $0x8] sm:$0xff]
        %v555 = vld [vmem:[%s421 + $0x10] sm:$0xff]
        %v556 = vld [vmem:[%s421 + $0x18] sm:$0xff]
        %v557 = vld [vmem:[%s421 + $0x20] sm:$0xff]
        %v558 = vld [vmem:[%s421 + $0x28] sm:$0xff]
        %v559 = vld [vmem:[%s421 + $0x30] sm:$0xff]
        %v560 = vld [vmem:[%s421 + $0x38] sm:$0xff]
        %v561 = vld [vmem:[%s421 + $0x40] sm:$0xff]
        %v562 = vld [vmem:[%s421 + $0x48] sm:$0xff]
        %v563 = vld [vmem:[%s421 + $0x50] sm:$0xff]
        %v564 = vld [vmem:[%s421 + $0x58] sm:$0xff]
        %v565 = vld [vmem:[%s421 + $0x60] sm:$0xff]
        %v566 = vld [vmem:[%s421 + $0x68] sm:$0xff]
        %v567 = vld [vmem:[%s421 + $0x70] sm:$0xff]
        %v568 = vld [vmem:[%s421 + $0x78] sm:$0xff]
        %v569 = vld [vmem:[%s430] sm:$0xf]
        %v570 = vld [vmem:[%s430 + $0x4] sm:$0xf]
        %v571 = vld [vmem:[%s430 + $0x8] sm:$0xf]
        %v572 = vld [vmem:[%s430 + $0xc] sm:$0xf]
        %v573 = vld [vmem:[%s430 + $0x10] sm:$0xf]
        %v574 = vld [vmem:[%s430 + $0x14] sm:$0xf]
        %v575 = vld [vmem:[%s430 + $0x18] sm:$0xf]
        %v576 = vld [vmem:[%s430 + $0x1c] sm:$0xf]
        %v577 = vld [vmem:[%s430 + $0x20] sm:$0xf]
        %v578 = vld [vmem:[%s430 + $0x24] sm:$0xf]
        %v579 = vld [vmem:[%s430 + $0x28] sm:$0xf]
        %v580 = vld [vmem:[%s430 + $0x2c] sm:$0xf]
        %v581 = vld [vmem:[%s430 + $0x30] sm:$0xf]
        %v582 = vld [vmem:[%s430 + $0x34] sm:$0xf]
        %v583 = vld [vmem:[%s430 + $0x38] sm:$0xf]
        %v584 = vld [vmem:[%s430 + $0x3c] sm:$0xf]
        %v585 = vld [vmem:[%s430 + $0x40] sm:$0xf]
        %v586 = vld [vmem:[%s430 + $0x44] sm:$0xf]
        %v587 = vld [vmem:[%s430 + $0x48] sm:$0xf]
        %v588 = vld [vmem:[%s430 + $0x4c] sm:$0xf]
        %v589 = vld [vmem:[%s430 + $0x50] sm:$0xf]
        %v590 = vld [vmem:[%s430 + $0x54] sm:$0xf]
        %v591 = vld [vmem:[%s430 + $0x58] sm:$0xf]
        %v592 = vld [vmem:[%s430 + $0x5c] sm:$0xf]
        %v593 = vld [vmem:[%s430 + $0x60] sm:$0xf]
        %v594 = vld [vmem:[%s430 + $0x64] sm:$0xf]
        %v595 = vld [vmem:[%s430 + $0x68] sm:$0xf]
        %v596 = vld [vmem:[%s430 + $0x6c] sm:$0xf]
        %v597 = vld [vmem:[%s430 + $0x70] sm:$0xf]
        %v598 = vld [vmem:[%s430 + $0x74] sm:$0xf]
        %v599 = vld [vmem:[%s430 + $0x78] sm:$0xf]
        %v600 = vld [vmem:[%s430 + $0x7c] sm:$0xf]
        %v601 = vld [vmem:[%s492] sm:$0xff]
        %v602 = vld [vmem:[%s492 + $0x8] sm:$0xff]
        %v603 = vpack.c.bf16 %v602, %v601
        %v604 = vlaneseq
        %v605 = vshrl.u32 %v604, 7
        %v606 = vsub.s32 0, %v605
        %v607 = vrot.slane %v502, %v606
        %v608 = vlaneseq
        %v609 = vshrl.u32 %v608, 7
        %v610 = vsub.s32 0, %v609
        %v611 = vrot.slane %v503, %v610
        %v612 = vlaneseq
        %v613 = vshrl.u32 %v612, 7
        %v614 = vsub.s32 0, %v613
        %v615 = vrot.slane %v504, %v614
        %v648 = vunpack.c.l.b16 %v505
        %v649 = vunpack.c.h.b16 %v505
        %v650 = vunpack.c.l.b16 %v506
        %v651 = vunpack.c.l.b16 %v507
        %v652 = vunpack.c.h.b16 %v507
        %v653 = vunpack.c.l.b16 %v508
        %v654 = vunpack.c.l.b16 %v509
        %v655 = vunpack.c.h.b16 %v509
        %v656 = vunpack.c.l.b16 %v510
        %v657 = vunpack.c.l.b16 %v511
        %v658 = vunpack.c.h.b16 %v511
        %v659 = vunpack.c.l.b16 %v512
        %v660 = vunpack.c.l.b16 %v513
        %v661 = vunpack.c.h.b16 %v513
        %v662 = vunpack.c.l.b16 %v514
        %v663 = vunpack.c.l.b16 %v515
        %v664 = vunpack.c.h.b16 %v515
        %v665 = vunpack.c.l.b16 %v516
        %v666 = vunpack.c.l.b16 %v517
        %v667 = vunpack.c.h.b16 %v517
        %v668 = vunpack.c.l.b16 %v518
        %v669 = vunpack.c.l.b16 %v519
        %v670 = vunpack.c.h.b16 %v519
        %v671 = vunpack.c.l.b16 %v520
        %v672 = vunpack.c.l.b16 %v521
        %v673 = vunpack.c.h.b16 %v521
        %v674 = vunpack.c.l.b16 %v522
        %v675 = vunpack.c.l.b16 %v523
        %v676 = vunpack.c.h.b16 %v523
        %v677 = vunpack.c.l.b16 %v524
        %v678 = vunpack.c.l.b16 %v525
        %v679 = vunpack.c.h.b16 %v525
        %v680 = vunpack.c.l.b16 %v526
        %v681 = vunpack.c.l.b16 %v527
        %v682 = vunpack.c.h.b16 %v527
        %v683 = vunpack.c.l.b16 %v528
        %v684 = vunpack.c.l.b16 %v529
        %v685 = vunpack.c.h.b16 %v529
        %v686 = vunpack.c.l.b16 %v530
        %v687 = vunpack.c.l.b16 %v531
        %v688 = vunpack.c.h.b16 %v531
        %v689 = vunpack.c.l.b16 %v532
        %v690 = vunpack.c.l.b16 %v533
        %v691 = vunpack.c.h.b16 %v533
        %v692 = vunpack.c.l.b16 %v534
        %v693 = vunpack.c.l.b16 %v535
        %v694 = vunpack.c.h.b16 %v535
        %v695 = vunpack.c.l.b16 %v536
        %v696 = vpack.c.b16 %v651, %v648
        %v697 = vpack.c.b16 %v652, %v649
        %v698 = vpack.c.b16 %v653, %v650
        %v699 = vpack.c.b16 %v657, %v654
        %v700 = vpack.c.b16 %v658, %v655
        %v701 = vpack.c.b16 %v659, %v656
        %v702 = vpack.c.b16 %v663, %v660
        %v703 = vpack.c.b16 %v664, %v661
        %v704 = vpack.c.b16 %v665, %v662
        %v705 = vpack.c.b16 %v669, %v666
        %v706 = vpack.c.b16 %v670, %v667
        %v707 = vpack.c.b16 %v671, %v668
        %v708 = vpack.c.b16 %v675, %v672
        %v709 = vpack.c.b16 %v676, %v673
        %v710 = vpack.c.b16 %v677, %v674
        %v711 = vpack.c.b16 %v681, %v678
        %v712 = vpack.c.b16 %v682, %v679
        %v713 = vpack.c.b16 %v683, %v680
        %v714 = vpack.c.b16 %v687, %v684
        %v715 = vpack.c.b16 %v688, %v685
        %v716 = vpack.c.b16 %v689, %v686
        %v717 = vpack.c.b16 %v693, %v690
        %v718 = vpack.c.b16 %v694, %v691
        %v719 = vpack.c.b16 %v695, %v692
        %744 = vmatprep.subr.bf16.mxu0 %v697
        %745 = vmatpush1.bf16.msra.mxu0 %v696
        %746 = vmatprep.subr.bf16.mxu0 %v700
        %747 = vmatpush1.bf16.msra.mxu0 %v699
        %748 = vmatprep.subr.bf16.mxu0 %v703
        %749 = vmatpush1.bf16.msra.mxu0 %v702
        %750 = vmatprep.subr.bf16.mxu0 %v706
        %751 = vmatpush1.bf16.msra.mxu0 %v705
        %752 = vmatprep.subr.bf16.mxu0 %v709
        %753 = vmatpush1.bf16.msra.mxu0 %v708
        %754 = vmatprep.subr.bf16.mxu0 %v712
        %755 = vmatpush1.bf16.msra.mxu0 %v711
        %756 = vmatprep.subr.bf16.mxu0 %v715
        %757 = vmatpush1.bf16.msra.mxu0 %v714
        %758 = vmatprep.subr.bf16.mxu0 %v718
        %759 = vmatpush1.bf16.msra.mxu0 %v717
        %760 = vmatprep.subr.bf16.mxu0 0
        %761 = vmatpush1.bf16.msra.mxu0 0
        %762 = vmatprep.subr.bf16.mxu0 0
        %763 = vmatpush1.bf16.msra.mxu0 0
        %764 = vmatprep.subr.bf16.mxu0 0
        %765 = vmatpush1.bf16.msra.mxu0 0
        %766 = vmatprep.subr.bf16.mxu0 0
        %767 = vmatpush1.bf16.msra.mxu0 0
        %768 = vmatprep.subr.bf16.mxu0 0
        %769 = vmatpush1.bf16.msra.mxu0 0
        %770 = vmatprep.subr.bf16.mxu0 0
        %771 = vmatpush1.bf16.msra.mxu0 0
        %772 = vmatprep.subr.bf16.mxu0 0
        %773 = vmatpush1.bf16.msra.mxu0 0
        %774 = vmatprep.subr.bf16.mxu0 0
        %775 = vmatpush1.bf16.msra.mxu0 0
        %776 = vmatprep.mubr.bf16.mxu0 0
        %777 = vmatmul.mubr.bf16.gmra.mrb[0].mxu0 %v603
        %v778 = vpop.f32.mrb[0].mxu0
        %v779 = vadd.f32 %v607, %v778
        %v780 = vpop.f32.mrb[0].mxu0
        %v781 = vadd.f32 %v611, %v780
        %v782 = vpop.f32.mrb[0].mxu0
        %v783 = vadd.f32 %v607, %v782
        %v784 = vpop.f32.mrb[0].mxu0
        %v785 = vadd.f32 %v611, %v784
        %786 = vdwg.mxu0
        %787 = vmatprep.subr.bf16.mxu0 0
        %788 = vmatpush1.bf16.msra.mxu0 %v698
        %789 = vmatprep.subr.bf16.mxu0 0
        %790 = vmatpush1.bf16.msra.mxu0 %v701
        %791 = vmatprep.subr.bf16.mxu0 0
        %792 = vmatpush1.bf16.msra.mxu0 %v704
        %793 = vmatprep.subr.bf16.mxu0 0
        %794 = vmatpush1.bf16.msra.mxu0 %v707
        %795 = vmatprep.subr.bf16.mxu0 0
        %796 = vmatpush1.bf16.msra.mxu0 %v710
        %797 = vmatprep.subr.bf16.mxu0 0
        %798 = vmatpush1.bf16.msra.mxu0 %v713
        %799 = vmatprep.subr.bf16.mxu0 0
        %800 = vmatpush1.bf16.msra.mxu0 %v716
        %801 = vmatprep.subr.bf16.mxu0 0
        %802 = vmatpush1.bf16.msra.mxu0 %v719
        %803 = vmatprep.subr.bf16.mxu0 0
        %804 = vmatpush1.bf16.msra.mxu0 0
        %805 = vmatprep.subr.bf16.mxu0 0
        %806 = vmatpush1.bf16.msra.mxu0 0
        %807 = vmatprep.subr.bf16.mxu0 0
        %808 = vmatpush1.bf16.msra.mxu0 0
        %809 = vmatprep.subr.bf16.mxu0 0
        %810 = vmatpush1.bf16.msra.mxu0 0
        %811 = vmatprep.subr.bf16.mxu0 0
        %812 = vmatpush1.bf16.msra.mxu0 0
        %813 = vmatprep.subr.bf16.mxu0 0
        %814 = vmatpush1.bf16.msra.mxu0 0
        %815 = vmatprep.subr.bf16.mxu0 0
        %816 = vmatpush1.bf16.msra.mxu0 0
        %817 = vmatprep.subr.bf16.mxu0 0
        %818 = vmatpush1.bf16.msra.mxu0 0
        %819 = vmatprep.mubr.bf16.mxu0 0
        %820 = vmatmul.mubr.bf16.gmra.mrb[0].mxu0 %v603
        %v821 = vpop.f32.mrb[0].mxu0
        %v822 = vadd.f32 %v615, %v821
        %v823 = vpop.f32.mrb[0].mxu0
        %v824 = vpop.f32.mrb[0].mxu0
        %v825 = vadd.f32 %v615, %v824
        %v826 = vpop.f32.mrb[0].mxu0
        %827 = vdwg.mxu0
        %830 = vrot.lane.b32.xlu0 %v779, 64
        %v831 = vpop.permute.xlu0 %830
        %832 = vrot.lane.b32.xlu0 %v783, 64
        %v833 = vpop.permute.xlu0 %832
        %v836 = vcombine.high %v779, 0.0
        %v838 = vunpack.c.l.s4 1983009808
        %v839 = vunpack.c.0.s8 %v838
        %v840 = vlaneseq
        %v841 = vshrl.u32 %v840, 7
        %v842 = vsub.s32 %v839, %v841
        %v843 = vrot.slane %v779, %v842
        %v845 = vunpack.c.l.s4 1983009808
        %v846 = vunpack.c.0.s8 %v845
        %v847 = vlaneseq
        %v848 = vshrl.u32 %v847, 7
        %v849 = vsub.s32 %v846, %v848
        %v850 = vrot.slane %v836, %v849
        %v851 = vcombine.high %v831, 0.0
        %v853 = vunpack.c.l.s4 1983009808
        %v854 = vunpack.c.0.s8 %v853
        %v855 = vlaneseq
        %v856 = vshrl.u32 %v855, 7
        %v857 = vsub.s32 %v854, %v856
        %v858 = vrot.slane %v831, %v857
        %v860 = vunpack.c.l.s4 1983009808
        %v861 = vunpack.c.0.s8 %v860
        %v862 = vlaneseq
        %v863 = vshrl.u32 %v862, 7
        %v864 = vsub.s32 %v861, %v863
        %v865 = vrot.slane %v851, %v864
        %v866 = vcombine.low %v843, %v858
        %v867 = vcombine.high %v843, %v858
        %v869 = vunpack.c.l.s4 1934713408
        %v870 = vunpack.c.0.s8 %v869
        %v871 = vlaneseq
        %v872 = vshrl.u32 %v871, 7
        %v873 = vsub.s32 %v870, %v872
        %v874 = vrot.slane %v866, %v873
        %v876 = vunpack.c.l.s4 1934713408
        %v877 = vunpack.c.0.s8 %v876
        %v878 = vlaneseq
        %v879 = vshrl.u32 %v878, 7
        %v880 = vsub.s32 %v877, %v879
        %v881 = vrot.slane %v867, %v880
        %v882 = vcombine.low %v850, %v865
        %v883 = vcombine.high %v850, %v865
        %v885 = vunpack.c.l.s4 1934713408
        %v886 = vunpack.c.0.s8 %v885
        %v887 = vlaneseq
        %v888 = vshrl.u32 %v887, 7
        %v889 = vsub.s32 %v886, %v888
        %v890 = vrot.slane %v882, %v889
        %v892 = vunpack.c.l.s4 1934713408
        %v893 = vunpack.c.0.s8 %v892
        %v894 = vlaneseq
        %v895 = vshrl.u32 %v894, 7
        %v896 = vsub.s32 %v893, %v895
        %v897 = vrot.slane %v883, %v896
        %v898 = vcombine.high %v874, 0.0
        %v899 = vcombine.high %v881, 0.0
        %v900 = vcombine.high %v890, 0.0
        %v901 = vcombine.high %v897, 0.0
        %v902 = vcombine.high %v783, 0.0
        %v904 = vunpack.c.l.s4 1983009808
        %v905 = vunpack.c.0.s8 %v904
        %v906 = vlaneseq
        %v907 = vshrl.u32 %v906, 7
        %v908 = vsub.s32 %v905, %v907
        %v909 = vrot.slane %v783, %v908
        %v911 = vunpack.c.l.s4 1983009808
        %v912 = vunpack.c.0.s8 %v911
        %v913 = vlaneseq
        %v914 = vshrl.u32 %v913, 7
        %v915 = vsub.s32 %v912, %v914
        %v916 = vrot.slane %v902, %v915
        %v917 = vcombine.high %v833, 0.0
        %v919 = vunpack.c.l.s4 1983009808
        %v920 = vunpack.c.0.s8 %v919
        %v921 = vlaneseq
        %v922 = vshrl.u32 %v921, 7
        %v923 = vsub.s32 %v920, %v922
        %v924 = vrot.slane %v833, %v923
        %v926 = vunpack.c.l.s4 1983009808
        %v927 = vunpack.c.0.s8 %v926
        %v928 = vlaneseq
        %v929 = vshrl.u32 %v928, 7
        %v930 = vsub.s32 %v927, %v929
        %v931 = vrot.slane %v917, %v930
        %v932 = vcombine.low %v909, %v924
        %v933 = vcombine.high %v909, %v924
        %v935 = vunpack.c.l.s4 1934713408
        %v936 = vunpack.c.0.s8 %v935
        %v937 = vlaneseq
        %v938 = vshrl.u32 %v937, 7
        %v939 = vsub.s32 %v936, %v938
        %v940 = vrot.slane %v932, %v939
        %v942 = vunpack.c.l.s4 1934713408
        %v943 = vunpack.c.0.s8 %v942
        %v944 = vlaneseq
        %v945 = vshrl.u32 %v944, 7
        %v946 = vsub.s32 %v943, %v945
        %v947 = vrot.slane %v933, %v946
        %v948 = vcombine.low %v916, %v931
        %v949 = vcombine.high %v916, %v931
        %v951 = vunpack.c.l.s4 1934713408
        %v952 = vunpack.c.0.s8 %v951
        %v953 = vlaneseq
        %v954 = vshrl.u32 %v953, 7
        %v955 = vsub.s32 %v952, %v954
        %v956 = vrot.slane %v948, %v955
        %v958 = vunpack.c.l.s4 1934713408
        %v959 = vunpack.c.0.s8 %v958
        %v960 = vlaneseq
        %v961 = vshrl.u32 %v960, 7
        %v962 = vsub.s32 %v959, %v961
        %v963 = vrot.slane %v949, %v962
        %v964 = vcombine.high %v940, 0.0
        %v965 = vcombine.high %v947, 0.0
        %v966 = vcombine.high %v956, 0.0
        %v967 = vcombine.high %v963, 0.0
        %970 = vrot.lane.b32.xlu0 %v781, 64
        %v971 = vpop.permute.xlu0 %970
        %972 = vrot.lane.b32.xlu0 %v785, 64
        %v973 = vpop.permute.xlu0 %972
        %v976 = vcombine.high %v781, 0.0
        %v978 = vunpack.c.l.s4 1983009808
        %v979 = vunpack.c.0.s8 %v978
        %v980 = vlaneseq
        %v981 = vshrl.u32 %v980, 7
        %v982 = vsub.s32 %v979, %v981
        %v983 = vrot.slane %v781, %v982
        %v985 = vunpack.c.l.s4 1983009808
        %v986 = vunpack.c.0.s8 %v985
        %v987 = vlaneseq
        %v988 = vshrl.u32 %v987, 7
        %v989 = vsub.s32 %v986, %v988
        %v990 = vrot.slane %v976, %v989
        %v991 = vcombine.high %v971, 0.0
        %v993 = vunpack.c.l.s4 1983009808
        %v994 = vunpack.c.0.s8 %v993
        %v995 = vlaneseq
        %v996 = vshrl.u32 %v995, 7
        %v997 = vsub.s32 %v994, %v996
        %v998 = vrot.slane %v971, %v997
        %v1000 = vunpack.c.l.s4 1983009808
        %v1001 = vunpack.c.0.s8 %v1000
        %v1002 = vlaneseq
        %v1003 = vshrl.u32 %v1002, 7
        %v1004 = vsub.s32 %v1001, %v1003
        %v1005 = vrot.slane %v991, %v1004
        %v1006 = vcombine.low %v983, %v998
        %v1007 = vcombine.high %v983, %v998
        %v1009 = vunpack.c.l.s4 1934713408
        %v1010 = vunpack.c.0.s8 %v1009
        %v1011 = vlaneseq
        %v1012 = vshrl.u32 %v1011, 7
        %v1013 = vsub.s32 %v1010, %v1012
        %v1014 = vrot.slane %v1006, %v1013
        %v1016 = vunpack.c.l.s4 1934713408
        %v1017 = vunpack.c.0.s8 %v1016
        %v1018 = vlaneseq
        %v1019 = vshrl.u32 %v1018, 7
        %v1020 = vsub.s32 %v1017, %v1019
        %v1021 = vrot.slane %v1007, %v1020
        %v1022 = vcombine.low %v990, %v1005
        %v1023 = vcombine.high %v990, %v1005
        %v1025 = vunpack.c.l.s4 1934713408
        %v1026 = vunpack.c.0.s8 %v1025
        %v1027 = vlaneseq
        %v1028 = vshrl.u32 %v1027, 7
        %v1029 = vsub.s32 %v1026, %v1028
        %v1030 = vrot.slane %v1022, %v1029
        %v1032 = vunpack.c.l.s4 1934713408
        %v1033 = vunpack.c.0.s8 %v1032
        %v1034 = vlaneseq
        %v1035 = vshrl.u32 %v1034, 7
        %v1036 = vsub.s32 %v1033, %v1035
        %v1037 = vrot.slane %v1023, %v1036
        %v1038 = vcombine.high %v1014, 0.0
        %v1039 = vcombine.high %v1021, 0.0
        %v1040 = vcombine.high %v1030, 0.0
        %v1041 = vcombine.high %v1037, 0.0
        %v1042 = vcombine.high %v785, 0.0
        %v1044 = vunpack.c.l.s4 1983009808
        %v1045 = vunpack.c.0.s8 %v1044
        %v1046 = vlaneseq
        %v1047 = vshrl.u32 %v1046, 7
        %v1048 = vsub.s32 %v1045, %v1047
        %v1049 = vrot.slane %v785, %v1048
        %v1051 = vunpack.c.l.s4 1983009808
        %v1052 = vunpack.c.0.s8 %v1051
        %v1053 = vlaneseq
        %v1054 = vshrl.u32 %v1053, 7
        %v1055 = vsub.s32 %v1052, %v1054
        %v1056 = vrot.slane %v1042, %v1055
        %v1057 = vcombine.high %v973, 0.0
        %v1059 = vunpack.c.l.s4 1983009808
        %v1060 = vunpack.c.0.s8 %v1059
        %v1061 = vlaneseq
        %v1062 = vshrl.u32 %v1061, 7
        %v1063 = vsub.s32 %v1060, %v1062
        %v1064 = vrot.slane %v973, %v1063
        %v1066 = vunpack.c.l.s4 1983009808
        %v1067 = vunpack.c.0.s8 %v1066
        %v1068 = vlaneseq
        %v1069 = vshrl.u32 %v1068, 7
        %v1070 = vsub.s32 %v1067, %v1069
        %v1071 = vrot.slane %v1057, %v1070
        %v1072 = vcombine.low %v1049, %v1064
        %v1073 = vcombine.high %v1049, %v1064
        %v1075 = vunpack.c.l.s4 1934713408
        %v1076 = vunpack.c.0.s8 %v1075
        %v1077 = vlaneseq
        %v1078 = vshrl.u32 %v1077, 7
        %v1079 = vsub.s32 %v1076, %v1078
        %v1080 = vrot.slane %v1072, %v1079
        %v1082 = vunpack.c.l.s4 1934713408
        %v1083 = vunpack.c.0.s8 %v1082
        %v1084 = vlaneseq
        %v1085 = vshrl.u32 %v1084, 7
        %v1086 = vsub.s32 %v1083, %v1085
        %v1087 = vrot.slane %v1073, %v1086
        %v1088 = vcombine.low %v1056, %v1071
        %v1089 = vcombine.high %v1056, %v1071
        %v1091 = vunpack.c.l.s4 1934713408
        %v1092 = vunpack.c.0.s8 %v1091
        %v1093 = vlaneseq
        %v1094 = vshrl.u32 %v1093, 7
        %v1095 = vsub.s32 %v1092, %v1094
        %v1096 = vrot.slane %v1088, %v1095
        %v1098 = vunpack.c.l.s4 1934713408
        %v1099 = vunpack.c.0.s8 %v1098
        %v1100 = vlaneseq
        %v1101 = vshrl.u32 %v1100, 7
        %v1102 = vsub.s32 %v1099, %v1101
        %v1103 = vrot.slane %v1089, %v1102
        %v1104 = vcombine.high %v1080, 0.0
        %v1105 = vcombine.high %v1087, 0.0
        %v1106 = vcombine.high %v1096, 0.0
        %v1107 = vcombine.high %v1103, 0.0
        %1110 = vrot.lane.b32.xlu0 %v822, 64
        %v1111 = vpop.permute.xlu0 %1110
        %1112 = vrot.lane.b32.xlu0 %v825, 64
        %v1113 = vpop.permute.xlu0 %1112
        %v1116 = vcombine.high %v822, 0.0
        %v1118 = vunpack.c.l.s4 1983009808
        %v1119 = vunpack.c.0.s8 %v1118
        %v1120 = vlaneseq
        %v1121 = vshrl.u32 %v1120, 7
        %v1122 = vsub.s32 %v1119, %v1121
        %v1123 = vrot.slane %v822, %v1122
        %v1125 = vunpack.c.l.s4 1983009808
        %v1126 = vunpack.c.0.s8 %v1125
        %v1127 = vlaneseq
        %v1128 = vshrl.u32 %v1127, 7
        %v1129 = vsub.s32 %v1126, %v1128
        %v1130 = vrot.slane %v1116, %v1129
        %v1131 = vcombine.high %v1111, 0.0
        %v1133 = vunpack.c.l.s4 1983009808
        %v1134 = vunpack.c.0.s8 %v1133
        %v1135 = vlaneseq
        %v1136 = vshrl.u32 %v1135, 7
        %v1137 = vsub.s32 %v1134, %v1136
        %v1138 = vrot.slane %v1111, %v1137
        %v1140 = vunpack.c.l.s4 1983009808
        %v1141 = vunpack.c.0.s8 %v1140
        %v1142 = vlaneseq
        %v1143 = vshrl.u32 %v1142, 7
        %v1144 = vsub.s32 %v1141, %v1143
        %v1145 = vrot.slane %v1131, %v1144
        %v1146 = vcombine.low %v1123, %v1138
        %v1147 = vcombine.high %v1123, %v1138
        %v1149 = vunpack.c.l.s4 1934713408
        %v1150 = vunpack.c.0.s8 %v1149
        %v1151 = vlaneseq
        %v1152 = vshrl.u32 %v1151, 7
        %v1153 = vsub.s32 %v1150, %v1152
        %v1154 = vrot.slane %v1146, %v1153
        %v1156 = vunpack.c.l.s4 1934713408
        %v1157 = vunpack.c.0.s8 %v1156
        %v1158 = vlaneseq
        %v1159 = vshrl.u32 %v1158, 7
        %v1160 = vsub.s32 %v1157, %v1159
        %v1161 = vrot.slane %v1147, %v1160
        %v1162 = vcombine.low %v1130, %v1145
        %v1163 = vcombine.high %v1130, %v1145
        %v1165 = vunpack.c.l.s4 1934713408
        %v1166 = vunpack.c.0.s8 %v1165
        %v1167 = vlaneseq
        %v1168 = vshrl.u32 %v1167, 7
        %v1169 = vsub.s32 %v1166, %v1168
        %v1170 = vrot.slane %v1162, %v1169
        %v1172 = vunpack.c.l.s4 1934713408
        %v1173 = vunpack.c.0.s8 %v1172
        %v1174 = vlaneseq
        %v1175 = vshrl.u32 %v1174, 7
        %v1176 = vsub.s32 %v1173, %v1175
        %v1177 = vrot.slane %v1163, %v1176
        %v1178 = vcombine.high %v1154, 0.0
        %v1179 = vcombine.high %v1161, 0.0
        %v1180 = vcombine.high %v1170, 0.0
        %v1181 = vcombine.high %v1177, 0.0
        %v1182 = vcombine.high %v825, 0.0
        %v1184 = vunpack.c.l.s4 1983009808
        %v1185 = vunpack.c.0.s8 %v1184
        %v1186 = vlaneseq
        %v1187 = vshrl.u32 %v1186, 7
        %v1188 = vsub.s32 %v1185, %v1187
        %v1189 = vrot.slane %v825, %v1188
        %v1191 = vunpack.c.l.s4 1983009808
        %v1192 = vunpack.c.0.s8 %v1191
        %v1193 = vlaneseq
        %v1194 = vshrl.u32 %v1193, 7
        %v1195 = vsub.s32 %v1192, %v1194
        %v1196 = vrot.slane %v1182, %v1195
        %v1197 = vcombine.high %v1113, 0.0
        %v1199 = vunpack.c.l.s4 1983009808
        %v1200 = vunpack.c.0.s8 %v1199
        %v1201 = vlaneseq
        %v1202 = vshrl.u32 %v1201, 7
        %v1203 = vsub.s32 %v1200, %v1202
        %v1204 = vrot.slane %v1113, %v1203
        %v1206 = vunpack.c.l.s4 1983009808
        %v1207 = vunpack.c.0.s8 %v1206
        %v1208 = vlaneseq
        %v1209 = vshrl.u32 %v1208, 7
        %v1210 = vsub.s32 %v1207, %v1209
        %v1211 = vrot.slane %v1197, %v1210
        %v1212 = vcombine.low %v1189, %v1204
        %v1213 = vcombine.high %v1189, %v1204
        %v1215 = vunpack.c.l.s4 1934713408
        %v1216 = vunpack.c.0.s8 %v1215
        %v1217 = vlaneseq
        %v1218 = vshrl.u32 %v1217, 7
        %v1219 = vsub.s32 %v1216, %v1218
        %v1220 = vrot.slane %v1212, %v1219
        %v1222 = vunpack.c.l.s4 1934713408
        %v1223 = vunpack.c.0.s8 %v1222
        %v1224 = vlaneseq
        %v1225 = vshrl.u32 %v1224, 7
        %v1226 = vsub.s32 %v1223, %v1225
        %v1227 = vrot.slane %v1213, %v1226
        %v1228 = vcombine.low %v1196, %v1211
        %v1229 = vcombine.high %v1196, %v1211
        %v1231 = vunpack.c.l.s4 1934713408
        %v1232 = vunpack.c.0.s8 %v1231
        %v1233 = vlaneseq
        %v1234 = vshrl.u32 %v1233, 7
        %v1235 = vsub.s32 %v1232, %v1234
        %v1236 = vrot.slane %v1228, %v1235
        %v1238 = vunpack.c.l.s4 1934713408
        %v1239 = vunpack.c.0.s8 %v1238
        %v1240 = vlaneseq
        %v1241 = vshrl.u32 %v1240, 7
        %v1242 = vsub.s32 %v1239, %v1241
        %v1243 = vrot.slane %v1229, %v1242
        %v1244 = vcombine.high %v1220, 0.0
        %v1245 = vcombine.high %v1227, 0.0
        %v1246 = vcombine.high %v1236, 0.0
        %v1247 = vcombine.high %v1243, 0.0
        %v1264 = vrot.slane %v874, 1
        %v1265 = vrot.slane %v898, 1
        %v1266 = vrot.slane %v881, 1
        %v1267 = vrot.slane %v899, 1
        %v1268 = vrot.slane %v890, 1
        %v1269 = vrot.slane %v900, 1
        %v1270 = vrot.slane %v897, 1
        %v1271 = vrot.slane %v901, 1
        %v1272 = vrot.slane %v940, 1
        %v1273 = vrot.slane %v964, 1
        %v1274 = vrot.slane %v947, 1
        %v1275 = vrot.slane %v965, 1
        %v1276 = vrot.slane %v956, 1
        %v1277 = vrot.slane %v966, 1
        %v1278 = vrot.slane %v963, 1
        %v1279 = vrot.slane %v967, 1
        %v1296 = vpack.c.bf16 %v874, %v874
        %v1297 = vpack.c.bf16 %v898, %v898
        %v1298 = vpack.c.bf16 %v881, %v881
        %v1299 = vpack.c.bf16 %v899, %v899
        %v1300 = vpack.c.bf16 %v890, %v890
        %v1301 = vpack.c.bf16 %v900, %v900
        %v1302 = vpack.c.bf16 %v897, %v897
        %v1303 = vpack.c.bf16 %v901, %v901
        %v1304 = vpack.c.bf16 %v1264, %v1264
        %v1305 = vpack.c.bf16 %v1265, %v1265
        %v1306 = vpack.c.bf16 %v1266, %v1266
        %v1307 = vpack.c.bf16 %v1267, %v1267
        %v1308 = vpack.c.bf16 %v1268, %v1268
        %v1309 = vpack.c.bf16 %v1269, %v1269
        %v1310 = vpack.c.bf16 %v1270, %v1270
        %v1311 = vpack.c.bf16 %v1271, %v1271
        %v1312 = vpack.c.bf16 %v940, %v940
        %v1313 = vpack.c.bf16 %v964, %v964
        %v1314 = vpack.c.bf16 %v947, %v947
        %v1315 = vpack.c.bf16 %v965, %v965
        %v1316 = vpack.c.bf16 %v956, %v956
        %v1317 = vpack.c.bf16 %v966, %v966
        %v1318 = vpack.c.bf16 %v963, %v963
        %v1319 = vpack.c.bf16 %v967, %v967
        %v1320 = vpack.c.bf16 %v1272, %v1272
        %v1321 = vpack.c.bf16 %v1273, %v1273
        %v1322 = vpack.c.bf16 %v1274, %v1274
        %v1323 = vpack.c.bf16 %v1275, %v1275
        %v1324 = vpack.c.bf16 %v1276, %v1276
        %v1325 = vpack.c.bf16 %v1277, %v1277
        %v1326 = vpack.c.bf16 %v1278, %v1278
        %v1327 = vpack.c.bf16 %v1279, %v1279
        %v1344 = vrot.slane %v1014, 1
        %v1345 = vrot.slane %v1038, 1
        %v1346 = vrot.slane %v1021, 1
        %v1347 = vrot.slane %v1039, 1
        %v1348 = vrot.slane %v1030, 1
        %v1349 = vrot.slane %v1040, 1
        %v1350 = vrot.slane %v1037, 1
        %v1351 = vrot.slane %v1041, 1
        %v1352 = vrot.slane %v1080, 1
        %v1353 = vrot.slane %v1104, 1
        %v1354 = vrot.slane %v1087, 1
        %v1355 = vrot.slane %v1105, 1
        %v1356 = vrot.slane %v1096, 1
        %v1357 = vrot.slane %v1106, 1
        %v1358 = vrot.slane %v1103, 1
        %v1359 = vrot.slane %v1107, 1
        %v1376 = vpack.c.bf16 %v1014, %v1014
        %v1377 = vpack.c.bf16 %v1038, %v1038
        %v1378 = vpack.c.bf16 %v1021, %v1021
        %v1379 = vpack.c.bf16 %v1039, %v1039
        %v1380 = vpack.c.bf16 %v1030, %v1030
        %v1381 = vpack.c.bf16 %v1040, %v1040
        %v1382 = vpack.c.bf16 %v1037, %v1037
        %v1383 = vpack.c.bf16 %v1041, %v1041
        %v1384 = vpack.c.bf16 %v1344, %v1344
        %v1385 = vpack.c.bf16 %v1345, %v1345
        %v1386 = vpack.c.bf16 %v1346, %v1346
        %v1387 = vpack.c.bf16 %v1347, %v1347
        %v1388 = vpack.c.bf16 %v1348, %v1348
        %v1389 = vpack.c.bf16 %v1349, %v1349
        %v1390 = vpack.c.bf16 %v1350, %v1350
        %v1391 = vpack.c.bf16 %v1351, %v1351
        %v1392 = vpack.c.bf16 %v1080, %v1080
        %v1393 = vpack.c.bf16 %v1104, %v1104
        %v1394 = vpack.c.bf16 %v1087, %v1087
        %v1395 = vpack.c.bf16 %v1105, %v1105
        %v1396 = vpack.c.bf16 %v1096, %v1096
        %v1397 = vpack.c.bf16 %v1106, %v1106
        %v1398 = vpack.c.bf16 %v1103, %v1103
        %v1399 = vpack.c.bf16 %v1107, %v1107
        %v1400 = vpack.c.bf16 %v1352, %v1352
        %v1401 = vpack.c.bf16 %v1353, %v1353
        %v1402 = vpack.c.bf16 %v1354, %v1354
        %v1403 = vpack.c.bf16 %v1355, %v1355
        %v1404 = vpack.c.bf16 %v1356, %v1356
        %v1405 = vpack.c.bf16 %v1357, %v1357
        %v1406 = vpack.c.bf16 %v1358, %v1358
        %v1407 = vpack.c.bf16 %v1359, %v1359
        %v1424 = vrot.slane %v1154, 1
        %v1425 = vrot.slane %v1178, 1
        %v1426 = vrot.slane %v1161, 1
        %v1427 = vrot.slane %v1179, 1
        %v1428 = vrot.slane %v1170, 1
        %v1429 = vrot.slane %v1180, 1
        %v1430 = vrot.slane %v1177, 1
        %v1431 = vrot.slane %v1181, 1
        %v1432 = vrot.slane %v1220, 1
        %v1433 = vrot.slane %v1244, 1
        %v1434 = vrot.slane %v1227, 1
        %v1435 = vrot.slane %v1245, 1
        %v1436 = vrot.slane %v1236, 1
        %v1437 = vrot.slane %v1246, 1
        %v1438 = vrot.slane %v1243, 1
        %v1439 = vrot.slane %v1247, 1
        %v1456 = vpack.c.bf16 %v1154, %v1154
        %v1457 = vpack.c.bf16 %v1178, %v1178
        %v1458 = vpack.c.bf16 %v1161, %v1161
        %v1459 = vpack.c.bf16 %v1179, %v1179
        %v1460 = vpack.c.bf16 %v1170, %v1170
        %v1461 = vpack.c.bf16 %v1180, %v1180
        %v1462 = vpack.c.bf16 %v1177, %v1177
        %v1463 = vpack.c.bf16 %v1181, %v1181
        %v1464 = vpack.c.bf16 %v1424, %v1424
        %v1465 = vpack.c.bf16 %v1425, %v1425
        %v1466 = vpack.c.bf16 %v1426, %v1426
        %v1467 = vpack.c.bf16 %v1427, %v1427
        %v1468 = vpack.c.bf16 %v1428, %v1428
        %v1469 = vpack.c.bf16 %v1429, %v1429
        %v1470 = vpack.c.bf16 %v1430, %v1430
        %v1471 = vpack.c.bf16 %v1431, %v1431
        %v1472 = vpack.c.bf16 %v1220, %v1220
        %v1473 = vpack.c.bf16 %v1244, %v1244
        %v1474 = vpack.c.bf16 %v1227, %v1227
        %v1475 = vpack.c.bf16 %v1245, %v1245
        %v1476 = vpack.c.bf16 %v1236, %v1236
        %v1477 = vpack.c.bf16 %v1246, %v1246
        %v1478 = vpack.c.bf16 %v1243, %v1243
        %v1479 = vpack.c.bf16 %v1247, %v1247
        %v1480 = vpack.c.bf16 %v1432, %v1432
        %v1481 = vpack.c.bf16 %v1433, %v1433
        %v1482 = vpack.c.bf16 %v1434, %v1434
        %v1483 = vpack.c.bf16 %v1435, %v1435
        %v1484 = vpack.c.bf16 %v1436, %v1436
        %v1485 = vpack.c.bf16 %v1437, %v1437
        %v1486 = vpack.c.bf16 %v1438, %v1438
        %v1487 = vpack.c.bf16 %v1439, %v1439
        %v1496 = vunpack.c.l.b16 %v1296
        %v1497 = vunpack.c.l.b16 %v1297
        %v1498 = vunpack.c.l.b16 %v1298
        %v1499 = vunpack.c.l.b16 %v1299
        %v1500 = vunpack.c.l.b16 %v1300
        %v1501 = vunpack.c.l.b16 %v1301
        %v1502 = vunpack.c.l.b16 %v1302
        %v1503 = vunpack.c.l.b16 %v1303
        %v1504 = vrot.slane %v1497, 7
        %vm1505 = vcmask 1041409
        %v1506 = vsel %vm1505, %v1504, %v1496
        %v1507 = vrot.slane %v1498, 6
        %vm1508 = vcmask 1042434
        %v1509 = vsel %vm1508, %v1507, %v1506
        %v1510 = vrot.slane %v1499, 5
        %vm1511 = vcmask 1043459
        %v1512 = vsel %vm1511, %v1510, %v1509
        %v1513 = vrot.slane %v1500, 4
        %vm1514 = vcmask 1044484
        %v1515 = vsel %vm1514, %v1513, %v1512
        %v1516 = vrot.slane %v1501, 3
        %vm1517 = vcmask 1045509
        %v1518 = vsel %vm1517, %v1516, %v1515
        %v1519 = vrot.slane %v1502, 2
        %vm1520 = vcmask 1046534
        %v1521 = vsel %vm1520, %v1519, %v1518
        %v1522 = vrot.slane %v1503, 1
        %vm1523 = vcmask 1047559
        %v1524 = vsel %vm1523, %v1522, %v1521
        %v1525 = vpack.c.b16 %v1524, %v1524
        %v1534 = vunpack.c.l.b16 %v1376
        %v1535 = vunpack.c.l.b16 %v1377
        %v1536 = vunpack.c.l.b16 %v1378
        %v1537 = vunpack.c.l.b16 %v1379
        %v1538 = vunpack.c.l.b16 %v1380
        %v1539 = vunpack.c.l.b16 %v1381
        %v1540 = vunpack.c.l.b16 %v1382
        %v1541 = vunpack.c.l.b16 %v1383
        %v1542 = vrot.slane %v1535, 7
        %v1543 = vsel %vm1505, %v1542, %v1534
        %v1544 = vrot.slane %v1536, 6
        %v1545 = vsel %vm1508, %v1544, %v1543
        %v1546 = vrot.slane %v1537, 5
        %v1547 = vsel %vm1511, %v1546, %v1545
        %v1548 = vrot.slane %v1538, 4
        %v1549 = vsel %vm1514, %v1548, %v1547
        %v1550 = vrot.slane %v1539, 3
        %v1551 = vsel %vm1517, %v1550, %v1549
        %v1552 = vrot.slane %v1540, 2
        %v1553 = vsel %vm1520, %v1552, %v1551
        %v1554 = vrot.slane %v1541, 1
        %v1555 = vsel %vm1523, %v1554, %v1553
        %v1556 = vpack.c.b16 %v1555, %v1555
        %vm1557 = vcmask 523264
        %v1559 = vsel %vm1557, %v1525, 0
        %v1562 = vsel %vm1557, %v1556, 0
        %1564 = vmatprep.subr.bf16.mxu0 0
        %1565 = vmatpush1.bf16.xpose.msra.mxu0 %v1562
        %1566 = vmatprep.subr.bf16.mxu0 0
        %1567 = vmatpush1.bf16.xpose.msra.mxu0 0
        %1568 = vmatprep.subr.bf16.mxu0 0
        %1569 = vmatpush1.bf16.xpose.msra.mxu0 0
        %1570 = vmatprep.subr.bf16.mxu0 0
        %1571 = vmatpush1.bf16.xpose.msra.mxu0 0
        %1572 = vmatprep.subr.bf16.mxu0 0
        %1573 = vmatpush1.bf16.xpose.msra.mxu0 0
        %1574 = vmatprep.subr.bf16.mxu0 0
        %1575 = vmatpush1.bf16.xpose.msra.mxu0 0
        %1576 = vmatprep.subr.bf16.mxu0 0
        %1577 = vmatpush1.bf16.xpose.msra.mxu0 0
        %1578 = vmatprep.subr.bf16.mxu0 0
        %1579 = vmatpush1.bf16.xpose.msra.mxu0 0
        %1580 = vmatprep.subr.bf16.mxu0 0
        %1581 = vmatpush1.bf16.xpose.msra.mxu0 0
        %1582 = vmatprep.subr.bf16.mxu0 0
        %1583 = vmatpush1.bf16.xpose.msra.mxu0 0
        %1584 = vmatprep.subr.bf16.mxu0 0
        %1585 = vmatpush1.bf16.xpose.msra.mxu0 0
        %1586 = vmatprep.subr.bf16.mxu0 0
        %1587 = vmatpush1.bf16.xpose.msra.mxu0 0
        %1588 = vmatprep.subr.bf16.mxu0 0
        %1589 = vmatpush1.bf16.xpose.msra.mxu0 0
        %1590 = vmatprep.subr.bf16.mxu0 0
        %1591 = vmatpush1.bf16.xpose.msra.mxu0 0
        %1592 = vmatprep.subr.bf16.mxu0 0
        %1593 = vmatpush1.bf16.xpose.msra.mxu0 0
        %1594 = vmatprep.subr.bf16.mxu0 0
        %1595 = vmatpush1.bf16.xpose.msra.mxu0 0
        %1596 = vmatprep.mubr.bf16.mxu0 0
        %1597 = vmatmul.mubr.bf16.gmra.mrb[0].mxu0 %v1559
        %v1598 = vpop.f32.mrb[0].mxu0
        %v1599 = vadd.f32 0.0, %v1598
        %v1600 = vpop.f32.mrb[0].mxu0
        %v1601 = vpop.f32.mrb[0].mxu0
        %v1602 = vpop.f32.mrb[0].mxu0
        %1603 = vdwg.mxu0
        %v1612 = vunpack.c.l.b16 %v1304
        %v1613 = vunpack.c.l.b16 %v1305
        %v1614 = vunpack.c.l.b16 %v1306
        %v1615 = vunpack.c.l.b16 %v1307
        %v1616 = vunpack.c.l.b16 %v1308
        %v1617 = vunpack.c.l.b16 %v1309
        %v1618 = vunpack.c.l.b16 %v1310
        %v1619 = vunpack.c.l.b16 %v1311
        %v1620 = vrot.slane %v1613, 7
        %v1621 = vsel %vm1505, %v1620, %v1612
        %v1622 = vrot.slane %v1614, 6
        %v1623 = vsel %vm1508, %v1622, %v1621
        %v1624 = vrot.slane %v1615, 5
        %v1625 = vsel %vm1511, %v1624, %v1623
        %v1626 = vrot.slane %v1616, 4
        %v1627 = vsel %vm1514, %v1626, %v1625
        %v1628 = vrot.slane %v1617, 3
        %v1629 = vsel %vm1517, %v1628, %v1627
        %v1630 = vrot.slane %v1618, 2
        %v1631 = vsel %vm1520, %v1630, %v1629
        %v1632 = vrot.slane %v1619, 1
        %v1633 = vsel %vm1523, %v1632, %v1631
        %v1634 = vpack.c.b16 %v1633, %v1633
        %v1643 = vunpack.c.l.b16 %v1384
        %v1644 = vunpack.c.l.b16 %v1385
        %v1645 = vunpack.c.l.b16 %v1386
        %v1646 = vunpack.c.l.b16 %v1387
        %v1647 = vunpack.c.l.b16 %v1388
        %v1648 = vunpack.c.l.b16 %v1389
        %v1649 = vunpack.c.l.b16 %v1390
        %v1650 = vunpack.c.l.b16 %v1391
        %v1651 = vrot.slane %v1644, 7
        %v1652 = vsel %vm1505, %v1651, %v1643
        %v1653 = vrot.slane %v1645, 6
        %v1654 = vsel %vm1508, %v1653, %v1652
        %v1655 = vrot.slane %v1646, 5
        %v1656 = vsel %vm1511, %v1655, %v1654
        %v1657 = vrot.slane %v1647, 4
        %v1658 = vsel %vm1514, %v1657, %v1656
        %v1659 = vrot.slane %v1648, 3
        %v1660 = vsel %vm1517, %v1659, %v1658
        %v1661 = vrot.slane %v1649, 2
        %v1662 = vsel %vm1520, %v1661, %v1660
        %v1663 = vrot.slane %v1650, 1
        %v1664 = vsel %vm1523, %v1663, %v1662
        %v1665 = vpack.c.b16 %v1664, %v1664
        %v1667 = vsel %vm1557, %v1634, 0
        %v1670 = vsel %vm1557, %v1665, 0
        %1672 = vmatprep.subr.bf16.mxu0 0
        %1673 = vmatpush1.bf16.xpose.msra.mxu0 %v1670
        %1674 = vmatprep.subr.bf16.mxu0 0
        %1675 = vmatpush1.bf16.xpose.msra.mxu0 0
        %1676 = vmatprep.subr.bf16.mxu0 0
        %1677 = vmatpush1.bf16.xpose.msra.mxu0 0
        %1678 = vmatprep.subr.bf16.mxu0 0
        %1679 = vmatpush1.bf16.xpose.msra.mxu0 0
        %1680 = vmatprep.subr.bf16.mxu0 0
        %1681 = vmatpush1.bf16.xpose.msra.mxu0 0
        %1682 = vmatprep.subr.bf16.mxu0 0
        %1683 = vmatpush1.bf16.xpose.msra.mxu0 0
        %1684 = vmatprep.subr.bf16.mxu0 0
        %1685 = vmatpush1.bf16.xpose.msra.mxu0 0
        %1686 = vmatprep.subr.bf16.mxu0 0
        %1687 = vmatpush1.bf16.xpose.msra.mxu0 0
        %1688 = vmatprep.subr.bf16.mxu0 0
        %1689 = vmatpush1.bf16.xpose.msra.mxu0 0
        %1690 = vmatprep.subr.bf16.mxu0 0
        %1691 = vmatpush1.bf16.xpose.msra.mxu0 0
        %1692 = vmatprep.subr.bf16.mxu0 0
        %1693 = vmatpush1.bf16.xpose.msra.mxu0 0
        %1694 = vmatprep.subr.bf16.mxu0 0
        %1695 = vmatpush1.bf16.xpose.msra.mxu0 0
        %1696 = vmatprep.subr.bf16.mxu0 0
        %1697 = vmatpush1.bf16.xpose.msra.mxu0 0
        %1698 = vmatprep.subr.bf16.mxu0 0
        %1699 = vmatpush1.bf16.xpose.msra.mxu0 0
        %1700 = vmatprep.subr.bf16.mxu0 0
        %1701 = vmatpush1.bf16.xpose.msra.mxu0 0
        %1702 = vmatprep.subr.bf16.mxu0 0
        %1703 = vmatpush1.bf16.xpose.msra.mxu0 0
        %1704 = vmatprep.mubr.bf16.mxu0 0
        %1705 = vmatmul.mubr.bf16.gmra.mrb[0].mxu0 %v1667
        %v1706 = vpop.f32.mrb[0].mxu0
        %v1707 = vadd.f32 0.0, %v1706
        %v1708 = vpop.f32.mrb[0].mxu0
        %v1709 = vpop.f32.mrb[0].mxu0
        %v1710 = vpop.f32.mrb[0].mxu0
        %1711 = vdwg.mxu0
        %v1720 = vunpack.c.l.b16 %v1312
        %v1721 = vunpack.c.l.b16 %v1313
        %v1722 = vunpack.c.l.b16 %v1314
        %v1723 = vunpack.c.l.b16 %v1315
        %v1724 = vunpack.c.l.b16 %v1316
        %v1725 = vunpack.c.l.b16 %v1317
        %v1726 = vunpack.c.l.b16 %v1318
        %v1727 = vunpack.c.l.b16 %v1319
        %v1728 = vrot.slane %v1721, 7
        %v1729 = vsel %vm1505, %v1728, %v1720
        %v1730 = vrot.slane %v1722, 6
        %v1731 = vsel %vm1508, %v1730, %v1729
        %v1732 = vrot.slane %v1723, 5
        %v1733 = vsel %vm1511, %v1732, %v1731
        %v1734 = vrot.slane %v1724, 4
        %v1735 = vsel %vm1514, %v1734, %v1733
        %v1736 = vrot.slane %v1725, 3
        %v1737 = vsel %vm1517, %v1736, %v1735
        %v1738 = vrot.slane %v1726, 2
        %v1739 = vsel %vm1520, %v1738, %v1737
        %v1740 = vrot.slane %v1727, 1
        %v1741 = vsel %vm1523, %v1740, %v1739
        %v1742 = vpack.c.b16 %v1741, %v1741
        %v1751 = vunpack.c.l.b16 %v1392
        %v1752 = vunpack.c.l.b16 %v1393
        %v1753 = vunpack.c.l.b16 %v1394
        %v1754 = vunpack.c.l.b16 %v1395
        %v1755 = vunpack.c.l.b16 %v1396
        %v1756 = vunpack.c.l.b16 %v1397
        %v1757 = vunpack.c.l.b16 %v1398
        %v1758 = vunpack.c.l.b16 %v1399
        %v1759 = vrot.slane %v1752, 7
        %v1760 = vsel %vm1505, %v1759, %v1751
        %v1761 = vrot.slane %v1753, 6
        %v1762 = vsel %vm1508, %v1761, %v1760
        %v1763 = vrot.slane %v1754, 5
        %v1764 = vsel %vm1511, %v1763, %v1762
        %v1765 = vrot.slane %v1755, 4
        %v1766 = vsel %vm1514, %v1765, %v1764
        %v1767 = vrot.slane %v1756, 3
        %v1768 = vsel %vm1517, %v1767, %v1766
        %v1769 = vrot.slane %v1757, 2
        %v1770 = vsel %vm1520, %v1769, %v1768
        %v1771 = vrot.slane %v1758, 1
        %v1772 = vsel %vm1523, %v1771, %v1770
        %v1773 = vpack.c.b16 %v1772, %v1772
        %v1775 = vsel %vm1557, %v1742, 0
        %v1778 = vsel %vm1557, %v1773, 0
        %1780 = vmatprep.subr.bf16.mxu0 0
        %1781 = vmatpush1.bf16.xpose.msra.mxu0 %v1778
        %1782 = vmatprep.subr.bf16.mxu0 0
        %1783 = vmatpush1.bf16.xpose.msra.mxu0 0
        %1784 = vmatprep.subr.bf16.mxu0 0
        %1785 = vmatpush1.bf16.xpose.msra.mxu0 0
        %1786 = vmatprep.subr.bf16.mxu0 0
        %1787 = vmatpush1.bf16.xpose.msra.mxu0 0
        %1788 = vmatprep.subr.bf16.mxu0 0
        %1789 = vmatpush1.bf16.xpose.msra.mxu0 0
        %1790 = vmatprep.subr.bf16.mxu0 0
        %1791 = vmatpush1.bf16.xpose.msra.mxu0 0
        %1792 = vmatprep.subr.bf16.mxu0 0
        %1793 = vmatpush1.bf16.xpose.msra.mxu0 0
        %1794 = vmatprep.subr.bf16.mxu0 0
        %1795 = vmatpush1.bf16.xpose.msra.mxu0 0
        %1796 = vmatprep.subr.bf16.mxu0 0
        %1797 = vmatpush1.bf16.xpose.msra.mxu0 0
        %1798 = vmatprep.subr.bf16.mxu0 0
        %1799 = vmatpush1.bf16.xpose.msra.mxu0 0
        %1800 = vmatprep.subr.bf16.mxu0 0
        %1801 = vmatpush1.bf16.xpose.msra.mxu0 0
        %1802 = vmatprep.subr.bf16.mxu0 0
        %1803 = vmatpush1.bf16.xpose.msra.mxu0 0
        %1804 = vmatprep.subr.bf16.mxu0 0
        %1805 = vmatpush1.bf16.xpose.msra.mxu0 0
        %1806 = vmatprep.subr.bf16.mxu0 0
        %1807 = vmatpush1.bf16.xpose.msra.mxu0 0
        %1808 = vmatprep.subr.bf16.mxu0 0
        %1809 = vmatpush1.bf16.xpose.msra.mxu0 0
        %1810 = vmatprep.subr.bf16.mxu0 0
        %1811 = vmatpush1.bf16.xpose.msra.mxu0 0
        %1812 = vmatprep.mubr.bf16.mxu0 0
        %1813 = vmatmul.mubr.bf16.gmra.mrb[0].mxu0 %v1775
        %v1814 = vpop.f32.mrb[0].mxu0
        %v1815 = vadd.f32 0.0, %v1814
        %v1816 = vpop.f32.mrb[0].mxu0
        %v1817 = vpop.f32.mrb[0].mxu0
        %v1818 = vpop.f32.mrb[0].mxu0
        %1819 = vdwg.mxu0
        %v1828 = vunpack.c.l.b16 %v1320
        %v1829 = vunpack.c.l.b16 %v1321
        %v1830 = vunpack.c.l.b16 %v1322
        %v1831 = vunpack.c.l.b16 %v1323
        %v1832 = vunpack.c.l.b16 %v1324
        %v1833 = vunpack.c.l.b16 %v1325
        %v1834 = vunpack.c.l.b16 %v1326
        %v1835 = vunpack.c.l.b16 %v1327
        %v1836 = vrot.slane %v1829, 7
        %v1837 = vsel %vm1505, %v1836, %v1828
        %v1838 = vrot.slane %v1830, 6
        %v1839 = vsel %vm1508, %v1838, %v1837
        %v1840 = vrot.slane %v1831, 5
        %v1841 = vsel %vm1511, %v1840, %v1839
        %v1842 = vrot.slane %v1832, 4
        %v1843 = vsel %vm1514, %v1842, %v1841
        %v1844 = vrot.slane %v1833, 3
        %v1845 = vsel %vm1517, %v1844, %v1843
        %v1846 = vrot.slane %v1834, 2
        %v1847 = vsel %vm1520, %v1846, %v1845
        %v1848 = vrot.slane %v1835, 1
        %v1849 = vsel %vm1523, %v1848, %v1847
        %v1850 = vpack.c.b16 %v1849, %v1849
        %v1859 = vunpack.c.l.b16 %v1400
        %v1860 = vunpack.c.l.b16 %v1401
        %v1861 = vunpack.c.l.b16 %v1402
        %v1862 = vunpack.c.l.b16 %v1403
        %v1863 = vunpack.c.l.b16 %v1404
        %v1864 = vunpack.c.l.b16 %v1405
        %v1865 = vunpack.c.l.b16 %v1406
        %v1866 = vunpack.c.l.b16 %v1407
        %v1867 = vrot.slane %v1860, 7
        %v1868 = vsel %vm1505, %v1867, %v1859
        %v1869 = vrot.slane %v1861, 6
        %v1870 = vsel %vm1508, %v1869, %v1868
        %v1871 = vrot.slane %v1862, 5
        %v1872 = vsel %vm1511, %v1871, %v1870
        %v1873 = vrot.slane %v1863, 4
        %v1874 = vsel %vm1514, %v1873, %v1872
        %v1875 = vrot.slane %v1864, 3
        %v1876 = vsel %vm1517, %v1875, %v1874
        %v1877 = vrot.slane %v1865, 2
        %v1878 = vsel %vm1520, %v1877, %v1876
        %v1879 = vrot.slane %v1866, 1
        %v1880 = vsel %vm1523, %v1879, %v1878
        %v1881 = vpack.c.b16 %v1880, %v1880
        %v1883 = vsel %vm1557, %v1850, 0
        %v1886 = vsel %vm1557, %v1881, 0
        %1888 = vmatprep.subr.bf16.mxu0 0
        %1889 = vmatpush1.bf16.xpose.msra.mxu0 %v1886
        %1890 = vmatprep.subr.bf16.mxu0 0
        %1891 = vmatpush1.bf16.xpose.msra.mxu0 0
        %1892 = vmatprep.subr.bf16.mxu0 0
        %1893 = vmatpush1.bf16.xpose.msra.mxu0 0
        %1894 = vmatprep.subr.bf16.mxu0 0
        %1895 = vmatpush1.bf16.xpose.msra.mxu0 0
        %1896 = vmatprep.subr.bf16.mxu0 0
        %1897 = vmatpush1.bf16.xpose.msra.mxu0 0
        %1898 = vmatprep.subr.bf16.mxu0 0
        %1899 = vmatpush1.bf16.xpose.msra.mxu0 0
        %1900 = vmatprep.subr.bf16.mxu0 0
        %1901 = vmatpush1.bf16.xpose.msra.mxu0 0
        %1902 = vmatprep.subr.bf16.mxu0 0
        %1903 = vmatpush1.bf16.xpose.msra.mxu0 0
        %1904 = vmatprep.subr.bf16.mxu0 0
        %1905 = vmatpush1.bf16.xpose.msra.mxu0 0
        %1906 = vmatprep.subr.bf16.mxu0 0
        %1907 = vmatpush1.bf16.xpose.msra.mxu0 0
        %1908 = vmatprep.subr.bf16.mxu0 0
        %1909 = vmatpush1.bf16.xpose.msra.mxu0 0
        %1910 = vmatprep.subr.bf16.mxu0 0
        %1911 = vmatpush1.bf16.xpose.msra.mxu0 0
        %1912 = vmatprep.subr.bf16.mxu0 0
        %1913 = vmatpush1.bf16.xpose.msra.mxu0 0
        %1914 = vmatprep.subr.bf16.mxu0 0
        %1915 = vmatpush1.bf16.xpose.msra.mxu0 0
        %1916 = vmatprep.subr.bf16.mxu0 0
        %1917 = vmatpush1.bf16.xpose.msra.mxu0 0
        %1918 = vmatprep.subr.bf16.mxu0 0
        %1919 = vmatpush1.bf16.xpose.msra.mxu0 0
        %1920 = vmatprep.mubr.bf16.mxu0 0
        %1921 = vmatmul.mubr.bf16.gmra.mrb[0].mxu0 %v1883
        %v1922 = vpop.f32.mrb[0].mxu0
        %v1923 = vadd.f32 0.0, %v1922
        %v1924 = vpop.f32.mrb[0].mxu0
        %v1925 = vpop.f32.mrb[0].mxu0
        %v1926 = vpop.f32.mrb[0].mxu0
        %1927 = vdwg.mxu0
        %v1928 = vmul.f32 %v1599, 0.125
        %v1929 = vmul.f32 %v1707, 0.125
        %v1930 = vmul.f32 %v1815, 0.125
        %v1931 = vmul.f32 %v1923, 0.125
        %vm1932 = vcmask 64512
        %v1933 = vsel %vm1932, %v1928, -inf
        %1934 = vmax.xlane.f32.xlu0 %v1933
        %v1935 = vpop.xlane.xlu0 %1934
        %v1936 = vsel %vm1932, %v1929, -inf
        %1937 = vmax.xlane.f32.xlu0 %v1936
        %v1938 = vpop.xlane.xlu0 %1937
        %v1939 = vsel %vm1932, %v1930, -inf
        %1940 = vmax.xlane.f32.xlu0 %v1939
        %v1941 = vpop.xlane.xlu0 %1940
        %v1942 = vsel %vm1932, %v1931, -inf
        %1943 = vmax.xlane.f32.xlu0 %v1942
        %v1944 = vpop.xlane.xlu0 %1943
        %v1945 = vsub.f32 %v1928, %v1935
        %v1946 = vsub.f32 %v1929, %v1938
        %v1947 = vsub.f32 %v1930, %v1941
        %v1948 = vsub.f32 %v1931, %v1944
        %v1949 = vmul.f32 %v1945, 1.442695
        %v1950 = vpow.pop %v1949
        %v1951 = vmul.f32 %v1946, 1.442695
        %v1952 = vpow.pop %v1951
        %v1953 = vmul.f32 %v1947, 1.442695
        %v1954 = vpow.pop %v1953
        %v1955 = vmul.f32 %v1948, 1.442695
        %v1956 = vpow.pop %v1955
        %v1957 = vsel %vm1932, %v1950, 0.0
        %1958 = vadd.xlane.f32.xlu0 %v1957
        %v1959 = vpop.xlane.xlu0 %1958
        %v1960 = vsel %vm1932, %v1952, 0.0
        %1961 = vadd.xlane.f32.xlu0 %v1960
        %v1962 = vpop.xlane.xlu0 %1961
        %v1963 = vsel %vm1932, %v1954, 0.0
        %1964 = vadd.xlane.f32.xlu0 %v1963
        %v1965 = vpop.xlane.xlu0 %1964
        %v1966 = vsel %vm1932, %v1956, 0.0
        %1967 = vadd.xlane.f32.xlu0 %v1966
        %v1968 = vpop.xlane.xlu0 %1967
        %v1969 = vrcp.pop %v1959
        %v1970 = vrcp.pop %v1962
        %v1971 = vrcp.pop %v1965
        %v1972 = vrcp.pop %v1968
        %v1973 = vmul.f32 %v1950, %v1969
        %v1974 = vmul.f32 %v1952, %v1970
        %v1975 = vmul.f32 %v1954, %v1971
        %v1976 = vmul.f32 %v1956, %v1972
        %v1977 = vpack.c.bf16 %v1973, %v1973
        %v1978 = vpack.c.bf16 %v1974, %v1974
        %v1979 = vpack.c.bf16 %v1975, %v1975
        %v1980 = vpack.c.bf16 %v1976, %v1976
        %v1989 = vunpack.c.l.b16 %v1456
        %v1990 = vunpack.c.l.b16 %v1457
        %v1991 = vunpack.c.l.b16 %v1458
        %v1992 = vunpack.c.l.b16 %v1459
        %v1993 = vunpack.c.l.b16 %v1460
        %v1994 = vunpack.c.l.b16 %v1461
        %v1995 = vunpack.c.l.b16 %v1462
        %v1996 = vunpack.c.l.b16 %v1463
        %v1997 = vrot.slane %v1990, 7
        %v1998 = vsel %vm1505, %v1997, %v1989
        %v1999 = vrot.slane %v1991, 6
        %v2000 = vsel %vm1508, %v1999, %v1998
        %v2001 = vrot.slane %v1992, 5
        %v2002 = vsel %vm1511, %v2001, %v2000
        %v2003 = vrot.slane %v1993, 4
        %v2004 = vsel %vm1514, %v2003, %v2002
        %v2005 = vrot.slane %v1994, 3
        %v2006 = vsel %vm1517, %v2005, %v2004
        %v2007 = vrot.slane %v1995, 2
        %v2008 = vsel %vm1520, %v2007, %v2006
        %v2009 = vrot.slane %v1996, 1
        %v2010 = vsel %vm1523, %v2009, %v2008
        %v2011 = vpack.c.b16 %v2010, %v2010
        %v2013 = vsel %vm1932, %v1977, 0
        %vm2015 = vcmask 1043456
        %v2017 = vsel %vm2015, %v2011, 0
        %2019 = vmatprep.subr.bf16.mxu0 0
        %2020 = vmatpush1.bf16.msra.mxu0 %v2017
        %2021 = vmatprep.subr.bf16.mxu0 0
        %2022 = vmatpush1.bf16.msra.mxu0 0
        %2023 = vmatprep.subr.bf16.mxu0 0
        %2024 = vmatpush1.bf16.msra.mxu0 0
        %2025 = vmatprep.subr.bf16.mxu0 0
        %2026 = vmatpush1.bf16.msra.mxu0 0
        %2027 = vmatprep.subr.bf16.mxu0 0
        %2028 = vmatpush1.bf16.msra.mxu0 0
        %2029 = vmatprep.subr.bf16.mxu0 0
        %2030 = vmatpush1.bf16.msra.mxu0 0
        %2031 = vmatprep.subr.bf16.mxu0 0
        %2032 = vmatpush1.bf16.msra.mxu0 0
        %2033 = vmatprep.subr.bf16.mxu0 0
        %2034 = vmatpush1.bf16.msra.mxu0 0
        %2035 = vmatprep.subr.bf16.mxu0 0
        %2036 = vmatpush1.bf16.msra.mxu0 0
        %2037 = vmatprep.subr.bf16.mxu0 0
        %2038 = vmatpush1.bf16.msra.mxu0 0
        %2039 = vmatprep.subr.bf16.mxu0 0
        %2040 = vmatpush1.bf16.msra.mxu0 0
        %2041 = vmatprep.subr.bf16.mxu0 0
        %2042 = vmatpush1.bf16.msra.mxu0 0
        %2043 = vmatprep.subr.bf16.mxu0 0
        %2044 = vmatpush1.bf16.msra.mxu0 0
        %2045 = vmatprep.subr.bf16.mxu0 0
        %2046 = vmatpush1.bf16.msra.mxu0 0
        %2047 = vmatprep.subr.bf16.mxu0 0
        %2048 = vmatpush1.bf16.msra.mxu0 0
        %2049 = vmatprep.subr.bf16.mxu0 0
        %2050 = vmatpush1.bf16.msra.mxu0 0
        %2051 = vmatprep.mubr.bf16.mxu0 0
        %2052 = vmatmul.mubr.bf16.gmra.mrb[0].mxu0 %v2013
        %v2053 = vpop.f32.mrb[0].mxu0
        %v2054 = vadd.f32 0.0, %v2053
        %v2055 = vpop.f32.mrb[0].mxu0
        %v2056 = vpop.f32.mrb[0].mxu0
        %v2057 = vpop.f32.mrb[0].mxu0
        %2058 = vdwg.mxu0
        %v2067 = vunpack.c.l.b16 %v1464
        %v2068 = vunpack.c.l.b16 %v1465
        %v2069 = vunpack.c.l.b16 %v1466
        %v2070 = vunpack.c.l.b16 %v1467
        %v2071 = vunpack.c.l.b16 %v1468
        %v2072 = vunpack.c.l.b16 %v1469
        %v2073 = vunpack.c.l.b16 %v1470
        %v2074 = vunpack.c.l.b16 %v1471
        %v2075 = vrot.slane %v2068, 7
        %v2076 = vsel %vm1505, %v2075, %v2067
        %v2077 = vrot.slane %v2069, 6
        %v2078 = vsel %vm1508, %v2077, %v2076
        %v2079 = vrot.slane %v2070, 5
        %v2080 = vsel %vm1511, %v2079, %v2078
        %v2081 = vrot.slane %v2071, 4
        %v2082 = vsel %vm1514, %v2081, %v2080
        %v2083 = vrot.slane %v2072, 3
        %v2084 = vsel %vm1517, %v2083, %v2082
        %v2085 = vrot.slane %v2073, 2
        %v2086 = vsel %vm1520, %v2085, %v2084
        %v2087 = vrot.slane %v2074, 1
        %v2088 = vsel %vm1523, %v2087, %v2086
        %v2089 = vpack.c.b16 %v2088, %v2088
        %v2091 = vsel %vm1932, %v1978, 0
        %v2094 = vsel %vm2015, %v2089, 0
        %2096 = vmatprep.subr.bf16.mxu0 0
        %2097 = vmatpush1.bf16.msra.mxu0 %v2094
        %2098 = vmatprep.subr.bf16.mxu0 0
        %2099 = vmatpush1.bf16.msra.mxu0 0
        %2100 = vmatprep.subr.bf16.mxu0 0
        %2101 = vmatpush1.bf16.msra.mxu0 0
        %2102 = vmatprep.subr.bf16.mxu0 0
        %2103 = vmatpush1.bf16.msra.mxu0 0
        %2104 = vmatprep.subr.bf16.mxu0 0
        %2105 = vmatpush1.bf16.msra.mxu0 0
        %2106 = vmatprep.subr.bf16.mxu0 0
        %2107 = vmatpush1.bf16.msra.mxu0 0
        %2108 = vmatprep.subr.bf16.mxu0 0
        %2109 = vmatpush1.bf16.msra.mxu0 0
        %2110 = vmatprep.subr.bf16.mxu0 0
        %2111 = vmatpush1.bf16.msra.mxu0 0
        %2112 = vmatprep.subr.bf16.mxu0 0
        %2113 = vmatpush1.bf16.msra.mxu0 0
        %2114 = vmatprep.subr.bf16.mxu0 0
        %2115 = vmatpush1.bf16.msra.mxu0 0
        %2116 = vmatprep.subr.bf16.mxu0 0
        %2117 = vmatpush1.bf16.msra.mxu0 0
        %2118 = vmatprep.subr.bf16.mxu0 0
        %2119 = vmatpush1.bf16.msra.mxu0 0
        %2120 = vmatprep.subr.bf16.mxu0 0
        %2121 = vmatpush1.bf16.msra.mxu0 0
        %2122 = vmatprep.subr.bf16.mxu0 0
        %2123 = vmatpush1.bf16.msra.mxu0 0
        %2124 = vmatprep.subr.bf16.mxu0 0
        %2125 = vmatpush1.bf16.msra.mxu0 0
        %2126 = vmatprep.subr.bf16.mxu0 0
        %2127 = vmatpush1.bf16.msra.mxu0 0
        %2128 = vmatprep.mubr.bf16.mxu0 0
        %2129 = vmatmul.mubr.bf16.gmra.mrb[0].mxu0 %v2091
        %v2130 = vpop.f32.mrb[0].mxu0
        %v2131 = vadd.f32 0.0, %v2130
        %v2132 = vpop.f32.mrb[0].mxu0
        %v2133 = vpop.f32.mrb[0].mxu0
        %v2134 = vpop.f32.mrb[0].mxu0
        %2135 = vdwg.mxu0
        %v2144 = vunpack.c.l.b16 %v1472
        %v2145 = vunpack.c.l.b16 %v1473
        %v2146 = vunpack.c.l.b16 %v1474
        %v2147 = vunpack.c.l.b16 %v1475
        %v2148 = vunpack.c.l.b16 %v1476
        %v2149 = vunpack.c.l.b16 %v1477
        %v2150 = vunpack.c.l.b16 %v1478
        %v2151 = vunpack.c.l.b16 %v1479
        %v2152 = vrot.slane %v2145, 7
        %v2153 = vsel %vm1505, %v2152, %v2144
        %v2154 = vrot.slane %v2146, 6
        %v2155 = vsel %vm1508, %v2154, %v2153
        %v2156 = vrot.slane %v2147, 5
        %v2157 = vsel %vm1511, %v2156, %v2155
        %v2158 = vrot.slane %v2148, 4
        %v2159 = vsel %vm1514, %v2158, %v2157
        %v2160 = vrot.slane %v2149, 3
        %v2161 = vsel %vm1517, %v2160, %v2159
        %v2162 = vrot.slane %v2150, 2
        %v2163 = vsel %vm1520, %v2162, %v2161
        %v2164 = vrot.slane %v2151, 1
        %v2165 = vsel %vm1523, %v2164, %v2163
        %v2166 = vpack.c.b16 %v2165, %v2165
        %v2168 = vsel %vm1932, %v1979, 0
        %v2171 = vsel %vm2015, %v2166, 0
        %2173 = vmatprep.subr.bf16.mxu0 0
        %2174 = vmatpush1.bf16.msra.mxu0 %v2171
        %2175 = vmatprep.subr.bf16.mxu0 0
        %2176 = vmatpush1.bf16.msra.mxu0 0
        %2177 = vmatprep.subr.bf16.mxu0 0
        %2178 = vmatpush1.bf16.msra.mxu0 0
        %2179 = vmatprep.subr.bf16.mxu0 0
        %2180 = vmatpush1.bf16.msra.mxu0 0
        %2181 = vmatprep.subr.bf16.mxu0 0
        %2182 = vmatpush1.bf16.msra.mxu0 0
        %2183 = vmatprep.subr.bf16.mxu0 0
        %2184 = vmatpush1.bf16.msra.mxu0 0
        %2185 = vmatprep.subr.bf16.mxu0 0
        %2186 = vmatpush1.bf16.msra.mxu0 0
        %2187 = vmatprep.subr.bf16.mxu0 0
        %2188 = vmatpush1.bf16.msra.mxu0 0
        %2189 = vmatprep.subr.bf16.mxu0 0
        %2190 = vmatpush1.bf16.msra.mxu0 0
        %2191 = vmatprep.subr.bf16.mxu0 0
        %2192 = vmatpush1.bf16.msra.mxu0 0
        %2193 = vmatprep.subr.bf16.mxu0 0
        %2194 = vmatpush1.bf16.msra.mxu0 0
        %2195 = vmatprep.subr.bf16.mxu0 0
        %2196 = vmatpush1.bf16.msra.mxu0 0
        %2197 = vmatprep.subr.bf16.mxu0 0
        %2198 = vmatpush1.bf16.msra.mxu0 0
        %2199 = vmatprep.subr.bf16.mxu0 0
        %2200 = vmatpush1.bf16.msra.mxu0 0
        %2201 = vmatprep.subr.bf16.mxu0 0
        %2202 = vmatpush1.bf16.msra.mxu0 0
        %2203 = vmatprep.subr.bf16.mxu0 0
        %2204 = vmatpush1.bf16.msra.mxu0 0
        %2205 = vmatprep.mubr.bf16.mxu0 0
        %2206 = vmatmul.mubr.bf16.gmra.mrb[0].mxu0 %v2168
        %v2207 = vpop.f32.mrb[0].mxu0
        %v2208 = vadd.f32 0.0, %v2207
        %v2209 = vpop.f32.mrb[0].mxu0
        %v2210 = vpop.f32.mrb[0].mxu0
        %v2211 = vpop.f32.mrb[0].mxu0
        %2212 = vdwg.mxu0
        %v2221 = vunpack.c.l.b16 %v1480
        %v2222 = vunpack.c.l.b16 %v1481
        %v2223 = vunpack.c.l.b16 %v1482
        %v2224 = vunpack.c.l.b16 %v1483
        %v2225 = vunpack.c.l.b16 %v1484
        %v2226 = vunpack.c.l.b16 %v1485
        %v2227 = vunpack.c.l.b16 %v1486
        %v2228 = vunpack.c.l.b16 %v1487
        %v2229 = vrot.slane %v2222, 7
        %v2230 = vsel %vm1505, %v2229, %v2221
        %v2231 = vrot.slane %v2223, 6
        %v2232 = vsel %vm1508, %v2231, %v2230
        %v2233 = vrot.slane %v2224, 5
        %v2234 = vsel %vm1511, %v2233, %v2232
        %v2235 = vrot.slane %v2225, 4
        %v2236 = vsel %vm1514, %v2235, %v2234
        %v2237 = vrot.slane %v2226, 3
        %v2238 = vsel %vm1517, %v2237, %v2236
        %v2239 = vrot.slane %v2227, 2
        %v2240 = vsel %vm1520, %v2239, %v2238
        %v2241 = vrot.slane %v2228, 1
        %v2242 = vsel %vm1523, %v2241, %v2240
        %v2243 = vpack.c.b16 %v2242, %v2242
        %v2245 = vsel %vm1932, %v1980, 0
        %v2248 = vsel %vm2015, %v2243, 0
        %2250 = vmatprep.subr.bf16.mxu0 0
        %2251 = vmatpush1.bf16.msra.mxu0 %v2248
        %2252 = vmatprep.subr.bf16.mxu0 0
        %2253 = vmatpush1.bf16.msra.mxu0 0
        %2254 = vmatprep.subr.bf16.mxu0 0
        %2255 = vmatpush1.bf16.msra.mxu0 0
        %2256 = vmatprep.subr.bf16.mxu0 0
        %2257 = vmatpush1.bf16.msra.mxu0 0
        %2258 = vmatprep.subr.bf16.mxu0 0
        %2259 = vmatpush1.bf16.msra.mxu0 0
        %2260 = vmatprep.subr.bf16.mxu0 0
        %2261 = vmatpush1.bf16.msra.mxu0 0
        %2262 = vmatprep.subr.bf16.mxu0 0
        %2263 = vmatpush1.bf16.msra.mxu0 0
        %2264 = vmatprep.subr.bf16.mxu0 0
        %2265 = vmatpush1.bf16.msra.mxu0 0
        %2266 = vmatprep.subr.bf16.mxu0 0
        %2267 = vmatpush1.bf16.msra.mxu0 0
        %2268 = vmatprep.subr.bf16.mxu0 0
        %2269 = vmatpush1.bf16.msra.mxu0 0
        %2270 = vmatprep.subr.bf16.mxu0 0
        %2271 = vmatpush1.bf16.msra.mxu0 0
        %2272 = vmatprep.subr.bf16.mxu0 0
        %2273 = vmatpush1.bf16.msra.mxu0 0
        %2274 = vmatprep.subr.bf16.mxu0 0
        %2275 = vmatpush1.bf16.msra.mxu0 0
        %2276 = vmatprep.subr.bf16.mxu0 0
        %2277 = vmatpush1.bf16.msra.mxu0 0
        %2278 = vmatprep.subr.bf16.mxu0 0
        %2279 = vmatpush1.bf16.msra.mxu0 0
        %2280 = vmatprep.subr.bf16.mxu0 0
        %2281 = vmatpush1.bf16.msra.mxu0 0
        %2282 = vmatprep.mubr.bf16.mxu0 0
        %2283 = vmatmul.mubr.bf16.gmra.mrb[0].mxu0 %v2245
        %v2284 = vpop.f32.mrb[0].mxu0
        %v2285 = vadd.f32 0.0, %v2284
        %v2286 = vpop.f32.mrb[0].mxu0
        %v2287 = vpop.f32.mrb[0].mxu0
        %v2288 = vpop.f32.mrb[0].mxu0
        %2289 = vdwg.mxu0
        %v2292 = vcombine.high %v2054, %v2054
        %v2294 = vunpack.c.l.s4 1966171168
        %v2295 = vunpack.c.0.s8 %v2294
        %v2296 = vlaneseq
        %v2297 = vshrl.u32 %v2296, 7
        %v2298 = vsub.s32 %v2295, %v2297
        %v2299 = vrot.slane %v2054, %v2298
        %v2301 = vunpack.c.l.s4 1966171168
        %v2302 = vunpack.c.0.s8 %v2301
        %v2303 = vlaneseq
        %v2304 = vshrl.u32 %v2303, 7
        %v2305 = vsub.s32 %v2302, %v2304
        %v2306 = vrot.slane %v2292, %v2305
        %v2307 = vcombine.high %v2299, %v2299
        %v2308 = vcombine.high %v2306, %v2306
        %v2310 = vunpack.c.l.s4 1966171168
        %v2311 = vunpack.c.0.s8 %v2310
        %v2312 = vlaneseq
        %v2313 = vshrl.u32 %v2312, 7
        %v2314 = vsub.s32 %v2311, %v2313
        %v2315 = vrot.slane %v2299, %v2314
        %v2317 = vunpack.c.l.s4 1966171168
        %v2318 = vunpack.c.0.s8 %v2317
        %v2319 = vlaneseq
        %v2320 = vshrl.u32 %v2319, 7
        %v2321 = vsub.s32 %v2318, %v2320
        %v2322 = vrot.slane %v2306, %v2321
        %v2324 = vunpack.c.l.s4 1966171168
        %v2325 = vunpack.c.0.s8 %v2324
        %v2326 = vlaneseq
        %v2327 = vshrl.u32 %v2326, 7
        %v2328 = vsub.s32 %v2325, %v2327
        %v2329 = vrot.slane %v2307, %v2328
        %v2331 = vunpack.c.l.s4 1966171168
        %v2332 = vunpack.c.0.s8 %v2331
        %v2333 = vlaneseq
        %v2334 = vshrl.u32 %v2333, 7
        %v2335 = vsub.s32 %v2332, %v2334
        %v2336 = vrot.slane %v2308, %v2335
        %v2337 = vcombine.high %v2315, %v2315
        %v2338 = vcombine.high %v2322, %v2322
        %v2339 = vcombine.high %v2329, %v2329
        %v2340 = vcombine.high %v2336, %v2336
        %v2341 = vcombine.high %v2208, %v2208
        %v2343 = vunpack.c.l.s4 1966171168
        %v2344 = vunpack.c.0.s8 %v2343
        %v2345 = vlaneseq
        %v2346 = vshrl.u32 %v2345, 7
        %v2347 = vsub.s32 %v2344, %v2346
        %v2348 = vrot.slane %v2208, %v2347
        %v2350 = vunpack.c.l.s4 1966171168
        %v2351 = vunpack.c.0.s8 %v2350
        %v2352 = vlaneseq
        %v2353 = vshrl.u32 %v2352, 7
        %v2354 = vsub.s32 %v2351, %v2353
        %v2355 = vrot.slane %v2341, %v2354
        %v2356 = vcombine.high %v2348, %v2348
        %v2357 = vcombine.high %v2355, %v2355
        %v2359 = vunpack.c.l.s4 1966171168
        %v2360 = vunpack.c.0.s8 %v2359
        %v2361 = vlaneseq
        %v2362 = vshrl.u32 %v2361, 7
        %v2363 = vsub.s32 %v2360, %v2362
        %v2364 = vrot.slane %v2348, %v2363
        %v2366 = vunpack.c.l.s4 1966171168
        %v2367 = vunpack.c.0.s8 %v2366
        %v2368 = vlaneseq
        %v2369 = vshrl.u32 %v2368, 7
        %v2370 = vsub.s32 %v2367, %v2369
        %v2371 = vrot.slane %v2355, %v2370
        %v2373 = vunpack.c.l.s4 1966171168
        %v2374 = vunpack.c.0.s8 %v2373
        %v2375 = vlaneseq
        %v2376 = vshrl.u32 %v2375, 7
        %v2377 = vsub.s32 %v2374, %v2376
        %v2378 = vrot.slane %v2356, %v2377
        %v2380 = vunpack.c.l.s4 1966171168
        %v2381 = vunpack.c.0.s8 %v2380
        %v2382 = vlaneseq
        %v2383 = vshrl.u32 %v2382, 7
        %v2384 = vsub.s32 %v2381, %v2383
        %v2385 = vrot.slane %v2357, %v2384
        %v2386 = vcombine.high %v2364, %v2364
        %v2387 = vcombine.high %v2371, %v2371
        %v2388 = vcombine.high %v2378, %v2378
        %v2389 = vcombine.high %v2385, %v2385
        %v2408 = vcombine.high %v2131, %v2131
        %v2410 = vunpack.c.l.s4 1966171168
        %v2411 = vunpack.c.0.s8 %v2410
        %v2412 = vlaneseq
        %v2413 = vshrl.u32 %v2412, 7
        %v2414 = vsub.s32 %v2411, %v2413
        %v2415 = vrot.slane %v2131, %v2414
        %v2417 = vunpack.c.l.s4 1966171168
        %v2418 = vunpack.c.0.s8 %v2417
        %v2419 = vlaneseq
        %v2420 = vshrl.u32 %v2419, 7
        %v2421 = vsub.s32 %v2418, %v2420
        %v2422 = vrot.slane %v2408, %v2421
        %v2423 = vcombine.high %v2415, %v2415
        %v2424 = vcombine.high %v2422, %v2422
        %v2426 = vunpack.c.l.s4 1966171168
        %v2427 = vunpack.c.0.s8 %v2426
        %v2428 = vlaneseq
        %v2429 = vshrl.u32 %v2428, 7
        %v2430 = vsub.s32 %v2427, %v2429
        %v2431 = vrot.slane %v2415, %v2430
        %v2433 = vunpack.c.l.s4 1966171168
        %v2434 = vunpack.c.0.s8 %v2433
        %v2435 = vlaneseq
        %v2436 = vshrl.u32 %v2435, 7
        %v2437 = vsub.s32 %v2434, %v2436
        %v2438 = vrot.slane %v2422, %v2437
        %v2440 = vunpack.c.l.s4 1966171168
        %v2441 = vunpack.c.0.s8 %v2440
        %v2442 = vlaneseq
        %v2443 = vshrl.u32 %v2442, 7
        %v2444 = vsub.s32 %v2441, %v2443
        %v2445 = vrot.slane %v2423, %v2444
        %v2447 = vunpack.c.l.s4 1966171168
        %v2448 = vunpack.c.0.s8 %v2447
        %v2449 = vlaneseq
        %v2450 = vshrl.u32 %v2449, 7
        %v2451 = vsub.s32 %v2448, %v2450
        %v2452 = vrot.slane %v2424, %v2451
        %v2453 = vcombine.high %v2431, %v2431
        %v2454 = vcombine.high %v2438, %v2438
        %v2455 = vcombine.high %v2445, %v2445
        %v2456 = vcombine.high %v2452, %v2452
        %v2457 = vcombine.high %v2285, %v2285
        %v2459 = vunpack.c.l.s4 1966171168
        %v2460 = vunpack.c.0.s8 %v2459
        %v2461 = vlaneseq
        %v2462 = vshrl.u32 %v2461, 7
        %v2463 = vsub.s32 %v2460, %v2462
        %v2464 = vrot.slane %v2285, %v2463
        %v2466 = vunpack.c.l.s4 1966171168
        %v2467 = vunpack.c.0.s8 %v2466
        %v2468 = vlaneseq
        %v2469 = vshrl.u32 %v2468, 7
        %v2470 = vsub.s32 %v2467, %v2469
        %v2471 = vrot.slane %v2457, %v2470
        %v2472 = vcombine.high %v2464, %v2464
        %v2473 = vcombine.high %v2471, %v2471
        %v2475 = vunpack.c.l.s4 1966171168
        %v2476 = vunpack.c.0.s8 %v2475
        %v2477 = vlaneseq
        %v2478 = vshrl.u32 %v2477, 7
        %v2479 = vsub.s32 %v2476, %v2478
        %v2480 = vrot.slane %v2464, %v2479
        %v2482 = vunpack.c.l.s4 1966171168
        %v2483 = vunpack.c.0.s8 %v2482
        %v2484 = vlaneseq
        %v2485 = vshrl.u32 %v2484, 7
        %v2486 = vsub.s32 %v2483, %v2485
        %v2487 = vrot.slane %v2471, %v2486
        %v2489 = vunpack.c.l.s4 1966171168
        %v2490 = vunpack.c.0.s8 %v2489
        %v2491 = vlaneseq
        %v2492 = vshrl.u32 %v2491, 7
        %v2493 = vsub.s32 %v2490, %v2492
        %v2494 = vrot.slane %v2472, %v2493
        %v2496 = vunpack.c.l.s4 1966171168
        %v2497 = vunpack.c.0.s8 %v2496
        %v2498 = vlaneseq
        %v2499 = vshrl.u32 %v2498, 7
        %v2500 = vsub.s32 %v2497, %v2499
        %v2501 = vrot.slane %v2473, %v2500
        %v2502 = vcombine.high %v2480, %v2480
        %v2503 = vcombine.high %v2487, %v2487
        %v2504 = vcombine.high %v2494, %v2494
        %v2505 = vcombine.high %v2501, %v2501
        %v2506 = vlaneseq
        %v2507 = vshrl.u32 %v2506, 7
        %v2508 = vsub.s32 0, %v2507
        %v2509 = vrot.slane %v2431, %v2508
        %v2510 = vlaneseq
        %v2511 = vshrl.u32 %v2510, 7
        %v2512 = vsub.s32 0, %v2511
        %v2513 = vrot.slane %v2445, %v2512
        %v2514 = vlaneseq
        %v2515 = vshrl.u32 %v2514, 7
        %v2516 = vsub.s32 0, %v2515
        %v2517 = vrot.slane %v2453, %v2516
        %v2518 = vlaneseq
        %v2519 = vshrl.u32 %v2518, 7
        %v2520 = vsub.s32 0, %v2519
        %v2521 = vrot.slane %v2455, %v2520
        %v2522 = vlaneseq
        %v2523 = vshrl.u32 %v2522, 7
        %v2524 = vsub.s32 0, %v2523
        %v2525 = vrot.slane %v2438, %v2524
        %v2526 = vlaneseq
        %v2527 = vshrl.u32 %v2526, 7
        %v2528 = vsub.s32 0, %v2527
        %v2529 = vrot.slane %v2452, %v2528
        %v2530 = vlaneseq
        %v2531 = vshrl.u32 %v2530, 7
        %v2532 = vsub.s32 0, %v2531
        %v2533 = vrot.slane %v2454, %v2532
        %v2534 = vlaneseq
        %v2535 = vshrl.u32 %v2534, 7
        %v2536 = vsub.s32 0, %v2535
        %v2537 = vrot.slane %v2456, %v2536
        %v2538 = vlaneseq
        %v2539 = vshrl.u32 %v2538, 7
        %v2540 = vsub.s32 0, %v2539
        %v2541 = vrot.slane %v2480, %v2540
        %v2542 = vlaneseq
        %v2543 = vshrl.u32 %v2542, 7
        %v2544 = vsub.s32 0, %v2543
        %v2545 = vrot.slane %v2494, %v2544
        %v2546 = vlaneseq
        %v2547 = vshrl.u32 %v2546, 7
        %v2548 = vsub.s32 0, %v2547
        %v2549 = vrot.slane %v2502, %v2548
        %v2550 = vlaneseq
        %v2551 = vshrl.u32 %v2550, 7
        %v2552 = vsub.s32 0, %v2551
        %v2553 = vrot.slane %v2504, %v2552
        %v2554 = vlaneseq
        %v2555 = vshrl.u32 %v2554, 7
        %v2556 = vsub.s32 0, %v2555
        %v2557 = vrot.slane %v2487, %v2556
        %v2558 = vlaneseq
        %v2559 = vshrl.u32 %v2558, 7
        %v2560 = vsub.s32 0, %v2559
        %v2561 = vrot.slane %v2501, %v2560
        %v2562 = vlaneseq
        %v2563 = vshrl.u32 %v2562, 7
        %v2564 = vsub.s32 0, %v2563
        %v2565 = vrot.slane %v2503, %v2564
        %v2566 = vlaneseq
        %v2567 = vshrl.u32 %v2566, 7
        %v2568 = vsub.s32 0, %v2567
        %v2569 = vrot.slane %v2505, %v2568
        %vm2586 = vcmask 1040384
        %v2587 = vsel %vm2586, %v2315, %v2509
        %v2588 = vsel %vm2586, %v2329, %v2513
        %v2589 = vsel %vm2586, %v2337, %v2517
        %v2590 = vsel %vm2586, %v2339, %v2521
        %v2591 = vsel %vm2586, %v2322, %v2525
        %v2592 = vsel %vm2586, %v2336, %v2529
        %v2593 = vsel %vm2586, %v2338, %v2533
        %v2594 = vsel %vm2586, %v2340, %v2537
        %v2595 = vsel %vm2586, %v2364, %v2541
        %v2596 = vsel %vm2586, %v2378, %v2545
        %v2597 = vsel %vm2586, %v2386, %v2549
        %v2598 = vsel %vm2586, %v2388, %v2553
        %v2599 = vsel %vm2586, %v2371, %v2557
        %v2600 = vsel %vm2586, %v2385, %v2561
        %v2601 = vsel %vm2586, %v2387, %v2565
        %v2602 = vsel %vm2586, %v2389, %v2569
        %v2603 = vcombine.low %v2587, %v2589
        %v2605 = vunpack.c.l.s4 1983009808
        %v2606 = vunpack.c.0.s8 %v2605
        %v2607 = vlaneseq
        %v2608 = vshrl.u32 %v2607, 7
        %v2609 = vsub.s32 %v2606, %v2608
        %v2610 = vrot.slane %v2603, %v2609
        %v2611 = vcombine.low %v2588, %v2590
        %v2613 = vunpack.c.l.s4 1983009808
        %v2614 = vunpack.c.0.s8 %v2613
        %v2615 = vlaneseq
        %v2616 = vshrl.u32 %v2615, 7
        %v2617 = vsub.s32 %v2614, %v2616
        %v2618 = vrot.slane %v2611, %v2617
        %v2619 = vcombine.low %v2591, %v2593
        %v2621 = vunpack.c.l.s4 1983009808
        %v2622 = vunpack.c.0.s8 %v2621
        %v2623 = vlaneseq
        %v2624 = vshrl.u32 %v2623, 7
        %v2625 = vsub.s32 %v2622, %v2624
        %v2626 = vrot.slane %v2619, %v2625
        %v2627 = vcombine.low %v2592, %v2594
        %v2629 = vunpack.c.l.s4 1983009808
        %v2630 = vunpack.c.0.s8 %v2629
        %v2631 = vlaneseq
        %v2632 = vshrl.u32 %v2631, 7
        %v2633 = vsub.s32 %v2630, %v2632
        %v2634 = vrot.slane %v2627, %v2633
        %v2635 = vcombine.low %v2610, %v2618
        %v2637 = vunpack.c.l.s4 1934713408
        %v2638 = vunpack.c.0.s8 %v2637
        %v2639 = vlaneseq
        %v2640 = vshrl.u32 %v2639, 7
        %v2641 = vsub.s32 %v2638, %v2640
        %v2642 = vrot.slane %v2635, %v2641
        %v2643 = vcombine.low %v2626, %v2634
        %v2645 = vunpack.c.l.s4 1934713408
        %v2646 = vunpack.c.0.s8 %v2645
        %v2647 = vlaneseq
        %v2648 = vshrl.u32 %v2647, 7
        %v2649 = vsub.s32 %v2646, %v2648
        %v2650 = vrot.slane %v2643, %v2649
        %v2651 = vcombine.low %v2642, %v2650
        %v2652 = vcombine.high %v2642, %v2650
        %v2653 = vcombine.low %v2595, %v2597
        %v2655 = vunpack.c.l.s4 1983009808
        %v2656 = vunpack.c.0.s8 %v2655
        %v2657 = vlaneseq
        %v2658 = vshrl.u32 %v2657, 7
        %v2659 = vsub.s32 %v2656, %v2658
        %v2660 = vrot.slane %v2653, %v2659
        %v2661 = vcombine.low %v2596, %v2598
        %v2663 = vunpack.c.l.s4 1983009808
        %v2664 = vunpack.c.0.s8 %v2663
        %v2665 = vlaneseq
        %v2666 = vshrl.u32 %v2665, 7
        %v2667 = vsub.s32 %v2664, %v2666
        %v2668 = vrot.slane %v2661, %v2667
        %v2669 = vcombine.low %v2599, %v2601
        %v2671 = vunpack.c.l.s4 1983009808
        %v2672 = vunpack.c.0.s8 %v2671
        %v2673 = vlaneseq
        %v2674 = vshrl.u32 %v2673, 7
        %v2675 = vsub.s32 %v2672, %v2674
        %v2676 = vrot.slane %v2669, %v2675
        %v2677 = vcombine.low %v2600, %v2602
        %v2679 = vunpack.c.l.s4 1983009808
        %v2680 = vunpack.c.0.s8 %v2679
        %v2681 = vlaneseq
        %v2682 = vshrl.u32 %v2681, 7
        %v2683 = vsub.s32 %v2680, %v2682
        %v2684 = vrot.slane %v2677, %v2683
        %v2685 = vcombine.low %v2660, %v2668
        %v2687 = vunpack.c.l.s4 1934713408
        %v2688 = vunpack.c.0.s8 %v2687
        %v2689 = vlaneseq
        %v2690 = vshrl.u32 %v2689, 7
        %v2691 = vsub.s32 %v2688, %v2690
        %v2692 = vrot.slane %v2685, %v2691
        %v2693 = vcombine.low %v2676, %v2684
        %v2695 = vunpack.c.l.s4 1934713408
        %v2696 = vunpack.c.0.s8 %v2695
        %v2697 = vlaneseq
        %v2698 = vshrl.u32 %v2697, 7
        %v2699 = vsub.s32 %v2696, %v2698
        %v2700 = vrot.slane %v2693, %v2699
        %v2701 = vcombine.low %v2692, %v2700
        %v2702 = vcombine.high %v2692, %v2700
        %2705 = vrot.lane.b32.xlu0 %v2652, 64
        %v2706 = vpop.permute.xlu0 %2705
        %2707 = vrot.lane.b32.xlu0 %v2702, 64
        %v2708 = vpop.permute.xlu0 %2707
        %v2711 = vsel %vm1557, %v2651, %v2706
        %v2712 = vsel %vm1557, %v2701, %v2708
        %v2713 = vpack.c.bf16 %v2712, %v2711
        %v2730 = vunpack.c.l.b16 %v537
        %v2731 = vunpack.c.l.b16 %v538
        %v2732 = vunpack.c.l.b16 %v539
        %v2733 = vunpack.c.l.b16 %v540
        %v2734 = vunpack.c.l.b16 %v541
        %v2735 = vunpack.c.l.b16 %v542
        %v2736 = vunpack.c.l.b16 %v543
        %v2737 = vunpack.c.l.b16 %v544
        %v2738 = vunpack.c.l.b16 %v545
        %v2739 = vunpack.c.l.b16 %v546
        %v2740 = vunpack.c.l.b16 %v547
        %v2741 = vunpack.c.l.b16 %v548
        %v2742 = vunpack.c.l.b16 %v549
        %v2743 = vunpack.c.l.b16 %v550
        %v2744 = vunpack.c.l.b16 %v551
        %v2745 = vunpack.c.l.b16 %v552
        %v2746 = vpack.c.b16 %v2731, %v2730
        %v2747 = vpack.c.b16 %v2733, %v2732
        %v2748 = vpack.c.b16 %v2735, %v2734
        %v2749 = vpack.c.b16 %v2737, %v2736
        %v2750 = vpack.c.b16 %v2739, %v2738
        %v2751 = vpack.c.b16 %v2741, %v2740
        %v2752 = vpack.c.b16 %v2743, %v2742
        %v2753 = vpack.c.b16 %v2745, %v2744
        %2762 = vmatprep.subr.bf16.mxu0 0
        %2763 = vmatpush1.bf16.msra.mxu0 %v2746
        %2764 = vmatprep.subr.bf16.mxu0 0
        %2765 = vmatpush1.bf16.msra.mxu0 %v2747
        %2766 = vmatprep.subr.bf16.mxu0 0
        %2767 = vmatpush1.bf16.msra.mxu0 %v2748
        %2768 = vmatprep.subr.bf16.mxu0 0
        %2769 = vmatpush1.bf16.msra.mxu0 %v2749
        %2770 = vmatprep.subr.bf16.mxu0 0
        %2771 = vmatpush1.bf16.msra.mxu0 %v2750
        %2772 = vmatprep.subr.bf16.mxu0 0
        %2773 = vmatpush1.bf16.msra.mxu0 %v2751
        %2774 = vmatprep.subr.bf16.mxu0 0
        %2775 = vmatpush1.bf16.msra.mxu0 %v2752
        %2776 = vmatprep.subr.bf16.mxu0 0
        %2777 = vmatpush1.bf16.msra.mxu0 %v2753
        %2778 = vmatprep.subr.bf16.mxu0 0
        %2779 = vmatpush1.bf16.msra.mxu0 0
        %2780 = vmatprep.subr.bf16.mxu0 0
        %2781 = vmatpush1.bf16.msra.mxu0 0
        %2782 = vmatprep.subr.bf16.mxu0 0
        %2783 = vmatpush1.bf16.msra.mxu0 0
        %2784 = vmatprep.subr.bf16.mxu0 0
        %2785 = vmatpush1.bf16.msra.mxu0 0
        %2786 = vmatprep.subr.bf16.mxu0 0
        %2787 = vmatpush1.bf16.msra.mxu0 0
        %2788 = vmatprep.subr.bf16.mxu0 0
        %2789 = vmatpush1.bf16.msra.mxu0 0
        %2790 = vmatprep.subr.bf16.mxu0 0
        %2791 = vmatpush1.bf16.msra.mxu0 0
        %2792 = vmatprep.subr.bf16.mxu0 0
        %2793 = vmatpush1.bf16.msra.mxu0 0
        %2794 = vmatprep.mubr.bf16.mxu0 0
        %2795 = vmatmul.mubr.bf16.gmra.mrb[0].mxu0 %v2713
        %v2796 = vpop.f32.mrb[0].mxu0
        %v2797 = vadd.f32 0.0, %v2796
        %v2798 = vpop.f32.mrb[0].mxu0
        %v2799 = vpop.f32.mrb[0].mxu0
        %v2800 = vadd.f32 0.0, %v2799
        %v2801 = vpop.f32.mrb[0].mxu0
        %2802 = vdwg.mxu0
        %v2803 = vadd.f32 %v601, %v2797
        %v2804 = vadd.f32 %v602, %v2800
        %v2805 = vlaneseq
        %v2806 = vshrl.u32 %v2805, 7
        %v2807 = vsub.s32 1, %v2806
        %v2808 = vrot.slane %v502, %v2807
        %v2809 = vadd.f32 %v2803, %v2808
        %v2810 = vadd.f32 %v2804, %v2808
        %2811 = vadd.xlane.f32.xlu0 %v2809
        %v2812 = vpop.xlane.xlu0 %2811
        %2813 = vadd.xlane.f32.xlu0 %v2810
        %v2814 = vpop.xlane.xlu0 %2813
        %v2815 = vrcp.pop 128.0
        %v2816 = vmul.f32 %v2812, %v2815
        %v2817 = vmul.f32 %v2814, %v2815
        %v2818 = vsub.f32 %v2809, %v2816
        %v2819 = vsub.f32 %v2810, %v2817
        %v2820 = vmul.f32 %v2818, %v2818
        %v2821 = vmul.f32 %v2819, %v2819
        %2822 = vadd.xlane.f32.xlu0 %v2820
        %v2823 = vpop.xlane.xlu0 %2822
        %2824 = vadd.xlane.f32.xlu0 %v2821
        %v2825 = vpop.xlane.xlu0 %2824
        %v2826 = vmul.f32 %v2823, %v2815
        %v2827 = vmul.f32 %v2825, %v2815
        %v2828 = vadd.f32 %v2826, 1e-12
        %v2829 = vadd.f32 %v2827, 1e-12
        %v2830 = vrsqrt.pop %v2828
        %v2831 = vrsqrt.pop %v2829
        %v2832 = vmul.f32 %v2818, %v2830
        %v2833 = vmul.f32 %v2819, %v2831
        %v2834 = vlaneseq
        %v2835 = vshrl.u32 %v2834, 7
        %v2836 = vsub.s32 2, %v2835
        %v2837 = vrot.slane %v502, %v2836
        %v2838 = vmul.f32 %v2832, %v2837
        %v2839 = vmul.f32 %v2833, %v2837
        %v2840 = vlaneseq
        %v2841 = vshrl.u32 %v2840, 7
        %v2842 = vsub.s32 3, %v2841
        %v2843 = vrot.slane %v502, %v2842
        %v2844 = vadd.f32 %v2838, %v2843
        %v2845 = vadd.f32 %v2839, %v2843
        %v2846 = vpack.c.bf16 %v2845, %v2844
        %v2847 = vlaneseq
        %v2848 = vshrl.u32 %v2847, 7
        %v2849 = vsub.s32 4, %v2848
        %v2850 = vrot.slane %v502, %v2849
        %v2851 = vlaneseq
        %v2852 = vshrl.u32 %v2851, 7
        %v2853 = vsub.s32 4, %v2852
        %v2854 = vrot.slane %v503, %v2853
        %v2871 = vunpack.c.l.b16 %v553
        %v2872 = vunpack.c.h.b16 %v553
        %v2873 = vunpack.c.l.b16 %v554
        %v2874 = vunpack.c.h.b16 %v554
        %v2875 = vunpack.c.l.b16 %v555
        %v2876 = vunpack.c.h.b16 %v555
        %v2877 = vunpack.c.l.b16 %v556
        %v2878 = vunpack.c.h.b16 %v556
        %v2879 = vunpack.c.l.b16 %v557
        %v2880 = vunpack.c.h.b16 %v557
        %v2881 = vunpack.c.l.b16 %v558
        %v2882 = vunpack.c.h.b16 %v558
        %v2883 = vunpack.c.l.b16 %v559
        %v2884 = vunpack.c.h.b16 %v559
        %v2885 = vunpack.c.l.b16 %v560
        %v2886 = vunpack.c.h.b16 %v560
        %v2887 = vunpack.c.l.b16 %v561
        %v2888 = vunpack.c.h.b16 %v561
        %v2889 = vunpack.c.l.b16 %v562
        %v2890 = vunpack.c.h.b16 %v562
        %v2891 = vunpack.c.l.b16 %v563
        %v2892 = vunpack.c.h.b16 %v563
        %v2893 = vunpack.c.l.b16 %v564
        %v2894 = vunpack.c.h.b16 %v564
        %v2895 = vunpack.c.l.b16 %v565
        %v2896 = vunpack.c.h.b16 %v565
        %v2897 = vunpack.c.l.b16 %v566
        %v2898 = vunpack.c.h.b16 %v566
        %v2899 = vunpack.c.l.b16 %v567
        %v2900 = vunpack.c.h.b16 %v567
        %v2901 = vunpack.c.l.b16 %v568
        %v2902 = vunpack.c.h.b16 %v568
        %v2903 = vpack.c.b16 %v2873, %v2871
        %v2904 = vpack.c.b16 %v2874, %v2872
        %v2905 = vpack.c.b16 %v2877, %v2875
        %v2906 = vpack.c.b16 %v2878, %v2876
        %v2907 = vpack.c.b16 %v2881, %v2879
        %v2908 = vpack.c.b16 %v2882, %v2880
        %v2909 = vpack.c.b16 %v2885, %v2883
        %v2910 = vpack.c.b16 %v2886, %v2884
        %v2911 = vpack.c.b16 %v2889, %v2887
        %v2912 = vpack.c.b16 %v2890, %v2888
        %v2913 = vpack.c.b16 %v2893, %v2891
        %v2914 = vpack.c.b16 %v2894, %v2892
        %v2915 = vpack.c.b16 %v2897, %v2895
        %v2916 = vpack.c.b16 %v2898, %v2896
        %v2917 = vpack.c.b16 %v2901, %v2899
        %v2918 = vpack.c.b16 %v2902, %v2900
        %2935 = vmatprep.subr.bf16.mxu0 %v2904
        %2936 = vmatpush1.bf16.msra.mxu0 %v2903
        %2937 = vmatprep.subr.bf16.mxu0 %v2906
        %2938 = vmatpush1.bf16.msra.mxu0 %v2905
        %2939 = vmatprep.subr.bf16.mxu0 %v2908
        %2940 = vmatpush1.bf16.msra.mxu0 %v2907
        %2941 = vmatprep.subr.bf16.mxu0 %v2910
        %2942 = vmatpush1.bf16.msra.mxu0 %v2909
        %2943 = vmatprep.subr.bf16.mxu0 %v2912
        %2944 = vmatpush1.bf16.msra.mxu0 %v2911
        %2945 = vmatprep.subr.bf16.mxu0 %v2914
        %2946 = vmatpush1.bf16.msra.mxu0 %v2913
        %2947 = vmatprep.subr.bf16.mxu0 %v2916
        %2948 = vmatpush1.bf16.msra.mxu0 %v2915
        %2949 = vmatprep.subr.bf16.mxu0 %v2918
        %2950 = vmatpush1.bf16.msra.mxu0 %v2917
        %2951 = vmatprep.subr.bf16.mxu0 0
        %2952 = vmatpush1.bf16.msra.mxu0 0
        %2953 = vmatprep.subr.bf16.mxu0 0
        %2954 = vmatpush1.bf16.msra.mxu0 0
        %2955 = vmatprep.subr.bf16.mxu0 0
        %2956 = vmatpush1.bf16.msra.mxu0 0
        %2957 = vmatprep.subr.bf16.mxu0 0
        %2958 = vmatpush1.bf16.msra.mxu0 0
        %2959 = vmatprep.subr.bf16.mxu0 0
        %2960 = vmatpush1.bf16.msra.mxu0 0
        %2961 = vmatprep.subr.bf16.mxu0 0
        %2962 = vmatpush1.bf16.msra.mxu0 0
        %2963 = vmatprep.subr.bf16.mxu0 0
        %2964 = vmatpush1.bf16.msra.mxu0 0
        %2965 = vmatprep.subr.bf16.mxu0 0
        %2966 = vmatpush1.bf16.msra.mxu0 0
        %2967 = vmatprep.mubr.bf16.mxu0 0
        %2968 = vmatmul.mubr.bf16.gmra.mrb[0].mxu0 %v2846
        %v2969 = vpop.f32.mrb[0].mxu0
        %v2970 = vadd.f32 %v2850, %v2969
        %v2971 = vpop.f32.mrb[0].mxu0
        %v2972 = vadd.f32 %v2854, %v2971
        %v2973 = vpop.f32.mrb[0].mxu0
        %v2974 = vadd.f32 %v2850, %v2973
        %v2975 = vpop.f32.mrb[0].mxu0
        %v2976 = vadd.f32 %v2854, %v2975
        %2977 = vdwg.mxu0
        %v2978 = vmul.f32 %v2970, 0.5
        %v2979 = vmul.f32 %v2972, 0.5
        %v2980 = vmul.f32 %v2974, 0.5
        %v2981 = vmul.f32 %v2976, 0.5
        %v2982 = vmul.f32 %v2970, 0.044715
        %v2983 = vmul.f32 %v2972, 0.044715
        %v2984 = vmul.f32 %v2974, 0.044715
        %v2985 = vmul.f32 %v2976, 0.044715
        %v2986 = vmul.f32 %v2982, %v2970
        %v2987 = vmul.f32 %v2983, %v2972
        %v2988 = vmul.f32 %v2984, %v2974
        %v2989 = vmul.f32 %v2985, %v2976
        %v2990 = vmul.f32 %v2986, %v2970
        %v2991 = vmul.f32 %v2987, %v2972
        %v2992 = vmul.f32 %v2988, %v2974
        %v2993 = vmul.f32 %v2989, %v2976
        %v2994 = vadd.f32 %v2970, %v2990
        %v2995 = vadd.f32 %v2972, %v2991
        %v2996 = vadd.f32 %v2974, %v2992
        %v2997 = vadd.f32 %v2976, %v2993
        %v2998 = vmul.f32 %v2994, 0.7978846
        %v2999 = vmul.f32 %v2995, 0.7978846
        %v3000 = vmul.f32 %v2996, 0.7978846
        %v3001 = vmul.f32 %v2997, 0.7978846
        %v3002 = vtanh.pop %v2998
        %v3003 = vtanh.pop %v2999
        %v3004 = vtanh.pop %v3000
        %v3005 = vtanh.pop %v3001
        %v3006 = vadd.f32 %v3002, 1.0
        %v3007 = vadd.f32 %v3003, 1.0
        %v3008 = vadd.f32 %v3004, 1.0
        %v3009 = vadd.f32 %v3005, 1.0
        %v3010 = vmul.f32 %v2978, %v3006
        %v3011 = vmul.f32 %v2979, %v3007
        %v3012 = vmul.f32 %v2980, %v3008
        %v3013 = vmul.f32 %v2981, %v3009
        %v3014 = vpack.c.bf16 %v3012, %v3010
        %v3015 = vpack.c.bf16 %v3013, %v3011
        %v3016 = vlaneseq
        %v3017 = vshrl.u32 %v3016, 7
        %v3018 = vsub.s32 5, %v3017
        %v3019 = vrot.slane %v502, %v3018
        %v3052 = vunpack.c.l.b16 %v569
        %v3053 = vunpack.c.l.b16 %v570
        %v3054 = vunpack.c.l.b16 %v571
        %v3055 = vunpack.c.l.b16 %v572
        %v3056 = vunpack.c.l.b16 %v573
        %v3057 = vunpack.c.l.b16 %v574
        %v3058 = vunpack.c.l.b16 %v575
        %v3059 = vunpack.c.l.b16 %v576
        %v3060 = vunpack.c.l.b16 %v577
        %v3061 = vunpack.c.l.b16 %v578
        %v3062 = vunpack.c.l.b16 %v579
        %v3063 = vunpack.c.l.b16 %v580
        %v3064 = vunpack.c.l.b16 %v581
        %v3065 = vunpack.c.l.b16 %v582
        %v3066 = vunpack.c.l.b16 %v583
        %v3067 = vunpack.c.l.b16 %v584
        %v3068 = vunpack.c.l.b16 %v585
        %v3069 = vunpack.c.l.b16 %v586
        %v3070 = vunpack.c.l.b16 %v587
        %v3071 = vunpack.c.l.b16 %v588
        %v3072 = vunpack.c.l.b16 %v589
        %v3073 = vunpack.c.l.b16 %v590
        %v3074 = vunpack.c.l.b16 %v591
        %v3075 = vunpack.c.l.b16 %v592
        %v3076 = vunpack.c.l.b16 %v593
        %v3077 = vunpack.c.l.b16 %v594
        %v3078 = vunpack.c.l.b16 %v595
        %v3079 = vunpack.c.l.b16 %v596
        %v3080 = vunpack.c.l.b16 %v597
        %v3081 = vunpack.c.l.b16 %v598
        %v3082 = vunpack.c.l.b16 %v599
        %v3083 = vunpack.c.l.b16 %v600
        %v3084 = vpack.c.b16 %v3053, %v3052
        %v3085 = vpack.c.b16 %v3055, %v3054
        %v3086 = vpack.c.b16 %v3057, %v3056
        %v3087 = vpack.c.b16 %v3059, %v3058
        %v3088 = vpack.c.b16 %v3061, %v3060
        %v3089 = vpack.c.b16 %v3063, %v3062
        %v3090 = vpack.c.b16 %v3065, %v3064
        %v3091 = vpack.c.b16 %v3067, %v3066
        %v3092 = vpack.c.b16 %v3069, %v3068
        %v3093 = vpack.c.b16 %v3071, %v3070
        %v3094 = vpack.c.b16 %v3073, %v3072
        %v3095 = vpack.c.b16 %v3075, %v3074
        %v3096 = vpack.c.b16 %v3077, %v3076
        %v3097 = vpack.c.b16 %v3079, %v3078
        %v3098 = vpack.c.b16 %v3081, %v3080
        %v3099 = vpack.c.b16 %v3083, %v3082
        %3116 = vmatprep.subr.bf16.mxu0 0
        %3117 = vmatpush1.bf16.msra.mxu0 %v3084
        %3118 = vmatprep.subr.bf16.mxu0 0
        %3119 = vmatpush1.bf16.msra.mxu0 %v3085
        %3120 = vmatprep.subr.bf16.mxu0 0
        %3121 = vmatpush1.bf16.msra.mxu0 %v3086
        %3122 = vmatprep.subr.bf16.mxu0 0
        %3123 = vmatpush1.bf16.msra.mxu0 %v3087
        %3124 = vmatprep.subr.bf16.mxu0 0
        %3125 = vmatpush1.bf16.msra.mxu0 %v3088
        %3126 = vmatprep.subr.bf16.mxu0 0
        %3127 = vmatpush1.bf16.msra.mxu0 %v3089
        %3128 = vmatprep.subr.bf16.mxu0 0
        %3129 = vmatpush1.bf16.msra.mxu0 %v3090
        %3130 = vmatprep.subr.bf16.mxu0 0
        %3131 = vmatpush1.bf16.msra.mxu0 %v3091
        %3132 = vmatprep.subr.bf16.mxu0 0
        %3133 = vmatpush1.bf16.msra.mxu0 %v3092
        %3134 = vmatprep.subr.bf16.mxu0 0
        %3135 = vmatpush1.bf16.msra.mxu0 %v3093
        %3136 = vmatprep.subr.bf16.mxu0 0
        %3137 = vmatpush1.bf16.msra.mxu0 %v3094
        %3138 = vmatprep.subr.bf16.mxu0 0
        %3139 = vmatpush1.bf16.msra.mxu0 %v3095
        %3140 = vmatprep.subr.bf16.mxu0 0
        %3141 = vmatpush1.bf16.msra.mxu0 %v3096
        %3142 = vmatprep.subr.bf16.mxu0 0
        %3143 = vmatpush1.bf16.msra.mxu0 %v3097
        %3144 = vmatprep.subr.bf16.mxu0 0
        %3145 = vmatpush1.bf16.msra.mxu0 %v3098
        %3146 = vmatprep.subr.bf16.mxu0 0
        %3147 = vmatpush1.bf16.msra.mxu0 %v3099
        %3148 = vmatprep.mubr.bf16.mxu0 %v3015
        %3149 = vmatmul.mubr.bf16.gmra.mrb[0].mxu0 %v3014
        %v3150 = vpop.f32.mrb[0].mxu0
        %v3151 = vadd.f32 %v3019, %v3150
        %v3152 = vpop.f32.mrb[0].mxu0
        %v3153 = vpop.f32.mrb[0].mxu0
        %v3154 = vadd.f32 %v3019, %v3153
        %v3155 = vpop.f32.mrb[0].mxu0
        %3156 = vdwg.mxu0
        %v3157 = vadd.f32 %v2844, %v3151
        %v3158 = vadd.f32 %v2845, %v3154
        %3159 = vadd.xlane.f32.xlu0 %v3157
        %v3160 = vpop.xlane.xlu0 %3159
        %3161 = vadd.xlane.f32.xlu0 %v3158
        %v3162 = vpop.xlane.xlu0 %3161
        %v3163 = vmul.f32 %v3160, %v2815
        %v3164 = vmul.f32 %v3162, %v2815
        %v3165 = vsub.f32 %v3157, %v3163
        %v3166 = vsub.f32 %v3158, %v3164
        %v3167 = vmul.f32 %v3165, %v3165
        %v3168 = vmul.f32 %v3166, %v3166
        %3169 = vadd.xlane.f32.xlu0 %v3167
        %v3170 = vpop.xlane.xlu0 %3169
        %3171 = vadd.xlane.f32.xlu0 %v3168
        %v3172 = vpop.xlane.xlu0 %3171
        %v3173 = vmul.f32 %v3170, %v2815
        %v3174 = vmul.f32 %v3172, %v2815
        %v3175 = vadd.f32 %v3173, 1e-12
        %v3176 = vadd.f32 %v3174, 1e-12
        %v3177 = vrsqrt.pop %v3175
        %v3178 = vrsqrt.pop %v3176
        %v3179 = vmul.f32 %v3165, %v3177
        %v3180 = vmul.f32 %v3166, %v3178
        %v3181 = vlaneseq
        %v3182 = vshrl.u32 %v3181, 7
        %v3183 = vsub.s32 6, %v3182
        %v3184 = vrot.slane %v502, %v3183
        %v3185 = vmul.f32 %v3179, %v3184
        %v3186 = vmul.f32 %v3180, %v3184
        %v3187 = vlaneseq
        %v3188 = vshrl.u32 %v3187, 7
        %v3189 = vsub.s32 7, %v3188
        %v3190 = vrot.slane %v502, %v3189
        %v3191 = vadd.f32 %v3185, %v3190
        %v3192 = vadd.f32 %v3186, %v3190
        %3193 = vst [vmem:[%s492] sm:$0xff] %v3191
        %3194 = vst [vmem:[%s492 + $0x8] sm:$0xff] %v3192
        %s3195 = sand.u32 %s218, 1
        %s3196 = scalar_lea.sflag [#allocation4], %s3195
        %s3197 = sand.u32 %s218, 1
        %s3198 = smul.addr %s3197, 16
        %s3199 = scalar_lea.vmem [#allocation13], %s3198
        // Predicated region
        $region73: #{_lambda_.3} parent=43 // pred_check
          %p3200 = pneg %p228
        $region74: #{_lambda_.3} parent=43 // pred_check_branch
          %3202 = sbr.rel (%p3200) target = $region76
        $region75: #{_lambda_.3} parent=43 // pred_region
          %s3204 = ssub.s32 256, 256
          %3205 = vsyncadd %s3196, %s3204
          %s3206 = smul.addr %s36, 128
          %s3207 = scalar_lea.hbm %s6, %s3206
          %s3208 = sshll.u32 %s3199, 4
          %s3209 = int_to_ptr.vmem [resolvable:$true] %s3208
          %3214 = dma.vmem_to_hbm [thread:$0]  %s3209, 256, %s3207, %s3196, 128, 256, 8
        $region76: #{_lambda_.3} parent=43 // pred_fallthru
          _
      $region44: #{_lambda_.3} parent=5 // pred_fallthru
        _
      %p3215 = scmp.le.s32.totalorder 2, %s27
      // Predicated region
      $region77: #{_lambda_.3} parent=5 // pred_check
        %p3216 = pneg %p3215
      $region78: #{_lambda_.3} parent=5 // pred_check_branch
        %3218 = sbr.rel (%p3216) target = $region80
      $region79: #{_lambda_.3} parent=5 // pred_region
        %s3219 = ssub.s32 %s27, 2
        // Predicated region
        $region81: #{_lambda_.3} parent=79 // pred_check
          %p3220 = pneg %p234
        $region82: #{_lambda_.3} parent=79 // pred_check_branch
          %3222 = sbr.rel (%p3220) target = $region84
        $region83: #{_lambda_.3} parent=79 // pred_region
          %s3223 = sand.u32 %s219, 1
          %s3224 = scalar_lea.sflag [#allocation4], %s3223
          %s3225 = sand.u32 %s219, 1
          %s3226 = smul.addr %s3225, 16
          %s3227 = scalar_lea.vmem [#allocation13], %s3226
          %3228 = dma.done %s3224, 256
        $region84: #{_lambda_.3} parent=79 // pred_fallthru
          _
      $region80: #{_lambda_.3} parent=5 // pred_fallthru
        _
    $region6: #{_lambda_.3} parent=1 // loop_footer
      %s31 = sadd.s32 1, %s27
    $region7: #{_lambda_.3} parent=1 // loop_footer_branch
      %26 = sbr.rel target = $region3
    $region8: #{_lambda_.3} parent=1 // loop_exit
      _
    %3229 = vsyncpa [#allocation3], 1
    %s3230 = scalar_lea.sflag [#allocation3], 1
    %3231 = vsyncpa %s3230, 1
    %3232 = vsyncpa [#allocation6], 1
    %s3233 = scalar_lea.sflag [#allocation6], 1
    %3234 = vsyncpa %s3233, 1
    %3235 = vsyncpa [#allocation9], 1
    %s3236 = scalar_lea.sflag [#allocation9], 1
    %3237 = vsyncpa %s3236, 1
    %3238 = vsyncpa [#allocation12], 1
    %s3239 = scalar_lea.sflag [#allocation12], 1
    %3240 = vsyncpa %s3239, 1
    %3241 = vsyncpa [#allocation4], 1
    %s3242 = scalar_lea.sflag [#allocation4], 1
    %3243 = vsyncpa %s3242, 1

</llo_original>
